<compile_context>
chip_gen: v7x
topology: tpu7x:2x2x1
jax: 0.10.0
libtpu: 0.0.40
codegen_flags: <defaults>
</compile_context>

<pallas_src>
import jax
import jax.numpy as jnp
from jax.experimental import pallas as pl
from jax.experimental.pallas import tpu as pltpu

F = 28          # real feature width of another_DN
FP = 128        # feature width padded to one lane tile
HP = 384        # hidden width (H=300) padded to a multiple of 128
TB = 256        # batch tile per grid step (two 128-row sub-tiles fill the MXU)
N_LAYERS = 6


def _mlp_residual_kernel(x_ref, w_ref, b_ref, o_ref):
    """One batch tile of: out = x + L6(tanh(L5(...tanh(L1(x))...)))."""
    half = x_ref.shape[0] // 2  # 128-row sub-tiles

    def layer_first(x_bf16):
        # (half, FP) @ (FP, HP), bf16 operands, f32 accumulate.
        acc = jnp.dot(x_bf16, w_ref[0, :FP, :],
                      preferred_element_type=jnp.float32)
        return jnp.tanh(acc + b_ref[0:1, :]).astype(jnp.bfloat16)

    def layer_mid(h, i):
        acc = jnp.dot(h, w_ref[i], preferred_element_type=jnp.float32)
        return jnp.tanh(acc + b_ref[i:i + 1, :]).astype(jnp.bfloat16)

    def layer_last(h, x_f32):
        acc = jnp.dot(h, w_ref[5, :, :FP], preferred_element_type=jnp.float32)
        return x_f32 + acc + b_ref[5:6, :FP]          # residual connection

    xa = x_ref[:half, :]
    xb = x_ref[half:, :]

    # Two independent sub-tiles, interleaved layer-by-layer so the MXU matmul
    # of one sub-tile can overlap the EUP tanh of the other.
    ha = layer_first(xa.astype(jnp.bfloat16))
    hb = layer_first(xb.astype(jnp.bfloat16))
    for i in range(1, 5):
        ha = layer_mid(ha, i)
        hb = layer_mid(hb, i)
    o_ref[:half, :] = layer_last(ha, xa)
    o_ref[half:, :] = layer_last(hb, xb)


def _pack_params(params):
    """Pad & stack the six (W, b) pairs into a bf16 weight cube + f32 bias matrix.

    params[i] = (W_i, b_i) with W_i shaped (in, out) and b_i shaped (out,).
    Padded rows/cols and padded bias lanes are exactly zero, so results in the
    real lanes are unchanged.
    """
    w_all = jnp.zeros((N_LAYERS, HP, HP), jnp.float32)
    b_all = jnp.zeros((N_LAYERS, HP), jnp.float32)
    for i, (w, b) in enumerate(params):
        w_all = w_all.at[i, :w.shape[0], :w.shape[1]].set(w)
        b_all = b_all.at[i, :b.shape[0]].set(b)
    return w_all.astype(jnp.bfloat16), b_all


@jax.jit
def another_dn_forward(x, w_all, b_all):
    """x: (B, 28) f32; w_all: (6, HP, HP) bf16; b_all: (6, HP) f32."""
    B = x.shape[0]
    n_tiles = pl.cdiv(B, TB)
    Bp = n_tiles * TB

    # Zero-pad batch to a multiple of TB and features to 128 lanes.
    x_p = jnp.zeros((Bp, FP), jnp.float32).at[:B, :F].set(x)

    flops = 2 * Bp * (FP * HP + 4 * HP * HP + HP * FP)
    cost = pl.CostEstimate(
        flops=flops,
        transcendentals=5 * Bp * HP,
        bytes_accessed=(x_p.size * 4 + w_all.size * 2 + b_all.size * 4
                        + Bp * FP * 4),
    )

    out = pl.pallas_call(
        _mlp_residual_kernel,
        out_shape=jax.ShapeDtypeStruct((Bp, FP), jnp.float32),
        grid=(n_tiles,),
        in_specs=[
            pl.BlockSpec((TB, FP), lambda i: (i, 0)),               # x tile
            pl.BlockSpec((N_LAYERS, HP, HP), lambda i: (0, 0, 0)),  # weights, resident
            pl.BlockSpec((N_LAYERS, HP), lambda i: (0, 0)),         # biases, resident
        ],
        out_specs=pl.BlockSpec((TB, FP), lambda i: (i, 0)),
        compiler_params=pltpu.CompilerParams(
            dimension_semantics=("parallel",)),
        cost_estimate=cost,
    )(x_p, w_all, b_all)

    return out[:B, :F]


def init_params(key, hidden=300):
    """Deterministic init mirroring nn.Linear defaults (U[-1/sqrt(fan_in), ...])."""
    dims = [(F, hidden)] + [(hidden, hidden)] * 4 + [(hidden, F)]
    params = []
    for i, (fan_in, fan_out) in enumerate(dims):
        kw, kb = jax.random.split(jax.random.fold_in(key, i))
        bound = float(fan_in) ** -0.5
        w = jax.random.uniform(kw, (fan_in, fan_out), jnp.float32, -bound, bound)
        b = jax.random.uniform(kb, (fan_out,), jnp.float32, -bound, bound)
        params.append((w, b))
    return params


def reference_forward_f32(x, params):
    h = x
    for i, (w, b) in enumerate(params):
        h = h @ w + b
        if i < len(params) - 1:
            h = jnp.tanh(h)
    return x + h


def reference_forward_bf16(x, params):
    """Mirrors the kernel numerics: bf16 matmul operands, f32 accumulate/tanh."""
    h = x
    for i, (w, b) in enumerate(params):
        h = jnp.dot(h.astype(jnp.bfloat16), w.astype(jnp.bfloat16),
                    preferred_element_type=jnp.float32) + b
        if i < len(params) - 1:
            h = jnp.tanh(h)
    return x + h


if __name__ == "__main__":
    key = jax.random.PRNGKey(0)
    kx, kp = jax.random.split(key)

    batch = 512       # two grid steps of TB=256 rows
    hidden = 300      # module default H

    x = jax.random.normal(kx, (batch, F), dtype=jnp.float32)
    params = init_params(kp, hidden)
    w_all, b_all = _pack_params(params)

    out = another_dn_forward(x, w_all, b_all)
    out = jax.block_until_ready(out)

    ref_bf16 = reference_forward_bf16(x, params)   # same quantization as kernel
    ref_f32 = reference_forward_f32(x, params)     # original module numerics

    assert out.shape == (batch, F)
    assert jnp.allclose(out, ref_bf16, atol=2e-3, rtol=2e-3), \
        float(jnp.max(jnp.abs(out - ref_bf16)))
    assert jnp.allclose(out, ref_f32, atol=5e-2, rtol=5e-2), \
        float(jnp.max(jnp.abs(out - ref_f32)))

    print("KERNEL_OK")
</pallas_src>

<mosaic_0001>
module attributes {stable_mosaic.version = 11 : i64} {
  func.func @_mlp_residual_kernel(%arg0: i32, %arg1: memref<256x128xf32, #tpu.memory_space<vmem>>, %arg2: memref<6x384x384xbf16, #tpu.memory_space<vmem>>, %arg3: memref<6x384xf32, #tpu.memory_space<vmem>>, %arg4: memref<256x128xf32, #tpu.memory_space<vmem>>) attributes {dimension_semantics = [#tpu.dimension_semantics<parallel>], iteration_bounds = array<i64: 2>, scalar_prefetch = 0 : i64, scratch_operands = 0 : i64, tpu.core_type = #tpu.core_type<tc>, window_params = [{transform_indices = @transform_0, window_bounds = array<i64: 256, 128>}, {pipeline_mode = #tpu.pipeline_mode<synchronous>, transform_indices = @transform_1, window_bounds = array<i64: 6, 384, 384>}, {pipeline_mode = #tpu.pipeline_mode<synchronous>, transform_indices = @transform_2, window_bounds = array<i64: 6, 384>}, {transform_indices = @transform_3, window_bounds = array<i64: 256, 128>}]} {
    %c0 = arith.constant 0 : index
    %c0_0 = arith.constant 0 : index
    %0 = vector.load %arg1[%c0, %c0_0] : memref<256x128xf32, #tpu.memory_space<vmem>>, vector<128x128xf32>
    %c128 = arith.constant 128 : index
    %c0_1 = arith.constant 0 : index
    %1 = vector.load %arg1[%c128, %c0_1] : memref<256x128xf32, #tpu.memory_space<vmem>>, vector<128x128xf32>
    %2 = arith.truncf %0 : vector<128x128xf32> to vector<128x128xbf16>
    %c0_2 = arith.constant 0 : index
    %c0_3 = arith.constant 0 : index
    %c0_4 = arith.constant 0 : index
    %3 = vector.load %arg2[%c0_2, %c0_3, %c0_4] : memref<6x384x384xbf16, #tpu.memory_space<vmem>>, vector<1x128x384xbf16>
    %4 = vector.shape_cast %3 : vector<1x128x384xbf16> to vector<128x384xbf16>
    %cst = arith.constant dense<0.000000e+00> : vector<128x384xf32>
    %5 = tpu.matmul %2, %4, %cst {dimension_numbers = #tpu.dot_dimension_numbers<[1], [0], [0], [1], [0, 0, 1, 1], [], []>} : vector<128x128xbf16>, vector<128x384xbf16>, vector<128x384xf32> -> vector<128x384xf32>
    %c0_5 = arith.constant 0 : index
    %c0_6 = arith.constant 0 : index
    %6 = vector.load %arg3[%c0_5, %c0_6] : memref<6x384xf32, #tpu.memory_space<vmem>>, vector<1x384xf32>
    %7 = vector.broadcast %6 : vector<1x384xf32> to vector<128x384xf32>
    %8 = arith.addf %5, %7 : vector<128x384xf32>
    %9 = math.tanh %8 : vector<128x384xf32>
    %10 = arith.truncf %9 : vector<128x384xf32> to vector<128x384xbf16>
    %11 = arith.truncf %1 : vector<128x128xf32> to vector<128x128xbf16>
    %c0_7 = arith.constant 0 : index
    %c0_8 = arith.constant 0 : index
    %c0_9 = arith.constant 0 : index
    %12 = vector.load %arg2[%c0_7, %c0_8, %c0_9] : memref<6x384x384xbf16, #tpu.memory_space<vmem>>, vector<1x128x384xbf16>
    %13 = vector.shape_cast %12 : vector<1x128x384xbf16> to vector<128x384xbf16>
    %cst_10 = arith.constant dense<0.000000e+00> : vector<128x384xf32>
    %14 = tpu.matmul %11, %13, %cst_10 {dimension_numbers = #tpu.dot_dimension_numbers<[1], [0], [0], [1], [0, 0, 1, 1], [], []>} : vector<128x128xbf16>, vector<128x384xbf16>, vector<128x384xf32> -> vector<128x384xf32>
    %c0_11 = arith.constant 0 : index
    %c0_12 = arith.constant 0 : index
    %15 = vector.load %arg3[%c0_11, %c0_12] : memref<6x384xf32, #tpu.memory_space<vmem>>, vector<1x384xf32>
    %16 = vector.broadcast %15 : vector<1x384xf32> to vector<128x384xf32>
    %17 = arith.addf %14, %16 : vector<128x384xf32>
    %18 = math.tanh %17 : vector<128x384xf32>
    %19 = arith.truncf %18 : vector<128x384xf32> to vector<128x384xbf16>
    %c1 = arith.constant 1 : index
    %c0_13 = arith.constant 0 : index
    %c0_14 = arith.constant 0 : index
    %20 = vector.load %arg2[%c1, %c0_13, %c0_14] : memref<6x384x384xbf16, #tpu.memory_space<vmem>>, vector<1x384x384xbf16>
    %21 = vector.shape_cast %20 : vector<1x384x384xbf16> to vector<384x384xbf16>
    %cst_15 = arith.constant dense<0.000000e+00> : vector<128x384xf32>
    %22 = tpu.matmul %10, %21, %cst_15 {dimension_numbers = #tpu.dot_dimension_numbers<[1], [0], [0], [1], [0, 0, 1, 1], [], []>} : vector<128x384xbf16>, vector<384x384xbf16>, vector<128x384xf32> -> vector<128x384xf32>
    %c1_16 = arith.constant 1 : index
    %c0_17 = arith.constant 0 : index
    %23 = vector.load %arg3[%c1_16, %c0_17] : memref<6x384xf32, #tpu.memory_space<vmem>>, vector<1x384xf32>
    %24 = vector.broadcast %23 : vector<1x384xf32> to vector<128x384xf32>
    %25 = arith.addf %22, %24 : vector<128x384xf32>
    %26 = math.tanh %25 : vector<128x384xf32>
    %27 = arith.truncf %26 : vector<128x384xf32> to vector<128x384xbf16>
    %c1_18 = arith.constant 1 : index
    %c0_19 = arith.constant 0 : index
    %c0_20 = arith.constant 0 : index
    %28 = vector.load %arg2[%c1_18, %c0_19, %c0_20] : memref<6x384x384xbf16, #tpu.memory_space<vmem>>, vector<1x384x384xbf16>
    %29 = vector.shape_cast %28 : vector<1x384x384xbf16> to vector<384x384xbf16>
    %cst_21 = arith.constant dense<0.000000e+00> : vector<128x384xf32>
    %30 = tpu.matmul %19, %29, %cst_21 {dimension_numbers = #tpu.dot_dimension_numbers<[1], [0], [0], [1], [0, 0, 1, 1], [], []>} : vector<128x384xbf16>, vector<384x384xbf16>, vector<128x384xf32> -> vector<128x384xf32>
    %c1_22 = arith.constant 1 : index
    %c0_23 = arith.constant 0 : index
    %31 = vector.load %arg3[%c1_22, %c0_23] : memref<6x384xf32, #tpu.memory_space<vmem>>, vector<1x384xf32>
    %32 = vector.broadcast %31 : vector<1x384xf32> to vector<128x384xf32>
    %33 = arith.addf %30, %32 : vector<128x384xf32>
    %34 = math.tanh %33 : vector<128x384xf32>
    %35 = arith.truncf %34 : vector<128x384xf32> to vector<128x384xbf16>
    %c2 = arith.constant 2 : index
    %c0_24 = arith.constant 0 : index
    %c0_25 = arith.constant 0 : index
    %36 = vector.load %arg2[%c2, %c0_24, %c0_25] : memref<6x384x384xbf16, #tpu.memory_space<vmem>>, vector<1x384x384xbf16>
    %37 = vector.shape_cast %36 : vector<1x384x384xbf16> to vector<384x384xbf16>
    %cst_26 = arith.constant dense<0.000000e+00> : vector<128x384xf32>
    %38 = tpu.matmul %27, %37, %cst_26 {dimension_numbers = #tpu.dot_dimension_numbers<[1], [0], [0], [1], [0, 0, 1, 1], [], []>} : vector<128x384xbf16>, vector<384x384xbf16>, vector<128x384xf32> -> vector<128x384xf32>
    %c2_27 = arith.constant 2 : index
    %c0_28 = arith.constant 0 : index
    %39 = vector.load %arg3[%c2_27, %c0_28] : memref<6x384xf32, #tpu.memory_space<vmem>>, vector<1x384xf32>
    %40 = vector.broadcast %39 : vector<1x384xf32> to vector<128x384xf32>
    %41 = arith.addf %38, %40 : vector<128x384xf32>
    %42 = math.tanh %41 : vector<128x384xf32>
    %43 = arith.truncf %42 : vector<128x384xf32> to vector<128x384xbf16>
    %c2_29 = arith.constant 2 : index
    %c0_30 = arith.constant 0 : index
    %c0_31 = arith.constant 0 : index
    %44 = vector.load %arg2[%c2_29, %c0_30, %c0_31] : memref<6x384x384xbf16, #tpu.memory_space<vmem>>, vector<1x384x384xbf16>
    %45 = vector.shape_cast %44 : vector<1x384x384xbf16> to vector<384x384xbf16>
    %cst_32 = arith.constant dense<0.000000e+00> : vector<128x384xf32>
    %46 = tpu.matmul %35, %45, %cst_32 {dimension_numbers = #tpu.dot_dimension_numbers<[1], [0], [0], [1], [0, 0, 1, 1], [], []>} : vector<128x384xbf16>, vector<384x384xbf16>, vector<128x384xf32> -> vector<128x384xf32>
    %c2_33 = arith.constant 2 : index
    %c0_34 = arith.constant 0 : index
    %47 = vector.load %arg3[%c2_33, %c0_34] : memref<6x384xf32, #tpu.memory_space<vmem>>, vector<1x384xf32>
    %48 = vector.broadcast %47 : vector<1x384xf32> to vector<128x384xf32>
    %49 = arith.addf %46, %48 : vector<128x384xf32>
    %50 = math.tanh %49 : vector<128x384xf32>
    %51 = arith.truncf %50 : vector<128x384xf32> to vector<128x384xbf16>
    %c3 = arith.constant 3 : index
    %c0_35 = arith.constant 0 : index
    %c0_36 = arith.constant 0 : index
    %52 = vector.load %arg2[%c3, %c0_35, %c0_36] : memref<6x384x384xbf16, #tpu.memory_space<vmem>>, vector<1x384x384xbf16>
    %53 = vector.shape_cast %52 : vector<1x384x384xbf16> to vector<384x384xbf16>
    %cst_37 = arith.constant dense<0.000000e+00> : vector<128x384xf32>
    %54 = tpu.matmul %43, %53, %cst_37 {dimension_numbers = #tpu.dot_dimension_numbers<[1], [0], [0], [1], [0, 0, 1, 1], [], []>} : vector<128x384xbf16>, vector<384x384xbf16>, vector<128x384xf32> -> vector<128x384xf32>
    %c3_38 = arith.constant 3 : index
    %c0_39 = arith.constant 0 : index
    %55 = vector.load %arg3[%c3_38, %c0_39] : memref<6x384xf32, #tpu.memory_space<vmem>>, vector<1x384xf32>
    %56 = vector.broadcast %55 : vector<1x384xf32> to vector<128x384xf32>
    %57 = arith.addf %54, %56 : vector<128x384xf32>
    %58 = math.tanh %57 : vector<128x384xf32>
    %59 = arith.truncf %58 : vector<128x384xf32> to vector<128x384xbf16>
    %c3_40 = arith.constant 3 : index
    %c0_41 = arith.constant 0 : index
    %c0_42 = arith.constant 0 : index
    %60 = vector.load %arg2[%c3_40, %c0_41, %c0_42] : memref<6x384x384xbf16, #tpu.memory_space<vmem>>, vector<1x384x384xbf16>
    %61 = vector.shape_cast %60 : vector<1x384x384xbf16> to vector<384x384xbf16>
    %cst_43 = arith.constant dense<0.000000e+00> : vector<128x384xf32>
    %62 = tpu.matmul %51, %61, %cst_43 {dimension_numbers = #tpu.dot_dimension_numbers<[1], [0], [0], [1], [0, 0, 1, 1], [], []>} : vector<128x384xbf16>, vector<384x384xbf16>, vector<128x384xf32> -> vector<128x384xf32>
    %c3_44 = arith.constant 3 : index
    %c0_45 = arith.constant 0 : index
    %63 = vector.load %arg3[%c3_44, %c0_45] : memref<6x384xf32, #tpu.memory_space<vmem>>, vector<1x384xf32>
    %64 = vector.broadcast %63 : vector<1x384xf32> to vector<128x384xf32>
    %65 = arith.addf %62, %64 : vector<128x384xf32>
    %66 = math.tanh %65 : vector<128x384xf32>
    %67 = arith.truncf %66 : vector<128x384xf32> to vector<128x384xbf16>
    %c4 = arith.constant 4 : index
    %c0_46 = arith.constant 0 : index
    %c0_47 = arith.constant 0 : index
    %68 = vector.load %arg2[%c4, %c0_46, %c0_47] : memref<6x384x384xbf16, #tpu.memory_space<vmem>>, vector<1x384x384xbf16>
    %69 = vector.shape_cast %68 : vector<1x384x384xbf16> to vector<384x384xbf16>
    %cst_48 = arith.constant dense<0.000000e+00> : vector<128x384xf32>
    %70 = tpu.matmul %59, %69, %cst_48 {dimension_numbers = #tpu.dot_dimension_numbers<[1], [0], [0], [1], [0, 0, 1, 1], [], []>} : vector<128x384xbf16>, vector<384x384xbf16>, vector<128x384xf32> -> vector<128x384xf32>
    %c4_49 = arith.constant 4 : index
    %c0_50 = arith.constant 0 : index
    %71 = vector.load %arg3[%c4_49, %c0_50] : memref<6x384xf32, #tpu.memory_space<vmem>>, vector<1x384xf32>
    %72 = vector.broadcast %71 : vector<1x384xf32> to vector<128x384xf32>
    %73 = arith.addf %70, %72 : vector<128x384xf32>
    %74 = math.tanh %73 : vector<128x384xf32>
    %75 = arith.truncf %74 : vector<128x384xf32> to vector<128x384xbf16>
    %c4_51 = arith.constant 4 : index
    %c0_52 = arith.constant 0 : index
    %c0_53 = arith.constant 0 : index
    %76 = vector.load %arg2[%c4_51, %c0_52, %c0_53] : memref<6x384x384xbf16, #tpu.memory_space<vmem>>, vector<1x384x384xbf16>
    %77 = vector.shape_cast %76 : vector<1x384x384xbf16> to vector<384x384xbf16>
    %cst_54 = arith.constant dense<0.000000e+00> : vector<128x384xf32>
    %78 = tpu.matmul %67, %77, %cst_54 {dimension_numbers = #tpu.dot_dimension_numbers<[1], [0], [0], [1], [0, 0, 1, 1], [], []>} : vector<128x384xbf16>, vector<384x384xbf16>, vector<128x384xf32> -> vector<128x384xf32>
    %c4_55 = arith.constant 4 : index
    %c0_56 = arith.constant 0 : index
    %79 = vector.load %arg3[%c4_55, %c0_56] : memref<6x384xf32, #tpu.memory_space<vmem>>, vector<1x384xf32>
    %80 = vector.broadcast %79 : vector<1x384xf32> to vector<128x384xf32>
    %81 = arith.addf %78, %80 : vector<128x384xf32>
    %82 = math.tanh %81 : vector<128x384xf32>
    %83 = arith.truncf %82 : vector<128x384xf32> to vector<128x384xbf16>
    %c5 = arith.constant 5 : index
    %c0_57 = arith.constant 0 : index
    %c0_58 = arith.constant 0 : index
    %84 = vector.load %arg2[%c5, %c0_57, %c0_58] : memref<6x384x384xbf16, #tpu.memory_space<vmem>>, vector<1x384x128xbf16>
    %85 = vector.shape_cast %84 : vector<1x384x128xbf16> to vector<384x128xbf16>
    %cst_59 = arith.constant dense<0.000000e+00> : vector<128x128xf32>
    %86 = tpu.matmul %75, %85, %cst_59 {dimension_numbers = #tpu.dot_dimension_numbers<[1], [0], [0], [1], [0, 0, 1, 1], [], []>} : vector<128x384xbf16>, vector<384x128xbf16>, vector<128x128xf32> -> vector<128x128xf32>
    %87 = arith.addf %0, %86 : vector<128x128xf32>
    %c5_60 = arith.constant 5 : index
    %c0_61 = arith.constant 0 : index
    %88 = vector.load %arg3[%c5_60, %c0_61] : memref<6x384xf32, #tpu.memory_space<vmem>>, vector<1x128xf32>
    %89 = vector.broadcast %88 : vector<1x128xf32> to vector<128x128xf32>
    %90 = arith.addf %87, %89 : vector<128x128xf32>
    %c0_62 = arith.constant 0 : index
    %c0_63 = arith.constant 0 : index
    %91 = vector.load %arg4[%c0_62, %c0_63] : memref<256x128xf32, #tpu.memory_space<vmem>>, vector<128x128xf32>
    tpu.vector_store %arg4[%c0_62, %c0_63], %90 {strides = array<i32>} : memref<256x128xf32, #tpu.memory_space<vmem>>, vector<128x128xf32>,
    %c5_64 = arith.constant 5 : index
    %c0_65 = arith.constant 0 : index
    %c0_66 = arith.constant 0 : index
    %92 = vector.load %arg2[%c5_64, %c0_65, %c0_66] : memref<6x384x384xbf16, #tpu.memory_space<vmem>>, vector<1x384x128xbf16>
    %93 = vector.shape_cast %92 : vector<1x384x128xbf16> to vector<384x128xbf16>
    %cst_67 = arith.constant dense<0.000000e+00> : vector<128x128xf32>
    %94 = tpu.matmul %83, %93, %cst_67 {dimension_numbers = #tpu.dot_dimension_numbers<[1], [0], [0], [1], [0, 0, 1, 1], [], []>} : vector<128x384xbf16>, vector<384x128xbf16>, vector<128x128xf32> -> vector<128x128xf32>
    %95 = arith.addf %1, %94 : vector<128x128xf32>
    %c5_68 = arith.constant 5 : index
    %c0_69 = arith.constant 0 : index
    %96 = vector.load %arg3[%c5_68, %c0_69] : memref<6x384xf32, #tpu.memory_space<vmem>>, vector<1x128xf32>
    %97 = vector.broadcast %96 : vector<1x128xf32> to vector<128x128xf32>
    %98 = arith.addf %95, %97 : vector<128x128xf32>
    %c128_70 = arith.constant 128 : index
    %c0_71 = arith.constant 0 : index
    %99 = vector.load %arg4[%c128_70, %c0_71] : memref<256x128xf32, #tpu.memory_space<vmem>>, vector<128x128xf32>
    tpu.vector_store %arg4[%c128_70, %c0_71], %98 {strides = array<i32>} : memref<256x128xf32, #tpu.memory_space<vmem>>, vector<128x128xf32>,
    return
  }
  func.func @transform_0(%arg0: i32) -> (i32, i32) {
    %c0_i32 = arith.constant 0 : i32
    %c0_i32_0 = arith.constant 0 : i32
    return %arg0, %c0_i32 : i32, i32
  }
  func.func @transform_1(%arg0: i32) -> (i32, i32, i32) {
    %c0_i32 = arith.constant 0 : i32
    %c0_i32_0 = arith.constant 0 : i32
    %c0_i32_1 = arith.constant 0 : i32
    %c0_i32_2 = arith.constant 0 : i32
    return %c0_i32, %c0_i32_0, %c0_i32_1 : i32, i32, i32
  }
  func.func @transform_2(%arg0: i32) -> (i32, i32) {
    %c0_i32 = arith.constant 0 : i32
    %c0_i32_0 = arith.constant 0 : i32
    %c0_i32_1 = arith.constant 0 : i32
    return %c0_i32, %c0_i32_0 : i32, i32
  }
  func.func @transform_3(%arg0: i32) -> (i32, i32) {
    %c0_i32 = arith.constant 0 : i32
    %c0_i32_0 = arith.constant 0 : i32
    return %arg0, %c0_i32 : i32, i32
  }
}

</mosaic_0001>

<llo_original>
// kernel: another_dn_forward.1
$region0: #{another_dn_forward.1}
  #allocation0 [shape = 'u32[]', space=smem, size = 0x4, offset = 0x4, fixed_abs, tag = 'smem constant byte address 0x4 - core index']
  #allocation1 [shape = 'u32[144,128]{1,0:T(1,128)}', space=vmem, size = 0x12000, scoped, tag = 'internal scratch']
  %s0 = inlined_call_operand.vmem [shape: f32[512,128], index: 0, kind: input, shape index: {}]
  %s1 = inlined_call_operand.hbm [shape: bf16[6,384,384], index: 1, kind: input, shape index: {}]
  %s2 = inlined_call_operand.hbm [shape: f32[6,384], index: 2, kind: input, shape index: {}]
  %s3 = inlined_call_operand.vmem [shape: f32[512,128], index: 3, kind: output, shape index: {}]
  %s4 = sld [smem:[#allocation0]]
  $region53: #{another_dn_forward.1} parent=0
    _
  %s6 = ssub.s32 1, %s4
  %s7 = scalar_select 0, %s6, %s4
  $region1: #{another_dn_forward.1} parent=0
    #allocation2 [shape = 'u8[1769472]{0}', space=vmem, size = 0x1b0000, scoped, tag = 'input window, operand 1, single buffered']
    #allocation3 [shape = 's32[2]{0}', space=sflag, size = 0x8, scoped, tag = 'scoped memory for another_dn_forward.1']
    #allocation4 [shape = 'u8[12288]{0}', space=vmem, size = 0x3000, scoped, tag = 'input window, operand 2, single buffered']
    #allocation5 [shape = 's32[1]{0}', space=sflag, size = 0x4, scoped, tag = 'scoped memory for another_dn_forward.1']
    %8 = vsyncpa [#allocation3], 0
    %9 = vsyncpa [#allocation5], 0
    loop: start=0, step=1, limit=4
    $region2: #{another_dn_forward.1} parent=1 // loop_pre_header
      _
    $region3: #{another_dn_forward.1} parent=1 // loop_header
      %s11 = sphi 0, %s15
      %p12 = scmp.ge.s32.totalorder %s11, 4
      %s21 = sphi 0, %s23
      %s24 = sphi 0, %s21
      %s25 = sphi 0, %s24
      %s41 = sphi 0, %s25
      %s45 = sphi 0, %s45
      %s47 = sphi 0, %s45
      %s48 = sphi 0, %s47
      %s62 = sphi 0, %s48
      %s66 = sphi 0, %s66
      %s68 = sphi 0, %s66
      %s69 = sphi 0, %s68
      %s83 = sphi 0, %s69
      %s89 = sphi 0, %s91
      %s92 = sphi 0, %s89
      %s93 = sphi 0, %s92
      %s109 = sphi 0, %s93
    $region4: #{another_dn_forward.1} parent=1 // loop_header_branch
      %14 = sbr.rel (%p12) target = $region8
    $region5: #{another_dn_forward.1} parent=1 // loop_body
      %s16 = ssub.s32 %s11, 1
      %s17 = ssub.s32 %s11, 2
      %s18 = sadd.s32 %s11, 1
      %s19 = ssub.s32 %s11, %s18
      %p20 = scmp.eq.s32.totalorder %s19, 0
      %s22 = sadd.s32 %s21, 1
      %s23 = scalar_select %p20, %s21, %s22
      %p26 = pneg %p20
      %p27 = scmp.eq.s32.totalorder %s11, 1
      %p28 = por %p26, %p27
      %p29 = scmp.ne.s32.totalorder %s21, %s24
      %p30 = scmp.eq.s32.totalorder %s11, 0
      %p31 = por %p29, %p30
      %p32 = scmp.ne.s32.totalorder %s21, %s24
      %p33 = scmp.eq.s32.totalorder %s16, 1
      %p34 = por %p32, %p33
      %p35 = scmp.ne.s32.totalorder %s24, %s25
      %p36 = scmp.eq.s32.totalorder %s16, 0
      %p37 = por %p35, %p36
      %p38 = scmp.ne.s32.totalorder %s24, %s25
      %p39 = scmp.eq.s32.totalorder %s17, 1
      %p40 = por %p38, %p39
      %p42 = scmp.ne.s32.totalorder %s25, %s41
      %p43 = scmp.eq.s32.totalorder %s17, 0
      %p44 = por %p42, %p43
      %s46 = sadd.s32 %s45, 1
      %p49 = scmp.eq.s32.totalorder %s11, 1
      %p50 = scmp.ne.s32.totalorder %s45, %s47
      %p51 = scmp.eq.s32.totalorder %s11, 0
      %p52 = por %p50, %p51
      %p53 = scmp.ne.s32.totalorder %s45, %s47
      %p54 = scmp.eq.s32.totalorder %s16, 1
      %p55 = por %p53, %p54
      %p56 = scmp.ne.s32.totalorder %s47, %s48
      %p57 = scmp.eq.s32.totalorder %s16, 0
      %p58 = por %p56, %p57
      %p59 = scmp.ne.s32.totalorder %s47, %s48
      %p60 = scmp.eq.s32.totalorder %s17, 1
      %p61 = por %p59, %p60
      %p63 = scmp.ne.s32.totalorder %s48, %s62
      %p64 = scmp.eq.s32.totalorder %s17, 0
      %p65 = por %p63, %p64
      %s67 = sadd.s32 %s66, 1
      %p70 = scmp.eq.s32.totalorder %s11, 1
      %p71 = scmp.ne.s32.totalorder %s66, %s68
      %p72 = scmp.eq.s32.totalorder %s11, 0
      %p73 = por %p71, %p72
      %p74 = scmp.ne.s32.totalorder %s66, %s68
      %p75 = scmp.eq.s32.totalorder %s16, 1
      %p76 = por %p74, %p75
      %p77 = scmp.ne.s32.totalorder %s68, %s69
      %p78 = scmp.eq.s32.totalorder %s16, 0
      %p79 = por %p77, %p78
      %p80 = scmp.ne.s32.totalorder %s68, %s69
      %p81 = scmp.eq.s32.totalorder %s17, 1
      %p82 = por %p80, %p81
      %p84 = scmp.ne.s32.totalorder %s69, %s83
      %p85 = scmp.eq.s32.totalorder %s17, 0
      %p86 = por %p84, %p85
      %s87 = ssub.s32 %s11, %s18
      %p88 = scmp.eq.s32.totalorder %s87, 0
      %s90 = sadd.s32 %s89, 1
      %s91 = scalar_select %p88, %s89, %s90
      %p94 = pneg %p88
      %p95 = scmp.eq.s32.totalorder %s11, 1
      %p96 = por %p94, %p95
      %p97 = scmp.ne.s32.totalorder %s89, %s92
      %p98 = scmp.eq.s32.totalorder %s11, 0
      %p99 = por %p97, %p98
      %p100 = scmp.ne.s32.totalorder %s89, %s92
      %p101 = scmp.eq.s32.totalorder %s16, 1
      %p102 = por %p100, %p101
      %p103 = scmp.ne.s32.totalorder %s92, %s93
      %p104 = scmp.eq.s32.totalorder %s16, 0
      %p105 = por %p103, %p104
      %p106 = scmp.ne.s32.totalorder %s92, %s93
      %p107 = scmp.eq.s32.totalorder %s17, 1
      %p108 = por %p106, %p107
      %p110 = scmp.ne.s32.totalorder %s93, %s109
      %p111 = scmp.eq.s32.totalorder %s17, 0
      %p112 = por %p110, %p111
      %p113 = scmp.le.s32.totalorder 1, %s11
      %p114 = scmp.lt.s32.totalorder %s11, 3
      %p115 = pnand %p113, %p114
      %p116 = pneg %p115
      // Predicated region
      $region9: #{another_dn_forward.1} parent=5 // pred_check
        _
      $region10: #{another_dn_forward.1} parent=5 // pred_check_branch
        %118 = sbr.rel (%p115) target = $region12
      $region11: #{another_dn_forward.1} parent=5 // pred_region
        %s119 = ssub.s32 %s11, 1
        // Predicated region
        $region13: #{another_dn_forward.1} parent=11 // pred_check
          %p120 = pneg %p58
        $region14: #{another_dn_forward.1} parent=11 // pred_check_branch
          %122 = sbr.rel (%p120) target = $region16
        $region15: #{another_dn_forward.1} parent=11 // pred_region
          %s124 = ssub.s32 55296, 55296
          %125 = vsyncadd [#allocation3], %s124
          %s126 = sshll.u32 [#allocation2], 4
          %s127 = int_to_ptr.vmem [resolvable:$true] %s126
          %132 = dma.hbm_to_vmem [thread:$0]  %s1, 55296, %s127, [#allocation3], 192, 192, 12
        $region16: #{another_dn_forward.1} parent=11 // pred_fallthru
          _
        // Predicated region
        $region17: #{another_dn_forward.1} parent=11 // pred_check
          %p133 = pneg %p79
        $region18: #{another_dn_forward.1} parent=11 // pred_check_branch
          %135 = sbr.rel (%p133) target = $region20
        $region19: #{another_dn_forward.1} parent=11 // pred_region
          %s137 = ssub.s32 384, 384
          %138 = vsyncadd [#allocation5], %s137
          %s140 = sshll.u32 [#allocation4], 4
          %s141 = int_to_ptr.vmem [resolvable:$true] %s140
          %143 = dma.hbm_to_vmem [thread:$0]  %s2, 384, %s141, [#allocation5]
        $region20: #{another_dn_forward.1} parent=11 // pred_fallthru
          _
      $region12: #{another_dn_forward.1} parent=5 // pred_fallthru
        _
      %p144 = scmp.lt.s32.totalorder %s11, 2
      // Predicated region
      $region21: #{another_dn_forward.1} parent=5 // pred_check
        %p145 = pneg %p144
      $region22: #{another_dn_forward.1} parent=5 // pred_check_branch
        %147 = sbr.rel (%p145) target = $region24
      $region23: #{another_dn_forward.1} parent=5 // pred_region
        // Predicated region
        $region25: #{another_dn_forward.1} parent=23 // pred_check
          %p148 = pneg %p31
        $region26: #{another_dn_forward.1} parent=23 // pred_check_branch
          %150 = sbr.rel (%p148) target = $region28
        $region27: #{another_dn_forward.1} parent=23 // pred_region
          %s151 = smul.u32 32, %s11
          %p152 = scmp.lt.s32.totalorder %s151, 63
          %s153 = scalar_select %p152, %s151, 63
          %s154 = smul.addr %s153, 8
          %s155 = scalar_lea.vmem %s0, %s154
          %s156 = smul.u32 32, %s11
        $region28: #{another_dn_forward.1} parent=23 // pred_fallthru
          _
      $region24: #{another_dn_forward.1} parent=5 // pred_fallthru
        _
      %p157 = scmp.le.s32.totalorder 1, %s11
      %p158 = scmp.lt.s32.totalorder %s11, 3
      %p159 = pnand %p157, %p158
      %p160 = pneg %p159
      // Predicated region
      $region29: #{another_dn_forward.1} parent=5 // pred_check
        _
      $region30: #{another_dn_forward.1} parent=5 // pred_check_branch
        %162 = sbr.rel (%p159) target = $region32
      $region31: #{another_dn_forward.1} parent=5 // pred_region
        %s163 = ssub.s32 %s11, 1
        // Predicated region
        $region33: #{another_dn_forward.1} parent=31 // pred_check
          %p164 = pneg %p58
        $region34: #{another_dn_forward.1} parent=31 // pred_check_branch
          %166 = sbr.rel (%p164) target = $region36
        $region35: #{another_dn_forward.1} parent=31 // pred_region
          %167 = dma.done [#allocation3], 55296
        $region36: #{another_dn_forward.1} parent=31 // pred_fallthru
          _
        // Predicated region
        $region37: #{another_dn_forward.1} parent=31 // pred_check
          %p168 = pneg %p79
        $region38: #{another_dn_forward.1} parent=31 // pred_check_branch
          %170 = sbr.rel (%p168) target = $region40
        $region39: #{another_dn_forward.1} parent=31 // pred_region
          %171 = dma.done [#allocation5], 384
        $region40: #{another_dn_forward.1} parent=31 // pred_fallthru
          _
        %s172 = smul.u32 32, %s16
        %p173 = scmp.lt.s32.totalorder %s172, 63
        %s174 = scalar_select %p173, %s172, 63
        %s175 = smul.addr %s174, 8
        %s176 = scalar_lea.vmem %s0, %s175
        %p177 = pneg %p37
        %p178 = pneg %p34
        %p179 = pneg %p58
        %p180 = pneg %p55
        %p181 = pneg %p79
        %p182 = pneg %p76
        %p183 = pneg %p105
        %p184 = pneg %p102
        %s185 = smul.u32 32, %s16
        %p186 = scmp.lt.s32.totalorder %s185, 63
        %s187 = scalar_select %p186, %s185, 63
        %s188 = smul.addr %s187, 8
        %s189 = scalar_lea.vmem %s3, %s188
        %s190 = smul.u32 32, %s16
        %p191 = scmp.lt.s32.totalorder %s190, 63
        %s192 = scalar_select %p191, %s190, 63
        %s193 = smul.addr %s192, 8
        %s194 = scalar_lea.vmem %s0, %s193
        %s195 = smul.u32 32, %s16
        %s196 = smul.u32 32, %s16
        %p197 = scmp.lt.s32.totalorder %s196, 63
        %s198 = scalar_select %p197, %s196, 63
        %s199 = smul.addr %s198, 8
        %s200 = scalar_lea.vmem %s3, %s199
        %s201 = smul.u32 32, %s16
        %v203 = vld [vmem:[%s194] sm:$0xff]
        %v204 = vld [vmem:[%s194 + $0x8] sm:$0xff]
        %v205 = vld [vmem:[%s194 + $0x10] sm:$0xff]
        %v206 = vld [vmem:[%s194 + $0x18] sm:$0xff]
        %v207 = vld [vmem:[%s194 + $0x20] sm:$0xff]
        %v208 = vld [vmem:[%s194 + $0x28] sm:$0xff]
        %v209 = vld [vmem:[%s194 + $0x30] sm:$0xff]
        %v210 = vld [vmem:[%s194 + $0x38] sm:$0xff]
        %v211 = vld [vmem:[%s194 + $0x40] sm:$0xff]
        %v212 = vld [vmem:[%s194 + $0x48] sm:$0xff]
        %v213 = vld [vmem:[%s194 + $0x50] sm:$0xff]
        %v214 = vld [vmem:[%s194 + $0x58] sm:$0xff]
        %v215 = vld [vmem:[%s194 + $0x60] sm:$0xff]
        %v216 = vld [vmem:[%s194 + $0x68] sm:$0xff]
        %v217 = vld [vmem:[%s194 + $0x70] sm:$0xff]
        %v218 = vld [vmem:[%s194 + $0x78] sm:$0xff]
        %v219 = vld [vmem:[%s194 + $0x80] sm:$0xff]
        %v220 = vld [vmem:[%s194 + $0x88] sm:$0xff]
        %v221 = vld [vmem:[%s194 + $0x90] sm:$0xff]
        %v222 = vld [vmem:[%s194 + $0x98] sm:$0xff]
        %v223 = vld [vmem:[%s194 + $0xa0] sm:$0xff]
        %v224 = vld [vmem:[%s194 + $0xa8] sm:$0xff]
        %v225 = vld [vmem:[%s194 + $0xb0] sm:$0xff]
        %v226 = vld [vmem:[%s194 + $0xb8] sm:$0xff]
        %v227 = vld [vmem:[%s194 + $0xc0] sm:$0xff]
        %v228 = vld [vmem:[%s194 + $0xc8] sm:$0xff]
        %v229 = vld [vmem:[%s194 + $0xd0] sm:$0xff]
        %v230 = vld [vmem:[%s194 + $0xd8] sm:$0xff]
        %v231 = vld [vmem:[%s194 + $0xe0] sm:$0xff]
        %v232 = vld [vmem:[%s194 + $0xe8] sm:$0xff]
        %v233 = vld [vmem:[%s194 + $0xf0] sm:$0xff]
        %v234 = vld [vmem:[%s194 + $0xf8] sm:$0xff]
        %v235 = vpack.c.bf16 %v204, %v203
        %v236 = vpack.c.bf16 %v206, %v205
        %v237 = vpack.c.bf16 %v208, %v207
        %v238 = vpack.c.bf16 %v210, %v209
        %v239 = vpack.c.bf16 %v212, %v211
        %v240 = vpack.c.bf16 %v214, %v213
        %v241 = vpack.c.bf16 %v216, %v215
        %v242 = vpack.c.bf16 %v218, %v217
        %v243 = vld [vmem:[#allocation2] sm:$0xff]
        %v244 = vld [vmem:[#allocation2 + $0x8] sm:$0xf]
        %v245 = vld [vmem:[#allocation2 + $0xc] sm:$0xff]
        %v246 = vld [vmem:[#allocation2 + $0x14] sm:$0xf]
        %v247 = vld [vmem:[#allocation2 + $0x18] sm:$0xff]
        %v248 = vld [vmem:[#allocation2 + $0x20] sm:$0xf]
        %v249 = vld [vmem:[#allocation2 + $0x24] sm:$0xff]
        %v250 = vld [vmem:[#allocation2 + $0x2c] sm:$0xf]
        %v251 = vld [vmem:[#allocation2 + $0x30] sm:$0xff]
        %v252 = vld [vmem:[#allocation2 + $0x38] sm:$0xf]
        %v253 = vld [vmem:[#allocation2 + $0x3c] sm:$0xff]
        %v254 = vld [vmem:[#allocation2 + $0x44] sm:$0xf]
        %v255 = vld [vmem:[#allocation2 + $0x48] sm:$0xff]
        %v256 = vld [vmem:[#allocation2 + $0x50] sm:$0xf]
        %v257 = vld [vmem:[#allocation2 + $0x54] sm:$0xff]
        %v258 = vld [vmem:[#allocation2 + $0x5c] sm:$0xf]
        %v259 = vld [vmem:[#allocation2 + $0x60] sm:$0xff]
        %v260 = vld [vmem:[#allocation2 + $0x68] sm:$0xf]
        %v261 = vld [vmem:[#allocation2 + $0x6c] sm:$0xff]
        %v262 = vld [vmem:[#allocation2 + $0x74] sm:$0xf]
        %v263 = vld [vmem:[#allocation2 + $0x78] sm:$0xff]
        %v264 = vld [vmem:[#allocation2 + $0x80] sm:$0xf]
        %v265 = vld [vmem:[#allocation2 + $0x84] sm:$0xff]
        %v266 = vld [vmem:[#allocation2 + $0x8c] sm:$0xf]
        %v267 = vld [vmem:[#allocation2 + $0x90] sm:$0xff]
        %v268 = vld [vmem:[#allocation2 + $0x98] sm:$0xf]
        %v269 = vld [vmem:[#allocation2 + $0x9c] sm:$0xff]
        %v270 = vld [vmem:[#allocation2 + $0xa4] sm:$0xf]
        %v271 = vld [vmem:[#allocation2 + $0xa8] sm:$0xff]
        %v272 = vld [vmem:[#allocation2 + $0xb0] sm:$0xf]
        %v273 = vld [vmem:[#allocation2 + $0xb4] sm:$0xff]
        %v274 = vld [vmem:[#allocation2 + $0xbc] sm:$0xf]
        %v275 = vld [vmem:[#allocation4] ss:$8 sm:$0x7]
        %v277 = vlaneseq
        %v278 = vshrl.u32 %v277, 7
        %v279 = vsub.s32 0, %v278
        %v280 = vrot.slane %v275, %v279
        %v281 = vlaneseq
        %v282 = vshrl.u32 %v281, 7
        %v283 = vsub.s32 1, %v282
        %v284 = vrot.slane %v275, %v283
        %v285 = vlaneseq
        %v286 = vshrl.u32 %v285, 7
        %v287 = vsub.s32 2, %v286
        %v288 = vrot.slane %v275, %v287
        %v324 = vunpack.c.l.b16 %v243
        %v325 = vunpack.c.h.b16 %v243
        %v326 = vunpack.c.l.b16 %v244
        %v327 = vunpack.c.l.b16 %v245
        %v328 = vunpack.c.h.b16 %v245
        %v329 = vunpack.c.l.b16 %v246
        %v330 = vunpack.c.l.b16 %v247
        %v331 = vunpack.c.h.b16 %v247
        %v332 = vunpack.c.l.b16 %v248
        %v333 = vunpack.c.l.b16 %v249
        %v334 = vunpack.c.h.b16 %v249
        %v335 = vunpack.c.l.b16 %v250
        %v336 = vunpack.c.l.b16 %v251
        %v337 = vunpack.c.h.b16 %v251
        %v338 = vunpack.c.l.b16 %v252
        %v339 = vunpack.c.l.b16 %v253
        %v340 = vunpack.c.h.b16 %v253
        %v341 = vunpack.c.l.b16 %v254
        %v342 = vunpack.c.l.b16 %v255
        %v343 = vunpack.c.h.b16 %v255
        %v344 = vunpack.c.l.b16 %v256
        %v345 = vunpack.c.l.b16 %v257
        %v346 = vunpack.c.h.b16 %v257
        %v347 = vunpack.c.l.b16 %v258
        %v348 = vunpack.c.l.b16 %v259
        %v349 = vunpack.c.h.b16 %v259
        %v350 = vunpack.c.l.b16 %v260
        %v351 = vunpack.c.l.b16 %v261
        %v352 = vunpack.c.h.b16 %v261
        %v353 = vunpack.c.l.b16 %v262
        %v354 = vunpack.c.l.b16 %v263
        %v355 = vunpack.c.h.b16 %v263
        %v356 = vunpack.c.l.b16 %v264
        %v357 = vunpack.c.l.b16 %v265
        %v358 = vunpack.c.h.b16 %v265
        %v359 = vunpack.c.l.b16 %v266
        %v360 = vunpack.c.l.b16 %v267
        %v361 = vunpack.c.h.b16 %v267
        %v362 = vunpack.c.l.b16 %v268
        %v363 = vunpack.c.l.b16 %v269
        %v364 = vunpack.c.h.b16 %v269
        %v365 = vunpack.c.l.b16 %v270
        %v366 = vunpack.c.l.b16 %v271
        %v367 = vunpack.c.h.b16 %v271
        %v368 = vunpack.c.l.b16 %v272
        %v369 = vunpack.c.l.b16 %v273
        %v370 = vunpack.c.h.b16 %v273
        %v371 = vunpack.c.l.b16 %v274
        %v372 = vpack.c.b16 %v327, %v324
        %v373 = vpack.c.b16 %v328, %v325
        %v374 = vpack.c.b16 %v329, %v326
        %v375 = vpack.c.b16 %v333, %v330
        %v376 = vpack.c.b16 %v334, %v331
        %v377 = vpack.c.b16 %v335, %v332
        %v378 = vpack.c.b16 %v339, %v336
        %v379 = vpack.c.b16 %v340, %v337
        %v380 = vpack.c.b16 %v341, %v338
        %v381 = vpack.c.b16 %v345, %v342
        %v382 = vpack.c.b16 %v346, %v343
        %v383 = vpack.c.b16 %v347, %v344
        %v384 = vpack.c.b16 %v351, %v348
        %v385 = vpack.c.b16 %v352, %v349
        %v386 = vpack.c.b16 %v353, %v350
        %v387 = vpack.c.b16 %v357, %v354
        %v388 = vpack.c.b16 %v358, %v355
        %v389 = vpack.c.b16 %v359, %v356
        %v390 = vpack.c.b16 %v363, %v360
        %v391 = vpack.c.b16 %v364, %v361
        %v392 = vpack.c.b16 %v365, %v362
        %v393 = vpack.c.b16 %v369, %v366
        %v394 = vpack.c.b16 %v370, %v367
        %v395 = vpack.c.b16 %v371, %v368
        %420 = vmatprep.subr.bf16.mxu0 %v373
        %421 = vmatpush1.bf16.msra.mxu0 %v372
        %422 = vmatprep.subr.bf16.mxu0 %v376
        %423 = vmatpush1.bf16.msra.mxu0 %v375
        %424 = vmatprep.subr.bf16.mxu0 %v379
        %425 = vmatpush1.bf16.msra.mxu0 %v378
        %426 = vmatprep.subr.bf16.mxu0 %v382
        %427 = vmatpush1.bf16.msra.mxu0 %v381
        %428 = vmatprep.subr.bf16.mxu0 %v385
        %429 = vmatpush1.bf16.msra.mxu0 %v384
        %430 = vmatprep.subr.bf16.mxu0 %v388
        %431 = vmatpush1.bf16.msra.mxu0 %v387
        %432 = vmatprep.subr.bf16.mxu0 %v391
        %433 = vmatpush1.bf16.msra.mxu0 %v390
        %434 = vmatprep.subr.bf16.mxu0 %v394
        %435 = vmatpush1.bf16.msra.mxu0 %v393
        %436 = vmatprep.subr.bf16.mxu0 0
        %437 = vmatpush1.bf16.msra.mxu0 0
        %438 = vmatprep.subr.bf16.mxu0 0
        %439 = vmatpush1.bf16.msra.mxu0 0
        %440 = vmatprep.subr.bf16.mxu0 0
        %441 = vmatpush1.bf16.msra.mxu0 0
        %442 = vmatprep.subr.bf16.mxu0 0
        %443 = vmatpush1.bf16.msra.mxu0 0
        %444 = vmatprep.subr.bf16.mxu0 0
        %445 = vmatpush1.bf16.msra.mxu0 0
        %446 = vmatprep.subr.bf16.mxu0 0
        %447 = vmatpush1.bf16.msra.mxu0 0
        %448 = vmatprep.subr.bf16.mxu0 0
        %449 = vmatpush1.bf16.msra.mxu0 0
        %450 = vmatprep.subr.bf16.mxu0 0
        %451 = vmatpush1.bf16.msra.mxu0 0
        %452 = vmatprep.mubr.bf16.mxu0 0
        %453 = vmatmul.mubr.bf16.gmra.mrb[0].mxu0 %v235
        %v454 = vpop.f32.mrb[0].mxu0
        %v455 = vadd.f32 %v280, %v454
        %v456 = vpop.f32.mrb[0].mxu0
        %v457 = vadd.f32 %v284, %v456
        %v458 = vpop.f32.mrb[0].mxu0
        %v459 = vadd.f32 %v280, %v458
        %v460 = vpop.f32.mrb[0].mxu0
        %v461 = vadd.f32 %v284, %v460
        %462 = vmatprep.mubr.bf16.mxu0 0
        %463 = vmatmul.mubr.bf16.gmra.mrb[0].mxu0 %v236
        %v464 = vpop.f32.mrb[0].mxu0
        %v465 = vadd.f32 %v280, %v464
        %v466 = vpop.f32.mrb[0].mxu0
        %v467 = vadd.f32 %v284, %v466
        %v468 = vpop.f32.mrb[0].mxu0
        %v469 = vadd.f32 %v280, %v468
        %v470 = vpop.f32.mrb[0].mxu0
        %v471 = vadd.f32 %v284, %v470
        %472 = vmatprep.mubr.bf16.mxu0 0
        %473 = vmatmul.mubr.bf16.gmra.mrb[0].mxu0 %v237
        %v474 = vpop.f32.mrb[0].mxu0
        %v475 = vadd.f32 %v280, %v474
        %v476 = vpop.f32.mrb[0].mxu0
        %v477 = vadd.f32 %v284, %v476
        %v478 = vpop.f32.mrb[0].mxu0
        %v479 = vadd.f32 %v280, %v478
        %v480 = vpop.f32.mrb[0].mxu0
        %v481 = vadd.f32 %v284, %v480
        %482 = vmatprep.mubr.bf16.mxu0 0
        %483 = vmatmul.mubr.bf16.gmra.mrb[0].mxu0 %v238
        %v484 = vpop.f32.mrb[0].mxu0
        %v485 = vadd.f32 %v280, %v484
        %v486 = vpop.f32.mrb[0].mxu0
        %v487 = vadd.f32 %v284, %v486
        %v488 = vpop.f32.mrb[0].mxu0
        %v489 = vadd.f32 %v280, %v488
        %v490 = vpop.f32.mrb[0].mxu0
        %v491 = vadd.f32 %v284, %v490
        %492 = vmatprep.mubr.bf16.mxu0 0
        %493 = vmatmul.mubr.bf16.gmra.mrb[0].mxu0 %v239
        %v494 = vpop.f32.mrb[0].mxu0
        %v495 = vadd.f32 %v280, %v494
        %v496 = vpop.f32.mrb[0].mxu0
        %v497 = vadd.f32 %v284, %v496
        %v498 = vpop.f32.mrb[0].mxu0
        %v499 = vadd.f32 %v280, %v498
        %v500 = vpop.f32.mrb[0].mxu0
        %v501 = vadd.f32 %v284, %v500
        %502 = vmatprep.mubr.bf16.mxu0 0
        %503 = vmatmul.mubr.bf16.gmra.mrb[0].mxu0 %v240
        %v504 = vpop.f32.mrb[0].mxu0
        %v505 = vadd.f32 %v280, %v504
        %v506 = vpop.f32.mrb[0].mxu0
        %v507 = vadd.f32 %v284, %v506
        %v508 = vpop.f32.mrb[0].mxu0
        %v509 = vadd.f32 %v280, %v508
        %v510 = vpop.f32.mrb[0].mxu0
        %v511 = vadd.f32 %v284, %v510
        %512 = vmatprep.mubr.bf16.mxu0 0
        %513 = vmatmul.mubr.bf16.gmra.mrb[0].mxu0 %v241
        %v514 = vpop.f32.mrb[0].mxu0
        %v515 = vadd.f32 %v280, %v514
        %v516 = vpop.f32.mrb[0].mxu0
        %v517 = vadd.f32 %v284, %v516
        %v518 = vpop.f32.mrb[0].mxu0
        %v519 = vadd.f32 %v280, %v518
        %v520 = vpop.f32.mrb[0].mxu0
        %v521 = vadd.f32 %v284, %v520
        %522 = vmatprep.mubr.bf16.mxu0 0
        %523 = vmatmul.mubr.bf16.gmra.mrb[0].mxu0 %v242
        %v524 = vpop.f32.mrb[0].mxu0
        %v525 = vadd.f32 %v280, %v524
        %v526 = vpop.f32.mrb[0].mxu0
        %v527 = vadd.f32 %v284, %v526
        %v528 = vpop.f32.mrb[0].mxu0
        %v529 = vadd.f32 %v280, %v528
        %v530 = vpop.f32.mrb[0].mxu0
        %v531 = vadd.f32 %v284, %v530
        %532 = vdwg.mxu0
        %533 = vmatprep.subr.bf16.mxu0 0
        %534 = vmatpush1.bf16.msra.mxu0 %v374
        %535 = vmatprep.subr.bf16.mxu0 0
        %536 = vmatpush1.bf16.msra.mxu0 %v377
        %537 = vmatprep.subr.bf16.mxu0 0
        %538 = vmatpush1.bf16.msra.mxu0 %v380
        %539 = vmatprep.subr.bf16.mxu0 0
        %540 = vmatpush1.bf16.msra.mxu0 %v383
        %541 = vmatprep.subr.bf16.mxu0 0
        %542 = vmatpush1.bf16.msra.mxu0 %v386
        %543 = vmatprep.subr.bf16.mxu0 0
        %544 = vmatpush1.bf16.msra.mxu0 %v389
        %545 = vmatprep.subr.bf16.mxu0 0
        %546 = vmatpush1.bf16.msra.mxu0 %v392
        %547 = vmatprep.subr.bf16.mxu0 0
        %548 = vmatpush1.bf16.msra.mxu0 %v395
        %549 = vmatprep.subr.bf16.mxu0 0
        %550 = vmatpush1.bf16.msra.mxu0 0
        %551 = vmatprep.subr.bf16.mxu0 0
        %552 = vmatpush1.bf16.msra.mxu0 0
        %553 = vmatprep.subr.bf16.mxu0 0
        %554 = vmatpush1.bf16.msra.mxu0 0
        %555 = vmatprep.subr.bf16.mxu0 0
        %556 = vmatpush1.bf16.msra.mxu0 0
        %557 = vmatprep.subr.bf16.mxu0 0
        %558 = vmatpush1.bf16.msra.mxu0 0
        %559 = vmatprep.subr.bf16.mxu0 0
        %560 = vmatpush1.bf16.msra.mxu0 0
        %561 = vmatprep.subr.bf16.mxu0 0
        %562 = vmatpush1.bf16.msra.mxu0 0
        %563 = vmatprep.subr.bf16.mxu0 0
        %564 = vmatpush1.bf16.msra.mxu0 0
        %565 = vmatprep.mubr.bf16.mxu0 0
        %566 = vmatmul.mubr.bf16.gmra.mrb[0].mxu0 %v235
        %v567 = vpop.f32.mrb[0].mxu0
        %v568 = vadd.f32 %v288, %v567
        %v569 = vpop.f32.mrb[0].mxu0
        %v570 = vpop.f32.mrb[0].mxu0
        %v571 = vadd.f32 %v288, %v570
        %v572 = vpop.f32.mrb[0].mxu0
        %573 = vmatprep.mubr.bf16.mxu0 0
        %574 = vmatmul.mubr.bf16.gmra.mrb[0].mxu0 %v236
        %v575 = vpop.f32.mrb[0].mxu0
        %v576 = vadd.f32 %v288, %v575
        %v577 = vpop.f32.mrb[0].mxu0
        %v578 = vpop.f32.mrb[0].mxu0
        %v579 = vadd.f32 %v288, %v578
        %v580 = vpop.f32.mrb[0].mxu0
        %581 = vmatprep.mubr.bf16.mxu0 0
        %582 = vmatmul.mubr.bf16.gmra.mrb[0].mxu0 %v237
        %v583 = vpop.f32.mrb[0].mxu0
        %v584 = vadd.f32 %v288, %v583
        %v585 = vpop.f32.mrb[0].mxu0
        %v586 = vpop.f32.mrb[0].mxu0
        %v587 = vadd.f32 %v288, %v586
        %v588 = vpop.f32.mrb[0].mxu0
        %589 = vmatprep.mubr.bf16.mxu0 0
        %590 = vmatmul.mubr.bf16.gmra.mrb[0].mxu0 %v238
        %v591 = vpop.f32.mrb[0].mxu0
        %v592 = vadd.f32 %v288, %v591
        %v593 = vpop.f32.mrb[0].mxu0
        %v594 = vpop.f32.mrb[0].mxu0
        %v595 = vadd.f32 %v288, %v594
        %v596 = vpop.f32.mrb[0].mxu0
        %597 = vmatprep.mubr.bf16.mxu0 0
        %598 = vmatmul.mubr.bf16.gmra.mrb[0].mxu0 %v239
        %v599 = vpop.f32.mrb[0].mxu0
        %v600 = vadd.f32 %v288, %v599
        %v601 = vpop.f32.mrb[0].mxu0
        %v602 = vpop.f32.mrb[0].mxu0
        %v603 = vadd.f32 %v288, %v602
        %v604 = vpop.f32.mrb[0].mxu0
        %605 = vmatprep.mubr.bf16.mxu0 0
        %606 = vmatmul.mubr.bf16.gmra.mrb[0].mxu0 %v240
        %v607 = vpop.f32.mrb[0].mxu0
        %v608 = vadd.f32 %v288, %v607
        %v609 = vpop.f32.mrb[0].mxu0
        %v610 = vpop.f32.mrb[0].mxu0
        %v611 = vadd.f32 %v288, %v610
        %v612 = vpop.f32.mrb[0].mxu0
        %613 = vmatprep.mubr.bf16.mxu0 0
        %614 = vmatmul.mubr.bf16.gmra.mrb[0].mxu0 %v241
        %v615 = vpop.f32.mrb[0].mxu0
        %v616 = vadd.f32 %v288, %v615
        %v617 = vpop.f32.mrb[0].mxu0
        %v618 = vpop.f32.mrb[0].mxu0
        %v619 = vadd.f32 %v288, %v618
        %v620 = vpop.f32.mrb[0].mxu0
        %621 = vmatprep.mubr.bf16.mxu0 0
        %622 = vmatmul.mubr.bf16.gmra.mrb[0].mxu0 %v242
        %v623 = vpop.f32.mrb[0].mxu0
        %v624 = vadd.f32 %v288, %v623
        %v625 = vpop.f32.mrb[0].mxu0
        %v626 = vpop.f32.mrb[0].mxu0
        %v627 = vadd.f32 %v288, %v626
        %v628 = vpop.f32.mrb[0].mxu0
        %629 = vdwg.mxu0
        %v630 = vtanh.pop %v455
        %v631 = vtanh.pop %v457
        %v632 = vtanh.pop %v568
        %v633 = vtanh.pop %v459
        %v634 = vtanh.pop %v461
        %v635 = vtanh.pop %v571
        %v636 = vtanh.pop %v465
        %v637 = vtanh.pop %v467
        %v638 = vtanh.pop %v576
        %v639 = vtanh.pop %v469
        %v640 = vtanh.pop %v471
        %v641 = vtanh.pop %v579
        %v642 = vtanh.pop %v475
        %v643 = vtanh.pop %v477
        %v644 = vtanh.pop %v584
        %v645 = vtanh.pop %v479
        %v646 = vtanh.pop %v481
        %v647 = vtanh.pop %v587
        %v648 = vtanh.pop %v485
        %v649 = vtanh.pop %v487
        %v650 = vtanh.pop %v592
        %v651 = vtanh.pop %v489
        %v652 = vtanh.pop %v491
        %v653 = vtanh.pop %v595
        %v654 = vtanh.pop %v495
        %v655 = vtanh.pop %v497
        %v656 = vtanh.pop %v600
        %v657 = vtanh.pop %v499
        %v658 = vtanh.pop %v501
        %v659 = vtanh.pop %v603
        %v660 = vtanh.pop %v505
        %v661 = vtanh.pop %v507
        %v662 = vtanh.pop %v608
        %v663 = vtanh.pop %v509
        %v664 = vtanh.pop %v511
        %v665 = vtanh.pop %v611
        %v666 = vtanh.pop %v515
        %v667 = vtanh.pop %v517
        %v668 = vtanh.pop %v616
        %v669 = vtanh.pop %v519
        %v670 = vtanh.pop %v521
        %v671 = vtanh.pop %v619
        %v672 = vtanh.pop %v525
        %v673 = vtanh.pop %v527
        %v674 = vtanh.pop %v624
        %v675 = vtanh.pop %v529
        %v676 = vtanh.pop %v531
        %v677 = vtanh.pop %v627
        %v678 = vpack.c.bf16 %v633, %v630
        %v679 = vpack.c.bf16 %v634, %v631
        %v680 = vpack.c.bf16 %v635, %v632
        %v681 = vpack.c.bf16 %v639, %v636
        %v682 = vpack.c.bf16 %v640, %v637
        %v683 = vpack.c.bf16 %v641, %v638
        %v684 = vpack.c.bf16 %v645, %v642
        %v685 = vpack.c.bf16 %v646, %v643
        %v686 = vpack.c.bf16 %v647, %v644
        %v687 = vpack.c.bf16 %v651, %v648
        %v688 = vpack.c.bf16 %v652, %v649
        %v689 = vpack.c.bf16 %v653, %v650
        %v690 = vpack.c.bf16 %v657, %v654
        %v691 = vpack.c.bf16 %v658, %v655
        %v692 = vpack.c.bf16 %v659, %v656
        %v693 = vpack.c.bf16 %v663, %v660
        %v694 = vpack.c.bf16 %v664, %v661
        %v695 = vpack.c.bf16 %v665, %v662
        %v696 = vpack.c.bf16 %v669, %v666
        %v697 = vpack.c.bf16 %v670, %v667
        %v698 = vpack.c.bf16 %v671, %v668
        %v699 = vpack.c.bf16 %v675, %v672
        %v700 = vpack.c.bf16 %v676, %v673
        %v701 = vpack.c.bf16 %v677, %v674
        %v702 = vpack.c.bf16 %v220, %v219
        %v703 = vpack.c.bf16 %v222, %v221
        %v704 = vpack.c.bf16 %v224, %v223
        %v705 = vpack.c.bf16 %v226, %v225
        %v706 = vpack.c.bf16 %v228, %v227
        %v707 = vpack.c.bf16 %v230, %v229
        %v708 = vpack.c.bf16 %v232, %v231
        %v709 = vpack.c.bf16 %v234, %v233
        %710 = vmatprep.subr.bf16.mxu0 %v373
        %711 = vmatpush1.bf16.msra.mxu0 %v372
        %712 = vmatprep.subr.bf16.mxu0 %v376
        %713 = vmatpush1.bf16.msra.mxu0 %v375
        %714 = vmatprep.subr.bf16.mxu0 %v379
        %715 = vmatpush1.bf16.msra.mxu0 %v378
        %716 = vmatprep.subr.bf16.mxu0 %v382
        %717 = vmatpush1.bf16.msra.mxu0 %v381
        %718 = vmatprep.subr.bf16.mxu0 %v385
        %719 = vmatpush1.bf16.msra.mxu0 %v384
        %720 = vmatprep.subr.bf16.mxu0 %v388
        %721 = vmatpush1.bf16.msra.mxu0 %v387
        %722 = vmatprep.subr.bf16.mxu0 %v391
        %723 = vmatpush1.bf16.msra.mxu0 %v390
        %724 = vmatprep.subr.bf16.mxu0 %v394
        %725 = vmatpush1.bf16.msra.mxu0 %v393
        %726 = vmatprep.subr.bf16.mxu0 0
        %727 = vmatpush1.bf16.msra.mxu0 0
        %728 = vmatprep.subr.bf16.mxu0 0
        %729 = vmatpush1.bf16.msra.mxu0 0
        %730 = vmatprep.subr.bf16.mxu0 0
        %731 = vmatpush1.bf16.msra.mxu0 0
        %732 = vmatprep.subr.bf16.mxu0 0
        %733 = vmatpush1.bf16.msra.mxu0 0
        %734 = vmatprep.subr.bf16.mxu0 0
        %735 = vmatpush1.bf16.msra.mxu0 0
        %736 = vmatprep.subr.bf16.mxu0 0
        %737 = vmatpush1.bf16.msra.mxu0 0
        %738 = vmatprep.subr.bf16.mxu0 0
        %739 = vmatpush1.bf16.msra.mxu0 0
        %740 = vmatprep.subr.bf16.mxu0 0
        %741 = vmatpush1.bf16.msra.mxu0 0
        %742 = vmatprep.mubr.bf16.mxu0 0
        %743 = vmatmul.mubr.bf16.gmra.mrb[0].mxu0 %v702
        %v744 = vpop.f32.mrb[0].mxu0
        %v745 = vadd.f32 %v280, %v744
        %v746 = vpop.f32.mrb[0].mxu0
        %v747 = vadd.f32 %v284, %v746
        %v748 = vpop.f32.mrb[0].mxu0
        %v749 = vadd.f32 %v280, %v748
        %v750 = vpop.f32.mrb[0].mxu0
        %v751 = vadd.f32 %v284, %v750
        %752 = vmatprep.mubr.bf16.mxu0 0
        %753 = vmatmul.mubr.bf16.gmra.mrb[0].mxu0 %v703
        %v754 = vpop.f32.mrb[0].mxu0
        %v755 = vadd.f32 %v280, %v754
        %v756 = vpop.f32.mrb[0].mxu0
        %v757 = vadd.f32 %v284, %v756
        %v758 = vpop.f32.mrb[0].mxu0
        %v759 = vadd.f32 %v280, %v758
        %v760 = vpop.f32.mrb[0].mxu0
        %v761 = vadd.f32 %v284, %v760
        %762 = vmatprep.mubr.bf16.mxu0 0
        %763 = vmatmul.mubr.bf16.gmra.mrb[0].mxu0 %v704
        %v764 = vpop.f32.mrb[0].mxu0
        %v765 = vadd.f32 %v280, %v764
        %v766 = vpop.f32.mrb[0].mxu0
        %v767 = vadd.f32 %v284, %v766
        %v768 = vpop.f32.mrb[0].mxu0
        %v769 = vadd.f32 %v280, %v768
        %v770 = vpop.f32.mrb[0].mxu0
        %v771 = vadd.f32 %v284, %v770
        %772 = vmatprep.mubr.bf16.mxu0 0
        %773 = vmatmul.mubr.bf16.gmra.mrb[0].mxu0 %v705
        %v774 = vpop.f32.mrb[0].mxu0
        %v775 = vadd.f32 %v280, %v774
        %v776 = vpop.f32.mrb[0].mxu0
        %v777 = vadd.f32 %v284, %v776
        %v778 = vpop.f32.mrb[0].mxu0
        %v779 = vadd.f32 %v280, %v778
        %v780 = vpop.f32.mrb[0].mxu0
        %v781 = vadd.f32 %v284, %v780
        %782 = vmatprep.mubr.bf16.mxu0 0
        %783 = vmatmul.mubr.bf16.gmra.mrb[0].mxu0 %v706
        %v784 = vpop.f32.mrb[0].mxu0
        %v785 = vadd.f32 %v280, %v784
        %v786 = vpop.f32.mrb[0].mxu0
        %v787 = vadd.f32 %v284, %v786
        %v788 = vpop.f32.mrb[0].mxu0
        %v789 = vadd.f32 %v280, %v788
        %v790 = vpop.f32.mrb[0].mxu0
        %v791 = vadd.f32 %v284, %v790
        %792 = vmatprep.mubr.bf16.mxu0 0
        %793 = vmatmul.mubr.bf16.gmra.mrb[0].mxu0 %v707
        %v794 = vpop.f32.mrb[0].mxu0
        %v795 = vadd.f32 %v280, %v794
        %v796 = vpop.f32.mrb[0].mxu0
        %v797 = vadd.f32 %v284, %v796
        %v798 = vpop.f32.mrb[0].mxu0
        %v799 = vadd.f32 %v280, %v798
        %v800 = vpop.f32.mrb[0].mxu0
        %v801 = vadd.f32 %v284, %v800
        %802 = vmatprep.mubr.bf16.mxu0 0
        %803 = vmatmul.mubr.bf16.gmra.mrb[0].mxu0 %v708
        %v804 = vpop.f32.mrb[0].mxu0
        %v805 = vadd.f32 %v280, %v804
        %v806 = vpop.f32.mrb[0].mxu0
        %v807 = vadd.f32 %v284, %v806
        %v808 = vpop.f32.mrb[0].mxu0
        %v809 = vadd.f32 %v280, %v808
        %v810 = vpop.f32.mrb[0].mxu0
        %v811 = vadd.f32 %v284, %v810
        %812 = vmatprep.mubr.bf16.mxu0 0
        %813 = vmatmul.mubr.bf16.gmra.mrb[0].mxu0 %v709
        %v814 = vpop.f32.mrb[0].mxu0
        %v815 = vadd.f32 %v280, %v814
        %v816 = vpop.f32.mrb[0].mxu0
        %v817 = vadd.f32 %v284, %v816
        %v818 = vpop.f32.mrb[0].mxu0
        %v819 = vadd.f32 %v280, %v818
        %v820 = vpop.f32.mrb[0].mxu0
        %v821 = vadd.f32 %v284, %v820
        %822 = vdwg.mxu0
        %823 = vmatprep.subr.bf16.mxu0 0
        %824 = vmatpush1.bf16.msra.mxu0 %v374
        %825 = vmatprep.subr.bf16.mxu0 0
        %826 = vmatpush1.bf16.msra.mxu0 %v377
        %827 = vmatprep.subr.bf16.mxu0 0
        %828 = vmatpush1.bf16.msra.mxu0 %v380
        %829 = vmatprep.subr.bf16.mxu0 0
        %830 = vmatpush1.bf16.msra.mxu0 %v383
        %831 = vmatprep.subr.bf16.mxu0 0
        %832 = vmatpush1.bf16.msra.mxu0 %v386
        %833 = vmatprep.subr.bf16.mxu0 0
        %834 = vmatpush1.bf16.msra.mxu0 %v389
        %835 = vmatprep.subr.bf16.mxu0 0
        %836 = vmatpush1.bf16.msra.mxu0 %v392
        %837 = vmatprep.subr.bf16.mxu0 0
        %838 = vmatpush1.bf16.msra.mxu0 %v395
        %839 = vmatprep.subr.bf16.mxu0 0
        %840 = vmatpush1.bf16.msra.mxu0 0
        %841 = vmatprep.subr.bf16.mxu0 0
        %842 = vmatpush1.bf16.msra.mxu0 0
        %843 = vmatprep.subr.bf16.mxu0 0
        %844 = vmatpush1.bf16.msra.mxu0 0
        %845 = vmatprep.subr.bf16.mxu0 0
        %846 = vmatpush1.bf16.msra.mxu0 0
        %847 = vmatprep.subr.bf16.mxu0 0
        %848 = vmatpush1.bf16.msra.mxu0 0
        %849 = vmatprep.subr.bf16.mxu0 0
        %850 = vmatpush1.bf16.msra.mxu0 0
        %851 = vmatprep.subr.bf16.mxu0 0
        %852 = vmatpush1.bf16.msra.mxu0 0
        %853 = vmatprep.subr.bf16.mxu0 0
        %854 = vmatpush1.bf16.msra.mxu0 0
        %855 = vmatprep.mubr.bf16.mxu0 0
        %856 = vmatmul.mubr.bf16.gmra.mrb[0].mxu0 %v702
        %v857 = vpop.f32.mrb[0].mxu0
        %v858 = vadd.f32 %v288, %v857
        %v859 = vpop.f32.mrb[0].mxu0
        %v860 = vpop.f32.mrb[0].mxu0
        %v861 = vadd.f32 %v288, %v860
        %v862 = vpop.f32.mrb[0].mxu0
        %863 = vmatprep.mubr.bf16.mxu0 0
        %864 = vmatmul.mubr.bf16.gmra.mrb[0].mxu0 %v703
        %v865 = vpop.f32.mrb[0].mxu0
        %v866 = vadd.f32 %v288, %v865
        %v867 = vpop.f32.mrb[0].mxu0
        %v868 = vpop.f32.mrb[0].mxu0
        %v869 = vadd.f32 %v288, %v868
        %v870 = vpop.f32.mrb[0].mxu0
        %871 = vmatprep.mubr.bf16.mxu0 0
        %872 = vmatmul.mubr.bf16.gmra.mrb[0].mxu0 %v704
        %v873 = vpop.f32.mrb[0].mxu0
        %v874 = vadd.f32 %v288, %v873
        %v875 = vpop.f32.mrb[0].mxu0
        %v876 = vpop.f32.mrb[0].mxu0
        %v877 = vadd.f32 %v288, %v876
        %v878 = vpop.f32.mrb[0].mxu0
        %879 = vmatprep.mubr.bf16.mxu0 0
        %880 = vmatmul.mubr.bf16.gmra.mrb[0].mxu0 %v705
        %v881 = vpop.f32.mrb[0].mxu0
        %v882 = vadd.f32 %v288, %v881
        %v883 = vpop.f32.mrb[0].mxu0
        %v884 = vpop.f32.mrb[0].mxu0
        %v885 = vadd.f32 %v288, %v884
        %v886 = vpop.f32.mrb[0].mxu0
        %887 = vmatprep.mubr.bf16.mxu0 0
        %888 = vmatmul.mubr.bf16.gmra.mrb[0].mxu0 %v706
        %v889 = vpop.f32.mrb[0].mxu0
        %v890 = vadd.f32 %v288, %v889
        %v891 = vpop.f32.mrb[0].mxu0
        %v892 = vpop.f32.mrb[0].mxu0
        %v893 = vadd.f32 %v288, %v892
        %v894 = vpop.f32.mrb[0].mxu0
        %895 = vmatprep.mubr.bf16.mxu0 0
        %896 = vmatmul.mubr.bf16.gmra.mrb[0].mxu0 %v707
        %v897 = vpop.f32.mrb[0].mxu0
        %v898 = vadd.f32 %v288, %v897
        %v899 = vpop.f32.mrb[0].mxu0
        %v900 = vpop.f32.mrb[0].mxu0
        %v901 = vadd.f32 %v288, %v900
        %v902 = vpop.f32.mrb[0].mxu0
        %903 = vmatprep.mubr.bf16.mxu0 0
        %904 = vmatmul.mubr.bf16.gmra.mrb[0].mxu0 %v708
        %v905 = vpop.f32.mrb[0].mxu0
        %v906 = vadd.f32 %v288, %v905
        %v907 = vpop.f32.mrb[0].mxu0
        %v908 = vpop.f32.mrb[0].mxu0
        %v909 = vadd.f32 %v288, %v908
        %v910 = vpop.f32.mrb[0].mxu0
        %911 = vmatprep.mubr.bf16.mxu0 0
        %912 = vmatmul.mubr.bf16.gmra.mrb[0].mxu0 %v709
        %v913 = vpop.f32.mrb[0].mxu0
        %v914 = vadd.f32 %v288, %v913
        %v915 = vpop.f32.mrb[0].mxu0
        %v916 = vpop.f32.mrb[0].mxu0
        %v917 = vadd.f32 %v288, %v916
        %v918 = vpop.f32.mrb[0].mxu0
        %919 = vdwg.mxu0
        %v920 = vtanh.pop %v745
        %v921 = vtanh.pop %v747
        %v922 = vtanh.pop %v858
        %v923 = vtanh.pop %v749
        %v924 = vtanh.pop %v751
        %v925 = vtanh.pop %v861
        %v926 = vtanh.pop %v755
        %v927 = vtanh.pop %v757
        %v928 = vtanh.pop %v866
        %v929 = vtanh.pop %v759
        %v930 = vtanh.pop %v761
        %v931 = vtanh.pop %v869
        %v932 = vtanh.pop %v765
        %v933 = vtanh.pop %v767
        %v934 = vtanh.pop %v874
        %v935 = vtanh.pop %v769
        %v936 = vtanh.pop %v771
        %v937 = vtanh.pop %v877
        %v938 = vtanh.pop %v775
        %v939 = vtanh.pop %v777
        %v940 = vtanh.pop %v882
        %v941 = vtanh.pop %v779
        %v942 = vtanh.pop %v781
        %v943 = vtanh.pop %v885
        %v944 = vtanh.pop %v785
        %v945 = vtanh.pop %v787
        %v946 = vtanh.pop %v890
        %v947 = vtanh.pop %v789
        %v948 = vtanh.pop %v791
        %v949 = vtanh.pop %v893
        %v950 = vtanh.pop %v795
        %v951 = vtanh.pop %v797
        %v952 = vtanh.pop %v898
        %v953 = vtanh.pop %v799
        %v954 = vtanh.pop %v801
        %v955 = vtanh.pop %v901
        %v956 = vtanh.pop %v805
        %v957 = vtanh.pop %v807
        %v958 = vtanh.pop %v906
        %v959 = vtanh.pop %v809
        %v960 = vtanh.pop %v811
        %v961 = vtanh.pop %v909
        %v962 = vtanh.pop %v815
        %v963 = vtanh.pop %v817
        %v964 = vtanh.pop %v914
        %v965 = vtanh.pop %v819
        %v966 = vtanh.pop %v821
        %v967 = vtanh.pop %v917
        %v968 = vpack.c.bf16 %v923, %v920
        %v969 = vpack.c.bf16 %v924, %v921
        %v970 = vpack.c.bf16 %v925, %v922
        %v971 = vpack.c.bf16 %v929, %v926
        %v972 = vpack.c.bf16 %v930, %v927
        %v973 = vpack.c.bf16 %v931, %v928
        %v974 = vpack.c.bf16 %v935, %v932
        %v975 = vpack.c.bf16 %v936, %v933
        %v976 = vpack.c.bf16 %v937, %v934
        %v977 = vpack.c.bf16 %v941, %v938
        %v978 = vpack.c.bf16 %v942, %v939
        %v979 = vpack.c.bf16 %v943, %v940
        %v980 = vpack.c.bf16 %v947, %v944
        %v981 = vpack.c.bf16 %v948, %v945
        %v982 = vpack.c.bf16 %v949, %v946
        %v983 = vpack.c.bf16 %v953, %v950
        %v984 = vpack.c.bf16 %v954, %v951
        %v985 = vpack.c.bf16 %v955, %v952
        %v986 = vpack.c.bf16 %v959, %v956
        %v987 = vpack.c.bf16 %v960, %v957
        %v988 = vpack.c.bf16 %v961, %v958
        %v989 = vpack.c.bf16 %v965, %v962
        %v990 = vpack.c.bf16 %v966, %v963
        %v991 = vpack.c.bf16 %v967, %v964
        %s992 = scalar_lea.vmem [#allocation2], 576
        %v993 = vld [vmem:[%s992] sm:$0xff]
        %v994 = vld [vmem:[%s992 + $0x8] sm:$0xf]
        %v995 = vld [vmem:[%s992 + $0xc] sm:$0xff]
        %v996 = vld [vmem:[%s992 + $0x14] sm:$0xf]
        %v997 = vld [vmem:[%s992 + $0x18] sm:$0xff]
        %v998 = vld [vmem:[%s992 + $0x20] sm:$0xf]
        %v999 = vld [vmem:[%s992 + $0x24] sm:$0xff]
        %v1000 = vld [vmem:[%s992 + $0x2c] sm:$0xf]
        %v1001 = vld [vmem:[%s992 + $0x30] sm:$0xff]
        %v1002 = vld [vmem:[%s992 + $0x38] sm:$0xf]
        %v1003 = vld [vmem:[%s992 + $0x3c] sm:$0xff]
        %v1004 = vld [vmem:[%s992 + $0x44] sm:$0xf]
        %v1005 = vld [vmem:[%s992 + $0x48] sm:$0xff]
        %v1006 = vld [vmem:[%s992 + $0x50] sm:$0xf]
        %v1007 = vld [vmem:[%s992 + $0x54] sm:$0xff]
        %v1008 = vld [vmem:[%s992 + $0x5c] sm:$0xf]
        %v1009 = vld [vmem:[%s992 + $0x60] sm:$0xff]
        %v1010 = vld [vmem:[%s992 + $0x68] sm:$0xf]
        %v1011 = vld [vmem:[%s992 + $0x6c] sm:$0xff]
        %v1012 = vld [vmem:[%s992 + $0x74] sm:$0xf]
        %v1013 = vld [vmem:[%s992 + $0x78] sm:$0xff]
        %v1014 = vld [vmem:[%s992 + $0x80] sm:$0xf]
        %v1015 = vld [vmem:[%s992 + $0x84] sm:$0xff]
        %v1016 = vld [vmem:[%s992 + $0x8c] sm:$0xf]
        %v1017 = vld [vmem:[%s992 + $0x90] sm:$0xff]
        %v1018 = vld [vmem:[%s992 + $0x98] sm:$0xf]
        %v1019 = vld [vmem:[%s992 + $0x9c] sm:$0xff]
        %v1020 = vld [vmem:[%s992 + $0xa4] sm:$0xf]
        %v1021 = vld [vmem:[%s992 + $0xa8] sm:$0xff]
        %v1022 = vld [vmem:[%s992 + $0xb0] sm:$0xf]
        %v1023 = vld [vmem:[%s992 + $0xb4] sm:$0xff]
        %v1024 = vld [vmem:[%s992 + $0xbc] sm:$0xf]
        %v1025 = vld [vmem:[%s992 + $0xc0] sm:$0xff]
        %v1026 = vld [vmem:[%s992 + $0xc8] sm:$0xf]
        %v1027 = vld [vmem:[%s992 + $0xcc] sm:$0xff]
        %v1028 = vld [vmem:[%s992 + $0xd4] sm:$0xf]
        %v1029 = vld [vmem:[%s992 + $0xd8] sm:$0xff]
        %v1030 = vld [vmem:[%s992 + $0xe0] sm:$0xf]
        %v1031 = vld [vmem:[%s992 + $0xe4] sm:$0xff]
        %v1032 = vld [vmem:[%s992 + $0xec] sm:$0xf]
        %v1033 = vld [vmem:[%s992 + $0xf0] sm:$0xff]
        %v1034 = vld [vmem:[%s992 + $0xf8] sm:$0xf]
        %v1035 = vld [vmem:[%s992 + $0xfc] sm:$0xff]
        %v1036 = vld [vmem:[%s992 + $0x104] sm:$0xf]
        %v1037 = vld [vmem:[%s992 + $0x108] sm:$0xff]
        %v1038 = vld [vmem:[%s992 + $0x110] sm:$0xf]
        %v1039 = vld [vmem:[%s992 + $0x114] sm:$0xff]
        %v1040 = vld [vmem:[%s992 + $0x11c] sm:$0xf]
        %v1041 = vld [vmem:[%s992 + $0x120] sm:$0xff]
        %v1042 = vld [vmem:[%s992 + $0x128] sm:$0xf]
        %v1043 = vld [vmem:[%s992 + $0x12c] sm:$0xff]
        %v1044 = vld [vmem:[%s992 + $0x134] sm:$0xf]
        %v1045 = vld [vmem:[%s992 + $0x138] sm:$0xff]
        %v1046 = vld [vmem:[%s992 + $0x140] sm:$0xf]
        %v1047 = vld [vmem:[%s992 + $0x144] sm:$0xff]
        %v1048 = vld [vmem:[%s992 + $0x14c] sm:$0xf]
        %v1049 = vld [vmem:[%s992 + $0x150] sm:$0xff]
        %v1050 = vld [vmem:[%s992 + $0x158] sm:$0xf]
        %v1051 = vld [vmem:[%s992 + $0x15c] sm:$0xff]
        %v1052 = vld [vmem:[%s992 + $0x164] sm:$0xf]
        %v1053 = vld [vmem:[%s992 + $0x168] sm:$0xff]
        %v1054 = vld [vmem:[%s992 + $0x170] sm:$0xf]
        %v1055 = vld [vmem:[%s992 + $0x174] sm:$0xff]
        %v1056 = vld [vmem:[%s992 + $0x17c] sm:$0xf]
        %v1057 = vld [vmem:[%s992 + $0x180] sm:$0xff]
        %v1058 = vld [vmem:[%s992 + $0x188] sm:$0xf]
        %v1059 = vld [vmem:[%s992 + $0x18c] sm:$0xff]
        %v1060 = vld [vmem:[%s992 + $0x194] sm:$0xf]
        %v1061 = vld [vmem:[%s992 + $0x198] sm:$0xff]
        %v1062 = vld [vmem:[%s992 + $0x1a0] sm:$0xf]
        %v1063 = vld [vmem:[%s992 + $0x1a4] sm:$0xff]
        %v1064 = vld [vmem:[%s992 + $0x1ac] sm:$0xf]
        %v1065 = vld [vmem:[%s992 + $0x1b0] sm:$0xff]
        %v1066 = vld [vmem:[%s992 + $0x1b8] sm:$0xf]
        %v1067 = vld [vmem:[%s992 + $0x1bc] sm:$0xff]
        %v1068 = vld [vmem:[%s992 + $0x1c4] sm:$0xf]
        %v1069 = vld [vmem:[%s992 + $0x1c8] sm:$0xff]
        %v1070 = vld [vmem:[%s992 + $0x1d0] sm:$0xf]
        %v1071 = vld [vmem:[%s992 + $0x1d4] sm:$0xff]
        %v1072 = vld [vmem:[%s992 + $0x1dc] sm:$0xf]
        %v1073 = vld [vmem:[%s992 + $0x1e0] sm:$0xff]
        %v1074 = vld [vmem:[%s992 + $0x1e8] sm:$0xf]
        %v1075 = vld [vmem:[%s992 + $0x1ec] sm:$0xff]
        %v1076 = vld [vmem:[%s992 + $0x1f4] sm:$0xf]
        %v1077 = vld [vmem:[%s992 + $0x1f8] sm:$0xff]
        %v1078 = vld [vmem:[%s992 + $0x200] sm:$0xf]
        %v1079 = vld [vmem:[%s992 + $0x204] sm:$0xff]
        %v1080 = vld [vmem:[%s992 + $0x20c] sm:$0xf]
        %v1081 = vld [vmem:[%s992 + $0x210] sm:$0xff]
        %v1082 = vld [vmem:[%s992 + $0x218] sm:$0xf]
        %v1083 = vld [vmem:[%s992 + $0x21c] sm:$0xff]
        %v1084 = vld [vmem:[%s992 + $0x224] sm:$0xf]
        %v1085 = vld [vmem:[%s992 + $0x228] sm:$0xff]
        %v1086 = vld [vmem:[%s992 + $0x230] sm:$0xf]
        %v1087 = vld [vmem:[%s992 + $0x234] sm:$0xff]
        %v1088 = vld [vmem:[%s992 + $0x23c] sm:$0xf]
        %s1089 = scalar_lea.vmem [#allocation4], 1
        %v1090 = vld [vmem:[%s1089] ss:$8 sm:$0x7]
        %v1092 = vlaneseq
        %v1093 = vshrl.u32 %v1092, 7
        %v1094 = vsub.s32 0, %v1093
        %v1095 = vrot.slane %v1090, %v1094
        %v1096 = vlaneseq
        %v1097 = vshrl.u32 %v1096, 7
        %v1098 = vsub.s32 1, %v1097
        %v1099 = vrot.slane %v1090, %v1098
        %v1100 = vlaneseq
        %v1101 = vshrl.u32 %v1100, 7
        %v1102 = vsub.s32 2, %v1101
        %v1103 = vrot.slane %v1090, %v1102
        %v1203 = vunpack.c.l.b16 %v993
        %v1204 = vunpack.c.h.b16 %v993
        %v1205 = vunpack.c.l.b16 %v994
        %v1206 = vunpack.c.l.b16 %v995
        %v1207 = vunpack.c.h.b16 %v995
        %v1208 = vunpack.c.l.b16 %v996
        %v1209 = vunpack.c.l.b16 %v997
        %v1210 = vunpack.c.h.b16 %v997
        %v1211 = vunpack.c.l.b16 %v998
        %v1212 = vunpack.c.l.b16 %v999
        %v1213 = vunpack.c.h.b16 %v999
        %v1214 = vunpack.c.l.b16 %v1000
        %v1215 = vunpack.c.l.b16 %v1001
        %v1216 = vunpack.c.h.b16 %v1001
        %v1217 = vunpack.c.l.b16 %v1002
        %v1218 = vunpack.c.l.b16 %v1003
        %v1219 = vunpack.c.h.b16 %v1003
        %v1220 = vunpack.c.l.b16 %v1004
        %v1221 = vunpack.c.l.b16 %v1005
        %v1222 = vunpack.c.h.b16 %v1005
        %v1223 = vunpack.c.l.b16 %v1006
        %v1224 = vunpack.c.l.b16 %v1007
        %v1225 = vunpack.c.h.b16 %v1007
        %v1226 = vunpack.c.l.b16 %v1008
        %v1227 = vunpack.c.l.b16 %v1009
        %v1228 = vunpack.c.h.b16 %v1009
        %v1229 = vunpack.c.l.b16 %v1010
        %v1230 = vunpack.c.l.b16 %v1011
        %v1231 = vunpack.c.h.b16 %v1011
        %v1232 = vunpack.c.l.b16 %v1012
        %v1233 = vunpack.c.l.b16 %v1013
        %v1234 = vunpack.c.h.b16 %v1013
        %v1235 = vunpack.c.l.b16 %v1014
        %v1236 = vunpack.c.l.b16 %v1015
        %v1237 = vunpack.c.h.b16 %v1015
        %v1238 = vunpack.c.l.b16 %v1016
        %v1239 = vunpack.c.l.b16 %v1017
        %v1240 = vunpack.c.h.b16 %v1017
        %v1241 = vunpack.c.l.b16 %v1018
        %v1242 = vunpack.c.l.b16 %v1019
        %v1243 = vunpack.c.h.b16 %v1019
        %v1244 = vunpack.c.l.b16 %v1020
        %v1245 = vunpack.c.l.b16 %v1021
        %v1246 = vunpack.c.h.b16 %v1021
        %v1247 = vunpack.c.l.b16 %v1022
        %v1248 = vunpack.c.l.b16 %v1023
        %v1249 = vunpack.c.h.b16 %v1023
        %v1250 = vunpack.c.l.b16 %v1024
        %v1251 = vunpack.c.l.b16 %v1025
        %v1252 = vunpack.c.h.b16 %v1025
        %v1253 = vunpack.c.l.b16 %v1026
        %v1254 = vunpack.c.l.b16 %v1027
        %v1255 = vunpack.c.h.b16 %v1027
        %v1256 = vunpack.c.l.b16 %v1028
        %v1257 = vunpack.c.l.b16 %v1029
        %v1258 = vunpack.c.h.b16 %v1029
        %v1259 = vunpack.c.l.b16 %v1030
        %v1260 = vunpack.c.l.b16 %v1031
        %v1261 = vunpack.c.h.b16 %v1031
        %v1262 = vunpack.c.l.b16 %v1032
        %v1263 = vunpack.c.l.b16 %v1033
        %v1264 = vunpack.c.h.b16 %v1033
        %v1265 = vunpack.c.l.b16 %v1034
        %v1266 = vunpack.c.l.b16 %v1035
        %v1267 = vunpack.c.h.b16 %v1035
        %v1268 = vunpack.c.l.b16 %v1036
        %v1269 = vunpack.c.l.b16 %v1037
        %v1270 = vunpack.c.h.b16 %v1037
        %v1271 = vunpack.c.l.b16 %v1038
        %v1272 = vunpack.c.l.b16 %v1039
        %v1273 = vunpack.c.h.b16 %v1039
        %v1274 = vunpack.c.l.b16 %v1040
        %v1275 = vunpack.c.l.b16 %v1041
        %v1276 = vunpack.c.h.b16 %v1041
        %v1277 = vunpack.c.l.b16 %v1042
        %v1278 = vunpack.c.l.b16 %v1043
        %v1279 = vunpack.c.h.b16 %v1043
        %v1280 = vunpack.c.l.b16 %v1044
        %v1281 = vunpack.c.l.b16 %v1045
        %v1282 = vunpack.c.h.b16 %v1045
        %v1283 = vunpack.c.l.b16 %v1046
        %v1284 = vunpack.c.l.b16 %v1047
        %v1285 = vunpack.c.h.b16 %v1047
        %v1286 = vunpack.c.l.b16 %v1048
        %v1287 = vunpack.c.l.b16 %v1049
        %v1288 = vunpack.c.h.b16 %v1049
        %v1289 = vunpack.c.l.b16 %v1050
        %v1290 = vunpack.c.l.b16 %v1051
        %v1291 = vunpack.c.h.b16 %v1051
        %v1292 = vunpack.c.l.b16 %v1052
        %v1293 = vunpack.c.l.b16 %v1053
        %v1294 = vunpack.c.h.b16 %v1053
        %v1295 = vunpack.c.l.b16 %v1054
        %v1296 = vunpack.c.l.b16 %v1055
        %v1297 = vunpack.c.h.b16 %v1055
        %v1298 = vunpack.c.l.b16 %v1056
        %v1299 = vunpack.c.l.b16 %v1057
        %v1300 = vunpack.c.h.b16 %v1057
        %v1301 = vunpack.c.l.b16 %v1058
        %v1302 = vunpack.c.l.b16 %v1059
        %v1303 = vunpack.c.h.b16 %v1059
        %v1304 = vunpack.c.l.b16 %v1060
        %v1305 = vunpack.c.l.b16 %v1061
        %v1306 = vunpack.c.h.b16 %v1061
        %v1307 = vunpack.c.l.b16 %v1062
        %v1308 = vunpack.c.l.b16 %v1063
        %v1309 = vunpack.c.h.b16 %v1063
        %v1310 = vunpack.c.l.b16 %v1064
        %v1311 = vunpack.c.l.b16 %v1065
        %v1312 = vunpack.c.h.b16 %v1065
        %v1313 = vunpack.c.l.b16 %v1066
        %v1314 = vunpack.c.l.b16 %v1067
        %v1315 = vunpack.c.h.b16 %v1067
        %v1316 = vunpack.c.l.b16 %v1068
        %v1317 = vunpack.c.l.b16 %v1069
        %v1318 = vunpack.c.h.b16 %v1069
        %v1319 = vunpack.c.l.b16 %v1070
        %v1320 = vunpack.c.l.b16 %v1071
        %v1321 = vunpack.c.h.b16 %v1071
        %v1322 = vunpack.c.l.b16 %v1072
        %v1323 = vunpack.c.l.b16 %v1073
        %v1324 = vunpack.c.h.b16 %v1073
        %v1325 = vunpack.c.l.b16 %v1074
        %v1326 = vunpack.c.l.b16 %v1075
        %v1327 = vunpack.c.h.b16 %v1075
        %v1328 = vunpack.c.l.b16 %v1076
        %v1329 = vunpack.c.l.b16 %v1077
        %v1330 = vunpack.c.h.b16 %v1077
        %v1331 = vunpack.c.l.b16 %v1078
        %v1332 = vunpack.c.l.b16 %v1079
        %v1333 = vunpack.c.h.b16 %v1079
        %v1334 = vunpack.c.l.b16 %v1080
        %v1335 = vunpack.c.l.b16 %v1081
        %v1336 = vunpack.c.h.b16 %v1081
        %v1337 = vunpack.c.l.b16 %v1082
        %v1338 = vunpack.c.l.b16 %v1083
        %v1339 = vunpack.c.h.b16 %v1083
        %v1340 = vunpack.c.l.b16 %v1084
        %v1341 = vunpack.c.l.b16 %v1085
        %v1342 = vunpack.c.h.b16 %v1085
        %v1343 = vunpack.c.l.b16 %v1086
        %v1344 = vunpack.c.l.b16 %v1087
        %v1345 = vunpack.c.h.b16 %v1087
        %v1346 = vunpack.c.l.b16 %v1088
        %v1347 = vpack.c.b16 %v1206, %v1203
        %v1348 = vpack.c.b16 %v1207, %v1204
        %v1349 = vpack.c.b16 %v1208, %v1205
        %v1350 = vpack.c.b16 %v1212, %v1209
        %v1351 = vpack.c.b16 %v1213, %v1210
        %v1352 = vpack.c.b16 %v1214, %v1211
        %v1353 = vpack.c.b16 %v1218, %v1215
        %v1354 = vpack.c.b16 %v1219, %v1216
        %v1355 = vpack.c.b16 %v1220, %v1217
        %v1356 = vpack.c.b16 %v1224, %v1221
        %v1357 = vpack.c.b16 %v1225, %v1222
        %v1358 = vpack.c.b16 %v1226, %v1223
        %v1359 = vpack.c.b16 %v1230, %v1227
        %v1360 = vpack.c.b16 %v1231, %v1228
        %v1361 = vpack.c.b16 %v1232, %v1229
        %v1362 = vpack.c.b16 %v1236, %v1233
        %v1363 = vpack.c.b16 %v1237, %v1234
        %v1364 = vpack.c.b16 %v1238, %v1235
        %v1365 = vpack.c.b16 %v1242, %v1239
        %v1366 = vpack.c.b16 %v1243, %v1240
        %v1367 = vpack.c.b16 %v1244, %v1241
        %v1368 = vpack.c.b16 %v1248, %v1245
        %v1369 = vpack.c.b16 %v1249, %v1246
        %v1370 = vpack.c.b16 %v1250, %v1247
        %v1371 = vpack.c.b16 %v1254, %v1251
        %v1372 = vpack.c.b16 %v1255, %v1252
        %v1373 = vpack.c.b16 %v1256, %v1253
        %v1374 = vpack.c.b16 %v1260, %v1257
        %v1375 = vpack.c.b16 %v1261, %v1258
        %v1376 = vpack.c.b16 %v1262, %v1259
        %v1377 = vpack.c.b16 %v1266, %v1263
        %v1378 = vpack.c.b16 %v1267, %v1264
        %v1379 = vpack.c.b16 %v1268, %v1265
        %v1380 = vpack.c.b16 %v1272, %v1269
        %v1381 = vpack.c.b16 %v1273, %v1270
        %v1382 = vpack.c.b16 %v1274, %v1271
        %v1383 = vpack.c.b16 %v1278, %v1275
        %v1384 = vpack.c.b16 %v1279, %v1276
        %v1385 = vpack.c.b16 %v1280, %v1277
        %v1386 = vpack.c.b16 %v1284, %v1281
        %v1387 = vpack.c.b16 %v1285, %v1282
        %v1388 = vpack.c.b16 %v1286, %v1283
        %v1389 = vpack.c.b16 %v1290, %v1287
        %v1390 = vpack.c.b16 %v1291, %v1288
        %v1391 = vpack.c.b16 %v1292, %v1289
        %v1392 = vpack.c.b16 %v1296, %v1293
        %v1393 = vpack.c.b16 %v1297, %v1294
        %v1394 = vpack.c.b16 %v1298, %v1295
        %v1395 = vpack.c.b16 %v1302, %v1299
        %v1396 = vpack.c.b16 %v1303, %v1300
        %v1397 = vpack.c.b16 %v1304, %v1301
        %v1398 = vpack.c.b16 %v1308, %v1305
        %v1399 = vpack.c.b16 %v1309, %v1306
        %v1400 = vpack.c.b16 %v1310, %v1307
        %v1401 = vpack.c.b16 %v1314, %v1311
        %v1402 = vpack.c.b16 %v1315, %v1312
        %v1403 = vpack.c.b16 %v1316, %v1313
        %v1404 = vpack.c.b16 %v1320, %v1317
        %v1405 = vpack.c.b16 %v1321, %v1318
        %v1406 = vpack.c.b16 %v1322, %v1319
        %v1407 = vpack.c.b16 %v1326, %v1323
        %v1408 = vpack.c.b16 %v1327, %v1324
        %v1409 = vpack.c.b16 %v1328, %v1325
        %v1410 = vpack.c.b16 %v1332, %v1329
        %v1411 = vpack.c.b16 %v1333, %v1330
        %v1412 = vpack.c.b16 %v1334, %v1331
        %v1413 = vpack.c.b16 %v1338, %v1335
        %v1414 = vpack.c.b16 %v1339, %v1336
        %v1415 = vpack.c.b16 %v1340, %v1337
        %v1416 = vpack.c.b16 %v1344, %v1341
        %v1417 = vpack.c.b16 %v1345, %v1342
        %v1418 = vpack.c.b16 %v1346, %v1343
        %1491 = vmatprep.subr.bf16.mxu0 %v1348
        %1492 = vmatpush1.bf16.msra.mxu0 %v1347
        %1493 = vmatprep.subr.bf16.mxu0 %v1351
        %1494 = vmatpush1.bf16.msra.mxu0 %v1350
        %1495 = vmatprep.subr.bf16.mxu0 %v1354
        %1496 = vmatpush1.bf16.msra.mxu0 %v1353
        %1497 = vmatprep.subr.bf16.mxu0 %v1357
        %1498 = vmatpush1.bf16.msra.mxu0 %v1356
        %1499 = vmatprep.subr.bf16.mxu0 %v1360
        %1500 = vmatpush1.bf16.msra.mxu0 %v1359
        %1501 = vmatprep.subr.bf16.mxu0 %v1363
        %1502 = vmatpush1.bf16.msra.mxu0 %v1362
        %1503 = vmatprep.subr.bf16.mxu0 %v1366
        %1504 = vmatpush1.bf16.msra.mxu0 %v1365
        %1505 = vmatprep.subr.bf16.mxu0 %v1369
        %1506 = vmatpush1.bf16.msra.mxu0 %v1368
        %1507 = vmatprep.subr.bf16.mxu0 %v1372
        %1508 = vmatpush1.bf16.msra.mxu0 %v1371
        %1509 = vmatprep.subr.bf16.mxu0 %v1375
        %1510 = vmatpush1.bf16.msra.mxu0 %v1374
        %1511 = vmatprep.subr.bf16.mxu0 %v1378
        %1512 = vmatpush1.bf16.msra.mxu0 %v1377
        %1513 = vmatprep.subr.bf16.mxu0 %v1381
        %1514 = vmatpush1.bf16.msra.mxu0 %v1380
        %1515 = vmatprep.subr.bf16.mxu0 %v1384
        %1516 = vmatpush1.bf16.msra.mxu0 %v1383
        %1517 = vmatprep.subr.bf16.mxu0 %v1387
        %1518 = vmatpush1.bf16.msra.mxu0 %v1386
        %1519 = vmatprep.subr.bf16.mxu0 %v1390
        %1520 = vmatpush1.bf16.msra.mxu0 %v1389
        %1521 = vmatprep.subr.bf16.mxu0 %v1393
        %1522 = vmatpush1.bf16.msra.mxu0 %v1392
        %1523 = vmatprep.mubr.bf16.mxu0 %v679
        %1524 = vmatmul.mubr.bf16.gmra.mrb[0].mxu0 %v678
        %v1525 = vpop.f32.mrb[0].mxu0
        %v1526 = vadd.f32 %v1095, %v1525
        %v1527 = vpop.f32.mrb[0].mxu0
        %v1528 = vadd.f32 %v1099, %v1527
        %v1529 = vpop.f32.mrb[0].mxu0
        %v1530 = vadd.f32 %v1095, %v1529
        %v1531 = vpop.f32.mrb[0].mxu0
        %v1532 = vadd.f32 %v1099, %v1531
        %1533 = vmatprep.mubr.bf16.mxu0 %v682
        %1534 = vmatmul.mubr.bf16.gmra.mrb[0].mxu0 %v681
        %v1535 = vpop.f32.mrb[0].mxu0
        %v1536 = vadd.f32 %v1095, %v1535
        %v1537 = vpop.f32.mrb[0].mxu0
        %v1538 = vadd.f32 %v1099, %v1537
        %v1539 = vpop.f32.mrb[0].mxu0
        %v1540 = vadd.f32 %v1095, %v1539
        %v1541 = vpop.f32.mrb[0].mxu0
        %v1542 = vadd.f32 %v1099, %v1541
        %1543 = vmatprep.mubr.bf16.mxu0 %v685
        %1544 = vmatmul.mubr.bf16.gmra.mrb[0].mxu0 %v684
        %v1545 = vpop.f32.mrb[0].mxu0
        %v1546 = vadd.f32 %v1095, %v1545
        %v1547 = vpop.f32.mrb[0].mxu0
        %v1548 = vadd.f32 %v1099, %v1547
        %v1549 = vpop.f32.mrb[0].mxu0
        %v1550 = vadd.f32 %v1095, %v1549
        %v1551 = vpop.f32.mrb[0].mxu0
        %v1552 = vadd.f32 %v1099, %v1551
        %1553 = vmatprep.mubr.bf16.mxu0 %v688
        %1554 = vmatmul.mubr.bf16.gmra.mrb[0].mxu0 %v687
        %v1555 = vpop.f32.mrb[0].mxu0
        %v1556 = vadd.f32 %v1095, %v1555
        %v1557 = vpop.f32.mrb[0].mxu0
        %v1558 = vadd.f32 %v1099, %v1557
        %v1559 = vpop.f32.mrb[0].mxu0
        %v1560 = vadd.f32 %v1095, %v1559
        %v1561 = vpop.f32.mrb[0].mxu0
        %v1562 = vadd.f32 %v1099, %v1561
        %1563 = vmatprep.mubr.bf16.mxu0 %v691
        %1564 = vmatmul.mubr.bf16.gmra.mrb[0].mxu0 %v690
        %v1565 = vpop.f32.mrb[0].mxu0
        %v1566 = vadd.f32 %v1095, %v1565
        %v1567 = vpop.f32.mrb[0].mxu0
        %v1568 = vadd.f32 %v1099, %v1567
        %v1569 = vpop.f32.mrb[0].mxu0
        %v1570 = vadd.f32 %v1095, %v1569
        %v1571 = vpop.f32.mrb[0].mxu0
        %v1572 = vadd.f32 %v1099, %v1571
        %1573 = vmatprep.mubr.bf16.mxu0 %v694
        %1574 = vmatmul.mubr.bf16.gmra.mrb[0].mxu0 %v693
        %v1575 = vpop.f32.mrb[0].mxu0
        %v1576 = vadd.f32 %v1095, %v1575
        %v1577 = vpop.f32.mrb[0].mxu0
        %v1578 = vadd.f32 %v1099, %v1577
        %v1579 = vpop.f32.mrb[0].mxu0
        %v1580 = vadd.f32 %v1095, %v1579
        %v1581 = vpop.f32.mrb[0].mxu0
        %v1582 = vadd.f32 %v1099, %v1581
        %1583 = vmatprep.mubr.bf16.mxu0 %v697
        %1584 = vmatmul.mubr.bf16.gmra.mrb[0].mxu0 %v696
        %v1585 = vpop.f32.mrb[0].mxu0
        %v1586 = vadd.f32 %v1095, %v1585
        %v1587 = vpop.f32.mrb[0].mxu0
        %v1588 = vadd.f32 %v1099, %v1587
        %v1589 = vpop.f32.mrb[0].mxu0
        %v1590 = vadd.f32 %v1095, %v1589
        %v1591 = vpop.f32.mrb[0].mxu0
        %v1592 = vadd.f32 %v1099, %v1591
        %1593 = vmatprep.mubr.bf16.mxu0 %v700
        %1594 = vmatmul.mubr.bf16.gmra.mrb[0].mxu0 %v699
        %v1595 = vpop.f32.mrb[0].mxu0
        %v1596 = vadd.f32 %v1095, %v1595
        %v1597 = vpop.f32.mrb[0].mxu0
        %v1598 = vadd.f32 %v1099, %v1597
        %v1599 = vpop.f32.mrb[0].mxu0
        %v1600 = vadd.f32 %v1095, %v1599
        %v1601 = vpop.f32.mrb[0].mxu0
        %v1602 = vadd.f32 %v1099, %v1601
        %1603 = vdwg.mxu0
        %1604 = vmatprep.subr.bf16.mxu0 %v1396
        %1605 = vmatpush1.bf16.msra.mxu0 %v1395
        %1606 = vmatprep.subr.bf16.mxu0 %v1399
        %1607 = vmatpush1.bf16.msra.mxu0 %v1398
        %1608 = vmatprep.subr.bf16.mxu0 %v1402
        %1609 = vmatpush1.bf16.msra.mxu0 %v1401
        %1610 = vmatprep.subr.bf16.mxu0 %v1405
        %1611 = vmatpush1.bf16.msra.mxu0 %v1404
        %1612 = vmatprep.subr.bf16.mxu0 %v1408
        %1613 = vmatpush1.bf16.msra.mxu0 %v1407
        %1614 = vmatprep.subr.bf16.mxu0 %v1411
        %1615 = vmatpush1.bf16.msra.mxu0 %v1410
        %1616 = vmatprep.subr.bf16.mxu0 %v1414
        %1617 = vmatpush1.bf16.msra.mxu0 %v1413
        %1618 = vmatprep.subr.bf16.mxu0 %v1417
        %1619 = vmatpush1.bf16.msra.mxu0 %v1416
        %1620 = vmatprep.subr.bf16.mxu0 0
        %1621 = vmatpush1.bf16.msra.mxu0 0
        %1622 = vmatprep.subr.bf16.mxu0 0
        %1623 = vmatpush1.bf16.msra.mxu0 0
        %1624 = vmatprep.subr.bf16.mxu0 0
        %1625 = vmatpush1.bf16.msra.mxu0 0
        %1626 = vmatprep.subr.bf16.mxu0 0
        %1627 = vmatpush1.bf16.msra.mxu0 0
        %1628 = vmatprep.subr.bf16.mxu0 0
        %1629 = vmatpush1.bf16.msra.mxu0 0
        %1630 = vmatprep.subr.bf16.mxu0 0
        %1631 = vmatpush1.bf16.msra.mxu0 0
        %1632 = vmatprep.subr.bf16.mxu0 0
        %1633 = vmatpush1.bf16.msra.mxu0 0
        %1634 = vmatprep.subr.bf16.mxu0 0
        %1635 = vmatpush1.bf16.msra.mxu0 0
        %1636 = vmatprep.mubr.bf16.mxu0 0
        %1637 = vmatmul.mubr.bf16.gmra.mrb[0].mxu0 %v680
        %v1638 = vpop.f32.mrb[0].mxu0
        %v1639 = vadd.f32 %v1526, %v1638
        %v1640 = vpop.f32.mrb[0].mxu0
        %v1641 = vadd.f32 %v1528, %v1640
        %v1642 = vpop.f32.mrb[0].mxu0
        %v1643 = vadd.f32 %v1530, %v1642
        %v1644 = vpop.f32.mrb[0].mxu0
        %v1645 = vadd.f32 %v1532, %v1644
        %1646 = vmatprep.mubr.bf16.mxu0 0
        %1647 = vmatmul.mubr.bf16.gmra.mrb[0].mxu0 %v683
        %v1648 = vpop.f32.mrb[0].mxu0
        %v1649 = vadd.f32 %v1536, %v1648
        %v1650 = vpop.f32.mrb[0].mxu0
        %v1651 = vadd.f32 %v1538, %v1650
        %v1652 = vpop.f32.mrb[0].mxu0
        %v1653 = vadd.f32 %v1540, %v1652
        %v1654 = vpop.f32.mrb[0].mxu0
        %v1655 = vadd.f32 %v1542, %v1654
        %1656 = vmatprep.mubr.bf16.mxu0 0
        %1657 = vmatmul.mubr.bf16.gmra.mrb[0].mxu0 %v686
        %v1658 = vpop.f32.mrb[0].mxu0
        %v1659 = vadd.f32 %v1546, %v1658
        %v1660 = vpop.f32.mrb[0].mxu0
        %v1661 = vadd.f32 %v1548, %v1660
        %v1662 = vpop.f32.mrb[0].mxu0
        %v1663 = vadd.f32 %v1550, %v1662
        %v1664 = vpop.f32.mrb[0].mxu0
        %v1665 = vadd.f32 %v1552, %v1664
        %1666 = vmatprep.mubr.bf16.mxu0 0
        %1667 = vmatmul.mubr.bf16.gmra.mrb[0].mxu0 %v689
        %v1668 = vpop.f32.mrb[0].mxu0
        %v1669 = vadd.f32 %v1556, %v1668
        %v1670 = vpop.f32.mrb[0].mxu0
        %v1671 = vadd.f32 %v1558, %v1670
        %v1672 = vpop.f32.mrb[0].mxu0
        %v1673 = vadd.f32 %v1560, %v1672
        %v1674 = vpop.f32.mrb[0].mxu0
        %v1675 = vadd.f32 %v1562, %v1674
        %1676 = vmatprep.mubr.bf16.mxu0 0
        %1677 = vmatmul.mubr.bf16.gmra.mrb[0].mxu0 %v692
        %v1678 = vpop.f32.mrb[0].mxu0
        %v1679 = vadd.f32 %v1566, %v1678
        %v1680 = vpop.f32.mrb[0].mxu0
        %v1681 = vadd.f32 %v1568, %v1680
        %v1682 = vpop.f32.mrb[0].mxu0
        %v1683 = vadd.f32 %v1570, %v1682
        %v1684 = vpop.f32.mrb[0].mxu0
        %v1685 = vadd.f32 %v1572, %v1684
        %1686 = vmatprep.mubr.bf16.mxu0 0
        %1687 = vmatmul.mubr.bf16.gmra.mrb[0].mxu0 %v695
        %v1688 = vpop.f32.mrb[0].mxu0
        %v1689 = vadd.f32 %v1576, %v1688
        %v1690 = vpop.f32.mrb[0].mxu0
        %v1691 = vadd.f32 %v1578, %v1690
        %v1692 = vpop.f32.mrb[0].mxu0
        %v1693 = vadd.f32 %v1580, %v1692
        %v1694 = vpop.f32.mrb[0].mxu0
        %v1695 = vadd.f32 %v1582, %v1694
        %1696 = vmatprep.mubr.bf16.mxu0 0
        %1697 = vmatmul.mubr.bf16.gmra.mrb[0].mxu0 %v698
        %v1698 = vpop.f32.mrb[0].mxu0
        %v1699 = vadd.f32 %v1586, %v1698
        %v1700 = vpop.f32.mrb[0].mxu0
        %v1701 = vadd.f32 %v1588, %v1700
        %v1702 = vpop.f32.mrb[0].mxu0
        %v1703 = vadd.f32 %v1590, %v1702
        %v1704 = vpop.f32.mrb[0].mxu0
        %v1705 = vadd.f32 %v1592, %v1704
        %1706 = vmatprep.mubr.bf16.mxu0 0
        %1707 = vmatmul.mubr.bf16.gmra.mrb[0].mxu0 %v701
        %v1708 = vpop.f32.mrb[0].mxu0
        %v1709 = vadd.f32 %v1596, %v1708
        %v1710 = vpop.f32.mrb[0].mxu0
        %v1711 = vadd.f32 %v1598, %v1710
        %v1712 = vpop.f32.mrb[0].mxu0
        %v1713 = vadd.f32 %v1600, %v1712
        %v1714 = vpop.f32.mrb[0].mxu0
        %v1715 = vadd.f32 %v1602, %v1714
        %1716 = vdwg.mxu0
        %1717 = vmatprep.subr.bf16.mxu0 0
        %1718 = vmatpush1.bf16.msra.mxu0 %v1349
        %1719 = vmatprep.subr.bf16.mxu0 0
        %1720 = vmatpush1.bf16.msra.mxu0 %v1352
        %1721 = vmatprep.subr.bf16.mxu0 0
        %1722 = vmatpush1.bf16.msra.mxu0 %v1355
        %1723 = vmatprep.subr.bf16.mxu0 0
        %1724 = vmatpush1.bf16.msra.mxu0 %v1358
        %1725 = vmatprep.subr.bf16.mxu0 0
        %1726 = vmatpush1.bf16.msra.mxu0 %v1361
        %1727 = vmatprep.subr.bf16.mxu0 0
        %1728 = vmatpush1.bf16.msra.mxu0 %v1364
        %1729 = vmatprep.subr.bf16.mxu0 0
        %1730 = vmatpush1.bf16.msra.mxu0 %v1367
        %1731 = vmatprep.subr.bf16.mxu0 0
        %1732 = vmatpush1.bf16.msra.mxu0 %v1370
        %1733 = vmatprep.subr.bf16.mxu0 0
        %1734 = vmatpush1.bf16.msra.mxu0 %v1373
        %1735 = vmatprep.subr.bf16.mxu0 0
        %1736 = vmatpush1.bf16.msra.mxu0 %v1376
        %1737 = vmatprep.subr.bf16.mxu0 0
        %1738 = vmatpush1.bf16.msra.mxu0 %v1379
        %1739 = vmatprep.subr.bf16.mxu0 0
        %1740 = vmatpush1.bf16.msra.mxu0 %v1382
        %1741 = vmatprep.subr.bf16.mxu0 0
        %1742 = vmatpush1.bf16.msra.mxu0 %v1385
        %1743 = vmatprep.subr.bf16.mxu0 0
        %1744 = vmatpush1.bf16.msra.mxu0 %v1388
        %1745 = vmatprep.subr.bf16.mxu0 0
        %1746 = vmatpush1.bf16.msra.mxu0 %v1391
        %1747 = vmatprep.subr.bf16.mxu0 0
        %1748 = vmatpush1.bf16.msra.mxu0 %v1394
        %1749 = vmatprep.mubr.bf16.mxu0 %v679
        %1750 = vmatmul.mubr.bf16.gmra.mrb[0].mxu0 %v678
        %v1751 = vpop.f32.mrb[0].mxu0
        %v1752 = vadd.f32 %v1103, %v1751
        %v1753 = vpop.f32.mrb[0].mxu0
        %v1754 = vpop.f32.mrb[0].mxu0
        %v1755 = vadd.f32 %v1103, %v1754
        %v1756 = vpop.f32.mrb[0].mxu0
        %1757 = vmatprep.mubr.bf16.mxu0 %v682
        %1758 = vmatmul.mubr.bf16.gmra.mrb[0].mxu0 %v681
        %v1759 = vpop.f32.mrb[0].mxu0
        %v1760 = vadd.f32 %v1103, %v1759
        %v1761 = vpop.f32.mrb[0].mxu0
        %v1762 = vpop.f32.mrb[0].mxu0
        %v1763 = vadd.f32 %v1103, %v1762
        %v1764 = vpop.f32.mrb[0].mxu0
        %1765 = vmatprep.mubr.bf16.mxu0 %v685
        %1766 = vmatmul.mubr.bf16.gmra.mrb[0].mxu0 %v684
        %v1767 = vpop.f32.mrb[0].mxu0
        %v1768 = vadd.f32 %v1103, %v1767
        %v1769 = vpop.f32.mrb[0].mxu0
        %v1770 = vpop.f32.mrb[0].mxu0
        %v1771 = vadd.f32 %v1103, %v1770
        %v1772 = vpop.f32.mrb[0].mxu0
        %1773 = vmatprep.mubr.bf16.mxu0 %v688
        %1774 = vmatmul.mubr.bf16.gmra.mrb[0].mxu0 %v687
        %v1775 = vpop.f32.mrb[0].mxu0
        %v1776 = vadd.f32 %v1103, %v1775
        %v1777 = vpop.f32.mrb[0].mxu0
        %v1778 = vpop.f32.mrb[0].mxu0
        %v1779 = vadd.f32 %v1103, %v1778
        %v1780 = vpop.f32.mrb[0].mxu0
        %1781 = vmatprep.mubr.bf16.mxu0 %v691
        %1782 = vmatmul.mubr.bf16.gmra.mrb[0].mxu0 %v690
        %v1783 = vpop.f32.mrb[0].mxu0
        %v1784 = vadd.f32 %v1103, %v1783
        %v1785 = vpop.f32.mrb[0].mxu0
        %v1786 = vpop.f32.mrb[0].mxu0
        %v1787 = vadd.f32 %v1103, %v1786
        %v1788 = vpop.f32.mrb[0].mxu0
        %1789 = vmatprep.mubr.bf16.mxu0 %v694
        %1790 = vmatmul.mubr.bf16.gmra.mrb[0].mxu0 %v693
        %v1791 = vpop.f32.mrb[0].mxu0
        %v1792 = vadd.f32 %v1103, %v1791
        %v1793 = vpop.f32.mrb[0].mxu0
        %v1794 = vpop.f32.mrb[0].mxu0
        %v1795 = vadd.f32 %v1103, %v1794
        %v1796 = vpop.f32.mrb[0].mxu0
        %1797 = vmatprep.mubr.bf16.mxu0 %v697
        %1798 = vmatmul.mubr.bf16.gmra.mrb[0].mxu0 %v696
        %v1799 = vpop.f32.mrb[0].mxu0
        %v1800 = vadd.f32 %v1103, %v1799
        %v1801 = vpop.f32.mrb[0].mxu0
        %v1802 = vpop.f32.mrb[0].mxu0
        %v1803 = vadd.f32 %v1103, %v1802
        %v1804 = vpop.f32.mrb[0].mxu0
        %1805 = vmatprep.mubr.bf16.mxu0 %v700
        %1806 = vmatmul.mubr.bf16.gmra.mrb[0].mxu0 %v699
        %v1807 = vpop.f32.mrb[0].mxu0
        %v1808 = vadd.f32 %v1103, %v1807
        %v1809 = vpop.f32.mrb[0].mxu0
        %v1810 = vpop.f32.mrb[0].mxu0
        %v1811 = vadd.f32 %v1103, %v1810
        %v1812 = vpop.f32.mrb[0].mxu0
        %1813 = vdwg.mxu0
        %1814 = vmatprep.subr.bf16.mxu0 0
        %1815 = vmatpush1.bf16.msra.mxu0 %v1397
        %1816 = vmatprep.subr.bf16.mxu0 0
        %1817 = vmatpush1.bf16.msra.mxu0 %v1400
        %1818 = vmatprep.subr.bf16.mxu0 0
        %1819 = vmatpush1.bf16.msra.mxu0 %v1403
        %1820 = vmatprep.subr.bf16.mxu0 0
        %1821 = vmatpush1.bf16.msra.mxu0 %v1406
        %1822 = vmatprep.subr.bf16.mxu0 0
        %1823 = vmatpush1.bf16.msra.mxu0 %v1409
        %1824 = vmatprep.subr.bf16.mxu0 0
        %1825 = vmatpush1.bf16.msra.mxu0 %v1412
        %1826 = vmatprep.subr.bf16.mxu0 0
        %1827 = vmatpush1.bf16.msra.mxu0 %v1415
        %1828 = vmatprep.subr.bf16.mxu0 0
        %1829 = vmatpush1.bf16.msra.mxu0 %v1418
        %1830 = vmatprep.subr.bf16.mxu0 0
        %1831 = vmatpush1.bf16.msra.mxu0 0
        %1832 = vmatprep.subr.bf16.mxu0 0
        %1833 = vmatpush1.bf16.msra.mxu0 0
        %1834 = vmatprep.subr.bf16.mxu0 0
        %1835 = vmatpush1.bf16.msra.mxu0 0
        %1836 = vmatprep.subr.bf16.mxu0 0
        %1837 = vmatpush1.bf16.msra.mxu0 0
        %1838 = vmatprep.subr.bf16.mxu0 0
        %1839 = vmatpush1.bf16.msra.mxu0 0
        %1840 = vmatprep.subr.bf16.mxu0 0
        %1841 = vmatpush1.bf16.msra.mxu0 0
        %1842 = vmatprep.subr.bf16.mxu0 0
        %1843 = vmatpush1.bf16.msra.mxu0 0
        %1844 = vmatprep.subr.bf16.mxu0 0
        %1845 = vmatpush1.bf16.msra.mxu0 0
        %1846 = vmatprep.mubr.bf16.mxu0 0
        %1847 = vmatmul.mubr.bf16.gmra.mrb[0].mxu0 %v680
        %v1848 = vpop.f32.mrb[0].mxu0
        %v1849 = vadd.f32 %v1752, %v1848
        %v1850 = vpop.f32.mrb[0].mxu0
        %v1851 = vpop.f32.mrb[0].mxu0
        %v1852 = vadd.f32 %v1755, %v1851
        %v1853 = vpop.f32.mrb[0].mxu0
        %1854 = vmatprep.mubr.bf16.mxu0 0
        %1855 = vmatmul.mubr.bf16.gmra.mrb[0].mxu0 %v683
        %v1856 = vpop.f32.mrb[0].mxu0
        %v1857 = vadd.f32 %v1760, %v1856
        %v1858 = vpop.f32.mrb[0].mxu0
        %v1859 = vpop.f32.mrb[0].mxu0
        %v1860 = vadd.f32 %v1763, %v1859
        %v1861 = vpop.f32.mrb[0].mxu0
        %1862 = vmatprep.mubr.bf16.mxu0 0
        %1863 = vmatmul.mubr.bf16.gmra.mrb[0].mxu0 %v686
        %v1864 = vpop.f32.mrb[0].mxu0
        %v1865 = vadd.f32 %v1768, %v1864
        %v1866 = vpop.f32.mrb[0].mxu0
        %v1867 = vpop.f32.mrb[0].mxu0
        %v1868 = vadd.f32 %v1771, %v1867
        %v1869 = vpop.f32.mrb[0].mxu0
        %1870 = vmatprep.mubr.bf16.mxu0 0
        %1871 = vmatmul.mubr.bf16.gmra.mrb[0].mxu0 %v689
        %v1872 = vpop.f32.mrb[0].mxu0
        %v1873 = vadd.f32 %v1776, %v1872
        %v1874 = vpop.f32.mrb[0].mxu0
        %v1875 = vpop.f32.mrb[0].mxu0
        %v1876 = vadd.f32 %v1779, %v1875
        %v1877 = vpop.f32.mrb[0].mxu0
        %1878 = vmatprep.mubr.bf16.mxu0 0
        %1879 = vmatmul.mubr.bf16.gmra.mrb[0].mxu0 %v692
        %v1880 = vpop.f32.mrb[0].mxu0
        %v1881 = vadd.f32 %v1784, %v1880
        %v1882 = vpop.f32.mrb[0].mxu0
        %v1883 = vpop.f32.mrb[0].mxu0
        %v1884 = vadd.f32 %v1787, %v1883
        %v1885 = vpop.f32.mrb[0].mxu0
        %1886 = vmatprep.mubr.bf16.mxu0 0
        %1887 = vmatmul.mubr.bf16.gmra.mrb[0].mxu0 %v695
        %v1888 = vpop.f32.mrb[0].mxu0
        %v1889 = vadd.f32 %v1792, %v1888
        %v1890 = vpop.f32.mrb[0].mxu0
        %v1891 = vpop.f32.mrb[0].mxu0
        %v1892 = vadd.f32 %v1795, %v1891
        %v1893 = vpop.f32.mrb[0].mxu0
        %1894 = vmatprep.mubr.bf16.mxu0 0
        %1895 = vmatmul.mubr.bf16.gmra.mrb[0].mxu0 %v698
        %v1896 = vpop.f32.mrb[0].mxu0
        %v1897 = vadd.f32 %v1800, %v1896
        %v1898 = vpop.f32.mrb[0].mxu0
        %v1899 = vpop.f32.mrb[0].mxu0
        %v1900 = vadd.f32 %v1803, %v1899
        %v1901 = vpop.f32.mrb[0].mxu0
        %1902 = vmatprep.mubr.bf16.mxu0 0
        %1903 = vmatmul.mubr.bf16.gmra.mrb[0].mxu0 %v701
        %v1904 = vpop.f32.mrb[0].mxu0
        %v1905 = vadd.f32 %v1808, %v1904
        %v1906 = vpop.f32.mrb[0].mxu0
        %v1907 = vpop.f32.mrb[0].mxu0
        %v1908 = vadd.f32 %v1811, %v1907
        %v1909 = vpop.f32.mrb[0].mxu0
        %1910 = vdwg.mxu0
        %v1911 = vtanh.pop %v1639
        %v1912 = vtanh.pop %v1641
        %v1913 = vtanh.pop %v1849
        %v1914 = vtanh.pop %v1643
        %v1915 = vtanh.pop %v1645
        %v1916 = vtanh.pop %v1852
        %v1917 = vtanh.pop %v1649
        %v1918 = vtanh.pop %v1651
        %v1919 = vtanh.pop %v1857
        %v1920 = vtanh.pop %v1653
        %v1921 = vtanh.pop %v1655
        %v1922 = vtanh.pop %v1860
        %v1923 = vtanh.pop %v1659
        %v1924 = vtanh.pop %v1661
        %v1925 = vtanh.pop %v1865
        %v1926 = vtanh.pop %v1663
        %v1927 = vtanh.pop %v1665
        %v1928 = vtanh.pop %v1868
        %v1929 = vtanh.pop %v1669
        %v1930 = vtanh.pop %v1671
        %v1931 = vtanh.pop %v1873
        %v1932 = vtanh.pop %v1673
        %v1933 = vtanh.pop %v1675
        %v1934 = vtanh.pop %v1876
        %v1935 = vtanh.pop %v1679
        %v1936 = vtanh.pop %v1681
        %v1937 = vtanh.pop %v1881
        %v1938 = vtanh.pop %v1683
        %v1939 = vtanh.pop %v1685
        %v1940 = vtanh.pop %v1884
        %v1941 = vtanh.pop %v1689
        %v1942 = vtanh.pop %v1691
        %v1943 = vtanh.pop %v1889
        %v1944 = vtanh.pop %v1693
        %v1945 = vtanh.pop %v1695
        %v1946 = vtanh.pop %v1892
        %v1947 = vtanh.pop %v1699
        %v1948 = vtanh.pop %v1701
        %v1949 = vtanh.pop %v1897
        %v1950 = vtanh.pop %v1703
        %v1951 = vtanh.pop %v1705
        %v1952 = vtanh.pop %v1900
        %v1953 = vtanh.pop %v1709
        %v1954 = vtanh.pop %v1711
        %v1955 = vtanh.pop %v1905
        %v1956 = vtanh.pop %v1713
        %v1957 = vtanh.pop %v1715
        %v1958 = vtanh.pop %v1908
        %v1959 = vpack.c.bf16 %v1914, %v1911
        %v1960 = vpack.c.bf16 %v1915, %v1912
        %v1961 = vpack.c.bf16 %v1916, %v1913
        %v1962 = vpack.c.bf16 %v1920, %v1917
        %v1963 = vpack.c.bf16 %v1921, %v1918
        %v1964 = vpack.c.bf16 %v1922, %v1919
        %v1965 = vpack.c.bf16 %v1926, %v1923
        %v1966 = vpack.c.bf16 %v1927, %v1924
        %v1967 = vpack.c.bf16 %v1928, %v1925
        %v1968 = vpack.c.bf16 %v1932, %v1929
        %v1969 = vpack.c.bf16 %v1933, %v1930
        %v1970 = vpack.c.bf16 %v1934, %v1931
        %v1971 = vpack.c.bf16 %v1938, %v1935
        %v1972 = vpack.c.bf16 %v1939, %v1936
        %v1973 = vpack.c.bf16 %v1940, %v1937
        %v1974 = vpack.c.bf16 %v1944, %v1941
        %v1975 = vpack.c.bf16 %v1945, %v1942
        %v1976 = vpack.c.bf16 %v1946, %v1943
        %v1977 = vpack.c.bf16 %v1950, %v1947
        %v1978 = vpack.c.bf16 %v1951, %v1948
        %v1979 = vpack.c.bf16 %v1952, %v1949
        %v1980 = vpack.c.bf16 %v1956, %v1953
        %v1981 = vpack.c.bf16 %v1957, %v1954
        %v1982 = vpack.c.bf16 %v1958, %v1955
        %1983 = vmatprep.subr.bf16.mxu0 %v1348
        %1984 = vmatpush1.bf16.msra.mxu0 %v1347
        %1985 = vmatprep.subr.bf16.mxu0 %v1351
        %1986 = vmatpush1.bf16.msra.mxu0 %v1350
        %1987 = vmatprep.subr.bf16.mxu0 %v1354
        %1988 = vmatpush1.bf16.msra.mxu0 %v1353
        %1989 = vmatprep.subr.bf16.mxu0 %v1357
        %1990 = vmatpush1.bf16.msra.mxu0 %v1356
        %1991 = vmatprep.subr.bf16.mxu0 %v1360
        %1992 = vmatpush1.bf16.msra.mxu0 %v1359
        %1993 = vmatprep.subr.bf16.mxu0 %v1363
        %1994 = vmatpush1.bf16.msra.mxu0 %v1362
        %1995 = vmatprep.subr.bf16.mxu0 %v1366
        %1996 = vmatpush1.bf16.msra.mxu0 %v1365
        %1997 = vmatprep.subr.bf16.mxu0 %v1369
        %1998 = vmatpush1.bf16.msra.mxu0 %v1368
        %1999 = vmatprep.subr.bf16.mxu0 %v1372
        %2000 = vmatpush1.bf16.msra.mxu0 %v1371
        %2001 = vmatprep.subr.bf16.mxu0 %v1375
        %2002 = vmatpush1.bf16.msra.mxu0 %v1374
        %2003 = vmatprep.subr.bf16.mxu0 %v1378
        %2004 = vmatpush1.bf16.msra.mxu0 %v1377
        %2005 = vmatprep.subr.bf16.mxu0 %v1381
        %2006 = vmatpush1.bf16.msra.mxu0 %v1380
        %2007 = vmatprep.subr.bf16.mxu0 %v1384
        %2008 = vmatpush1.bf16.msra.mxu0 %v1383
        %2009 = vmatprep.subr.bf16.mxu0 %v1387
        %2010 = vmatpush1.bf16.msra.mxu0 %v1386
        %2011 = vmatprep.subr.bf16.mxu0 %v1390
        %2012 = vmatpush1.bf16.msra.mxu0 %v1389
        %2013 = vmatprep.subr.bf16.mxu0 %v1393
        %2014 = vmatpush1.bf16.msra.mxu0 %v1392
        %2015 = vmatprep.mubr.bf16.mxu0 %v969
        %2016 = vmatmul.mubr.bf16.gmra.mrb[0].mxu0 %v968
        %v2017 = vpop.f32.mrb[0].mxu0
        %v2018 = vadd.f32 %v1095, %v2017
        %v2019 = vpop.f32.mrb[0].mxu0
        %v2020 = vadd.f32 %v1099, %v2019
        %v2021 = vpop.f32.mrb[0].mxu0
        %v2022 = vadd.f32 %v1095, %v2021
        %v2023 = vpop.f32.mrb[0].mxu0
        %v2024 = vadd.f32 %v1099, %v2023
        %2025 = vmatprep.mubr.bf16.mxu0 %v972
        %2026 = vmatmul.mubr.bf16.gmra.mrb[0].mxu0 %v971
        %v2027 = vpop.f32.mrb[0].mxu0
        %v2028 = vadd.f32 %v1095, %v2027
        %v2029 = vpop.f32.mrb[0].mxu0
        %v2030 = vadd.f32 %v1099, %v2029
        %v2031 = vpop.f32.mrb[0].mxu0
        %v2032 = vadd.f32 %v1095, %v2031
        %v2033 = vpop.f32.mrb[0].mxu0
        %v2034 = vadd.f32 %v1099, %v2033
        %2035 = vmatprep.mubr.bf16.mxu0 %v975
        %2036 = vmatmul.mubr.bf16.gmra.mrb[0].mxu0 %v974
        %v2037 = vpop.f32.mrb[0].mxu0
        %v2038 = vadd.f32 %v1095, %v2037
        %v2039 = vpop.f32.mrb[0].mxu0
        %v2040 = vadd.f32 %v1099, %v2039
        %v2041 = vpop.f32.mrb[0].mxu0
        %v2042 = vadd.f32 %v1095, %v2041
        %v2043 = vpop.f32.mrb[0].mxu0
        %v2044 = vadd.f32 %v1099, %v2043
        %2045 = vmatprep.mubr.bf16.mxu0 %v978
        %2046 = vmatmul.mubr.bf16.gmra.mrb[0].mxu0 %v977
        %v2047 = vpop.f32.mrb[0].mxu0
        %v2048 = vadd.f32 %v1095, %v2047
        %v2049 = vpop.f32.mrb[0].mxu0
        %v2050 = vadd.f32 %v1099, %v2049
        %v2051 = vpop.f32.mrb[0].mxu0
        %v2052 = vadd.f32 %v1095, %v2051
        %v2053 = vpop.f32.mrb[0].mxu0
        %v2054 = vadd.f32 %v1099, %v2053
        %2055 = vmatprep.mubr.bf16.mxu0 %v981
        %2056 = vmatmul.mubr.bf16.gmra.mrb[0].mxu0 %v980
        %v2057 = vpop.f32.mrb[0].mxu0
        %v2058 = vadd.f32 %v1095, %v2057
        %v2059 = vpop.f32.mrb[0].mxu0
        %v2060 = vadd.f32 %v1099, %v2059
        %v2061 = vpop.f32.mrb[0].mxu0
        %v2062 = vadd.f32 %v1095, %v2061
        %v2063 = vpop.f32.mrb[0].mxu0
        %v2064 = vadd.f32 %v1099, %v2063
        %2065 = vmatprep.mubr.bf16.mxu0 %v984
        %2066 = vmatmul.mubr.bf16.gmra.mrb[0].mxu0 %v983
        %v2067 = vpop.f32.mrb[0].mxu0
        %v2068 = vadd.f32 %v1095, %v2067
        %v2069 = vpop.f32.mrb[0].mxu0
        %v2070 = vadd.f32 %v1099, %v2069
        %v2071 = vpop.f32.mrb[0].mxu0
        %v2072 = vadd.f32 %v1095, %v2071
        %v2073 = vpop.f32.mrb[0].mxu0
        %v2074 = vadd.f32 %v1099, %v2073
        %2075 = vmatprep.mubr.bf16.mxu0 %v987
        %2076 = vmatmul.mubr.bf16.gmra.mrb[0].mxu0 %v986
        %v2077 = vpop.f32.mrb[0].mxu0
        %v2078 = vadd.f32 %v1095, %v2077
        %v2079 = vpop.f32.mrb[0].mxu0
        %v2080 = vadd.f32 %v1099, %v2079
        %v2081 = vpop.f32.mrb[0].mxu0
        %v2082 = vadd.f32 %v1095, %v2081
        %v2083 = vpop.f32.mrb[0].mxu0
        %v2084 = vadd.f32 %v1099, %v2083
        %2085 = vmatprep.mubr.bf16.mxu0 %v990
        %2086 = vmatmul.mubr.bf16.gmra.mrb[0].mxu0 %v989
        %v2087 = vpop.f32.mrb[0].mxu0
        %v2088 = vadd.f32 %v1095, %v2087
        %v2089 = vpop.f32.mrb[0].mxu0
        %v2090 = vadd.f32 %v1099, %v2089
        %v2091 = vpop.f32.mrb[0].mxu0
        %v2092 = vadd.f32 %v1095, %v2091
        %v2093 = vpop.f32.mrb[0].mxu0
        %v2094 = vadd.f32 %v1099, %v2093
        %2095 = vdwg.mxu0
        %2096 = vmatprep.subr.bf16.mxu0 %v1396
        %2097 = vmatpush1.bf16.msra.mxu0 %v1395
        %2098 = vmatprep.subr.bf16.mxu0 %v1399
        %2099 = vmatpush1.bf16.msra.mxu0 %v1398
        %2100 = vmatprep.subr.bf16.mxu0 %v1402
        %2101 = vmatpush1.bf16.msra.mxu0 %v1401
        %2102 = vmatprep.subr.bf16.mxu0 %v1405
        %2103 = vmatpush1.bf16.msra.mxu0 %v1404
        %2104 = vmatprep.subr.bf16.mxu0 %v1408
        %2105 = vmatpush1.bf16.msra.mxu0 %v1407
        %2106 = vmatprep.subr.bf16.mxu0 %v1411
        %2107 = vmatpush1.bf16.msra.mxu0 %v1410
        %2108 = vmatprep.subr.bf16.mxu0 %v1414
        %2109 = vmatpush1.bf16.msra.mxu0 %v1413
        %2110 = vmatprep.subr.bf16.mxu0 %v1417
        %2111 = vmatpush1.bf16.msra.mxu0 %v1416
        %2112 = vmatprep.subr.bf16.mxu0 0
        %2113 = vmatpush1.bf16.msra.mxu0 0
        %2114 = vmatprep.subr.bf16.mxu0 0
        %2115 = vmatpush1.bf16.msra.mxu0 0
        %2116 = vmatprep.subr.bf16.mxu0 0
        %2117 = vmatpush1.bf16.msra.mxu0 0
        %2118 = vmatprep.subr.bf16.mxu0 0
        %2119 = vmatpush1.bf16.msra.mxu0 0
        %2120 = vmatprep.subr.bf16.mxu0 0
        %2121 = vmatpush1.bf16.msra.mxu0 0
        %2122 = vmatprep.subr.bf16.mxu0 0
        %2123 = vmatpush1.bf16.msra.mxu0 0
        %2124 = vmatprep.subr.bf16.mxu0 0
        %2125 = vmatpush1.bf16.msra.mxu0 0
        %2126 = vmatprep.subr.bf16.mxu0 0
        %2127 = vmatpush1.bf16.msra.mxu0 0
        %2128 = vmatprep.mubr.bf16.mxu0 0
        %2129 = vmatmul.mubr.bf16.gmra.mrb[0].mxu0 %v970
        %v2130 = vpop.f32.mrb[0].mxu0
        %v2131 = vadd.f32 %v2018, %v2130
        %v2132 = vpop.f32.mrb[0].mxu0
        %v2133 = vadd.f32 %v2020, %v2132
        %v2134 = vpop.f32.mrb[0].mxu0
        %v2135 = vadd.f32 %v2022, %v2134
        %v2136 = vpop.f32.mrb[0].mxu0
        %v2137 = vadd.f32 %v2024, %v2136
        %2138 = vmatprep.mubr.bf16.mxu0 0
        %2139 = vmatmul.mubr.bf16.gmra.mrb[0].mxu0 %v973
        %v2140 = vpop.f32.mrb[0].mxu0
        %v2141 = vadd.f32 %v2028, %v2140
        %v2142 = vpop.f32.mrb[0].mxu0
        %v2143 = vadd.f32 %v2030, %v2142
        %v2144 = vpop.f32.mrb[0].mxu0
        %v2145 = vadd.f32 %v2032, %v2144
        %v2146 = vpop.f32.mrb[0].mxu0
        %v2147 = vadd.f32 %v2034, %v2146
        %2148 = vmatprep.mubr.bf16.mxu0 0
        %2149 = vmatmul.mubr.bf16.gmra.mrb[0].mxu0 %v976
        %v2150 = vpop.f32.mrb[0].mxu0
        %v2151 = vadd.f32 %v2038, %v2150
        %v2152 = vpop.f32.mrb[0].mxu0
        %v2153 = vadd.f32 %v2040, %v2152
        %v2154 = vpop.f32.mrb[0].mxu0
        %v2155 = vadd.f32 %v2042, %v2154
        %v2156 = vpop.f32.mrb[0].mxu0
        %v2157 = vadd.f32 %v2044, %v2156
        %2158 = vmatprep.mubr.bf16.mxu0 0
        %2159 = vmatmul.mubr.bf16.gmra.mrb[0].mxu0 %v979
        %v2160 = vpop.f32.mrb[0].mxu0
        %v2161 = vadd.f32 %v2048, %v2160
        %v2162 = vpop.f32.mrb[0].mxu0
        %v2163 = vadd.f32 %v2050, %v2162
        %v2164 = vpop.f32.mrb[0].mxu0
        %v2165 = vadd.f32 %v2052, %v2164
        %v2166 = vpop.f32.mrb[0].mxu0
        %v2167 = vadd.f32 %v2054, %v2166
        %2168 = vmatprep.mubr.bf16.mxu0 0
        %2169 = vmatmul.mubr.bf16.gmra.mrb[0].mxu0 %v982
        %v2170 = vpop.f32.mrb[0].mxu0
        %v2171 = vadd.f32 %v2058, %v2170
        %v2172 = vpop.f32.mrb[0].mxu0
        %v2173 = vadd.f32 %v2060, %v2172
        %v2174 = vpop.f32.mrb[0].mxu0
        %v2175 = vadd.f32 %v2062, %v2174
        %v2176 = vpop.f32.mrb[0].mxu0
        %v2177 = vadd.f32 %v2064, %v2176
        %2178 = vmatprep.mubr.bf16.mxu0 0
        %2179 = vmatmul.mubr.bf16.gmra.mrb[0].mxu0 %v985
        %v2180 = vpop.f32.mrb[0].mxu0
        %v2181 = vadd.f32 %v2068, %v2180
        %v2182 = vpop.f32.mrb[0].mxu0
        %v2183 = vadd.f32 %v2070, %v2182
        %v2184 = vpop.f32.mrb[0].mxu0
        %v2185 = vadd.f32 %v2072, %v2184
        %v2186 = vpop.f32.mrb[0].mxu0
        %v2187 = vadd.f32 %v2074, %v2186
        %2188 = vmatprep.mubr.bf16.mxu0 0
        %2189 = vmatmul.mubr.bf16.gmra.mrb[0].mxu0 %v988
        %v2190 = vpop.f32.mrb[0].mxu0
        %v2191 = vadd.f32 %v2078, %v2190
        %v2192 = vpop.f32.mrb[0].mxu0
        %v2193 = vadd.f32 %v2080, %v2192
        %v2194 = vpop.f32.mrb[0].mxu0
        %v2195 = vadd.f32 %v2082, %v2194
        %v2196 = vpop.f32.mrb[0].mxu0
        %v2197 = vadd.f32 %v2084, %v2196
        %2198 = vmatprep.mubr.bf16.mxu0 0
        %2199 = vmatmul.mubr.bf16.gmra.mrb[0].mxu0 %v991
        %v2200 = vpop.f32.mrb[0].mxu0
        %v2201 = vadd.f32 %v2088, %v2200
        %v2202 = vpop.f32.mrb[0].mxu0
        %v2203 = vadd.f32 %v2090, %v2202
        %v2204 = vpop.f32.mrb[0].mxu0
        %v2205 = vadd.f32 %v2092, %v2204
        %v2206 = vpop.f32.mrb[0].mxu0
        %v2207 = vadd.f32 %v2094, %v2206
        %2208 = vdwg.mxu0
        %2209 = vmatprep.subr.bf16.mxu0 0
        %2210 = vmatpush1.bf16.msra.mxu0 %v1349
        %2211 = vmatprep.subr.bf16.mxu0 0
        %2212 = vmatpush1.bf16.msra.mxu0 %v1352
        %2213 = vmatprep.subr.bf16.mxu0 0
        %2214 = vmatpush1.bf16.msra.mxu0 %v1355
        %2215 = vmatprep.subr.bf16.mxu0 0
        %2216 = vmatpush1.bf16.msra.mxu0 %v1358
        %2217 = vmatprep.subr.bf16.mxu0 0
        %2218 = vmatpush1.bf16.msra.mxu0 %v1361
        %2219 = vmatprep.subr.bf16.mxu0 0
        %2220 = vmatpush1.bf16.msra.mxu0 %v1364
        %2221 = vmatprep.subr.bf16.mxu0 0
        %2222 = vmatpush1.bf16.msra.mxu0 %v1367
        %2223 = vmatprep.subr.bf16.mxu0 0
        %2224 = vmatpush1.bf16.msra.mxu0 %v1370
        %2225 = vmatprep.subr.bf16.mxu0 0
        %2226 = vmatpush1.bf16.msra.mxu0 %v1373
        %2227 = vmatprep.subr.bf16.mxu0 0
        %2228 = vmatpush1.bf16.msra.mxu0 %v1376
        %2229 = vmatprep.subr.bf16.mxu0 0
        %2230 = vmatpush1.bf16.msra.mxu0 %v1379
        %2231 = vmatprep.subr.bf16.mxu0 0
        %2232 = vmatpush1.bf16.msra.mxu0 %v1382
        %2233 = vmatprep.subr.bf16.mxu0 0
        %2234 = vmatpush1.bf16.msra.mxu0 %v1385
        %2235 = vmatprep.subr.bf16.mxu0 0
        %2236 = vmatpush1.bf16.msra.mxu0 %v1388
        %2237 = vmatprep.subr.bf16.mxu0 0
        %2238 = vmatpush1.bf16.msra.mxu0 %v1391
        %2239 = vmatprep.subr.bf16.mxu0 0
        %2240 = vmatpush1.bf16.msra.mxu0 %v1394
        %2241 = vmatprep.mubr.bf16.mxu0 %v969
        %2242 = vmatmul.mubr.bf16.gmra.mrb[0].mxu0 %v968
        %v2243 = vpop.f32.mrb[0].mxu0
        %v2244 = vadd.f32 %v1103, %v2243
        %v2245 = vpop.f32.mrb[0].mxu0
        %v2246 = vpop.f32.mrb[0].mxu0
        %v2247 = vadd.f32 %v1103, %v2246
        %v2248 = vpop.f32.mrb[0].mxu0
        %2249 = vmatprep.mubr.bf16.mxu0 %v972
        %2250 = vmatmul.mubr.bf16.gmra.mrb[0].mxu0 %v971
        %v2251 = vpop.f32.mrb[0].mxu0
        %v2252 = vadd.f32 %v1103, %v2251
        %v2253 = vpop.f32.mrb[0].mxu0
        %v2254 = vpop.f32.mrb[0].mxu0
        %v2255 = vadd.f32 %v1103, %v2254
        %v2256 = vpop.f32.mrb[0].mxu0
        %2257 = vmatprep.mubr.bf16.mxu0 %v975
        %2258 = vmatmul.mubr.bf16.gmra.mrb[0].mxu0 %v974
        %v2259 = vpop.f32.mrb[0].mxu0
        %v2260 = vadd.f32 %v1103, %v2259
        %v2261 = vpop.f32.mrb[0].mxu0
        %v2262 = vpop.f32.mrb[0].mxu0
        %v2263 = vadd.f32 %v1103, %v2262
        %v2264 = vpop.f32.mrb[0].mxu0
        %2265 = vmatprep.mubr.bf16.mxu0 %v978
        %2266 = vmatmul.mubr.bf16.gmra.mrb[0].mxu0 %v977
        %v2267 = vpop.f32.mrb[0].mxu0
        %v2268 = vadd.f32 %v1103, %v2267
        %v2269 = vpop.f32.mrb[0].mxu0
        %v2270 = vpop.f32.mrb[0].mxu0
        %v2271 = vadd.f32 %v1103, %v2270
        %v2272 = vpop.f32.mrb[0].mxu0
        %2273 = vmatprep.mubr.bf16.mxu0 %v981
        %2274 = vmatmul.mubr.bf16.gmra.mrb[0].mxu0 %v980
        %v2275 = vpop.f32.mrb[0].mxu0
        %v2276 = vadd.f32 %v1103, %v2275
        %v2277 = vpop.f32.mrb[0].mxu0
        %v2278 = vpop.f32.mrb[0].mxu0
        %v2279 = vadd.f32 %v1103, %v2278
        %v2280 = vpop.f32.mrb[0].mxu0
        %2281 = vmatprep.mubr.bf16.mxu0 %v984
        %2282 = vmatmul.mubr.bf16.gmra.mrb[0].mxu0 %v983
        %v2283 = vpop.f32.mrb[0].mxu0
        %v2284 = vadd.f32 %v1103, %v2283
        %v2285 = vpop.f32.mrb[0].mxu0
        %v2286 = vpop.f32.mrb[0].mxu0
        %v2287 = vadd.f32 %v1103, %v2286
        %v2288 = vpop.f32.mrb[0].mxu0
        %2289 = vmatprep.mubr.bf16.mxu0 %v987
        %2290 = vmatmul.mubr.bf16.gmra.mrb[0].mxu0 %v986
        %v2291 = vpop.f32.mrb[0].mxu0
        %v2292 = vadd.f32 %v1103, %v2291
        %v2293 = vpop.f32.mrb[0].mxu0
        %v2294 = vpop.f32.mrb[0].mxu0
        %v2295 = vadd.f32 %v1103, %v2294
        %v2296 = vpop.f32.mrb[0].mxu0
        %2297 = vmatprep.mubr.bf16.mxu0 %v990
        %2298 = vmatmul.mubr.bf16.gmra.mrb[0].mxu0 %v989
        %v2299 = vpop.f32.mrb[0].mxu0
        %v2300 = vadd.f32 %v1103, %v2299
        %v2301 = vpop.f32.mrb[0].mxu0
        %v2302 = vpop.f32.mrb[0].mxu0
        %v2303 = vadd.f32 %v1103, %v2302
        %v2304 = vpop.f32.mrb[0].mxu0
        %2305 = vdwg.mxu0
        %2306 = vmatprep.subr.bf16.mxu0 0
        %2307 = vmatpush1.bf16.msra.mxu0 %v1397
        %2308 = vmatprep.subr.bf16.mxu0 0
        %2309 = vmatpush1.bf16.msra.mxu0 %v1400
        %2310 = vmatprep.subr.bf16.mxu0 0
        %2311 = vmatpush1.bf16.msra.mxu0 %v1403
        %2312 = vmatprep.subr.bf16.mxu0 0
        %2313 = vmatpush1.bf16.msra.mxu0 %v1406
        %2314 = vmatprep.subr.bf16.mxu0 0
        %2315 = vmatpush1.bf16.msra.mxu0 %v1409
        %2316 = vmatprep.subr.bf16.mxu0 0
        %2317 = vmatpush1.bf16.msra.mxu0 %v1412
        %2318 = vmatprep.subr.bf16.mxu0 0
        %2319 = vmatpush1.bf16.msra.mxu0 %v1415
        %2320 = vmatprep.subr.bf16.mxu0 0
        %2321 = vmatpush1.bf16.msra.mxu0 %v1418
        %2322 = vmatprep.subr.bf16.mxu0 0
        %2323 = vmatpush1.bf16.msra.mxu0 0
        %2324 = vmatprep.subr.bf16.mxu0 0
        %2325 = vmatpush1.bf16.msra.mxu0 0
        %2326 = vmatprep.subr.bf16.mxu0 0
        %2327 = vmatpush1.bf16.msra.mxu0 0
        %2328 = vmatprep.subr.bf16.mxu0 0
        %2329 = vmatpush1.bf16.msra.mxu0 0
        %2330 = vmatprep.subr.bf16.mxu0 0
        %2331 = vmatpush1.bf16.msra.mxu0 0
        %2332 = vmatprep.subr.bf16.mxu0 0
        %2333 = vmatpush1.bf16.msra.mxu0 0
        %2334 = vmatprep.subr.bf16.mxu0 0
        %2335 = vmatpush1.bf16.msra.mxu0 0
        %2336 = vmatprep.subr.bf16.mxu0 0
        %2337 = vmatpush1.bf16.msra.mxu0 0
        %2338 = vmatprep.mubr.bf16.mxu0 0
        %2339 = vmatmul.mubr.bf16.gmra.mrb[0].mxu0 %v970
        %v2340 = vpop.f32.mrb[0].mxu0
        %v2341 = vadd.f32 %v2244, %v2340
        %v2342 = vpop.f32.mrb[0].mxu0
        %v2343 = vpop.f32.mrb[0].mxu0
        %v2344 = vadd.f32 %v2247, %v2343
        %v2345 = vpop.f32.mrb[0].mxu0
        %2346 = vmatprep.mubr.bf16.mxu0 0
        %2347 = vmatmul.mubr.bf16.gmra.mrb[0].mxu0 %v973
        %v2348 = vpop.f32.mrb[0].mxu0
        %v2349 = vadd.f32 %v2252, %v2348
        %v2350 = vpop.f32.mrb[0].mxu0
        %v2351 = vpop.f32.mrb[0].mxu0
        %v2352 = vadd.f32 %v2255, %v2351
        %v2353 = vpop.f32.mrb[0].mxu0
        %2354 = vmatprep.mubr.bf16.mxu0 0
        %2355 = vmatmul.mubr.bf16.gmra.mrb[0].mxu0 %v976
        %v2356 = vpop.f32.mrb[0].mxu0
        %v2357 = vadd.f32 %v2260, %v2356
        %v2358 = vpop.f32.mrb[0].mxu0
        %v2359 = vpop.f32.mrb[0].mxu0
        %v2360 = vadd.f32 %v2263, %v2359
        %v2361 = vpop.f32.mrb[0].mxu0
        %2362 = vmatprep.mubr.bf16.mxu0 0
        %2363 = vmatmul.mubr.bf16.gmra.mrb[0].mxu0 %v979
        %v2364 = vpop.f32.mrb[0].mxu0
        %v2365 = vadd.f32 %v2268, %v2364
        %v2366 = vpop.f32.mrb[0].mxu0
        %v2367 = vpop.f32.mrb[0].mxu0
        %v2368 = vadd.f32 %v2271, %v2367
        %v2369 = vpop.f32.mrb[0].mxu0
        %2370 = vmatprep.mubr.bf16.mxu0 0
        %2371 = vmatmul.mubr.bf16.gmra.mrb[0].mxu0 %v982
        %v2372 = vpop.f32.mrb[0].mxu0
        %v2373 = vadd.f32 %v2276, %v2372
        %v2374 = vpop.f32.mrb[0].mxu0
        %v2375 = vpop.f32.mrb[0].mxu0
        %v2376 = vadd.f32 %v2279, %v2375
        %v2377 = vpop.f32.mrb[0].mxu0
        %2378 = vmatprep.mubr.bf16.mxu0 0
        %2379 = vmatmul.mubr.bf16.gmra.mrb[0].mxu0 %v985
        %v2380 = vpop.f32.mrb[0].mxu0
        %v2381 = vadd.f32 %v2284, %v2380
        %v2382 = vpop.f32.mrb[0].mxu0
        %v2383 = vpop.f32.mrb[0].mxu0
        %v2384 = vadd.f32 %v2287, %v2383
        %v2385 = vpop.f32.mrb[0].mxu0
        %2386 = vmatprep.mubr.bf16.mxu0 0
        %2387 = vmatmul.mubr.bf16.gmra.mrb[0].mxu0 %v988
        %v2388 = vpop.f32.mrb[0].mxu0
        %v2389 = vadd.f32 %v2292, %v2388
        %v2390 = vpop.f32.mrb[0].mxu0
        %v2391 = vpop.f32.mrb[0].mxu0
        %v2392 = vadd.f32 %v2295, %v2391
        %v2393 = vpop.f32.mrb[0].mxu0
        %2394 = vmatprep.mubr.bf16.mxu0 0
        %2395 = vmatmul.mubr.bf16.gmra.mrb[0].mxu0 %v991
        %v2396 = vpop.f32.mrb[0].mxu0
        %v2397 = vadd.f32 %v2300, %v2396
        %v2398 = vpop.f32.mrb[0].mxu0
        %v2399 = vpop.f32.mrb[0].mxu0
        %v2400 = vadd.f32 %v2303, %v2399
        %v2401 = vpop.f32.mrb[0].mxu0
        %2402 = vdwg.mxu0
        %v2403 = vtanh.pop %v2131
        %v2404 = vtanh.pop %v2133
        %v2405 = vtanh.pop %v2341
        %v2406 = vtanh.pop %v2135
        %v2407 = vtanh.pop %v2137
        %v2408 = vtanh.pop %v2344
        %v2409 = vtanh.pop %v2141
        %v2410 = vtanh.pop %v2143
        %v2411 = vtanh.pop %v2349
        %v2412 = vtanh.pop %v2145
        %v2413 = vtanh.pop %v2147
        %v2414 = vtanh.pop %v2352
        %v2415 = vtanh.pop %v2151
        %v2416 = vtanh.pop %v2153
        %v2417 = vtanh.pop %v2357
        %v2418 = vtanh.pop %v2155
        %v2419 = vtanh.pop %v2157
        %v2420 = vtanh.pop %v2360
        %v2421 = vtanh.pop %v2161
        %v2422 = vtanh.pop %v2163
        %v2423 = vtanh.pop %v2365
        %v2424 = vtanh.pop %v2165
        %v2425 = vtanh.pop %v2167
        %v2426 = vtanh.pop %v2368
        %v2427 = vtanh.pop %v2171
        %v2428 = vtanh.pop %v2173
        %v2429 = vtanh.pop %v2373
        %v2430 = vtanh.pop %v2175
        %v2431 = vtanh.pop %v2177
        %v2432 = vtanh.pop %v2376
        %v2433 = vtanh.pop %v2181
        %v2434 = vtanh.pop %v2183
        %v2435 = vtanh.pop %v2381
        %v2436 = vtanh.pop %v2185
        %v2437 = vtanh.pop %v2187
        %v2438 = vtanh.pop %v2384
        %v2439 = vtanh.pop %v2191
        %v2440 = vtanh.pop %v2193
        %v2441 = vtanh.pop %v2389
        %v2442 = vtanh.pop %v2195
        %v2443 = vtanh.pop %v2197
        %v2444 = vtanh.pop %v2392
        %v2445 = vtanh.pop %v2201
        %v2446 = vtanh.pop %v2203
        %v2447 = vtanh.pop %v2397
        %v2448 = vtanh.pop %v2205
        %v2449 = vtanh.pop %v2207
        %v2450 = vtanh.pop %v2400
        %v2451 = vpack.c.bf16 %v2406, %v2403
        %v2452 = vpack.c.bf16 %v2407, %v2404
        %v2453 = vpack.c.bf16 %v2408, %v2405
        %v2454 = vpack.c.bf16 %v2412, %v2409
        %v2455 = vpack.c.bf16 %v2413, %v2410
        %v2456 = vpack.c.bf16 %v2414, %v2411
        %v2457 = vpack.c.bf16 %v2418, %v2415
        %v2458 = vpack.c.bf16 %v2419, %v2416
        %v2459 = vpack.c.bf16 %v2420, %v2417
        %v2460 = vpack.c.bf16 %v2424, %v2421
        %v2461 = vpack.c.bf16 %v2425, %v2422
        %v2462 = vpack.c.bf16 %v2426, %v2423
        %v2463 = vpack.c.bf16 %v2430, %v2427
        %v2464 = vpack.c.bf16 %v2431, %v2428
        %v2465 = vpack.c.bf16 %v2432, %v2429
        %v2466 = vpack.c.bf16 %v2436, %v2433
        %v2467 = vpack.c.bf16 %v2437, %v2434
        %v2468 = vpack.c.bf16 %v2438, %v2435
        %v2469 = vpack.c.bf16 %v2442, %v2439
        %v2470 = vpack.c.bf16 %v2443, %v2440
        %v2471 = vpack.c.bf16 %v2444, %v2441
        %v2472 = vpack.c.bf16 %v2448, %v2445
        %v2473 = vpack.c.bf16 %v2449, %v2446
        %v2474 = vpack.c.bf16 %v2450, %v2447
        %s2475 = scalar_lea.vmem [#allocation2], 1152
        %v2476 = vld [vmem:[%s2475] sm:$0xff]
        %v2477 = vld [vmem:[%s2475 + $0x8] sm:$0xf]
        %v2478 = vld [vmem:[%s2475 + $0xc] sm:$0xff]
        %v2479 = vld [vmem:[%s2475 + $0x14] sm:$0xf]
        %v2480 = vld [vmem:[%s2475 + $0x18] sm:$0xff]
        %v2481 = vld [vmem:[%s2475 + $0x20] sm:$0xf]
        %v2482 = vld [vmem:[%s2475 + $0x24] sm:$0xff]
        %v2483 = vld [vmem:[%s2475 + $0x2c] sm:$0xf]
        %v2484 = vld [vmem:[%s2475 + $0x30] sm:$0xff]
        %v2485 = vld [vmem:[%s2475 + $0x38] sm:$0xf]
        %v2486 = vld [vmem:[%s2475 + $0x3c] sm:$0xff]
        %v2487 = vld [vmem:[%s2475 + $0x44] sm:$0xf]
        %v2488 = vld [vmem:[%s2475 + $0x48] sm:$0xff]
        %v2489 = vld [vmem:[%s2475 + $0x50] sm:$0xf]
        %v2490 = vld [vmem:[%s2475 + $0x54] sm:$0xff]
        %v2491 = vld [vmem:[%s2475 + $0x5c] sm:$0xf]
        %v2492 = vld [vmem:[%s2475 + $0x60] sm:$0xff]
        %v2493 = vld [vmem:[%s2475 + $0x68] sm:$0xf]
        %v2494 = vld [vmem:[%s2475 + $0x6c] sm:$0xff]
        %v2495 = vld [vmem:[%s2475 + $0x74] sm:$0xf]
        %v2496 = vld [vmem:[%s2475 + $0x78] sm:$0xff]
        %v2497 = vld [vmem:[%s2475 + $0x80] sm:$0xf]
        %v2498 = vld [vmem:[%s2475 + $0x84] sm:$0xff]
        %v2499 = vld [vmem:[%s2475 + $0x8c] sm:$0xf]
        %v2500 = vld [vmem:[%s2475 + $0x90] sm:$0xff]
        %v2501 = vld [vmem:[%s2475 + $0x98] sm:$0xf]
        %v2502 = vld [vmem:[%s2475 + $0x9c] sm:$0xff]
        %v2503 = vld [vmem:[%s2475 + $0xa4] sm:$0xf]
        %v2504 = vld [vmem:[%s2475 + $0xa8] sm:$0xff]
        %v2505 = vld [vmem:[%s2475 + $0xb0] sm:$0xf]
        %v2506 = vld [vmem:[%s2475 + $0xb4] sm:$0xff]
        %v2507 = vld [vmem:[%s2475 + $0xbc] sm:$0xf]
        %v2508 = vld [vmem:[%s2475 + $0xc0] sm:$0xff]
        %v2509 = vld [vmem:[%s2475 + $0xc8] sm:$0xf]
        %v2510 = vld [vmem:[%s2475 + $0xcc] sm:$0xff]
        %v2511 = vld [vmem:[%s2475 + $0xd4] sm:$0xf]
        %v2512 = vld [vmem:[%s2475 + $0xd8] sm:$0xff]
        %v2513 = vld [vmem:[%s2475 + $0xe0] sm:$0xf]
        %v2514 = vld [vmem:[%s2475 + $0xe4] sm:$0xff]
        %v2515 = vld [vmem:[%s2475 + $0xec] sm:$0xf]
        %v2516 = vld [vmem:[%s2475 + $0xf0] sm:$0xff]
        %v2517 = vld [vmem:[%s2475 + $0xf8] sm:$0xf]
        %v2518 = vld [vmem:[%s2475 + $0xfc] sm:$0xff]
        %v2519 = vld [vmem:[%s2475 + $0x104] sm:$0xf]
        %v2520 = vld [vmem:[%s2475 + $0x108] sm:$0xff]
        %v2521 = vld [vmem:[%s2475 + $0x110] sm:$0xf]
        %v2522 = vld [vmem:[%s2475 + $0x114] sm:$0xff]
        %v2523 = vld [vmem:[%s2475 + $0x11c] sm:$0xf]
        %v2524 = vld [vmem:[%s2475 + $0x120] sm:$0xff]
        %v2525 = vld [vmem:[%s2475 + $0x128] sm:$0xf]
        %v2526 = vld [vmem:[%s2475 + $0x12c] sm:$0xff]
        %v2527 = vld [vmem:[%s2475 + $0x134] sm:$0xf]
        %v2528 = vld [vmem:[%s2475 + $0x138] sm:$0xff]
        %v2529 = vld [vmem:[%s2475 + $0x140] sm:$0xf]
        %v2530 = vld [vmem:[%s2475 + $0x144] sm:$0xff]
        %v2531 = vld [vmem:[%s2475 + $0x14c] sm:$0xf]
        %v2532 = vld [vmem:[%s2475 + $0x150] sm:$0xff]
        %v2533 = vld [vmem:[%s2475 + $0x158] sm:$0xf]
        %v2534 = vld [vmem:[%s2475 + $0x15c] sm:$0xff]
        %v2535 = vld [vmem:[%s2475 + $0x164] sm:$0xf]
        %v2536 = vld [vmem:[%s2475 + $0x168] sm:$0xff]
        %v2537 = vld [vmem:[%s2475 + $0x170] sm:$0xf]
        %v2538 = vld [vmem:[%s2475 + $0x174] sm:$0xff]
        %v2539 = vld [vmem:[%s2475 + $0x17c] sm:$0xf]
        %v2540 = vld [vmem:[%s2475 + $0x180] sm:$0xff]
        %v2541 = vld [vmem:[%s2475 + $0x188] sm:$0xf]
        %v2542 = vld [vmem:[%s2475 + $0x18c] sm:$0xff]
        %v2543 = vld [vmem:[%s2475 + $0x194] sm:$0xf]
        %v2544 = vld [vmem:[%s2475 + $0x198] sm:$0xff]
        %v2545 = vld [vmem:[%s2475 + $0x1a0] sm:$0xf]
        %v2546 = vld [vmem:[%s2475 + $0x1a4] sm:$0xff]
        %v2547 = vld [vmem:[%s2475 + $0x1ac] sm:$0xf]
        %v2548 = vld [vmem:[%s2475 + $0x1b0] sm:$0xff]
        %v2549 = vld [vmem:[%s2475 + $0x1b8] sm:$0xf]
        %v2550 = vld [vmem:[%s2475 + $0x1bc] sm:$0xff]
        %v2551 = vld [vmem:[%s2475 + $0x1c4] sm:$0xf]
        %v2552 = vld [vmem:[%s2475 + $0x1c8] sm:$0xff]
        %v2553 = vld [vmem:[%s2475 + $0x1d0] sm:$0xf]
        %v2554 = vld [vmem:[%s2475 + $0x1d4] sm:$0xff]
        %v2555 = vld [vmem:[%s2475 + $0x1dc] sm:$0xf]
        %v2556 = vld [vmem:[%s2475 + $0x1e0] sm:$0xff]
        %v2557 = vld [vmem:[%s2475 + $0x1e8] sm:$0xf]
        %v2558 = vld [vmem:[%s2475 + $0x1ec] sm:$0xff]
        %v2559 = vld [vmem:[%s2475 + $0x1f4] sm:$0xf]
        %v2560 = vld [vmem:[%s2475 + $0x1f8] sm:$0xff]
        %v2561 = vld [vmem:[%s2475 + $0x200] sm:$0xf]
        %v2562 = vld [vmem:[%s2475 + $0x204] sm:$0xff]
        %v2563 = vld [vmem:[%s2475 + $0x20c] sm:$0xf]
        %v2564 = vld [vmem:[%s2475 + $0x210] sm:$0xff]
        %v2565 = vld [vmem:[%s2475 + $0x218] sm:$0xf]
        %v2566 = vld [vmem:[%s2475 + $0x21c] sm:$0xff]
        %v2567 = vld [vmem:[%s2475 + $0x224] sm:$0xf]
        %v2568 = vld [vmem:[%s2475 + $0x228] sm:$0xff]
        %v2569 = vld [vmem:[%s2475 + $0x230] sm:$0xf]
        %v2570 = vld [vmem:[%s2475 + $0x234] sm:$0xff]
        %v2571 = vld [vmem:[%s2475 + $0x23c] sm:$0xf]
        %s2572 = scalar_lea.vmem [#allocation4], 2
        %v2573 = vld [vmem:[%s2572] ss:$8 sm:$0x7]
        %v2575 = vlaneseq
        %v2576 = vshrl.u32 %v2575, 7
        %v2577 = vsub.s32 0, %v2576
        %v2578 = vrot.slane %v2573, %v2577
        %v2579 = vlaneseq
        %v2580 = vshrl.u32 %v2579, 7
        %v2581 = vsub.s32 1, %v2580
        %v2582 = vrot.slane %v2573, %v2581
        %v2583 = vlaneseq
        %v2584 = vshrl.u32 %v2583, 7
        %v2585 = vsub.s32 2, %v2584
        %v2586 = vrot.slane %v2573, %v2585
        %v2686 = vunpack.c.l.b16 %v2476
        %v2687 = vunpack.c.h.b16 %v2476
        %v2688 = vunpack.c.l.b16 %v2477
        %v2689 = vunpack.c.l.b16 %v2478
        %v2690 = vunpack.c.h.b16 %v2478
        %v2691 = vunpack.c.l.b16 %v2479
        %v2692 = vunpack.c.l.b16 %v2480
        %v2693 = vunpack.c.h.b16 %v2480
        %v2694 = vunpack.c.l.b16 %v2481
        %v2695 = vunpack.c.l.b16 %v2482
        %v2696 = vunpack.c.h.b16 %v2482
        %v2697 = vunpack.c.l.b16 %v2483
        %v2698 = vunpack.c.l.b16 %v2484
        %v2699 = vunpack.c.h.b16 %v2484
        %v2700 = vunpack.c.l.b16 %v2485
        %v2701 = vunpack.c.l.b16 %v2486
        %v2702 = vunpack.c.h.b16 %v2486
        %v2703 = vunpack.c.l.b16 %v2487
        %v2704 = vunpack.c.l.b16 %v2488
        %v2705 = vunpack.c.h.b16 %v2488
        %v2706 = vunpack.c.l.b16 %v2489
        %v2707 = vunpack.c.l.b16 %v2490
        %v2708 = vunpack.c.h.b16 %v2490
        %v2709 = vunpack.c.l.b16 %v2491
        %v2710 = vunpack.c.l.b16 %v2492
        %v2711 = vunpack.c.h.b16 %v2492
        %v2712 = vunpack.c.l.b16 %v2493
        %v2713 = vunpack.c.l.b16 %v2494
        %v2714 = vunpack.c.h.b16 %v2494
        %v2715 = vunpack.c.l.b16 %v2495
        %v2716 = vunpack.c.l.b16 %v2496
        %v2717 = vunpack.c.h.b16 %v2496
        %v2718 = vunpack.c.l.b16 %v2497
        %v2719 = vunpack.c.l.b16 %v2498
        %v2720 = vunpack.c.h.b16 %v2498
        %v2721 = vunpack.c.l.b16 %v2499
        %v2722 = vunpack.c.l.b16 %v2500
        %v2723 = vunpack.c.h.b16 %v2500
        %v2724 = vunpack.c.l.b16 %v2501
        %v2725 = vunpack.c.l.b16 %v2502
        %v2726 = vunpack.c.h.b16 %v2502
        %v2727 = vunpack.c.l.b16 %v2503
        %v2728 = vunpack.c.l.b16 %v2504
        %v2729 = vunpack.c.h.b16 %v2504
        %v2730 = vunpack.c.l.b16 %v2505
        %v2731 = vunpack.c.l.b16 %v2506
        %v2732 = vunpack.c.h.b16 %v2506
        %v2733 = vunpack.c.l.b16 %v2507
        %v2734 = vunpack.c.l.b16 %v2508
        %v2735 = vunpack.c.h.b16 %v2508
        %v2736 = vunpack.c.l.b16 %v2509
        %v2737 = vunpack.c.l.b16 %v2510
        %v2738 = vunpack.c.h.b16 %v2510
        %v2739 = vunpack.c.l.b16 %v2511
        %v2740 = vunpack.c.l.b16 %v2512
        %v2741 = vunpack.c.h.b16 %v2512
        %v2742 = vunpack.c.l.b16 %v2513
        %v2743 = vunpack.c.l.b16 %v2514
        %v2744 = vunpack.c.h.b16 %v2514
        %v2745 = vunpack.c.l.b16 %v2515
        %v2746 = vunpack.c.l.b16 %v2516
        %v2747 = vunpack.c.h.b16 %v2516
        %v2748 = vunpack.c.l.b16 %v2517
        %v2749 = vunpack.c.l.b16 %v2518
        %v2750 = vunpack.c.h.b16 %v2518
        %v2751 = vunpack.c.l.b16 %v2519
        %v2752 = vunpack.c.l.b16 %v2520
        %v2753 = vunpack.c.h.b16 %v2520
        %v2754 = vunpack.c.l.b16 %v2521
        %v2755 = vunpack.c.l.b16 %v2522
        %v2756 = vunpack.c.h.b16 %v2522
        %v2757 = vunpack.c.l.b16 %v2523
        %v2758 = vunpack.c.l.b16 %v2524
        %v2759 = vunpack.c.h.b16 %v2524
        %v2760 = vunpack.c.l.b16 %v2525
        %v2761 = vunpack.c.l.b16 %v2526
        %v2762 = vunpack.c.h.b16 %v2526
        %v2763 = vunpack.c.l.b16 %v2527
        %v2764 = vunpack.c.l.b16 %v2528
        %v2765 = vunpack.c.h.b16 %v2528
        %v2766 = vunpack.c.l.b16 %v2529
        %v2767 = vunpack.c.l.b16 %v2530
        %v2768 = vunpack.c.h.b16 %v2530
        %v2769 = vunpack.c.l.b16 %v2531
        %v2770 = vunpack.c.l.b16 %v2532
        %v2771 = vunpack.c.h.b16 %v2532
        %v2772 = vunpack.c.l.b16 %v2533
        %v2773 = vunpack.c.l.b16 %v2534
        %v2774 = vunpack.c.h.b16 %v2534
        %v2775 = vunpack.c.l.b16 %v2535
        %v2776 = vunpack.c.l.b16 %v2536
        %v2777 = vunpack.c.h.b16 %v2536
        %v2778 = vunpack.c.l.b16 %v2537
        %v2779 = vunpack.c.l.b16 %v2538
        %v2780 = vunpack.c.h.b16 %v2538
        %v2781 = vunpack.c.l.b16 %v2539
        %v2782 = vunpack.c.l.b16 %v2540
        %v2783 = vunpack.c.h.b16 %v2540
        %v2784 = vunpack.c.l.b16 %v2541
        %v2785 = vunpack.c.l.b16 %v2542
        %v2786 = vunpack.c.h.b16 %v2542
        %v2787 = vunpack.c.l.b16 %v2543
        %v2788 = vunpack.c.l.b16 %v2544
        %v2789 = vunpack.c.h.b16 %v2544
        %v2790 = vunpack.c.l.b16 %v2545
        %v2791 = vunpack.c.l.b16 %v2546
        %v2792 = vunpack.c.h.b16 %v2546
        %v2793 = vunpack.c.l.b16 %v2547
        %v2794 = vunpack.c.l.b16 %v2548
        %v2795 = vunpack.c.h.b16 %v2548
        %v2796 = vunpack.c.l.b16 %v2549
        %v2797 = vunpack.c.l.b16 %v2550
        %v2798 = vunpack.c.h.b16 %v2550
        %v2799 = vunpack.c.l.b16 %v2551
        %v2800 = vunpack.c.l.b16 %v2552
        %v2801 = vunpack.c.h.b16 %v2552
        %v2802 = vunpack.c.l.b16 %v2553
        %v2803 = vunpack.c.l.b16 %v2554
        %v2804 = vunpack.c.h.b16 %v2554
        %v2805 = vunpack.c.l.b16 %v2555
        %v2806 = vunpack.c.l.b16 %v2556
        %v2807 = vunpack.c.h.b16 %v2556
        %v2808 = vunpack.c.l.b16 %v2557
        %v2809 = vunpack.c.l.b16 %v2558
        %v2810 = vunpack.c.h.b16 %v2558
        %v2811 = vunpack.c.l.b16 %v2559
        %v2812 = vunpack.c.l.b16 %v2560
        %v2813 = vunpack.c.h.b16 %v2560
        %v2814 = vunpack.c.l.b16 %v2561
        %v2815 = vunpack.c.l.b16 %v2562
        %v2816 = vunpack.c.h.b16 %v2562
        %v2817 = vunpack.c.l.b16 %v2563
        %v2818 = vunpack.c.l.b16 %v2564
        %v2819 = vunpack.c.h.b16 %v2564
        %v2820 = vunpack.c.l.b16 %v2565
        %v2821 = vunpack.c.l.b16 %v2566
        %v2822 = vunpack.c.h.b16 %v2566
        %v2823 = vunpack.c.l.b16 %v2567
        %v2824 = vunpack.c.l.b16 %v2568
        %v2825 = vunpack.c.h.b16 %v2568
        %v2826 = vunpack.c.l.b16 %v2569
        %v2827 = vunpack.c.l.b16 %v2570
        %v2828 = vunpack.c.h.b16 %v2570
        %v2829 = vunpack.c.l.b16 %v2571
        %v2830 = vpack.c.b16 %v2689, %v2686
        %v2831 = vpack.c.b16 %v2690, %v2687
        %v2832 = vpack.c.b16 %v2691, %v2688
        %v2833 = vpack.c.b16 %v2695, %v2692
        %v2834 = vpack.c.b16 %v2696, %v2693
        %v2835 = vpack.c.b16 %v2697, %v2694
        %v2836 = vpack.c.b16 %v2701, %v2698
        %v2837 = vpack.c.b16 %v2702, %v2699
        %v2838 = vpack.c.b16 %v2703, %v2700
        %v2839 = vpack.c.b16 %v2707, %v2704
        %v2840 = vpack.c.b16 %v2708, %v2705
        %v2841 = vpack.c.b16 %v2709, %v2706
        %v2842 = vpack.c.b16 %v2713, %v2710
        %v2843 = vpack.c.b16 %v2714, %v2711
        %v2844 = vpack.c.b16 %v2715, %v2712
        %v2845 = vpack.c.b16 %v2719, %v2716
        %v2846 = vpack.c.b16 %v2720, %v2717
        %v2847 = vpack.c.b16 %v2721, %v2718
        %v2848 = vpack.c.b16 %v2725, %v2722
        %v2849 = vpack.c.b16 %v2726, %v2723
        %v2850 = vpack.c.b16 %v2727, %v2724
        %v2851 = vpack.c.b16 %v2731, %v2728
        %v2852 = vpack.c.b16 %v2732, %v2729
        %v2853 = vpack.c.b16 %v2733, %v2730
        %v2854 = vpack.c.b16 %v2737, %v2734
        %v2855 = vpack.c.b16 %v2738, %v2735
        %v2856 = vpack.c.b16 %v2739, %v2736
        %v2857 = vpack.c.b16 %v2743, %v2740
        %v2858 = vpack.c.b16 %v2744, %v2741
        %v2859 = vpack.c.b16 %v2745, %v2742
        %v2860 = vpack.c.b16 %v2749, %v2746
        %v2861 = vpack.c.b16 %v2750, %v2747
        %v2862 = vpack.c.b16 %v2751, %v2748
        %v2863 = vpack.c.b16 %v2755, %v2752
        %v2864 = vpack.c.b16 %v2756, %v2753
        %v2865 = vpack.c.b16 %v2757, %v2754
        %v2866 = vpack.c.b16 %v2761, %v2758
        %v2867 = vpack.c.b16 %v2762, %v2759
        %v2868 = vpack.c.b16 %v2763, %v2760
        %v2869 = vpack.c.b16 %v2767, %v2764
        %v2870 = vpack.c.b16 %v2768, %v2765
        %v2871 = vpack.c.b16 %v2769, %v2766
        %v2872 = vpack.c.b16 %v2773, %v2770
        %v2873 = vpack.c.b16 %v2774, %v2771
        %v2874 = vpack.c.b16 %v2775, %v2772
        %v2875 = vpack.c.b16 %v2779, %v2776
        %v2876 = vpack.c.b16 %v2780, %v2777
        %v2877 = vpack.c.b16 %v2781, %v2778
        %v2878 = vpack.c.b16 %v2785, %v2782
        %v2879 = vpack.c.b16 %v2786, %v2783
        %v2880 = vpack.c.b16 %v2787, %v2784
        %v2881 = vpack.c.b16 %v2791, %v2788
        %v2882 = vpack.c.b16 %v2792, %v2789
        %v2883 = vpack.c.b16 %v2793, %v2790
        %v2884 = vpack.c.b16 %v2797, %v2794
        %v2885 = vpack.c.b16 %v2798, %v2795
        %v2886 = vpack.c.b16 %v2799, %v2796
        %v2887 = vpack.c.b16 %v2803, %v2800
        %v2888 = vpack.c.b16 %v2804, %v2801
        %v2889 = vpack.c.b16 %v2805, %v2802
        %v2890 = vpack.c.b16 %v2809, %v2806
        %v2891 = vpack.c.b16 %v2810, %v2807
        %v2892 = vpack.c.b16 %v2811, %v2808
        %v2893 = vpack.c.b16 %v2815, %v2812
        %v2894 = vpack.c.b16 %v2816, %v2813
        %v2895 = vpack.c.b16 %v2817, %v2814
        %v2896 = vpack.c.b16 %v2821, %v2818
        %v2897 = vpack.c.b16 %v2822, %v2819
        %v2898 = vpack.c.b16 %v2823, %v2820
        %v2899 = vpack.c.b16 %v2827, %v2824
        %v2900 = vpack.c.b16 %v2828, %v2825
        %v2901 = vpack.c.b16 %v2829, %v2826
        %2974 = vmatprep.subr.bf16.mxu0 %v2831
        %2975 = vmatpush1.bf16.msra.mxu0 %v2830
        %2976 = vmatprep.subr.bf16.mxu0 %v2834
        %2977 = vmatpush1.bf16.msra.mxu0 %v2833
        %2978 = vmatprep.subr.bf16.mxu0 %v2837
        %2979 = vmatpush1.bf16.msra.mxu0 %v2836
        %2980 = vmatprep.subr.bf16.mxu0 %v2840
        %2981 = vmatpush1.bf16.msra.mxu0 %v2839
        %2982 = vmatprep.subr.bf16.mxu0 %v2843
        %2983 = vmatpush1.bf16.msra.mxu0 %v2842
        %2984 = vmatprep.subr.bf16.mxu0 %v2846
        %2985 = vmatpush1.bf16.msra.mxu0 %v2845
        %2986 = vmatprep.subr.bf16.mxu0 %v2849
        %2987 = vmatpush1.bf16.msra.mxu0 %v2848
        %2988 = vmatprep.subr.bf16.mxu0 %v2852
        %2989 = vmatpush1.bf16.msra.mxu0 %v2851
        %2990 = vmatprep.subr.bf16.mxu0 %v2855
        %2991 = vmatpush1.bf16.msra.mxu0 %v2854
        %2992 = vmatprep.subr.bf16.mxu0 %v2858
        %2993 = vmatpush1.bf16.msra.mxu0 %v2857
        %2994 = vmatprep.subr.bf16.mxu0 %v2861
        %2995 = vmatpush1.bf16.msra.mxu0 %v2860
        %2996 = vmatprep.subr.bf16.mxu0 %v2864
        %2997 = vmatpush1.bf16.msra.mxu0 %v2863
        %2998 = vmatprep.subr.bf16.mxu0 %v2867
        %2999 = vmatpush1.bf16.msra.mxu0 %v2866
        %3000 = vmatprep.subr.bf16.mxu0 %v2870
        %3001 = vmatpush1.bf16.msra.mxu0 %v2869
        %3002 = vmatprep.subr.bf16.mxu0 %v2873
        %3003 = vmatpush1.bf16.msra.mxu0 %v2872
        %3004 = vmatprep.subr.bf16.mxu0 %v2876
        %3005 = vmatpush1.bf16.msra.mxu0 %v2875
        %3006 = vmatprep.mubr.bf16.mxu0 %v1960
        %3007 = vmatmul.mubr.bf16.gmra.mrb[0].mxu0 %v1959
        %v3008 = vpop.f32.mrb[0].mxu0
        %v3009 = vadd.f32 %v2578, %v3008
        %v3010 = vpop.f32.mrb[0].mxu0
        %v3011 = vadd.f32 %v2582, %v3010
        %v3012 = vpop.f32.mrb[0].mxu0
        %v3013 = vadd.f32 %v2578, %v3012
        %v3014 = vpop.f32.mrb[0].mxu0
        %v3015 = vadd.f32 %v2582, %v3014
        %3016 = vmatprep.mubr.bf16.mxu0 %v1963
        %3017 = vmatmul.mubr.bf16.gmra.mrb[0].mxu0 %v1962
        %v3018 = vpop.f32.mrb[0].mxu0
        %v3019 = vadd.f32 %v2578, %v3018
        %v3020 = vpop.f32.mrb[0].mxu0
        %v3021 = vadd.f32 %v2582, %v3020
        %v3022 = vpop.f32.mrb[0].mxu0
        %v3023 = vadd.f32 %v2578, %v3022
        %v3024 = vpop.f32.mrb[0].mxu0
        %v3025 = vadd.f32 %v2582, %v3024
        %3026 = vmatprep.mubr.bf16.mxu0 %v1966
        %3027 = vmatmul.mubr.bf16.gmra.mrb[0].mxu0 %v1965
        %v3028 = vpop.f32.mrb[0].mxu0
        %v3029 = vadd.f32 %v2578, %v3028
        %v3030 = vpop.f32.mrb[0].mxu0
        %v3031 = vadd.f32 %v2582, %v3030
        %v3032 = vpop.f32.mrb[0].mxu0
        %v3033 = vadd.f32 %v2578, %v3032
        %v3034 = vpop.f32.mrb[0].mxu0
        %v3035 = vadd.f32 %v2582, %v3034
        %3036 = vmatprep.mubr.bf16.mxu0 %v1969
        %3037 = vmatmul.mubr.bf16.gmra.mrb[0].mxu0 %v1968
        %v3038 = vpop.f32.mrb[0].mxu0
        %v3039 = vadd.f32 %v2578, %v3038
        %v3040 = vpop.f32.mrb[0].mxu0
        %v3041 = vadd.f32 %v2582, %v3040
        %v3042 = vpop.f32.mrb[0].mxu0
        %v3043 = vadd.f32 %v2578, %v3042
        %v3044 = vpop.f32.mrb[0].mxu0
        %v3045 = vadd.f32 %v2582, %v3044
        %3046 = vmatprep.mubr.bf16.mxu0 %v1972
        %3047 = vmatmul.mubr.bf16.gmra.mrb[0].mxu0 %v1971
        %v3048 = vpop.f32.mrb[0].mxu0
        %v3049 = vadd.f32 %v2578, %v3048
        %v3050 = vpop.f32.mrb[0].mxu0
        %v3051 = vadd.f32 %v2582, %v3050
        %v3052 = vpop.f32.mrb[0].mxu0
        %v3053 = vadd.f32 %v2578, %v3052
        %v3054 = vpop.f32.mrb[0].mxu0
        %v3055 = vadd.f32 %v2582, %v3054
        %3056 = vmatprep.mubr.bf16.mxu0 %v1975
        %3057 = vmatmul.mubr.bf16.gmra.mrb[0].mxu0 %v1974
        %v3058 = vpop.f32.mrb[0].mxu0
        %v3059 = vadd.f32 %v2578, %v3058
        %v3060 = vpop.f32.mrb[0].mxu0
        %v3061 = vadd.f32 %v2582, %v3060
        %v3062 = vpop.f32.mrb[0].mxu0
        %v3063 = vadd.f32 %v2578, %v3062
        %v3064 = vpop.f32.mrb[0].mxu0
        %v3065 = vadd.f32 %v2582, %v3064
        %3066 = vmatprep.mubr.bf16.mxu0 %v1978
        %3067 = vmatmul.mubr.bf16.gmra.mrb[0].mxu0 %v1977
        %v3068 = vpop.f32.mrb[0].mxu0
        %v3069 = vadd.f32 %v2578, %v3068
        %v3070 = vpop.f32.mrb[0].mxu0
        %v3071 = vadd.f32 %v2582, %v3070
        %v3072 = vpop.f32.mrb[0].mxu0
        %v3073 = vadd.f32 %v2578, %v3072
        %v3074 = vpop.f32.mrb[0].mxu0
        %v3075 = vadd.f32 %v2582, %v3074
        %3076 = vmatprep.mubr.bf16.mxu0 %v1981
        %3077 = vmatmul.mubr.bf16.gmra.mrb[0].mxu0 %v1980
        %v3078 = vpop.f32.mrb[0].mxu0
        %v3079 = vadd.f32 %v2578, %v3078
        %v3080 = vpop.f32.mrb[0].mxu0
        %v3081 = vadd.f32 %v2582, %v3080
        %v3082 = vpop.f32.mrb[0].mxu0
        %v3083 = vadd.f32 %v2578, %v3082
        %v3084 = vpop.f32.mrb[0].mxu0
        %v3085 = vadd.f32 %v2582, %v3084
        %3086 = vdwg.mxu0
        %3087 = vmatprep.subr.bf16.mxu0 %v2879
        %3088 = vmatpush1.bf16.msra.mxu0 %v2878
        %3089 = vmatprep.subr.bf16.mxu0 %v2882
        %3090 = vmatpush1.bf16.msra.mxu0 %v2881
        %3091 = vmatprep.subr.bf16.mxu0 %v2885
        %3092 = vmatpush1.bf16.msra.mxu0 %v2884
        %3093 = vmatprep.subr.bf16.mxu0 %v2888
        %3094 = vmatpush1.bf16.msra.mxu0 %v2887
        %3095 = vmatprep.subr.bf16.mxu0 %v2891
        %3096 = vmatpush1.bf16.msra.mxu0 %v2890
        %3097 = vmatprep.subr.bf16.mxu0 %v2894
        %3098 = vmatpush1.bf16.msra.mxu0 %v2893
        %3099 = vmatprep.subr.bf16.mxu0 %v2897
        %3100 = vmatpush1.bf16.msra.mxu0 %v2896
        %3101 = vmatprep.subr.bf16.mxu0 %v2900
        %3102 = vmatpush1.bf16.msra.mxu0 %v2899
        %3103 = vmatprep.subr.bf16.mxu0 0
        %3104 = vmatpush1.bf16.msra.mxu0 0
        %3105 = vmatprep.subr.bf16.mxu0 0
        %3106 = vmatpush1.bf16.msra.mxu0 0
        %3107 = vmatprep.subr.bf16.mxu0 0
        %3108 = vmatpush1.bf16.msra.mxu0 0
        %3109 = vmatprep.subr.bf16.mxu0 0
        %3110 = vmatpush1.bf16.msra.mxu0 0
        %3111 = vmatprep.subr.bf16.mxu0 0
        %3112 = vmatpush1.bf16.msra.mxu0 0
        %3113 = vmatprep.subr.bf16.mxu0 0
        %3114 = vmatpush1.bf16.msra.mxu0 0
        %3115 = vmatprep.subr.bf16.mxu0 0
        %3116 = vmatpush1.bf16.msra.mxu0 0
        %3117 = vmatprep.subr.bf16.mxu0 0
        %3118 = vmatpush1.bf16.msra.mxu0 0
        %3119 = vmatprep.mubr.bf16.mxu0 0
        %3120 = vmatmul.mubr.bf16.gmra.mrb[0].mxu0 %v1961
        %v3121 = vpop.f32.mrb[0].mxu0
        %v3122 = vadd.f32 %v3009, %v3121
        %v3123 = vpop.f32.mrb[0].mxu0
        %v3124 = vadd.f32 %v3011, %v3123
        %v3125 = vpop.f32.mrb[0].mxu0
        %v3126 = vadd.f32 %v3013, %v3125
        %v3127 = vpop.f32.mrb[0].mxu0
        %v3128 = vadd.f32 %v3015, %v3127
        %3129 = vmatprep.mubr.bf16.mxu0 0
        %3130 = vmatmul.mubr.bf16.gmra.mrb[0].mxu0 %v1964
        %v3131 = vpop.f32.mrb[0].mxu0
        %v3132 = vadd.f32 %v3019, %v3131
        %v3133 = vpop.f32.mrb[0].mxu0
        %v3134 = vadd.f32 %v3021, %v3133
        %v3135 = vpop.f32.mrb[0].mxu0
        %v3136 = vadd.f32 %v3023, %v3135
        %v3137 = vpop.f32.mrb[0].mxu0
        %v3138 = vadd.f32 %v3025, %v3137
        %3139 = vmatprep.mubr.bf16.mxu0 0
        %3140 = vmatmul.mubr.bf16.gmra.mrb[0].mxu0 %v1967
        %v3141 = vpop.f32.mrb[0].mxu0
        %v3142 = vadd.f32 %v3029, %v3141
        %v3143 = vpop.f32.mrb[0].mxu0
        %v3144 = vadd.f32 %v3031, %v3143
        %v3145 = vpop.f32.mrb[0].mxu0
        %v3146 = vadd.f32 %v3033, %v3145
        %v3147 = vpop.f32.mrb[0].mxu0
        %v3148 = vadd.f32 %v3035, %v3147
        %3149 = vmatprep.mubr.bf16.mxu0 0
        %3150 = vmatmul.mubr.bf16.gmra.mrb[0].mxu0 %v1970
        %v3151 = vpop.f32.mrb[0].mxu0
        %v3152 = vadd.f32 %v3039, %v3151
        %v3153 = vpop.f32.mrb[0].mxu0
        %v3154 = vadd.f32 %v3041, %v3153
        %v3155 = vpop.f32.mrb[0].mxu0
        %v3156 = vadd.f32 %v3043, %v3155
        %v3157 = vpop.f32.mrb[0].mxu0
        %v3158 = vadd.f32 %v3045, %v3157
        %3159 = vmatprep.mubr.bf16.mxu0 0
        %3160 = vmatmul.mubr.bf16.gmra.mrb[0].mxu0 %v1973
        %v3161 = vpop.f32.mrb[0].mxu0
        %v3162 = vadd.f32 %v3049, %v3161
        %v3163 = vpop.f32.mrb[0].mxu0
        %v3164 = vadd.f32 %v3051, %v3163
        %v3165 = vpop.f32.mrb[0].mxu0
        %v3166 = vadd.f32 %v3053, %v3165
        %v3167 = vpop.f32.mrb[0].mxu0
        %v3168 = vadd.f32 %v3055, %v3167
        %3169 = vmatprep.mubr.bf16.mxu0 0
        %3170 = vmatmul.mubr.bf16.gmra.mrb[0].mxu0 %v1976
        %v3171 = vpop.f32.mrb[0].mxu0
        %v3172 = vadd.f32 %v3059, %v3171
        %v3173 = vpop.f32.mrb[0].mxu0
        %v3174 = vadd.f32 %v3061, %v3173
        %v3175 = vpop.f32.mrb[0].mxu0
        %v3176 = vadd.f32 %v3063, %v3175
        %v3177 = vpop.f32.mrb[0].mxu0
        %v3178 = vadd.f32 %v3065, %v3177
        %3179 = vmatprep.mubr.bf16.mxu0 0
        %3180 = vmatmul.mubr.bf16.gmra.mrb[0].mxu0 %v1979
        %v3181 = vpop.f32.mrb[0].mxu0
        %v3182 = vadd.f32 %v3069, %v3181
        %v3183 = vpop.f32.mrb[0].mxu0
        %v3184 = vadd.f32 %v3071, %v3183
        %v3185 = vpop.f32.mrb[0].mxu0
        %v3186 = vadd.f32 %v3073, %v3185
        %v3187 = vpop.f32.mrb[0].mxu0
        %v3188 = vadd.f32 %v3075, %v3187
        %3189 = vmatprep.mubr.bf16.mxu0 0
        %3190 = vmatmul.mubr.bf16.gmra.mrb[0].mxu0 %v1982
        %v3191 = vpop.f32.mrb[0].mxu0
        %v3192 = vadd.f32 %v3079, %v3191
        %v3193 = vpop.f32.mrb[0].mxu0
        %v3194 = vadd.f32 %v3081, %v3193
        %v3195 = vpop.f32.mrb[0].mxu0
        %v3196 = vadd.f32 %v3083, %v3195
        %v3197 = vpop.f32.mrb[0].mxu0
        %v3198 = vadd.f32 %v3085, %v3197
        %3199 = vdwg.mxu0
        %3200 = vmatprep.subr.bf16.mxu0 0
        %3201 = vmatpush1.bf16.msra.mxu0 %v2832
        %3202 = vmatprep.subr.bf16.mxu0 0
        %3203 = vmatpush1.bf16.msra.mxu0 %v2835
        %3204 = vmatprep.subr.bf16.mxu0 0
        %3205 = vmatpush1.bf16.msra.mxu0 %v2838
        %3206 = vmatprep.subr.bf16.mxu0 0
        %3207 = vmatpush1.bf16.msra.mxu0 %v2841
        %3208 = vmatprep.subr.bf16.mxu0 0
        %3209 = vmatpush1.bf16.msra.mxu0 %v2844
        %3210 = vmatprep.subr.bf16.mxu0 0
        %3211 = vmatpush1.bf16.msra.mxu0 %v2847
        %3212 = vmatprep.subr.bf16.mxu0 0
        %3213 = vmatpush1.bf16.msra.mxu0 %v2850
        %3214 = vmatprep.subr.bf16.mxu0 0
        %3215 = vmatpush1.bf16.msra.mxu0 %v2853
        %3216 = vmatprep.subr.bf16.mxu0 0
        %3217 = vmatpush1.bf16.msra.mxu0 %v2856
        %3218 = vmatprep.subr.bf16.mxu0 0
        %3219 = vmatpush1.bf16.msra.mxu0 %v2859
        %3220 = vmatprep.subr.bf16.mxu0 0
        %3221 = vmatpush1.bf16.msra.mxu0 %v2862
        %3222 = vmatprep.subr.bf16.mxu0 0
        %3223 = vmatpush1.bf16.msra.mxu0 %v2865
        %3224 = vmatprep.subr.bf16.mxu0 0
        %3225 = vmatpush1.bf16.msra.mxu0 %v2868
        %3226 = vmatprep.subr.bf16.mxu0 0
        %3227 = vmatpush1.bf16.msra.mxu0 %v2871
        %3228 = vmatprep.subr.bf16.mxu0 0
        %3229 = vmatpush1.bf16.msra.mxu0 %v2874
        %3230 = vmatprep.subr.bf16.mxu0 0
        %3231 = vmatpush1.bf16.msra.mxu0 %v2877
        %3232 = vmatprep.mubr.bf16.mxu0 %v1960
        %3233 = vmatmul.mubr.bf16.gmra.mrb[0].mxu0 %v1959
        %v3234 = vpop.f32.mrb[0].mxu0
        %v3235 = vadd.f32 %v2586, %v3234
        %v3236 = vpop.f32.mrb[0].mxu0
        %v3237 = vpop.f32.mrb[0].mxu0
        %v3238 = vadd.f32 %v2586, %v3237
        %v3239 = vpop.f32.mrb[0].mxu0
        %3240 = vmatprep.mubr.bf16.mxu0 %v1963
        %3241 = vmatmul.mubr.bf16.gmra.mrb[0].mxu0 %v1962
        %v3242 = vpop.f32.mrb[0].mxu0
        %v3243 = vadd.f32 %v2586, %v3242
        %v3244 = vpop.f32.mrb[0].mxu0
        %v3245 = vpop.f32.mrb[0].mxu0
        %v3246 = vadd.f32 %v2586, %v3245
        %v3247 = vpop.f32.mrb[0].mxu0
        %3248 = vmatprep.mubr.bf16.mxu0 %v1966
        %3249 = vmatmul.mubr.bf16.gmra.mrb[0].mxu0 %v1965
        %v3250 = vpop.f32.mrb[0].mxu0
        %v3251 = vadd.f32 %v2586, %v3250
        %v3252 = vpop.f32.mrb[0].mxu0
        %v3253 = vpop.f32.mrb[0].mxu0
        %v3254 = vadd.f32 %v2586, %v3253
        %v3255 = vpop.f32.mrb[0].mxu0
        %3256 = vmatprep.mubr.bf16.mxu0 %v1969
        %3257 = vmatmul.mubr.bf16.gmra.mrb[0].mxu0 %v1968
        %v3258 = vpop.f32.mrb[0].mxu0
        %v3259 = vadd.f32 %v2586, %v3258
        %v3260 = vpop.f32.mrb[0].mxu0
        %v3261 = vpop.f32.mrb[0].mxu0
        %v3262 = vadd.f32 %v2586, %v3261
        %v3263 = vpop.f32.mrb[0].mxu0
        %3264 = vmatprep.mubr.bf16.mxu0 %v1972
        %3265 = vmatmul.mubr.bf16.gmra.mrb[0].mxu0 %v1971
        %v3266 = vpop.f32.mrb[0].mxu0
        %v3267 = vadd.f32 %v2586, %v3266
        %v3268 = vpop.f32.mrb[0].mxu0
        %v3269 = vpop.f32.mrb[0].mxu0
        %v3270 = vadd.f32 %v2586, %v3269
        %v3271 = vpop.f32.mrb[0].mxu0
        %3272 = vmatprep.mubr.bf16.mxu0 %v1975
        %3273 = vmatmul.mubr.bf16.gmra.mrb[0].mxu0 %v1974
        %v3274 = vpop.f32.mrb[0].mxu0
        %v3275 = vadd.f32 %v2586, %v3274
        %v3276 = vpop.f32.mrb[0].mxu0
        %v3277 = vpop.f32.mrb[0].mxu0
        %v3278 = vadd.f32 %v2586, %v3277
        %v3279 = vpop.f32.mrb[0].mxu0
        %3280 = vmatprep.mubr.bf16.mxu0 %v1978
        %3281 = vmatmul.mubr.bf16.gmra.mrb[0].mxu0 %v1977
        %v3282 = vpop.f32.mrb[0].mxu0
        %v3283 = vadd.f32 %v2586, %v3282
        %v3284 = vpop.f32.mrb[0].mxu0
        %v3285 = vpop.f32.mrb[0].mxu0
        %v3286 = vadd.f32 %v2586, %v3285
        %v3287 = vpop.f32.mrb[0].mxu0
        %3288 = vmatprep.mubr.bf16.mxu0 %v1981
        %3289 = vmatmul.mubr.bf16.gmra.mrb[0].mxu0 %v1980
        %v3290 = vpop.f32.mrb[0].mxu0
        %v3291 = vadd.f32 %v2586, %v3290
        %v3292 = vpop.f32.mrb[0].mxu0
        %v3293 = vpop.f32.mrb[0].mxu0
        %v3294 = vadd.f32 %v2586, %v3293
        %v3295 = vpop.f32.mrb[0].mxu0
        %3296 = vdwg.mxu0
        %3297 = vmatprep.subr.bf16.mxu0 0
        %3298 = vmatpush1.bf16.msra.mxu0 %v2880
        %3299 = vmatprep.subr.bf16.mxu0 0
        %3300 = vmatpush1.bf16.msra.mxu0 %v2883
        %3301 = vmatprep.subr.bf16.mxu0 0
        %3302 = vmatpush1.bf16.msra.mxu0 %v2886
        %3303 = vmatprep.subr.bf16.mxu0 0
        %3304 = vmatpush1.bf16.msra.mxu0 %v2889
        %3305 = vmatprep.subr.bf16.mxu0 0
        %3306 = vmatpush1.bf16.msra.mxu0 %v2892
        %3307 = vmatprep.subr.bf16.mxu0 0
        %3308 = vmatpush1.bf16.msra.mxu0 %v2895
        %3309 = vmatprep.subr.bf16.mxu0 0
        %3310 = vmatpush1.bf16.msra.mxu0 %v2898
        %3311 = vmatprep.subr.bf16.mxu0 0
        %3312 = vmatpush1.bf16.msra.mxu0 %v2901
        %3313 = vmatprep.subr.bf16.mxu0 0
        %3314 = vmatpush1.bf16.msra.mxu0 0
        %3315 = vmatprep.subr.bf16.mxu0 0
        %3316 = vmatpush1.bf16.msra.mxu0 0
        %3317 = vmatprep.subr.bf16.mxu0 0
        %3318 = vmatpush1.bf16.msra.mxu0 0
        %3319 = vmatprep.subr.bf16.mxu0 0
        %3320 = vmatpush1.bf16.msra.mxu0 0
        %3321 = vmatprep.subr.bf16.mxu0 0
        %3322 = vmatpush1.bf16.msra.mxu0 0
        %3323 = vmatprep.subr.bf16.mxu0 0
        %3324 = vmatpush1.bf16.msra.mxu0 0
        %3325 = vmatprep.subr.bf16.mxu0 0
        %3326 = vmatpush1.bf16.msra.mxu0 0
        %3327 = vmatprep.subr.bf16.mxu0 0
        %3328 = vmatpush1.bf16.msra.mxu0 0
        %3329 = vmatprep.mubr.bf16.mxu0 0
        %3330 = vmatmul.mubr.bf16.gmra.mrb[0].mxu0 %v1961
        %v3331 = vpop.f32.mrb[0].mxu0
        %v3332 = vadd.f32 %v3235, %v3331
        %v3333 = vpop.f32.mrb[0].mxu0
        %v3334 = vpop.f32.mrb[0].mxu0
        %v3335 = vadd.f32 %v3238, %v3334
        %v3336 = vpop.f32.mrb[0].mxu0
        %3337 = vmatprep.mubr.bf16.mxu0 0
        %3338 = vmatmul.mubr.bf16.gmra.mrb[0].mxu0 %v1964
        %v3339 = vpop.f32.mrb[0].mxu0
        %v3340 = vadd.f32 %v3243, %v3339
        %v3341 = vpop.f32.mrb[0].mxu0
        %v3342 = vpop.f32.mrb[0].mxu0
        %v3343 = vadd.f32 %v3246, %v3342
        %v3344 = vpop.f32.mrb[0].mxu0
        %3345 = vmatprep.mubr.bf16.mxu0 0
        %3346 = vmatmul.mubr.bf16.gmra.mrb[0].mxu0 %v1967
        %v3347 = vpop.f32.mrb[0].mxu0
        %v3348 = vadd.f32 %v3251, %v3347
        %v3349 = vpop.f32.mrb[0].mxu0
        %v3350 = vpop.f32.mrb[0].mxu0
        %v3351 = vadd.f32 %v3254, %v3350
        %v3352 = vpop.f32.mrb[0].mxu0
        %3353 = vmatprep.mubr.bf16.mxu0 0
        %3354 = vmatmul.mubr.bf16.gmra.mrb[0].mxu0 %v1970
        %v3355 = vpop.f32.mrb[0].mxu0
        %v3356 = vadd.f32 %v3259, %v3355
        %v3357 = vpop.f32.mrb[0].mxu0
        %v3358 = vpop.f32.mrb[0].mxu0
        %v3359 = vadd.f32 %v3262, %v3358
        %v3360 = vpop.f32.mrb[0].mxu0
        %3361 = vmatprep.mubr.bf16.mxu0 0
        %3362 = vmatmul.mubr.bf16.gmra.mrb[0].mxu0 %v1973
        %v3363 = vpop.f32.mrb[0].mxu0
        %v3364 = vadd.f32 %v3267, %v3363
        %v3365 = vpop.f32.mrb[0].mxu0
        %v3366 = vpop.f32.mrb[0].mxu0
        %v3367 = vadd.f32 %v3270, %v3366
        %v3368 = vpop.f32.mrb[0].mxu0
        %3369 = vmatprep.mubr.bf16.mxu0 0
        %3370 = vmatmul.mubr.bf16.gmra.mrb[0].mxu0 %v1976
        %v3371 = vpop.f32.mrb[0].mxu0
        %v3372 = vadd.f32 %v3275, %v3371
        %v3373 = vpop.f32.mrb[0].mxu0
        %v3374 = vpop.f32.mrb[0].mxu0
        %v3375 = vadd.f32 %v3278, %v3374
        %v3376 = vpop.f32.mrb[0].mxu0
        %3377 = vmatprep.mubr.bf16.mxu0 0
        %3378 = vmatmul.mubr.bf16.gmra.mrb[0].mxu0 %v1979
        %v3379 = vpop.f32.mrb[0].mxu0
        %v3380 = vadd.f32 %v3283, %v3379
        %v3381 = vpop.f32.mrb[0].mxu0
        %v3382 = vpop.f32.mrb[0].mxu0
        %v3383 = vadd.f32 %v3286, %v3382
        %v3384 = vpop.f32.mrb[0].mxu0
        %3385 = vmatprep.mubr.bf16.mxu0 0
        %3386 = vmatmul.mubr.bf16.gmra.mrb[0].mxu0 %v1982
        %v3387 = vpop.f32.mrb[0].mxu0
        %v3388 = vadd.f32 %v3291, %v3387
        %v3389 = vpop.f32.mrb[0].mxu0
        %v3390 = vpop.f32.mrb[0].mxu0
        %v3391 = vadd.f32 %v3294, %v3390
        %v3392 = vpop.f32.mrb[0].mxu0
        %3393 = vdwg.mxu0
        %v3394 = vtanh.pop %v3122
        %v3395 = vtanh.pop %v3124
        %v3396 = vtanh.pop %v3332
        %v3397 = vtanh.pop %v3126
        %v3398 = vtanh.pop %v3128
        %v3399 = vtanh.pop %v3335
        %v3400 = vtanh.pop %v3132
        %v3401 = vtanh.pop %v3134
        %v3402 = vtanh.pop %v3340
        %v3403 = vtanh.pop %v3136
        %v3404 = vtanh.pop %v3138
        %v3405 = vtanh.pop %v3343
        %v3406 = vtanh.pop %v3142
        %v3407 = vtanh.pop %v3144
        %v3408 = vtanh.pop %v3348
        %v3409 = vtanh.pop %v3146
        %v3410 = vtanh.pop %v3148
        %v3411 = vtanh.pop %v3351
        %v3412 = vtanh.pop %v3152
        %v3413 = vtanh.pop %v3154
        %v3414 = vtanh.pop %v3356
        %v3415 = vtanh.pop %v3156
        %v3416 = vtanh.pop %v3158
        %v3417 = vtanh.pop %v3359
        %v3418 = vtanh.pop %v3162
        %v3419 = vtanh.pop %v3164
        %v3420 = vtanh.pop %v3364
        %v3421 = vtanh.pop %v3166
        %v3422 = vtanh.pop %v3168
        %v3423 = vtanh.pop %v3367
        %v3424 = vtanh.pop %v3172
        %v3425 = vtanh.pop %v3174
        %v3426 = vtanh.pop %v3372
        %v3427 = vtanh.pop %v3176
        %v3428 = vtanh.pop %v3178
        %v3429 = vtanh.pop %v3375
        %v3430 = vtanh.pop %v3182
        %v3431 = vtanh.pop %v3184
        %v3432 = vtanh.pop %v3380
        %v3433 = vtanh.pop %v3186
        %v3434 = vtanh.pop %v3188
        %v3435 = vtanh.pop %v3383
        %v3436 = vtanh.pop %v3192
        %v3437 = vtanh.pop %v3194
        %v3438 = vtanh.pop %v3388
        %v3439 = vtanh.pop %v3196
        %v3440 = vtanh.pop %v3198
        %v3441 = vtanh.pop %v3391
        %v3442 = vpack.c.bf16 %v3397, %v3394
        %v3443 = vpack.c.bf16 %v3398, %v3395
        %v3444 = vpack.c.bf16 %v3399, %v3396
        %v3445 = vpack.c.bf16 %v3403, %v3400
        %v3446 = vpack.c.bf16 %v3404, %v3401
        %v3447 = vpack.c.bf16 %v3405, %v3402
        %v3448 = vpack.c.bf16 %v3409, %v3406
        %v3449 = vpack.c.bf16 %v3410, %v3407
        %v3450 = vpack.c.bf16 %v3411, %v3408
        %v3451 = vpack.c.bf16 %v3415, %v3412
        %v3452 = vpack.c.bf16 %v3416, %v3413
        %v3453 = vpack.c.bf16 %v3417, %v3414
        %v3454 = vpack.c.bf16 %v3421, %v3418
        %v3455 = vpack.c.bf16 %v3422, %v3419
        %v3456 = vpack.c.bf16 %v3423, %v3420
        %v3457 = vpack.c.bf16 %v3427, %v3424
        %v3458 = vpack.c.bf16 %v3428, %v3425
        %v3459 = vpack.c.bf16 %v3429, %v3426
        %v3460 = vpack.c.bf16 %v3433, %v3430
        %v3461 = vpack.c.bf16 %v3434, %v3431
        %v3462 = vpack.c.bf16 %v3435, %v3432
        %v3463 = vpack.c.bf16 %v3439, %v3436
        %v3464 = vpack.c.bf16 %v3440, %v3437
        %v3465 = vpack.c.bf16 %v3441, %v3438
        %3466 = vmatprep.subr.bf16.mxu0 %v2831
        %3467 = vmatpush1.bf16.msra.mxu0 %v2830
        %3468 = vmatprep.subr.bf16.mxu0 %v2834
        %3469 = vmatpush1.bf16.msra.mxu0 %v2833
        %3470 = vmatprep.subr.bf16.mxu0 %v2837
        %3471 = vmatpush1.bf16.msra.mxu0 %v2836
        %3472 = vmatprep.subr.bf16.mxu0 %v2840
        %3473 = vmatpush1.bf16.msra.mxu0 %v2839
        %3474 = vmatprep.subr.bf16.mxu0 %v2843
        %3475 = vmatpush1.bf16.msra.mxu0 %v2842
        %3476 = vmatprep.subr.bf16.mxu0 %v2846
        %3477 = vmatpush1.bf16.msra.mxu0 %v2845
        %3478 = vmatprep.subr.bf16.mxu0 %v2849
        %3479 = vmatpush1.bf16.msra.mxu0 %v2848
        %3480 = vmatprep.subr.bf16.mxu0 %v2852
        %3481 = vmatpush1.bf16.msra.mxu0 %v2851
        %3482 = vmatprep.subr.bf16.mxu0 %v2855
        %3483 = vmatpush1.bf16.msra.mxu0 %v2854
        %3484 = vmatprep.subr.bf16.mxu0 %v2858
        %3485 = vmatpush1.bf16.msra.mxu0 %v2857
        %3486 = vmatprep.subr.bf16.mxu0 %v2861
        %3487 = vmatpush1.bf16.msra.mxu0 %v2860
        %3488 = vmatprep.subr.bf16.mxu0 %v2864
        %3489 = vmatpush1.bf16.msra.mxu0 %v2863
        %3490 = vmatprep.subr.bf16.mxu0 %v2867
        %3491 = vmatpush1.bf16.msra.mxu0 %v2866
        %3492 = vmatprep.subr.bf16.mxu0 %v2870
        %3493 = vmatpush1.bf16.msra.mxu0 %v2869
        %3494 = vmatprep.subr.bf16.mxu0 %v2873
        %3495 = vmatpush1.bf16.msra.mxu0 %v2872
        %3496 = vmatprep.subr.bf16.mxu0 %v2876
        %3497 = vmatpush1.bf16.msra.mxu0 %v2875
        %3498 = vmatprep.mubr.bf16.mxu0 %v2452
        %3499 = vmatmul.mubr.bf16.gmra.mrb[0].mxu0 %v2451
        %v3500 = vpop.f32.mrb[0].mxu0
        %v3501 = vadd.f32 %v2578, %v3500
        %v3502 = vpop.f32.mrb[0].mxu0
        %v3503 = vadd.f32 %v2582, %v3502
        %v3504 = vpop.f32.mrb[0].mxu0
        %v3505 = vadd.f32 %v2578, %v3504
        %v3506 = vpop.f32.mrb[0].mxu0
        %v3507 = vadd.f32 %v2582, %v3506
        %3508 = vmatprep.mubr.bf16.mxu0 %v2455
        %3509 = vmatmul.mubr.bf16.gmra.mrb[0].mxu0 %v2454
        %v3510 = vpop.f32.mrb[0].mxu0
        %v3511 = vadd.f32 %v2578, %v3510
        %v3512 = vpop.f32.mrb[0].mxu0
        %v3513 = vadd.f32 %v2582, %v3512
        %v3514 = vpop.f32.mrb[0].mxu0
        %v3515 = vadd.f32 %v2578, %v3514
        %v3516 = vpop.f32.mrb[0].mxu0
        %v3517 = vadd.f32 %v2582, %v3516
        %3518 = vmatprep.mubr.bf16.mxu0 %v2458
        %3519 = vmatmul.mubr.bf16.gmra.mrb[0].mxu0 %v2457
        %v3520 = vpop.f32.mrb[0].mxu0
        %v3521 = vadd.f32 %v2578, %v3520
        %v3522 = vpop.f32.mrb[0].mxu0
        %v3523 = vadd.f32 %v2582, %v3522
        %v3524 = vpop.f32.mrb[0].mxu0
        %v3525 = vadd.f32 %v2578, %v3524
        %v3526 = vpop.f32.mrb[0].mxu0
        %v3527 = vadd.f32 %v2582, %v3526
        %3528 = vmatprep.mubr.bf16.mxu0 %v2461
        %3529 = vmatmul.mubr.bf16.gmra.mrb[0].mxu0 %v2460
        %v3530 = vpop.f32.mrb[0].mxu0
        %v3531 = vadd.f32 %v2578, %v3530
        %v3532 = vpop.f32.mrb[0].mxu0
        %v3533 = vadd.f32 %v2582, %v3532
        %v3534 = vpop.f32.mrb[0].mxu0
        %v3535 = vadd.f32 %v2578, %v3534
        %v3536 = vpop.f32.mrb[0].mxu0
        %v3537 = vadd.f32 %v2582, %v3536
        %3538 = vmatprep.mubr.bf16.mxu0 %v2464
        %3539 = vmatmul.mubr.bf16.gmra.mrb[0].mxu0 %v2463
        %v3540 = vpop.f32.mrb[0].mxu0
        %v3541 = vadd.f32 %v2578, %v3540
        %v3542 = vpop.f32.mrb[0].mxu0
        %v3543 = vadd.f32 %v2582, %v3542
        %v3544 = vpop.f32.mrb[0].mxu0
        %v3545 = vadd.f32 %v2578, %v3544
        %v3546 = vpop.f32.mrb[0].mxu0
        %v3547 = vadd.f32 %v2582, %v3546
        %3548 = vmatprep.mubr.bf16.mxu0 %v2467
        %3549 = vmatmul.mubr.bf16.gmra.mrb[0].mxu0 %v2466
        %v3550 = vpop.f32.mrb[0].mxu0
        %v3551 = vadd.f32 %v2578, %v3550
        %v3552 = vpop.f32.mrb[0].mxu0
        %v3553 = vadd.f32 %v2582, %v3552
        %v3554 = vpop.f32.mrb[0].mxu0
        %v3555 = vadd.f32 %v2578, %v3554
        %v3556 = vpop.f32.mrb[0].mxu0
        %v3557 = vadd.f32 %v2582, %v3556
        %3558 = vmatprep.mubr.bf16.mxu0 %v2470
        %3559 = vmatmul.mubr.bf16.gmra.mrb[0].mxu0 %v2469
        %v3560 = vpop.f32.mrb[0].mxu0
        %v3561 = vadd.f32 %v2578, %v3560
        %v3562 = vpop.f32.mrb[0].mxu0
        %v3563 = vadd.f32 %v2582, %v3562
        %v3564 = vpop.f32.mrb[0].mxu0
        %v3565 = vadd.f32 %v2578, %v3564
        %v3566 = vpop.f32.mrb[0].mxu0
        %v3567 = vadd.f32 %v2582, %v3566
        %3568 = vmatprep.mubr.bf16.mxu0 %v2473
        %3569 = vmatmul.mubr.bf16.gmra.mrb[0].mxu0 %v2472
        %v3570 = vpop.f32.mrb[0].mxu0
        %v3571 = vadd.f32 %v2578, %v3570
        %v3572 = vpop.f32.mrb[0].mxu0
        %v3573 = vadd.f32 %v2582, %v3572
        %v3574 = vpop.f32.mrb[0].mxu0
        %v3575 = vadd.f32 %v2578, %v3574
        %v3576 = vpop.f32.mrb[0].mxu0
        %v3577 = vadd.f32 %v2582, %v3576
        %3578 = vdwg.mxu0
        %3579 = vmatprep.subr.bf16.mxu0 %v2879
        %3580 = vmatpush1.bf16.msra.mxu0 %v2878
        %3581 = vmatprep.subr.bf16.mxu0 %v2882
        %3582 = vmatpush1.bf16.msra.mxu0 %v2881
        %3583 = vmatprep.subr.bf16.mxu0 %v2885
        %3584 = vmatpush1.bf16.msra.mxu0 %v2884
        %3585 = vmatprep.subr.bf16.mxu0 %v2888
        %3586 = vmatpush1.bf16.msra.mxu0 %v2887
        %3587 = vmatprep.subr.bf16.mxu0 %v2891
        %3588 = vmatpush1.bf16.msra.mxu0 %v2890
        %3589 = vmatprep.subr.bf16.mxu0 %v2894
        %3590 = vmatpush1.bf16.msra.mxu0 %v2893
        %3591 = vmatprep.subr.bf16.mxu0 %v2897
        %3592 = vmatpush1.bf16.msra.mxu0 %v2896
        %3593 = vmatprep.subr.bf16.mxu0 %v2900
        %3594 = vmatpush1.bf16.msra.mxu0 %v2899
        %3595 = vmatprep.subr.bf16.mxu0 0
        %3596 = vmatpush1.bf16.msra.mxu0 0
        %3597 = vmatprep.subr.bf16.mxu0 0
        %3598 = vmatpush1.bf16.msra.mxu0 0
        %3599 = vmatprep.subr.bf16.mxu0 0
        %3600 = vmatpush1.bf16.msra.mxu0 0
        %3601 = vmatprep.subr.bf16.mxu0 0
        %3602 = vmatpush1.bf16.msra.mxu0 0
        %3603 = vmatprep.subr.bf16.mxu0 0
        %3604 = vmatpush1.bf16.msra.mxu0 0
        %3605 = vmatprep.subr.bf16.mxu0 0
        %3606 = vmatpush1.bf16.msra.mxu0 0
        %3607 = vmatprep.subr.bf16.mxu0 0
        %3608 = vmatpush1.bf16.msra.mxu0 0
        %3609 = vmatprep.subr.bf16.mxu0 0
        %3610 = vmatpush1.bf16.msra.mxu0 0
        %3611 = vmatprep.mubr.bf16.mxu0 0
        %3612 = vmatmul.mubr.bf16.gmra.mrb[0].mxu0 %v2453
        %v3613 = vpop.f32.mrb[0].mxu0
        %v3614 = vadd.f32 %v3501, %v3613
        %v3615 = vpop.f32.mrb[0].mxu0
        %v3616 = vadd.f32 %v3503, %v3615
        %v3617 = vpop.f32.mrb[0].mxu0
        %v3618 = vadd.f32 %v3505, %v3617
        %v3619 = vpop.f32.mrb[0].mxu0
        %v3620 = vadd.f32 %v3507, %v3619
        %3621 = vmatprep.mubr.bf16.mxu0 0
        %3622 = vmatmul.mubr.bf16.gmra.mrb[0].mxu0 %v2456
        %v3623 = vpop.f32.mrb[0].mxu0
        %v3624 = vadd.f32 %v3511, %v3623
        %v3625 = vpop.f32.mrb[0].mxu0
        %v3626 = vadd.f32 %v3513, %v3625
        %v3627 = vpop.f32.mrb[0].mxu0
        %v3628 = vadd.f32 %v3515, %v3627
        %v3629 = vpop.f32.mrb[0].mxu0
        %v3630 = vadd.f32 %v3517, %v3629
        %3631 = vmatprep.mubr.bf16.mxu0 0
        %3632 = vmatmul.mubr.bf16.gmra.mrb[0].mxu0 %v2459
        %v3633 = vpop.f32.mrb[0].mxu0
        %v3634 = vadd.f32 %v3521, %v3633
        %v3635 = vpop.f32.mrb[0].mxu0
        %v3636 = vadd.f32 %v3523, %v3635
        %v3637 = vpop.f32.mrb[0].mxu0
        %v3638 = vadd.f32 %v3525, %v3637
        %v3639 = vpop.f32.mrb[0].mxu0
        %v3640 = vadd.f32 %v3527, %v3639
        %3641 = vmatprep.mubr.bf16.mxu0 0
        %3642 = vmatmul.mubr.bf16.gmra.mrb[0].mxu0 %v2462
        %v3643 = vpop.f32.mrb[0].mxu0
        %v3644 = vadd.f32 %v3531, %v3643
        %v3645 = vpop.f32.mrb[0].mxu0
        %v3646 = vadd.f32 %v3533, %v3645
        %v3647 = vpop.f32.mrb[0].mxu0
        %v3648 = vadd.f32 %v3535, %v3647
        %v3649 = vpop.f32.mrb[0].mxu0
        %v3650 = vadd.f32 %v3537, %v3649
        %3651 = vmatprep.mubr.bf16.mxu0 0
        %3652 = vmatmul.mubr.bf16.gmra.mrb[0].mxu0 %v2465
        %v3653 = vpop.f32.mrb[0].mxu0
        %v3654 = vadd.f32 %v3541, %v3653
        %v3655 = vpop.f32.mrb[0].mxu0
        %v3656 = vadd.f32 %v3543, %v3655
        %v3657 = vpop.f32.mrb[0].mxu0
        %v3658 = vadd.f32 %v3545, %v3657
        %v3659 = vpop.f32.mrb[0].mxu0
        %v3660 = vadd.f32 %v3547, %v3659
        %3661 = vmatprep.mubr.bf16.mxu0 0
        %3662 = vmatmul.mubr.bf16.gmra.mrb[0].mxu0 %v2468
        %v3663 = vpop.f32.mrb[0].mxu0
        %v3664 = vadd.f32 %v3551, %v3663
        %v3665 = vpop.f32.mrb[0].mxu0
        %v3666 = vadd.f32 %v3553, %v3665
        %v3667 = vpop.f32.mrb[0].mxu0
        %v3668 = vadd.f32 %v3555, %v3667
        %v3669 = vpop.f32.mrb[0].mxu0
        %v3670 = vadd.f32 %v3557, %v3669
        %3671 = vmatprep.mubr.bf16.mxu0 0
        %3672 = vmatmul.mubr.bf16.gmra.mrb[0].mxu0 %v2471
        %v3673 = vpop.f32.mrb[0].mxu0
        %v3674 = vadd.f32 %v3561, %v3673
        %v3675 = vpop.f32.mrb[0].mxu0
        %v3676 = vadd.f32 %v3563, %v3675
        %v3677 = vpop.f32.mrb[0].mxu0
        %v3678 = vadd.f32 %v3565, %v3677
        %v3679 = vpop.f32.mrb[0].mxu0
        %v3680 = vadd.f32 %v3567, %v3679
        %3681 = vmatprep.mubr.bf16.mxu0 0
        %3682 = vmatmul.mubr.bf16.gmra.mrb[0].mxu0 %v2474
        %v3683 = vpop.f32.mrb[0].mxu0
        %v3684 = vadd.f32 %v3571, %v3683
        %v3685 = vpop.f32.mrb[0].mxu0
        %v3686 = vadd.f32 %v3573, %v3685
        %v3687 = vpop.f32.mrb[0].mxu0
        %v3688 = vadd.f32 %v3575, %v3687
        %v3689 = vpop.f32.mrb[0].mxu0
        %v3690 = vadd.f32 %v3577, %v3689
        %3691 = vdwg.mxu0
        %3692 = vmatprep.subr.bf16.mxu0 0
        %3693 = vmatpush1.bf16.msra.mxu0 %v2832
        %3694 = vmatprep.subr.bf16.mxu0 0
        %3695 = vmatpush1.bf16.msra.mxu0 %v2835
        %3696 = vmatprep.subr.bf16.mxu0 0
        %3697 = vmatpush1.bf16.msra.mxu0 %v2838
        %3698 = vmatprep.subr.bf16.mxu0 0
        %3699 = vmatpush1.bf16.msra.mxu0 %v2841
        %3700 = vmatprep.subr.bf16.mxu0 0
        %3701 = vmatpush1.bf16.msra.mxu0 %v2844
        %3702 = vmatprep.subr.bf16.mxu0 0
        %3703 = vmatpush1.bf16.msra.mxu0 %v2847
        %3704 = vmatprep.subr.bf16.mxu0 0
        %3705 = vmatpush1.bf16.msra.mxu0 %v2850
        %3706 = vmatprep.subr.bf16.mxu0 0
        %3707 = vmatpush1.bf16.msra.mxu0 %v2853
        %3708 = vmatprep.subr.bf16.mxu0 0
        %3709 = vmatpush1.bf16.msra.mxu0 %v2856
        %3710 = vmatprep.subr.bf16.mxu0 0
        %3711 = vmatpush1.bf16.msra.mxu0 %v2859
        %3712 = vmatprep.subr.bf16.mxu0 0
        %3713 = vmatpush1.bf16.msra.mxu0 %v2862
        %3714 = vmatprep.subr.bf16.mxu0 0
        %3715 = vmatpush1.bf16.msra.mxu0 %v2865
        %3716 = vmatprep.subr.bf16.mxu0 0
        %3717 = vmatpush1.bf16.msra.mxu0 %v2868
        %3718 = vmatprep.subr.bf16.mxu0 0
        %3719 = vmatpush1.bf16.msra.mxu0 %v2871
        %3720 = vmatprep.subr.bf16.mxu0 0
        %3721 = vmatpush1.bf16.msra.mxu0 %v2874
        %3722 = vmatprep.subr.bf16.mxu0 0
        %3723 = vmatpush1.bf16.msra.mxu0 %v2877
        %3724 = vmatprep.mubr.bf16.mxu0 %v2452
        %3725 = vmatmul.mubr.bf16.gmra.mrb[0].mxu0 %v2451
        %v3726 = vpop.f32.mrb[0].mxu0
        %v3727 = vadd.f32 %v2586, %v3726
        %v3728 = vpop.f32.mrb[0].mxu0
        %v3729 = vpop.f32.mrb[0].mxu0
        %v3730 = vadd.f32 %v2586, %v3729
        %v3731 = vpop.f32.mrb[0].mxu0
        %3732 = vmatprep.mubr.bf16.mxu0 %v2455
        %3733 = vmatmul.mubr.bf16.gmra.mrb[0].mxu0 %v2454
        %v3734 = vpop.f32.mrb[0].mxu0
        %v3735 = vadd.f32 %v2586, %v3734
        %v3736 = vpop.f32.mrb[0].mxu0
        %v3737 = vpop.f32.mrb[0].mxu0
        %v3738 = vadd.f32 %v2586, %v3737
        %v3739 = vpop.f32.mrb[0].mxu0
        %3740 = vmatprep.mubr.bf16.mxu0 %v2458
        %3741 = vmatmul.mubr.bf16.gmra.mrb[0].mxu0 %v2457
        %v3742 = vpop.f32.mrb[0].mxu0
        %v3743 = vadd.f32 %v2586, %v3742
        %v3744 = vpop.f32.mrb[0].mxu0
        %v3745 = vpop.f32.mrb[0].mxu0
        %v3746 = vadd.f32 %v2586, %v3745
        %v3747 = vpop.f32.mrb[0].mxu0
        %3748 = vmatprep.mubr.bf16.mxu0 %v2461
        %3749 = vmatmul.mubr.bf16.gmra.mrb[0].mxu0 %v2460
        %v3750 = vpop.f32.mrb[0].mxu0
        %v3751 = vadd.f32 %v2586, %v3750
        %v3752 = vpop.f32.mrb[0].mxu0
        %v3753 = vpop.f32.mrb[0].mxu0
        %v3754 = vadd.f32 %v2586, %v3753
        %v3755 = vpop.f32.mrb[0].mxu0
        %3756 = vmatprep.mubr.bf16.mxu0 %v2464
        %3757 = vmatmul.mubr.bf16.gmra.mrb[0].mxu0 %v2463
        %v3758 = vpop.f32.mrb[0].mxu0
        %v3759 = vadd.f32 %v2586, %v3758
        %v3760 = vpop.f32.mrb[0].mxu0
        %v3761 = vpop.f32.mrb[0].mxu0
        %v3762 = vadd.f32 %v2586, %v3761
        %v3763 = vpop.f32.mrb[0].mxu0
        %3764 = vmatprep.mubr.bf16.mxu0 %v2467
        %3765 = vmatmul.mubr.bf16.gmra.mrb[0].mxu0 %v2466
        %v3766 = vpop.f32.mrb[0].mxu0
        %v3767 = vadd.f32 %v2586, %v3766
        %v3768 = vpop.f32.mrb[0].mxu0
        %v3769 = vpop.f32.mrb[0].mxu0
        %v3770 = vadd.f32 %v2586, %v3769
        %v3771 = vpop.f32.mrb[0].mxu0
        %3772 = vmatprep.mubr.bf16.mxu0 %v2470
        %3773 = vmatmul.mubr.bf16.gmra.mrb[0].mxu0 %v2469
        %v3774 = vpop.f32.mrb[0].mxu0
        %v3775 = vadd.f32 %v2586, %v3774
        %v3776 = vpop.f32.mrb[0].mxu0
        %v3777 = vpop.f32.mrb[0].mxu0
        %v3778 = vadd.f32 %v2586, %v3777
        %v3779 = vpop.f32.mrb[0].mxu0
        %3780 = vmatprep.mubr.bf16.mxu0 %v2473
        %3781 = vmatmul.mubr.bf16.gmra.mrb[0].mxu0 %v2472
        %v3782 = vpop.f32.mrb[0].mxu0
        %v3783 = vadd.f32 %v2586, %v3782
        %v3784 = vpop.f32.mrb[0].mxu0
        %v3785 = vpop.f32.mrb[0].mxu0
        %v3786 = vadd.f32 %v2586, %v3785
        %v3787 = vpop.f32.mrb[0].mxu0
        %3788 = vdwg.mxu0
        %3789 = vmatprep.subr.bf16.mxu0 0
        %3790 = vmatpush1.bf16.msra.mxu0 %v2880
        %3791 = vmatprep.subr.bf16.mxu0 0
        %3792 = vmatpush1.bf16.msra.mxu0 %v2883
        %3793 = vmatprep.subr.bf16.mxu0 0
        %3794 = vmatpush1.bf16.msra.mxu0 %v2886
        %3795 = vmatprep.subr.bf16.mxu0 0
        %3796 = vmatpush1.bf16.msra.mxu0 %v2889
        %3797 = vmatprep.subr.bf16.mxu0 0
        %3798 = vmatpush1.bf16.msra.mxu0 %v2892
        %3799 = vmatprep.subr.bf16.mxu0 0
        %3800 = vmatpush1.bf16.msra.mxu0 %v2895
        %3801 = vmatprep.subr.bf16.mxu0 0
        %3802 = vmatpush1.bf16.msra.mxu0 %v2898
        %3803 = vmatprep.subr.bf16.mxu0 0
        %3804 = vmatpush1.bf16.msra.mxu0 %v2901
        %3805 = vmatprep.subr.bf16.mxu0 0
        %3806 = vmatpush1.bf16.msra.mxu0 0
        %3807 = vmatprep.subr.bf16.mxu0 0
        %3808 = vmatpush1.bf16.msra.mxu0 0
        %3809 = vmatprep.subr.bf16.mxu0 0
        %3810 = vmatpush1.bf16.msra.mxu0 0
        %3811 = vmatprep.subr.bf16.mxu0 0
        %3812 = vmatpush1.bf16.msra.mxu0 0
        %3813 = vmatprep.subr.bf16.mxu0 0
        %3814 = vmatpush1.bf16.msra.mxu0 0
        %3815 = vmatprep.subr.bf16.mxu0 0
        %3816 = vmatpush1.bf16.msra.mxu0 0
        %3817 = vmatprep.subr.bf16.mxu0 0
        %3818 = vmatpush1.bf16.msra.mxu0 0
        %3819 = vmatprep.subr.bf16.mxu0 0
        %3820 = vmatpush1.bf16.msra.mxu0 0
        %3821 = vmatprep.mubr.bf16.mxu0 0
        %3822 = vmatmul.mubr.bf16.gmra.mrb[0].mxu0 %v2453
        %v3823 = vpop.f32.mrb[0].mxu0
        %v3824 = vadd.f32 %v3727, %v3823
        %v3825 = vpop.f32.mrb[0].mxu0
        %v3826 = vpop.f32.mrb[0].mxu0
        %v3827 = vadd.f32 %v3730, %v3826
        %v3828 = vpop.f32.mrb[0].mxu0
        %3829 = vmatprep.mubr.bf16.mxu0 0
        %3830 = vmatmul.mubr.bf16.gmra.mrb[0].mxu0 %v2456
        %v3831 = vpop.f32.mrb[0].mxu0
        %v3832 = vadd.f32 %v3735, %v3831
        %v3833 = vpop.f32.mrb[0].mxu0
        %v3834 = vpop.f32.mrb[0].mxu0
        %v3835 = vadd.f32 %v3738, %v3834
        %v3836 = vpop.f32.mrb[0].mxu0
        %3837 = vmatprep.mubr.bf16.mxu0 0
        %3838 = vmatmul.mubr.bf16.gmra.mrb[0].mxu0 %v2459
        %v3839 = vpop.f32.mrb[0].mxu0
        %v3840 = vadd.f32 %v3743, %v3839
        %v3841 = vpop.f32.mrb[0].mxu0
        %v3842 = vpop.f32.mrb[0].mxu0
        %v3843 = vadd.f32 %v3746, %v3842
        %v3844 = vpop.f32.mrb[0].mxu0
        %3845 = vmatprep.mubr.bf16.mxu0 0
        %3846 = vmatmul.mubr.bf16.gmra.mrb[0].mxu0 %v2462
        %v3847 = vpop.f32.mrb[0].mxu0
        %v3848 = vadd.f32 %v3751, %v3847
        %v3849 = vpop.f32.mrb[0].mxu0
        %v3850 = vpop.f32.mrb[0].mxu0
        %v3851 = vadd.f32 %v3754, %v3850
        %v3852 = vpop.f32.mrb[0].mxu0
        %3853 = vmatprep.mubr.bf16.mxu0 0
        %3854 = vmatmul.mubr.bf16.gmra.mrb[0].mxu0 %v2465
        %v3855 = vpop.f32.mrb[0].mxu0
        %v3856 = vadd.f32 %v3759, %v3855
        %v3857 = vpop.f32.mrb[0].mxu0
        %v3858 = vpop.f32.mrb[0].mxu0
        %v3859 = vadd.f32 %v3762, %v3858
        %v3860 = vpop.f32.mrb[0].mxu0
        %3861 = vmatprep.mubr.bf16.mxu0 0
        %3862 = vmatmul.mubr.bf16.gmra.mrb[0].mxu0 %v2468
        %v3863 = vpop.f32.mrb[0].mxu0
        %v3864 = vadd.f32 %v3767, %v3863
        %v3865 = vpop.f32.mrb[0].mxu0
        %v3866 = vpop.f32.mrb[0].mxu0
        %v3867 = vadd.f32 %v3770, %v3866
        %v3868 = vpop.f32.mrb[0].mxu0
        %3869 = vmatprep.mubr.bf16.mxu0 0
        %3870 = vmatmul.mubr.bf16.gmra.mrb[0].mxu0 %v2471
        %v3871 = vpop.f32.mrb[0].mxu0
        %v3872 = vadd.f32 %v3775, %v3871
        %v3873 = vpop.f32.mrb[0].mxu0
        %v3874 = vpop.f32.mrb[0].mxu0
        %v3875 = vadd.f32 %v3778, %v3874
        %v3876 = vpop.f32.mrb[0].mxu0
        %3877 = vmatprep.mubr.bf16.mxu0 0
        %3878 = vmatmul.mubr.bf16.gmra.mrb[0].mxu0 %v2474
        %v3879 = vpop.f32.mrb[0].mxu0
        %v3880 = vadd.f32 %v3783, %v3879
        %v3881 = vpop.f32.mrb[0].mxu0
        %v3882 = vpop.f32.mrb[0].mxu0
        %v3883 = vadd.f32 %v3786, %v3882
        %v3884 = vpop.f32.mrb[0].mxu0
        %3885 = vdwg.mxu0
        %v3886 = vtanh.pop %v3614
        %v3887 = vtanh.pop %v3616
        %v3888 = vtanh.pop %v3824
        %v3889 = vtanh.pop %v3618
        %v3890 = vtanh.pop %v3620
        %v3891 = vtanh.pop %v3827
        %v3892 = vtanh.pop %v3624
        %v3893 = vtanh.pop %v3626
        %v3894 = vtanh.pop %v3832
        %v3895 = vtanh.pop %v3628
        %v3896 = vtanh.pop %v3630
        %v3897 = vtanh.pop %v3835
        %v3898 = vtanh.pop %v3634
        %v3899 = vtanh.pop %v3636
        %v3900 = vtanh.pop %v3840
        %v3901 = vtanh.pop %v3638
        %v3902 = vtanh.pop %v3640
        %v3903 = vtanh.pop %v3843
        %v3904 = vtanh.pop %v3644
        %v3905 = vtanh.pop %v3646
        %v3906 = vtanh.pop %v3848
        %v3907 = vtanh.pop %v3648
        %v3908 = vtanh.pop %v3650
        %v3909 = vtanh.pop %v3851
        %v3910 = vtanh.pop %v3654
        %v3911 = vtanh.pop %v3656
        %v3912 = vtanh.pop %v3856
        %v3913 = vtanh.pop %v3658
        %v3914 = vtanh.pop %v3660
        %v3915 = vtanh.pop %v3859
        %v3916 = vtanh.pop %v3664
        %v3917 = vtanh.pop %v3666
        %v3918 = vtanh.pop %v3864
        %v3919 = vtanh.pop %v3668
        %v3920 = vtanh.pop %v3670
        %v3921 = vtanh.pop %v3867
        %v3922 = vtanh.pop %v3674
        %v3923 = vtanh.pop %v3676
        %v3924 = vtanh.pop %v3872
        %v3925 = vtanh.pop %v3678
        %v3926 = vtanh.pop %v3680
        %v3927 = vtanh.pop %v3875
        %v3928 = vtanh.pop %v3684
        %v3929 = vtanh.pop %v3686
        %v3930 = vtanh.pop %v3880
        %v3931 = vtanh.pop %v3688
        %v3932 = vtanh.pop %v3690
        %v3933 = vtanh.pop %v3883
        %v3934 = vpack.c.bf16 %v3889, %v3886
        %v3935 = vpack.c.bf16 %v3890, %v3887
        %v3936 = vpack.c.bf16 %v3891, %v3888
        %v3937 = vpack.c.bf16 %v3895, %v3892
        %v3938 = vpack.c.bf16 %v3896, %v3893
        %v3939 = vpack.c.bf16 %v3897, %v3894
        %v3940 = vpack.c.bf16 %v3901, %v3898
        %v3941 = vpack.c.bf16 %v3902, %v3899
        %v3942 = vpack.c.bf16 %v3903, %v3900
        %v3943 = vpack.c.bf16 %v3907, %v3904
        %v3944 = vpack.c.bf16 %v3908, %v3905
        %v3945 = vpack.c.bf16 %v3909, %v3906
        %v3946 = vpack.c.bf16 %v3913, %v3910
        %v3947 = vpack.c.bf16 %v3914, %v3911
        %v3948 = vpack.c.bf16 %v3915, %v3912
        %v3949 = vpack.c.bf16 %v3919, %v3916
        %v3950 = vpack.c.bf16 %v3920, %v3917
        %v3951 = vpack.c.bf16 %v3921, %v3918
        %v3952 = vpack.c.bf16 %v3925, %v3922
        %v3953 = vpack.c.bf16 %v3926, %v3923
        %v3954 = vpack.c.bf16 %v3927, %v3924
        %v3955 = vpack.c.bf16 %v3931, %v3928
        %v3956 = vpack.c.bf16 %v3932, %v3929
        %v3957 = vpack.c.bf16 %v3933, %v3930
        %s3958 = scalar_lea.vmem [#allocation2], 1728
        %v3959 = vld [vmem:[%s3958] sm:$0xff]
        %v3960 = vld [vmem:[%s3958 + $0x8] sm:$0xf]
        %v3961 = vld [vmem:[%s3958 + $0xc] sm:$0xff]
        %v3962 = vld [vmem:[%s3958 + $0x14] sm:$0xf]
        %v3963 = vld [vmem:[%s3958 + $0x18] sm:$0xff]
        %v3964 = vld [vmem:[%s3958 + $0x20] sm:$0xf]
        %v3965 = vld [vmem:[%s3958 + $0x24] sm:$0xff]
        %v3966 = vld [vmem:[%s3958 + $0x2c] sm:$0xf]
        %v3967 = vld [vmem:[%s3958 + $0x30] sm:$0xff]
        %v3968 = vld [vmem:[%s3958 + $0x38] sm:$0xf]
        %v3969 = vld [vmem:[%s3958 + $0x3c] sm:$0xff]
        %v3970 = vld [vmem:[%s3958 + $0x44] sm:$0xf]
        %v3971 = vld [vmem:[%s3958 + $0x48] sm:$0xff]
        %v3972 = vld [vmem:[%s3958 + $0x50] sm:$0xf]
        %v3973 = vld [vmem:[%s3958 + $0x54] sm:$0xff]
        %v3974 = vld [vmem:[%s3958 + $0x5c] sm:$0xf]
        %v3975 = vld [vmem:[%s3958 + $0x60] sm:$0xff]
        %v3976 = vld [vmem:[%s3958 + $0x68] sm:$0xf]
        %v3977 = vld [vmem:[%s3958 + $0x6c] sm:$0xff]
        %v3978 = vld [vmem:[%s3958 + $0x74] sm:$0xf]
        %v3979 = vld [vmem:[%s3958 + $0x78] sm:$0xff]
        %v3980 = vld [vmem:[%s3958 + $0x80] sm:$0xf]
        %v3981 = vld [vmem:[%s3958 + $0x84] sm:$0xff]
        %v3982 = vld [vmem:[%s3958 + $0x8c] sm:$0xf]
        %v3983 = vld [vmem:[%s3958 + $0x90] sm:$0xff]
        %v3984 = vld [vmem:[%s3958 + $0x98] sm:$0xf]
        %v3985 = vld [vmem:[%s3958 + $0x9c] sm:$0xff]
        %v3986 = vld [vmem:[%s3958 + $0xa4] sm:$0xf]
        %v3987 = vld [vmem:[%s3958 + $0xa8] sm:$0xff]
        %v3988 = vld [vmem:[%s3958 + $0xb0] sm:$0xf]
        %v3989 = vld [vmem:[%s3958 + $0xb4] sm:$0xff]
        %v3990 = vld [vmem:[%s3958 + $0xbc] sm:$0xf]
        %v3991 = vld [vmem:[%s3958 + $0xc0] sm:$0xff]
        %v3992 = vld [vmem:[%s3958 + $0xc8] sm:$0xf]
        %v3993 = vld [vmem:[%s3958 + $0xcc] sm:$0xff]
        %v3994 = vld [vmem:[%s3958 + $0xd4] sm:$0xf]
        %v3995 = vld [vmem:[%s3958 + $0xd8] sm:$0xff]
        %v3996 = vld [vmem:[%s3958 + $0xe0] sm:$0xf]
        %v3997 = vld [vmem:[%s3958 + $0xe4] sm:$0xff]
        %v3998 = vld [vmem:[%s3958 + $0xec] sm:$0xf]
        %v3999 = vld [vmem:[%s3958 + $0xf0] sm:$0xff]
        %v4000 = vld [vmem:[%s3958 + $0xf8] sm:$0xf]
        %v4001 = vld [vmem:[%s3958 + $0xfc] sm:$0xff]
        %v4002 = vld [vmem:[%s3958 + $0x104] sm:$0xf]
        %v4003 = vld [vmem:[%s3958 + $0x108] sm:$0xff]
        %v4004 = vld [vmem:[%s3958 + $0x110] sm:$0xf]
        %v4005 = vld [vmem:[%s3958 + $0x114] sm:$0xff]
        %v4006 = vld [vmem:[%s3958 + $0x11c] sm:$0xf]
        %v4007 = vld [vmem:[%s3958 + $0x120] sm:$0xff]
        %v4008 = vld [vmem:[%s3958 + $0x128] sm:$0xf]
        %v4009 = vld [vmem:[%s3958 + $0x12c] sm:$0xff]
        %v4010 = vld [vmem:[%s3958 + $0x134] sm:$0xf]
        %v4011 = vld [vmem:[%s3958 + $0x138] sm:$0xff]
        %v4012 = vld [vmem:[%s3958 + $0x140] sm:$0xf]
        %v4013 = vld [vmem:[%s3958 + $0x144] sm:$0xff]
        %v4014 = vld [vmem:[%s3958 + $0x14c] sm:$0xf]
        %v4015 = vld [vmem:[%s3958 + $0x150] sm:$0xff]
        %v4016 = vld [vmem:[%s3958 + $0x158] sm:$0xf]
        %v4017 = vld [vmem:[%s3958 + $0x15c] sm:$0xff]
        %v4018 = vld [vmem:[%s3958 + $0x164] sm:$0xf]
        %v4019 = vld [vmem:[%s3958 + $0x168] sm:$0xff]
        %v4020 = vld [vmem:[%s3958 + $0x170] sm:$0xf]
        %v4021 = vld [vmem:[%s3958 + $0x174] sm:$0xff]
        %v4022 = vld [vmem:[%s3958 + $0x17c] sm:$0xf]
        %v4023 = vld [vmem:[%s3958 + $0x180] sm:$0xff]
        %v4024 = vld [vmem:[%s3958 + $0x188] sm:$0xf]
        %v4025 = vld [vmem:[%s3958 + $0x18c] sm:$0xff]
        %v4026 = vld [vmem:[%s3958 + $0x194] sm:$0xf]
        %v4027 = vld [vmem:[%s3958 + $0x198] sm:$0xff]
        %v4028 = vld [vmem:[%s3958 + $0x1a0] sm:$0xf]
        %v4029 = vld [vmem:[%s3958 + $0x1a4] sm:$0xff]
        %v4030 = vld [vmem:[%s3958 + $0x1ac] sm:$0xf]
        %v4031 = vld [vmem:[%s3958 + $0x1b0] sm:$0xff]
        %v4032 = vld [vmem:[%s3958 + $0x1b8] sm:$0xf]
        %v4033 = vld [vmem:[%s3958 + $0x1bc] sm:$0xff]
        %v4034 = vld [vmem:[%s3958 + $0x1c4] sm:$0xf]
        %v4035 = vld [vmem:[%s3958 + $0x1c8] sm:$0xff]
        %v4036 = vld [vmem:[%s3958 + $0x1d0] sm:$0xf]
        %v4037 = vld [vmem:[%s3958 + $0x1d4] sm:$0xff]
        %v4038 = vld [vmem:[%s3958 + $0x1dc] sm:$0xf]
        %v4039 = vld [vmem:[%s3958 + $0x1e0] sm:$0xff]
        %v4040 = vld [vmem:[%s3958 + $0x1e8] sm:$0xf]
        %v4041 = vld [vmem:[%s3958 + $0x1ec] sm:$0xff]
        %v4042 = vld [vmem:[%s3958 + $0x1f4] sm:$0xf]
        %v4043 = vld [vmem:[%s3958 + $0x1f8] sm:$0xff]
        %v4044 = vld [vmem:[%s3958 + $0x200] sm:$0xf]
        %v4045 = vld [vmem:[%s3958 + $0x204] sm:$0xff]
        %v4046 = vld [vmem:[%s3958 + $0x20c] sm:$0xf]
        %v4047 = vld [vmem:[%s3958 + $0x210] sm:$0xff]
        %v4048 = vld [vmem:[%s3958 + $0x218] sm:$0xf]
        %v4049 = vld [vmem:[%s3958 + $0x21c] sm:$0xff]
        %v4050 = vld [vmem:[%s3958 + $0x224] sm:$0xf]
        %v4051 = vld [vmem:[%s3958 + $0x228] sm:$0xff]
        %v4052 = vld [vmem:[%s3958 + $0x230] sm:$0xf]
        %v4053 = vld [vmem:[%s3958 + $0x234] sm:$0xff]
        %v4054 = vld [vmem:[%s3958 + $0x23c] sm:$0xf]
        %s4055 = scalar_lea.vmem [#allocation4], 3
        %v4056 = vld [vmem:[%s4055] ss:$8 sm:$0x7]
        %v4058 = vlaneseq
        %v4059 = vshrl.u32 %v4058, 7
        %v4060 = vsub.s32 0, %v4059
        %v4061 = vrot.slane %v4056, %v4060
        %v4062 = vlaneseq
        %v4063 = vshrl.u32 %v4062, 7
        %v4064 = vsub.s32 1, %v4063
        %v4065 = vrot.slane %v4056, %v4064
        %v4066 = vlaneseq
        %v4067 = vshrl.u32 %v4066, 7
        %v4068 = vsub.s32 2, %v4067
        %v4069 = vrot.slane %v4056, %v4068
        %v4169 = vunpack.c.l.b16 %v3959
        %v4170 = vunpack.c.h.b16 %v3959
        %v4171 = vunpack.c.l.b16 %v3960
        %v4172 = vunpack.c.l.b16 %v3961
        %v4173 = vunpack.c.h.b16 %v3961
        %v4174 = vunpack.c.l.b16 %v3962
        %v4175 = vunpack.c.l.b16 %v3963
        %v4176 = vunpack.c.h.b16 %v3963
        %v4177 = vunpack.c.l.b16 %v3964
        %v4178 = vunpack.c.l.b16 %v3965
        %v4179 = vunpack.c.h.b16 %v3965
        %v4180 = vunpack.c.l.b16 %v3966
        %v4181 = vunpack.c.l.b16 %v3967
        %v4182 = vunpack.c.h.b16 %v3967
        %v4183 = vunpack.c.l.b16 %v3968
        %v4184 = vunpack.c.l.b16 %v3969
        %v4185 = vunpack.c.h.b16 %v3969
        %v4186 = vunpack.c.l.b16 %v3970
        %v4187 = vunpack.c.l.b16 %v3971
        %v4188 = vunpack.c.h.b16 %v3971
        %v4189 = vunpack.c.l.b16 %v3972
        %v4190 = vunpack.c.l.b16 %v3973
        %v4191 = vunpack.c.h.b16 %v3973
        %v4192 = vunpack.c.l.b16 %v3974
        %v4193 = vunpack.c.l.b16 %v3975
        %v4194 = vunpack.c.h.b16 %v3975
        %v4195 = vunpack.c.l.b16 %v3976
        %v4196 = vunpack.c.l.b16 %v3977
        %v4197 = vunpack.c.h.b16 %v3977
        %v4198 = vunpack.c.l.b16 %v3978
        %v4199 = vunpack.c.l.b16 %v3979
        %v4200 = vunpack.c.h.b16 %v3979
        %v4201 = vunpack.c.l.b16 %v3980
        %v4202 = vunpack.c.l.b16 %v3981
        %v4203 = vunpack.c.h.b16 %v3981
        %v4204 = vunpack.c.l.b16 %v3982
        %v4205 = vunpack.c.l.b16 %v3983
        %v4206 = vunpack.c.h.b16 %v3983
        %v4207 = vunpack.c.l.b16 %v3984
        %v4208 = vunpack.c.l.b16 %v3985
        %v4209 = vunpack.c.h.b16 %v3985
        %v4210 = vunpack.c.l.b16 %v3986
        %v4211 = vunpack.c.l.b16 %v3987
        %v4212 = vunpack.c.h.b16 %v3987
        %v4213 = vunpack.c.l.b16 %v3988
        %v4214 = vunpack.c.l.b16 %v3989
        %v4215 = vunpack.c.h.b16 %v3989
        %v4216 = vunpack.c.l.b16 %v3990
        %v4217 = vunpack.c.l.b16 %v3991
        %v4218 = vunpack.c.h.b16 %v3991
        %v4219 = vunpack.c.l.b16 %v3992
        %v4220 = vunpack.c.l.b16 %v3993
        %v4221 = vunpack.c.h.b16 %v3993
        %v4222 = vunpack.c.l.b16 %v3994
        %v4223 = vunpack.c.l.b16 %v3995
        %v4224 = vunpack.c.h.b16 %v3995
        %v4225 = vunpack.c.l.b16 %v3996
        %v4226 = vunpack.c.l.b16 %v3997
        %v4227 = vunpack.c.h.b16 %v3997
        %v4228 = vunpack.c.l.b16 %v3998
        %v4229 = vunpack.c.l.b16 %v3999
        %v4230 = vunpack.c.h.b16 %v3999
        %v4231 = vunpack.c.l.b16 %v4000
        %v4232 = vunpack.c.l.b16 %v4001
        %v4233 = vunpack.c.h.b16 %v4001
        %v4234 = vunpack.c.l.b16 %v4002
        %v4235 = vunpack.c.l.b16 %v4003
        %v4236 = vunpack.c.h.b16 %v4003
        %v4237 = vunpack.c.l.b16 %v4004
        %v4238 = vunpack.c.l.b16 %v4005
        %v4239 = vunpack.c.h.b16 %v4005
        %v4240 = vunpack.c.l.b16 %v4006
        %v4241 = vunpack.c.l.b16 %v4007
        %v4242 = vunpack.c.h.b16 %v4007
        %v4243 = vunpack.c.l.b16 %v4008
        %v4244 = vunpack.c.l.b16 %v4009
        %v4245 = vunpack.c.h.b16 %v4009
        %v4246 = vunpack.c.l.b16 %v4010
        %v4247 = vunpack.c.l.b16 %v4011
        %v4248 = vunpack.c.h.b16 %v4011
        %v4249 = vunpack.c.l.b16 %v4012
        %v4250 = vunpack.c.l.b16 %v4013
        %v4251 = vunpack.c.h.b16 %v4013
        %v4252 = vunpack.c.l.b16 %v4014
        %v4253 = vunpack.c.l.b16 %v4015
        %v4254 = vunpack.c.h.b16 %v4015
        %v4255 = vunpack.c.l.b16 %v4016
        %v4256 = vunpack.c.l.b16 %v4017
        %v4257 = vunpack.c.h.b16 %v4017
        %v4258 = vunpack.c.l.b16 %v4018
        %v4259 = vunpack.c.l.b16 %v4019
        %v4260 = vunpack.c.h.b16 %v4019
        %v4261 = vunpack.c.l.b16 %v4020
        %v4262 = vunpack.c.l.b16 %v4021
        %v4263 = vunpack.c.h.b16 %v4021
        %v4264 = vunpack.c.l.b16 %v4022
        %v4265 = vunpack.c.l.b16 %v4023
        %v4266 = vunpack.c.h.b16 %v4023
        %v4267 = vunpack.c.l.b16 %v4024
        %v4268 = vunpack.c.l.b16 %v4025
        %v4269 = vunpack.c.h.b16 %v4025
        %v4270 = vunpack.c.l.b16 %v4026
        %v4271 = vunpack.c.l.b16 %v4027
        %v4272 = vunpack.c.h.b16 %v4027
        %v4273 = vunpack.c.l.b16 %v4028
        %v4274 = vunpack.c.l.b16 %v4029
        %v4275 = vunpack.c.h.b16 %v4029
        %v4276 = vunpack.c.l.b16 %v4030
        %v4277 = vunpack.c.l.b16 %v4031
        %v4278 = vunpack.c.h.b16 %v4031
        %v4279 = vunpack.c.l.b16 %v4032
        %v4280 = vunpack.c.l.b16 %v4033
        %v4281 = vunpack.c.h.b16 %v4033
        %v4282 = vunpack.c.l.b16 %v4034
        %v4283 = vunpack.c.l.b16 %v4035
        %v4284 = vunpack.c.h.b16 %v4035
        %v4285 = vunpack.c.l.b16 %v4036
        %v4286 = vunpack.c.l.b16 %v4037
        %v4287 = vunpack.c.h.b16 %v4037
        %v4288 = vunpack.c.l.b16 %v4038
        %v4289 = vunpack.c.l.b16 %v4039
        %v4290 = vunpack.c.h.b16 %v4039
        %v4291 = vunpack.c.l.b16 %v4040
        %v4292 = vunpack.c.l.b16 %v4041
        %v4293 = vunpack.c.h.b16 %v4041
        %v4294 = vunpack.c.l.b16 %v4042
        %v4295 = vunpack.c.l.b16 %v4043
        %v4296 = vunpack.c.h.b16 %v4043
        %v4297 = vunpack.c.l.b16 %v4044
        %v4298 = vunpack.c.l.b16 %v4045
        %v4299 = vunpack.c.h.b16 %v4045
        %v4300 = vunpack.c.l.b16 %v4046
        %v4301 = vunpack.c.l.b16 %v4047
        %v4302 = vunpack.c.h.b16 %v4047
        %v4303 = vunpack.c.l.b16 %v4048
        %v4304 = vunpack.c.l.b16 %v4049
        %v4305 = vunpack.c.h.b16 %v4049
        %v4306 = vunpack.c.l.b16 %v4050
        %v4307 = vunpack.c.l.b16 %v4051
        %v4308 = vunpack.c.h.b16 %v4051
        %v4309 = vunpack.c.l.b16 %v4052
        %v4310 = vunpack.c.l.b16 %v4053
        %v4311 = vunpack.c.h.b16 %v4053
        %v4312 = vunpack.c.l.b16 %v4054
        %v4313 = vpack.c.b16 %v4172, %v4169
        %v4314 = vpack.c.b16 %v4173, %v4170
        %v4315 = vpack.c.b16 %v4174, %v4171
        %v4316 = vpack.c.b16 %v4178, %v4175
        %v4317 = vpack.c.b16 %v4179, %v4176
        %v4318 = vpack.c.b16 %v4180, %v4177
        %v4319 = vpack.c.b16 %v4184, %v4181
        %v4320 = vpack.c.b16 %v4185, %v4182
        %v4321 = vpack.c.b16 %v4186, %v4183
        %v4322 = vpack.c.b16 %v4190, %v4187
        %v4323 = vpack.c.b16 %v4191, %v4188
        %v4324 = vpack.c.b16 %v4192, %v4189
        %v4325 = vpack.c.b16 %v4196, %v4193
        %v4326 = vpack.c.b16 %v4197, %v4194
        %v4327 = vpack.c.b16 %v4198, %v4195
        %v4328 = vpack.c.b16 %v4202, %v4199
        %v4329 = vpack.c.b16 %v4203, %v4200
        %v4330 = vpack.c.b16 %v4204, %v4201
        %v4331 = vpack.c.b16 %v4208, %v4205
        %v4332 = vpack.c.b16 %v4209, %v4206
        %v4333 = vpack.c.b16 %v4210, %v4207
        %v4334 = vpack.c.b16 %v4214, %v4211
        %v4335 = vpack.c.b16 %v4215, %v4212
        %v4336 = vpack.c.b16 %v4216, %v4213
        %v4337 = vpack.c.b16 %v4220, %v4217
        %v4338 = vpack.c.b16 %v4221, %v4218
        %v4339 = vpack.c.b16 %v4222, %v4219
        %v4340 = vpack.c.b16 %v4226, %v4223
        %v4341 = vpack.c.b16 %v4227, %v4224
        %v4342 = vpack.c.b16 %v4228, %v4225
        %v4343 = vpack.c.b16 %v4232, %v4229
        %v4344 = vpack.c.b16 %v4233, %v4230
        %v4345 = vpack.c.b16 %v4234, %v4231
        %v4346 = vpack.c.b16 %v4238, %v4235
        %v4347 = vpack.c.b16 %v4239, %v4236
        %v4348 = vpack.c.b16 %v4240, %v4237
        %v4349 = vpack.c.b16 %v4244, %v4241
        %v4350 = vpack.c.b16 %v4245, %v4242
        %v4351 = vpack.c.b16 %v4246, %v4243
        %v4352 = vpack.c.b16 %v4250, %v4247
        %v4353 = vpack.c.b16 %v4251, %v4248
        %v4354 = vpack.c.b16 %v4252, %v4249
        %v4355 = vpack.c.b16 %v4256, %v4253
        %v4356 = vpack.c.b16 %v4257, %v4254
        %v4357 = vpack.c.b16 %v4258, %v4255
        %v4358 = vpack.c.b16 %v4262, %v4259
        %v4359 = vpack.c.b16 %v4263, %v4260
        %v4360 = vpack.c.b16 %v4264, %v4261
        %v4361 = vpack.c.b16 %v4268, %v4265
        %v4362 = vpack.c.b16 %v4269, %v4266
        %v4363 = vpack.c.b16 %v4270, %v4267
        %v4364 = vpack.c.b16 %v4274, %v4271
        %v4365 = vpack.c.b16 %v4275, %v4272
        %v4366 = vpack.c.b16 %v4276, %v4273
        %v4367 = vpack.c.b16 %v4280, %v4277
        %v4368 = vpack.c.b16 %v4281, %v4278
        %v4369 = vpack.c.b16 %v4282, %v4279
        %v4370 = vpack.c.b16 %v4286, %v4283
        %v4371 = vpack.c.b16 %v4287, %v4284
        %v4372 = vpack.c.b16 %v4288, %v4285
        %v4373 = vpack.c.b16 %v4292, %v4289
        %v4374 = vpack.c.b16 %v4293, %v4290
        %v4375 = vpack.c.b16 %v4294, %v4291
        %v4376 = vpack.c.b16 %v4298, %v4295
        %v4377 = vpack.c.b16 %v4299, %v4296
        %v4378 = vpack.c.b16 %v4300, %v4297
        %v4379 = vpack.c.b16 %v4304, %v4301
        %v4380 = vpack.c.b16 %v4305, %v4302
        %v4381 = vpack.c.b16 %v4306, %v4303
        %v4382 = vpack.c.b16 %v4310, %v4307
        %v4383 = vpack.c.b16 %v4311, %v4308
        %v4384 = vpack.c.b16 %v4312, %v4309
        %4457 = vmatprep.subr.bf16.mxu0 %v4314
        %4458 = vmatpush1.bf16.msra.mxu0 %v4313
        %4459 = vmatprep.subr.bf16.mxu0 %v4317
        %4460 = vmatpush1.bf16.msra.mxu0 %v4316
        %4461 = vmatprep.subr.bf16.mxu0 %v4320
        %4462 = vmatpush1.bf16.msra.mxu0 %v4319
        %4463 = vmatprep.subr.bf16.mxu0 %v4323
        %4464 = vmatpush1.bf16.msra.mxu0 %v4322
        %4465 = vmatprep.subr.bf16.mxu0 %v4326
        %4466 = vmatpush1.bf16.msra.mxu0 %v4325
        %4467 = vmatprep.subr.bf16.mxu0 %v4329
        %4468 = vmatpush1.bf16.msra.mxu0 %v4328
        %4469 = vmatprep.subr.bf16.mxu0 %v4332
        %4470 = vmatpush1.bf16.msra.mxu0 %v4331
        %4471 = vmatprep.subr.bf16.mxu0 %v4335
        %4472 = vmatpush1.bf16.msra.mxu0 %v4334
        %4473 = vmatprep.subr.bf16.mxu0 %v4338
        %4474 = vmatpush1.bf16.msra.mxu0 %v4337
        %4475 = vmatprep.subr.bf16.mxu0 %v4341
        %4476 = vmatpush1.bf16.msra.mxu0 %v4340
        %4477 = vmatprep.subr.bf16.mxu0 %v4344
        %4478 = vmatpush1.bf16.msra.mxu0 %v4343
        %4479 = vmatprep.subr.bf16.mxu0 %v4347
        %4480 = vmatpush1.bf16.msra.mxu0 %v4346
        %4481 = vmatprep.subr.bf16.mxu0 %v4350
        %4482 = vmatpush1.bf16.msra.mxu0 %v4349
        %4483 = vmatprep.subr.bf16.mxu0 %v4353
        %4484 = vmatpush1.bf16.msra.mxu0 %v4352
        %4485 = vmatprep.subr.bf16.mxu0 %v4356
        %4486 = vmatpush1.bf16.msra.mxu0 %v4355
        %4487 = vmatprep.subr.bf16.mxu0 %v4359
        %4488 = vmatpush1.bf16.msra.mxu0 %v4358
        %4489 = vmatprep.mubr.bf16.mxu0 %v3443
        %4490 = vmatmul.mubr.bf16.gmra.mrb[0].mxu0 %v3442
        %v4491 = vpop.f32.mrb[0].mxu0
        %v4492 = vadd.f32 %v4061, %v4491
        %v4493 = vpop.f32.mrb[0].mxu0
        %v4494 = vadd.f32 %v4065, %v4493
        %v4495 = vpop.f32.mrb[0].mxu0
        %v4496 = vadd.f32 %v4061, %v4495
        %v4497 = vpop.f32.mrb[0].mxu0
        %v4498 = vadd.f32 %v4065, %v4497
        %4499 = vmatprep.mubr.bf16.mxu0 %v3446
        %4500 = vmatmul.mubr.bf16.gmra.mrb[0].mxu0 %v3445
        %v4501 = vpop.f32.mrb[0].mxu0
        %v4502 = vadd.f32 %v4061, %v4501
        %v4503 = vpop.f32.mrb[0].mxu0
        %v4504 = vadd.f32 %v4065, %v4503
        %v4505 = vpop.f32.mrb[0].mxu0
        %v4506 = vadd.f32 %v4061, %v4505
        %v4507 = vpop.f32.mrb[0].mxu0
        %v4508 = vadd.f32 %v4065, %v4507
        %4509 = vmatprep.mubr.bf16.mxu0 %v3449
        %4510 = vmatmul.mubr.bf16.gmra.mrb[0].mxu0 %v3448
        %v4511 = vpop.f32.mrb[0].mxu0
        %v4512 = vadd.f32 %v4061, %v4511
        %v4513 = vpop.f32.mrb[0].mxu0
        %v4514 = vadd.f32 %v4065, %v4513
        %v4515 = vpop.f32.mrb[0].mxu0
        %v4516 = vadd.f32 %v4061, %v4515
        %v4517 = vpop.f32.mrb[0].mxu0
        %v4518 = vadd.f32 %v4065, %v4517
        %4519 = vmatprep.mubr.bf16.mxu0 %v3452
        %4520 = vmatmul.mubr.bf16.gmra.mrb[0].mxu0 %v3451
        %v4521 = vpop.f32.mrb[0].mxu0
        %v4522 = vadd.f32 %v4061, %v4521
        %v4523 = vpop.f32.mrb[0].mxu0
        %v4524 = vadd.f32 %v4065, %v4523
        %v4525 = vpop.f32.mrb[0].mxu0
        %v4526 = vadd.f32 %v4061, %v4525
        %v4527 = vpop.f32.mrb[0].mxu0
        %v4528 = vadd.f32 %v4065, %v4527
        %4529 = vmatprep.mubr.bf16.mxu0 %v3455
        %4530 = vmatmul.mubr.bf16.gmra.mrb[0].mxu0 %v3454
        %v4531 = vpop.f32.mrb[0].mxu0
        %v4532 = vadd.f32 %v4061, %v4531
        %v4533 = vpop.f32.mrb[0].mxu0
        %v4534 = vadd.f32 %v4065, %v4533
        %v4535 = vpop.f32.mrb[0].mxu0
        %v4536 = vadd.f32 %v4061, %v4535
        %v4537 = vpop.f32.mrb[0].mxu0
        %v4538 = vadd.f32 %v4065, %v4537
        %4539 = vmatprep.mubr.bf16.mxu0 %v3458
        %4540 = vmatmul.mubr.bf16.gmra.mrb[0].mxu0 %v3457
        %v4541 = vpop.f32.mrb[0].mxu0
        %v4542 = vadd.f32 %v4061, %v4541
        %v4543 = vpop.f32.mrb[0].mxu0
        %v4544 = vadd.f32 %v4065, %v4543
        %v4545 = vpop.f32.mrb[0].mxu0
        %v4546 = vadd.f32 %v4061, %v4545
        %v4547 = vpop.f32.mrb[0].mxu0
        %v4548 = vadd.f32 %v4065, %v4547
        %4549 = vmatprep.mubr.bf16.mxu0 %v3461
        %4550 = vmatmul.mubr.bf16.gmra.mrb[0].mxu0 %v3460
        %v4551 = vpop.f32.mrb[0].mxu0
        %v4552 = vadd.f32 %v4061, %v4551
        %v4553 = vpop.f32.mrb[0].mxu0
        %v4554 = vadd.f32 %v4065, %v4553
        %v4555 = vpop.f32.mrb[0].mxu0
        %v4556 = vadd.f32 %v4061, %v4555
        %v4557 = vpop.f32.mrb[0].mxu0
        %v4558 = vadd.f32 %v4065, %v4557
        %4559 = vmatprep.mubr.bf16.mxu0 %v3464
        %4560 = vmatmul.mubr.bf16.gmra.mrb[0].mxu0 %v3463
        %v4561 = vpop.f32.mrb[0].mxu0
        %v4562 = vadd.f32 %v4061, %v4561
        %v4563 = vpop.f32.mrb[0].mxu0
        %v4564 = vadd.f32 %v4065, %v4563
        %v4565 = vpop.f32.mrb[0].mxu0
        %v4566 = vadd.f32 %v4061, %v4565
        %v4567 = vpop.f32.mrb[0].mxu0
        %v4568 = vadd.f32 %v4065, %v4567
        %4569 = vdwg.mxu0
        %4570 = vmatprep.subr.bf16.mxu0 %v4362
        %4571 = vmatpush1.bf16.msra.mxu0 %v4361
        %4572 = vmatprep.subr.bf16.mxu0 %v4365
        %4573 = vmatpush1.bf16.msra.mxu0 %v4364
        %4574 = vmatprep.subr.bf16.mxu0 %v4368
        %4575 = vmatpush1.bf16.msra.mxu0 %v4367
        %4576 = vmatprep.subr.bf16.mxu0 %v4371
        %4577 = vmatpush1.bf16.msra.mxu0 %v4370
        %4578 = vmatprep.subr.bf16.mxu0 %v4374
        %4579 = vmatpush1.bf16.msra.mxu0 %v4373
        %4580 = vmatprep.subr.bf16.mxu0 %v4377
        %4581 = vmatpush1.bf16.msra.mxu0 %v4376
        %4582 = vmatprep.subr.bf16.mxu0 %v4380
        %4583 = vmatpush1.bf16.msra.mxu0 %v4379
        %4584 = vmatprep.subr.bf16.mxu0 %v4383
        %4585 = vmatpush1.bf16.msra.mxu0 %v4382
        %4586 = vmatprep.subr.bf16.mxu0 0
        %4587 = vmatpush1.bf16.msra.mxu0 0
        %4588 = vmatprep.subr.bf16.mxu0 0
        %4589 = vmatpush1.bf16.msra.mxu0 0
        %4590 = vmatprep.subr.bf16.mxu0 0
        %4591 = vmatpush1.bf16.msra.mxu0 0
        %4592 = vmatprep.subr.bf16.mxu0 0
        %4593 = vmatpush1.bf16.msra.mxu0 0
        %4594 = vmatprep.subr.bf16.mxu0 0
        %4595 = vmatpush1.bf16.msra.mxu0 0
        %4596 = vmatprep.subr.bf16.mxu0 0
        %4597 = vmatpush1.bf16.msra.mxu0 0
        %4598 = vmatprep.subr.bf16.mxu0 0
        %4599 = vmatpush1.bf16.msra.mxu0 0
        %4600 = vmatprep.subr.bf16.mxu0 0
        %4601 = vmatpush1.bf16.msra.mxu0 0
        %4602 = vmatprep.mubr.bf16.mxu0 0
        %4603 = vmatmul.mubr.bf16.gmra.mrb[0].mxu0 %v3444
        %v4604 = vpop.f32.mrb[0].mxu0
        %v4605 = vadd.f32 %v4492, %v4604
        %v4606 = vpop.f32.mrb[0].mxu0
        %v4607 = vadd.f32 %v4494, %v4606
        %v4608 = vpop.f32.mrb[0].mxu0
        %v4609 = vadd.f32 %v4496, %v4608
        %v4610 = vpop.f32.mrb[0].mxu0
        %v4611 = vadd.f32 %v4498, %v4610
        %4612 = vmatprep.mubr.bf16.mxu0 0
        %4613 = vmatmul.mubr.bf16.gmra.mrb[0].mxu0 %v3447
        %v4614 = vpop.f32.mrb[0].mxu0
        %v4615 = vadd.f32 %v4502, %v4614
        %v4616 = vpop.f32.mrb[0].mxu0
        %v4617 = vadd.f32 %v4504, %v4616
        %v4618 = vpop.f32.mrb[0].mxu0
        %v4619 = vadd.f32 %v4506, %v4618
        %v4620 = vpop.f32.mrb[0].mxu0
        %v4621 = vadd.f32 %v4508, %v4620
        %4622 = vmatprep.mubr.bf16.mxu0 0
        %4623 = vmatmul.mubr.bf16.gmra.mrb[0].mxu0 %v3450
        %v4624 = vpop.f32.mrb[0].mxu0
        %v4625 = vadd.f32 %v4512, %v4624
        %v4626 = vpop.f32.mrb[0].mxu0
        %v4627 = vadd.f32 %v4514, %v4626
        %v4628 = vpop.f32.mrb[0].mxu0
        %v4629 = vadd.f32 %v4516, %v4628
        %v4630 = vpop.f32.mrb[0].mxu0
        %v4631 = vadd.f32 %v4518, %v4630
        %4632 = vmatprep.mubr.bf16.mxu0 0
        %4633 = vmatmul.mubr.bf16.gmra.mrb[0].mxu0 %v3453
        %v4634 = vpop.f32.mrb[0].mxu0
        %v4635 = vadd.f32 %v4522, %v4634
        %v4636 = vpop.f32.mrb[0].mxu0
        %v4637 = vadd.f32 %v4524, %v4636
        %v4638 = vpop.f32.mrb[0].mxu0
        %v4639 = vadd.f32 %v4526, %v4638
        %v4640 = vpop.f32.mrb[0].mxu0
        %v4641 = vadd.f32 %v4528, %v4640
        %4642 = vmatprep.mubr.bf16.mxu0 0
        %4643 = vmatmul.mubr.bf16.gmra.mrb[0].mxu0 %v3456
        %v4644 = vpop.f32.mrb[0].mxu0
        %v4645 = vadd.f32 %v4532, %v4644
        %v4646 = vpop.f32.mrb[0].mxu0
        %v4647 = vadd.f32 %v4534, %v4646
        %v4648 = vpop.f32.mrb[0].mxu0
        %v4649 = vadd.f32 %v4536, %v4648
        %v4650 = vpop.f32.mrb[0].mxu0
        %v4651 = vadd.f32 %v4538, %v4650
        %4652 = vmatprep.mubr.bf16.mxu0 0
        %4653 = vmatmul.mubr.bf16.gmra.mrb[0].mxu0 %v3459
        %v4654 = vpop.f32.mrb[0].mxu0
        %v4655 = vadd.f32 %v4542, %v4654
        %v4656 = vpop.f32.mrb[0].mxu0
        %v4657 = vadd.f32 %v4544, %v4656
        %v4658 = vpop.f32.mrb[0].mxu0
        %v4659 = vadd.f32 %v4546, %v4658
        %v4660 = vpop.f32.mrb[0].mxu0
        %v4661 = vadd.f32 %v4548, %v4660
        %4662 = vmatprep.mubr.bf16.mxu0 0
        %4663 = vmatmul.mubr.bf16.gmra.mrb[0].mxu0 %v3462
        %v4664 = vpop.f32.mrb[0].mxu0
        %v4665 = vadd.f32 %v4552, %v4664
        %v4666 = vpop.f32.mrb[0].mxu0
        %v4667 = vadd.f32 %v4554, %v4666
        %v4668 = vpop.f32.mrb[0].mxu0
        %v4669 = vadd.f32 %v4556, %v4668
        %v4670 = vpop.f32.mrb[0].mxu0
        %v4671 = vadd.f32 %v4558, %v4670
        %4672 = vmatprep.mubr.bf16.mxu0 0
        %4673 = vmatmul.mubr.bf16.gmra.mrb[0].mxu0 %v3465
        %v4674 = vpop.f32.mrb[0].mxu0
        %v4675 = vadd.f32 %v4562, %v4674
        %v4676 = vpop.f32.mrb[0].mxu0
        %v4677 = vadd.f32 %v4564, %v4676
        %v4678 = vpop.f32.mrb[0].mxu0
        %v4679 = vadd.f32 %v4566, %v4678
        %v4680 = vpop.f32.mrb[0].mxu0
        %v4681 = vadd.f32 %v4568, %v4680
        %4682 = vdwg.mxu0
        %4683 = vmatprep.subr.bf16.mxu0 0
        %4684 = vmatpush1.bf16.msra.mxu0 %v4315
        %4685 = vmatprep.subr.bf16.mxu0 0
        %4686 = vmatpush1.bf16.msra.mxu0 %v4318
        %4687 = vmatprep.subr.bf16.mxu0 0
        %4688 = vmatpush1.bf16.msra.mxu0 %v4321
        %4689 = vmatprep.subr.bf16.mxu0 0
        %4690 = vmatpush1.bf16.msra.mxu0 %v4324
        %4691 = vmatprep.subr.bf16.mxu0 0
        %4692 = vmatpush1.bf16.msra.mxu0 %v4327
        %4693 = vmatprep.subr.bf16.mxu0 0
        %4694 = vmatpush1.bf16.msra.mxu0 %v4330
        %4695 = vmatprep.subr.bf16.mxu0 0
        %4696 = vmatpush1.bf16.msra.mxu0 %v4333
        %4697 = vmatprep.subr.bf16.mxu0 0
        %4698 = vmatpush1.bf16.msra.mxu0 %v4336
        %4699 = vmatprep.subr.bf16.mxu0 0
        %4700 = vmatpush1.bf16.msra.mxu0 %v4339
        %4701 = vmatprep.subr.bf16.mxu0 0
        %4702 = vmatpush1.bf16.msra.mxu0 %v4342
        %4703 = vmatprep.subr.bf16.mxu0 0
        %4704 = vmatpush1.bf16.msra.mxu0 %v4345
        %4705 = vmatprep.subr.bf16.mxu0 0
        %4706 = vmatpush1.bf16.msra.mxu0 %v4348
        %4707 = vmatprep.subr.bf16.mxu0 0
        %4708 = vmatpush1.bf16.msra.mxu0 %v4351
        %4709 = vmatprep.subr.bf16.mxu0 0
        %4710 = vmatpush1.bf16.msra.mxu0 %v4354
        %4711 = vmatprep.subr.bf16.mxu0 0
        %4712 = vmatpush1.bf16.msra.mxu0 %v4357
        %4713 = vmatprep.subr.bf16.mxu0 0
        %4714 = vmatpush1.bf16.msra.mxu0 %v4360
        %4715 = vmatprep.mubr.bf16.mxu0 %v3443
        %4716 = vmatmul.mubr.bf16.gmra.mrb[0].mxu0 %v3442
        %v4717 = vpop.f32.mrb[0].mxu0
        %v4718 = vadd.f32 %v4069, %v4717
        %v4719 = vpop.f32.mrb[0].mxu0
        %v4720 = vpop.f32.mrb[0].mxu0
        %v4721 = vadd.f32 %v4069, %v4720
        %v4722 = vpop.f32.mrb[0].mxu0
        %4723 = vmatprep.mubr.bf16.mxu0 %v3446
        %4724 = vmatmul.mubr.bf16.gmra.mrb[0].mxu0 %v3445
        %v4725 = vpop.f32.mrb[0].mxu0
        %v4726 = vadd.f32 %v4069, %v4725
        %v4727 = vpop.f32.mrb[0].mxu0
        %v4728 = vpop.f32.mrb[0].mxu0
        %v4729 = vadd.f32 %v4069, %v4728
        %v4730 = vpop.f32.mrb[0].mxu0
        %4731 = vmatprep.mubr.bf16.mxu0 %v3449
        %4732 = vmatmul.mubr.bf16.gmra.mrb[0].mxu0 %v3448
        %v4733 = vpop.f32.mrb[0].mxu0
        %v4734 = vadd.f32 %v4069, %v4733
        %v4735 = vpop.f32.mrb[0].mxu0
        %v4736 = vpop.f32.mrb[0].mxu0
        %v4737 = vadd.f32 %v4069, %v4736
        %v4738 = vpop.f32.mrb[0].mxu0
        %4739 = vmatprep.mubr.bf16.mxu0 %v3452
        %4740 = vmatmul.mubr.bf16.gmra.mrb[0].mxu0 %v3451
        %v4741 = vpop.f32.mrb[0].mxu0
        %v4742 = vadd.f32 %v4069, %v4741
        %v4743 = vpop.f32.mrb[0].mxu0
        %v4744 = vpop.f32.mrb[0].mxu0
        %v4745 = vadd.f32 %v4069, %v4744
        %v4746 = vpop.f32.mrb[0].mxu0
        %4747 = vmatprep.mubr.bf16.mxu0 %v3455
        %4748 = vmatmul.mubr.bf16.gmra.mrb[0].mxu0 %v3454
        %v4749 = vpop.f32.mrb[0].mxu0
        %v4750 = vadd.f32 %v4069, %v4749
        %v4751 = vpop.f32.mrb[0].mxu0
        %v4752 = vpop.f32.mrb[0].mxu0
        %v4753 = vadd.f32 %v4069, %v4752
        %v4754 = vpop.f32.mrb[0].mxu0
        %4755 = vmatprep.mubr.bf16.mxu0 %v3458
        %4756 = vmatmul.mubr.bf16.gmra.mrb[0].mxu0 %v3457
        %v4757 = vpop.f32.mrb[0].mxu0
        %v4758 = vadd.f32 %v4069, %v4757
        %v4759 = vpop.f32.mrb[0].mxu0
        %v4760 = vpop.f32.mrb[0].mxu0
        %v4761 = vadd.f32 %v4069, %v4760
        %v4762 = vpop.f32.mrb[0].mxu0
        %4763 = vmatprep.mubr.bf16.mxu0 %v3461
        %4764 = vmatmul.mubr.bf16.gmra.mrb[0].mxu0 %v3460
        %v4765 = vpop.f32.mrb[0].mxu0
        %v4766 = vadd.f32 %v4069, %v4765
        %v4767 = vpop.f32.mrb[0].mxu0
        %v4768 = vpop.f32.mrb[0].mxu0
        %v4769 = vadd.f32 %v4069, %v4768
        %v4770 = vpop.f32.mrb[0].mxu0
        %4771 = vmatprep.mubr.bf16.mxu0 %v3464
        %4772 = vmatmul.mubr.bf16.gmra.mrb[0].mxu0 %v3463
        %v4773 = vpop.f32.mrb[0].mxu0
        %v4774 = vadd.f32 %v4069, %v4773
        %v4775 = vpop.f32.mrb[0].mxu0
        %v4776 = vpop.f32.mrb[0].mxu0
        %v4777 = vadd.f32 %v4069, %v4776
        %v4778 = vpop.f32.mrb[0].mxu0
        %4779 = vdwg.mxu0
        %4780 = vmatprep.subr.bf16.mxu0 0
        %4781 = vmatpush1.bf16.msra.mxu0 %v4363
        %4782 = vmatprep.subr.bf16.mxu0 0
        %4783 = vmatpush1.bf16.msra.mxu0 %v4366
        %4784 = vmatprep.subr.bf16.mxu0 0
        %4785 = vmatpush1.bf16.msra.mxu0 %v4369
        %4786 = vmatprep.subr.bf16.mxu0 0
        %4787 = vmatpush1.bf16.msra.mxu0 %v4372
        %4788 = vmatprep.subr.bf16.mxu0 0
        %4789 = vmatpush1.bf16.msra.mxu0 %v4375
        %4790 = vmatprep.subr.bf16.mxu0 0
        %4791 = vmatpush1.bf16.msra.mxu0 %v4378
        %4792 = vmatprep.subr.bf16.mxu0 0
        %4793 = vmatpush1.bf16.msra.mxu0 %v4381
        %4794 = vmatprep.subr.bf16.mxu0 0
        %4795 = vmatpush1.bf16.msra.mxu0 %v4384
        %4796 = vmatprep.subr.bf16.mxu0 0
        %4797 = vmatpush1.bf16.msra.mxu0 0
        %4798 = vmatprep.subr.bf16.mxu0 0
        %4799 = vmatpush1.bf16.msra.mxu0 0
        %4800 = vmatprep.subr.bf16.mxu0 0
        %4801 = vmatpush1.bf16.msra.mxu0 0
        %4802 = vmatprep.subr.bf16.mxu0 0
        %4803 = vmatpush1.bf16.msra.mxu0 0
        %4804 = vmatprep.subr.bf16.mxu0 0
        %4805 = vmatpush1.bf16.msra.mxu0 0
        %4806 = vmatprep.subr.bf16.mxu0 0
        %4807 = vmatpush1.bf16.msra.mxu0 0
        %4808 = vmatprep.subr.bf16.mxu0 0
        %4809 = vmatpush1.bf16.msra.mxu0 0
        %4810 = vmatprep.subr.bf16.mxu0 0
        %4811 = vmatpush1.bf16.msra.mxu0 0
        %4812 = vmatprep.mubr.bf16.mxu0 0
        %4813 = vmatmul.mubr.bf16.gmra.mrb[0].mxu0 %v3444
        %v4814 = vpop.f32.mrb[0].mxu0
        %v4815 = vadd.f32 %v4718, %v4814
        %v4816 = vpop.f32.mrb[0].mxu0
        %v4817 = vpop.f32.mrb[0].mxu0
        %v4818 = vadd.f32 %v4721, %v4817
        %v4819 = vpop.f32.mrb[0].mxu0
        %4820 = vmatprep.mubr.bf16.mxu0 0
        %4821 = vmatmul.mubr.bf16.gmra.mrb[0].mxu0 %v3447
        %v4822 = vpop.f32.mrb[0].mxu0
        %v4823 = vadd.f32 %v4726, %v4822
        %v4824 = vpop.f32.mrb[0].mxu0
        %v4825 = vpop.f32.mrb[0].mxu0
        %v4826 = vadd.f32 %v4729, %v4825
        %v4827 = vpop.f32.mrb[0].mxu0
        %4828 = vmatprep.mubr.bf16.mxu0 0
        %4829 = vmatmul.mubr.bf16.gmra.mrb[0].mxu0 %v3450
        %v4830 = vpop.f32.mrb[0].mxu0
        %v4831 = vadd.f32 %v4734, %v4830
        %v4832 = vpop.f32.mrb[0].mxu0
        %v4833 = vpop.f32.mrb[0].mxu0
        %v4834 = vadd.f32 %v4737, %v4833
        %v4835 = vpop.f32.mrb[0].mxu0
        %4836 = vmatprep.mubr.bf16.mxu0 0
        %4837 = vmatmul.mubr.bf16.gmra.mrb[0].mxu0 %v3453
        %v4838 = vpop.f32.mrb[0].mxu0
        %v4839 = vadd.f32 %v4742, %v4838
        %v4840 = vpop.f32.mrb[0].mxu0
        %v4841 = vpop.f32.mrb[0].mxu0
        %v4842 = vadd.f32 %v4745, %v4841
        %v4843 = vpop.f32.mrb[0].mxu0
        %4844 = vmatprep.mubr.bf16.mxu0 0
        %4845 = vmatmul.mubr.bf16.gmra.mrb[0].mxu0 %v3456
        %v4846 = vpop.f32.mrb[0].mxu0
        %v4847 = vadd.f32 %v4750, %v4846
        %v4848 = vpop.f32.mrb[0].mxu0
        %v4849 = vpop.f32.mrb[0].mxu0
        %v4850 = vadd.f32 %v4753, %v4849
        %v4851 = vpop.f32.mrb[0].mxu0
        %4852 = vmatprep.mubr.bf16.mxu0 0
        %4853 = vmatmul.mubr.bf16.gmra.mrb[0].mxu0 %v3459
        %v4854 = vpop.f32.mrb[0].mxu0
        %v4855 = vadd.f32 %v4758, %v4854
        %v4856 = vpop.f32.mrb[0].mxu0
        %v4857 = vpop.f32.mrb[0].mxu0
        %v4858 = vadd.f32 %v4761, %v4857
        %v4859 = vpop.f32.mrb[0].mxu0
        %4860 = vmatprep.mubr.bf16.mxu0 0
        %4861 = vmatmul.mubr.bf16.gmra.mrb[0].mxu0 %v3462
        %v4862 = vpop.f32.mrb[0].mxu0
        %v4863 = vadd.f32 %v4766, %v4862
        %v4864 = vpop.f32.mrb[0].mxu0
        %v4865 = vpop.f32.mrb[0].mxu0
        %v4866 = vadd.f32 %v4769, %v4865
        %v4867 = vpop.f32.mrb[0].mxu0
        %4868 = vmatprep.mubr.bf16.mxu0 0
        %4869 = vmatmul.mubr.bf16.gmra.mrb[0].mxu0 %v3465
        %v4870 = vpop.f32.mrb[0].mxu0
        %v4871 = vadd.f32 %v4774, %v4870
        %v4872 = vpop.f32.mrb[0].mxu0
        %v4873 = vpop.f32.mrb[0].mxu0
        %v4874 = vadd.f32 %v4777, %v4873
        %v4875 = vpop.f32.mrb[0].mxu0
        %4876 = vdwg.mxu0
        %v4877 = vtanh.pop %v4605
        %v4878 = vtanh.pop %v4607
        %v4879 = vtanh.pop %v4815
        %v4880 = vtanh.pop %v4609
        %v4881 = vtanh.pop %v4611
        %v4882 = vtanh.pop %v4818
        %v4883 = vtanh.pop %v4615
        %v4884 = vtanh.pop %v4617
        %v4885 = vtanh.pop %v4823
        %v4886 = vtanh.pop %v4619
        %v4887 = vtanh.pop %v4621
        %v4888 = vtanh.pop %v4826
        %v4889 = vtanh.pop %v4625
        %v4890 = vtanh.pop %v4627
        %v4891 = vtanh.pop %v4831
        %v4892 = vtanh.pop %v4629
        %v4893 = vtanh.pop %v4631
        %v4894 = vtanh.pop %v4834
        %v4895 = vtanh.pop %v4635
        %v4896 = vtanh.pop %v4637
        %v4897 = vtanh.pop %v4839
        %v4898 = vtanh.pop %v4639
        %v4899 = vtanh.pop %v4641
        %v4900 = vtanh.pop %v4842
        %v4901 = vtanh.pop %v4645
        %v4902 = vtanh.pop %v4647
        %v4903 = vtanh.pop %v4847
        %v4904 = vtanh.pop %v4649
        %v4905 = vtanh.pop %v4651
        %v4906 = vtanh.pop %v4850
        %v4907 = vtanh.pop %v4655
        %v4908 = vtanh.pop %v4657
        %v4909 = vtanh.pop %v4855
        %v4910 = vtanh.pop %v4659
        %v4911 = vtanh.pop %v4661
        %v4912 = vtanh.pop %v4858
        %v4913 = vtanh.pop %v4665
        %v4914 = vtanh.pop %v4667
        %v4915 = vtanh.pop %v4863
        %v4916 = vtanh.pop %v4669
        %v4917 = vtanh.pop %v4671
        %v4918 = vtanh.pop %v4866
        %v4919 = vtanh.pop %v4675
        %v4920 = vtanh.pop %v4677
        %v4921 = vtanh.pop %v4871
        %v4922 = vtanh.pop %v4679
        %v4923 = vtanh.pop %v4681
        %v4924 = vtanh.pop %v4874
        %v4925 = vpack.c.bf16 %v4880, %v4877
        %v4926 = vpack.c.bf16 %v4881, %v4878
        %v4927 = vpack.c.bf16 %v4882, %v4879
        %v4928 = vpack.c.bf16 %v4886, %v4883
        %v4929 = vpack.c.bf16 %v4887, %v4884
        %v4930 = vpack.c.bf16 %v4888, %v4885
        %v4931 = vpack.c.bf16 %v4892, %v4889
        %v4932 = vpack.c.bf16 %v4893, %v4890
        %v4933 = vpack.c.bf16 %v4894, %v4891
        %v4934 = vpack.c.bf16 %v4898, %v4895
        %v4935 = vpack.c.bf16 %v4899, %v4896
        %v4936 = vpack.c.bf16 %v4900, %v4897
        %v4937 = vpack.c.bf16 %v4904, %v4901
        %v4938 = vpack.c.bf16 %v4905, %v4902
        %v4939 = vpack.c.bf16 %v4906, %v4903
        %v4940 = vpack.c.bf16 %v4910, %v4907
        %v4941 = vpack.c.bf16 %v4911, %v4908
        %v4942 = vpack.c.bf16 %v4912, %v4909
        %v4943 = vpack.c.bf16 %v4916, %v4913
        %v4944 = vpack.c.bf16 %v4917, %v4914
        %v4945 = vpack.c.bf16 %v4918, %v4915
        %v4946 = vpack.c.bf16 %v4922, %v4919
        %v4947 = vpack.c.bf16 %v4923, %v4920
        %v4948 = vpack.c.bf16 %v4924, %v4921
        %4949 = vmatprep.subr.bf16.mxu0 %v4314
        %4950 = vmatpush1.bf16.msra.mxu0 %v4313
        %4951 = vmatprep.subr.bf16.mxu0 %v4317
        %4952 = vmatpush1.bf16.msra.mxu0 %v4316
        %4953 = vmatprep.subr.bf16.mxu0 %v4320
        %4954 = vmatpush1.bf16.msra.mxu0 %v4319
        %4955 = vmatprep.subr.bf16.mxu0 %v4323
        %4956 = vmatpush1.bf16.msra.mxu0 %v4322
        %4957 = vmatprep.subr.bf16.mxu0 %v4326
        %4958 = vmatpush1.bf16.msra.mxu0 %v4325
        %4959 = vmatprep.subr.bf16.mxu0 %v4329
        %4960 = vmatpush1.bf16.msra.mxu0 %v4328
        %4961 = vmatprep.subr.bf16.mxu0 %v4332
        %4962 = vmatpush1.bf16.msra.mxu0 %v4331
        %4963 = vmatprep.subr.bf16.mxu0 %v4335
        %4964 = vmatpush1.bf16.msra.mxu0 %v4334
        %4965 = vmatprep.subr.bf16.mxu0 %v4338
        %4966 = vmatpush1.bf16.msra.mxu0 %v4337
        %4967 = vmatprep.subr.bf16.mxu0 %v4341
        %4968 = vmatpush1.bf16.msra.mxu0 %v4340
        %4969 = vmatprep.subr.bf16.mxu0 %v4344
        %4970 = vmatpush1.bf16.msra.mxu0 %v4343
        %4971 = vmatprep.subr.bf16.mxu0 %v4347
        %4972 = vmatpush1.bf16.msra.mxu0 %v4346
        %4973 = vmatprep.subr.bf16.mxu0 %v4350
        %4974 = vmatpush1.bf16.msra.mxu0 %v4349
        %4975 = vmatprep.subr.bf16.mxu0 %v4353
        %4976 = vmatpush1.bf16.msra.mxu0 %v4352
        %4977 = vmatprep.subr.bf16.mxu0 %v4356
        %4978 = vmatpush1.bf16.msra.mxu0 %v4355
        %4979 = vmatprep.subr.bf16.mxu0 %v4359
        %4980 = vmatpush1.bf16.msra.mxu0 %v4358
        %4981 = vmatprep.mubr.bf16.mxu0 %v3935
        %4982 = vmatmul.mubr.bf16.gmra.mrb[0].mxu0 %v3934
        %v4983 = vpop.f32.mrb[0].mxu0
        %v4984 = vadd.f32 %v4061, %v4983
        %v4985 = vpop.f32.mrb[0].mxu0
        %v4986 = vadd.f32 %v4065, %v4985
        %v4987 = vpop.f32.mrb[0].mxu0
        %v4988 = vadd.f32 %v4061, %v4987
        %v4989 = vpop.f32.mrb[0].mxu0
        %v4990 = vadd.f32 %v4065, %v4989
        %4991 = vmatprep.mubr.bf16.mxu0 %v3938
        %4992 = vmatmul.mubr.bf16.gmra.mrb[0].mxu0 %v3937
        %v4993 = vpop.f32.mrb[0].mxu0
        %v4994 = vadd.f32 %v4061, %v4993
        %v4995 = vpop.f32.mrb[0].mxu0
        %v4996 = vadd.f32 %v4065, %v4995
        %v4997 = vpop.f32.mrb[0].mxu0
        %v4998 = vadd.f32 %v4061, %v4997
        %v4999 = vpop.f32.mrb[0].mxu0
        %v5000 = vadd.f32 %v4065, %v4999
        %5001 = vmatprep.mubr.bf16.mxu0 %v3941
        %5002 = vmatmul.mubr.bf16.gmra.mrb[0].mxu0 %v3940
        %v5003 = vpop.f32.mrb[0].mxu0
        %v5004 = vadd.f32 %v4061, %v5003
        %v5005 = vpop.f32.mrb[0].mxu0
        %v5006 = vadd.f32 %v4065, %v5005
        %v5007 = vpop.f32.mrb[0].mxu0
        %v5008 = vadd.f32 %v4061, %v5007
        %v5009 = vpop.f32.mrb[0].mxu0
        %v5010 = vadd.f32 %v4065, %v5009
        %5011 = vmatprep.mubr.bf16.mxu0 %v3944
        %5012 = vmatmul.mubr.bf16.gmra.mrb[0].mxu0 %v3943
        %v5013 = vpop.f32.mrb[0].mxu0
        %v5014 = vadd.f32 %v4061, %v5013
        %v5015 = vpop.f32.mrb[0].mxu0
        %v5016 = vadd.f32 %v4065, %v5015
        %v5017 = vpop.f32.mrb[0].mxu0
        %v5018 = vadd.f32 %v4061, %v5017
        %v5019 = vpop.f32.mrb[0].mxu0
        %v5020 = vadd.f32 %v4065, %v5019
        %5021 = vmatprep.mubr.bf16.mxu0 %v3947
        %5022 = vmatmul.mubr.bf16.gmra.mrb[0].mxu0 %v3946
        %v5023 = vpop.f32.mrb[0].mxu0
        %v5024 = vadd.f32 %v4061, %v5023
        %v5025 = vpop.f32.mrb[0].mxu0
        %v5026 = vadd.f32 %v4065, %v5025
        %v5027 = vpop.f32.mrb[0].mxu0
        %v5028 = vadd.f32 %v4061, %v5027
        %v5029 = vpop.f32.mrb[0].mxu0
        %v5030 = vadd.f32 %v4065, %v5029
        %5031 = vmatprep.mubr.bf16.mxu0 %v3950
        %5032 = vmatmul.mubr.bf16.gmra.mrb[0].mxu0 %v3949
        %v5033 = vpop.f32.mrb[0].mxu0
        %v5034 = vadd.f32 %v4061, %v5033
        %v5035 = vpop.f32.mrb[0].mxu0
        %v5036 = vadd.f32 %v4065, %v5035
        %v5037 = vpop.f32.mrb[0].mxu0
        %v5038 = vadd.f32 %v4061, %v5037
        %v5039 = vpop.f32.mrb[0].mxu0
        %v5040 = vadd.f32 %v4065, %v5039
        %5041 = vmatprep.mubr.bf16.mxu0 %v3953
        %5042 = vmatmul.mubr.bf16.gmra.mrb[0].mxu0 %v3952
        %v5043 = vpop.f32.mrb[0].mxu0
        %v5044 = vadd.f32 %v4061, %v5043
        %v5045 = vpop.f32.mrb[0].mxu0
        %v5046 = vadd.f32 %v4065, %v5045
        %v5047 = vpop.f32.mrb[0].mxu0
        %v5048 = vadd.f32 %v4061, %v5047
        %v5049 = vpop.f32.mrb[0].mxu0
        %v5050 = vadd.f32 %v4065, %v5049
        %5051 = vmatprep.mubr.bf16.mxu0 %v3956
        %5052 = vmatmul.mubr.bf16.gmra.mrb[0].mxu0 %v3955
        %v5053 = vpop.f32.mrb[0].mxu0
        %v5054 = vadd.f32 %v4061, %v5053
        %v5055 = vpop.f32.mrb[0].mxu0
        %v5056 = vadd.f32 %v4065, %v5055
        %v5057 = vpop.f32.mrb[0].mxu0
        %v5058 = vadd.f32 %v4061, %v5057
        %v5059 = vpop.f32.mrb[0].mxu0
        %v5060 = vadd.f32 %v4065, %v5059
        %5061 = vdwg.mxu0
        %5062 = vmatprep.subr.bf16.mxu0 %v4362
        %5063 = vmatpush1.bf16.msra.mxu0 %v4361
        %5064 = vmatprep.subr.bf16.mxu0 %v4365
        %5065 = vmatpush1.bf16.msra.mxu0 %v4364
        %5066 = vmatprep.subr.bf16.mxu0 %v4368
        %5067 = vmatpush1.bf16.msra.mxu0 %v4367
        %5068 = vmatprep.subr.bf16.mxu0 %v4371
        %5069 = vmatpush1.bf16.msra.mxu0 %v4370
        %5070 = vmatprep.subr.bf16.mxu0 %v4374
        %5071 = vmatpush1.bf16.msra.mxu0 %v4373
        %5072 = vmatprep.subr.bf16.mxu0 %v4377
        %5073 = vmatpush1.bf16.msra.mxu0 %v4376
        %5074 = vmatprep.subr.bf16.mxu0 %v4380
        %5075 = vmatpush1.bf16.msra.mxu0 %v4379
        %5076 = vmatprep.subr.bf16.mxu0 %v4383
        %5077 = vmatpush1.bf16.msra.mxu0 %v4382
        %5078 = vmatprep.subr.bf16.mxu0 0
        %5079 = vmatpush1.bf16.msra.mxu0 0
        %5080 = vmatprep.subr.bf16.mxu0 0
        %5081 = vmatpush1.bf16.msra.mxu0 0
        %5082 = vmatprep.subr.bf16.mxu0 0
        %5083 = vmatpush1.bf16.msra.mxu0 0
        %5084 = vmatprep.subr.bf16.mxu0 0
        %5085 = vmatpush1.bf16.msra.mxu0 0
        %5086 = vmatprep.subr.bf16.mxu0 0
        %5087 = vmatpush1.bf16.msra.mxu0 0
        %5088 = vmatprep.subr.bf16.mxu0 0
        %5089 = vmatpush1.bf16.msra.mxu0 0
        %5090 = vmatprep.subr.bf16.mxu0 0
        %5091 = vmatpush1.bf16.msra.mxu0 0
        %5092 = vmatprep.subr.bf16.mxu0 0
        %5093 = vmatpush1.bf16.msra.mxu0 0
        %5094 = vmatprep.mubr.bf16.mxu0 0
        %5095 = vmatmul.mubr.bf16.gmra.mrb[0].mxu0 %v3936
        %v5096 = vpop.f32.mrb[0].mxu0
        %v5097 = vadd.f32 %v4984, %v5096
        %v5098 = vpop.f32.mrb[0].mxu0
        %v5099 = vadd.f32 %v4986, %v5098
        %v5100 = vpop.f32.mrb[0].mxu0
        %v5101 = vadd.f32 %v4988, %v5100
        %v5102 = vpop.f32.mrb[0].mxu0
        %v5103 = vadd.f32 %v4990, %v5102
        %5104 = vmatprep.mubr.bf16.mxu0 0
        %5105 = vmatmul.mubr.bf16.gmra.mrb[0].mxu0 %v3939
        %v5106 = vpop.f32.mrb[0].mxu0
        %v5107 = vadd.f32 %v4994, %v5106
        %v5108 = vpop.f32.mrb[0].mxu0
        %v5109 = vadd.f32 %v4996, %v5108
        %v5110 = vpop.f32.mrb[0].mxu0
        %v5111 = vadd.f32 %v4998, %v5110
        %v5112 = vpop.f32.mrb[0].mxu0
        %v5113 = vadd.f32 %v5000, %v5112
        %5114 = vmatprep.mubr.bf16.mxu0 0
        %5115 = vmatmul.mubr.bf16.gmra.mrb[0].mxu0 %v3942
        %v5116 = vpop.f32.mrb[0].mxu0
        %v5117 = vadd.f32 %v5004, %v5116
        %v5118 = vpop.f32.mrb[0].mxu0
        %v5119 = vadd.f32 %v5006, %v5118
        %v5120 = vpop.f32.mrb[0].mxu0
        %v5121 = vadd.f32 %v5008, %v5120
        %v5122 = vpop.f32.mrb[0].mxu0
        %v5123 = vadd.f32 %v5010, %v5122
        %5124 = vmatprep.mubr.bf16.mxu0 0
        %5125 = vmatmul.mubr.bf16.gmra.mrb[0].mxu0 %v3945
        %v5126 = vpop.f32.mrb[0].mxu0
        %v5127 = vadd.f32 %v5014, %v5126
        %v5128 = vpop.f32.mrb[0].mxu0
        %v5129 = vadd.f32 %v5016, %v5128
        %v5130 = vpop.f32.mrb[0].mxu0
        %v5131 = vadd.f32 %v5018, %v5130
        %v5132 = vpop.f32.mrb[0].mxu0
        %v5133 = vadd.f32 %v5020, %v5132
        %5134 = vmatprep.mubr.bf16.mxu0 0
        %5135 = vmatmul.mubr.bf16.gmra.mrb[0].mxu0 %v3948
        %v5136 = vpop.f32.mrb[0].mxu0
        %v5137 = vadd.f32 %v5024, %v5136
        %v5138 = vpop.f32.mrb[0].mxu0
        %v5139 = vadd.f32 %v5026, %v5138
        %v5140 = vpop.f32.mrb[0].mxu0
        %v5141 = vadd.f32 %v5028, %v5140
        %v5142 = vpop.f32.mrb[0].mxu0
        %v5143 = vadd.f32 %v5030, %v5142
        %5144 = vmatprep.mubr.bf16.mxu0 0
        %5145 = vmatmul.mubr.bf16.gmra.mrb[0].mxu0 %v3951
        %v5146 = vpop.f32.mrb[0].mxu0
        %v5147 = vadd.f32 %v5034, %v5146
        %v5148 = vpop.f32.mrb[0].mxu0
        %v5149 = vadd.f32 %v5036, %v5148
        %v5150 = vpop.f32.mrb[0].mxu0
        %v5151 = vadd.f32 %v5038, %v5150
        %v5152 = vpop.f32.mrb[0].mxu0
        %v5153 = vadd.f32 %v5040, %v5152
        %5154 = vmatprep.mubr.bf16.mxu0 0
        %5155 = vmatmul.mubr.bf16.gmra.mrb[0].mxu0 %v3954
        %v5156 = vpop.f32.mrb[0].mxu0
        %v5157 = vadd.f32 %v5044, %v5156
        %v5158 = vpop.f32.mrb[0].mxu0
        %v5159 = vadd.f32 %v5046, %v5158
        %v5160 = vpop.f32.mrb[0].mxu0
        %v5161 = vadd.f32 %v5048, %v5160
        %v5162 = vpop.f32.mrb[0].mxu0
        %v5163 = vadd.f32 %v5050, %v5162
        %5164 = vmatprep.mubr.bf16.mxu0 0
        %5165 = vmatmul.mubr.bf16.gmra.mrb[0].mxu0 %v3957
        %v5166 = vpop.f32.mrb[0].mxu0
        %v5167 = vadd.f32 %v5054, %v5166
        %v5168 = vpop.f32.mrb[0].mxu0
        %v5169 = vadd.f32 %v5056, %v5168
        %v5170 = vpop.f32.mrb[0].mxu0
        %v5171 = vadd.f32 %v5058, %v5170
        %v5172 = vpop.f32.mrb[0].mxu0
        %v5173 = vadd.f32 %v5060, %v5172
        %5174 = vdwg.mxu0
        %5175 = vmatprep.subr.bf16.mxu0 0
        %5176 = vmatpush1.bf16.msra.mxu0 %v4315
        %5177 = vmatprep.subr.bf16.mxu0 0
        %5178 = vmatpush1.bf16.msra.mxu0 %v4318
        %5179 = vmatprep.subr.bf16.mxu0 0
        %5180 = vmatpush1.bf16.msra.mxu0 %v4321
        %5181 = vmatprep.subr.bf16.mxu0 0
        %5182 = vmatpush1.bf16.msra.mxu0 %v4324
        %5183 = vmatprep.subr.bf16.mxu0 0
        %5184 = vmatpush1.bf16.msra.mxu0 %v4327
        %5185 = vmatprep.subr.bf16.mxu0 0
        %5186 = vmatpush1.bf16.msra.mxu0 %v4330
        %5187 = vmatprep.subr.bf16.mxu0 0
        %5188 = vmatpush1.bf16.msra.mxu0 %v4333
        %5189 = vmatprep.subr.bf16.mxu0 0
        %5190 = vmatpush1.bf16.msra.mxu0 %v4336
        %5191 = vmatprep.subr.bf16.mxu0 0
        %5192 = vmatpush1.bf16.msra.mxu0 %v4339
        %5193 = vmatprep.subr.bf16.mxu0 0
        %5194 = vmatpush1.bf16.msra.mxu0 %v4342
        %5195 = vmatprep.subr.bf16.mxu0 0
        %5196 = vmatpush1.bf16.msra.mxu0 %v4345
        %5197 = vmatprep.subr.bf16.mxu0 0
        %5198 = vmatpush1.bf16.msra.mxu0 %v4348
        %5199 = vmatprep.subr.bf16.mxu0 0
        %5200 = vmatpush1.bf16.msra.mxu0 %v4351
        %5201 = vmatprep.subr.bf16.mxu0 0
        %5202 = vmatpush1.bf16.msra.mxu0 %v4354
        %5203 = vmatprep.subr.bf16.mxu0 0
        %5204 = vmatpush1.bf16.msra.mxu0 %v4357
        %5205 = vmatprep.subr.bf16.mxu0 0
        %5206 = vmatpush1.bf16.msra.mxu0 %v4360
        %5207 = vmatprep.mubr.bf16.mxu0 %v3935
        %5208 = vmatmul.mubr.bf16.gmra.mrb[0].mxu0 %v3934
        %v5209 = vpop.f32.mrb[0].mxu0
        %v5210 = vadd.f32 %v4069, %v5209
        %v5211 = vpop.f32.mrb[0].mxu0
        %v5212 = vpop.f32.mrb[0].mxu0
        %v5213 = vadd.f32 %v4069, %v5212
        %v5214 = vpop.f32.mrb[0].mxu0
        %5215 = vmatprep.mubr.bf16.mxu0 %v3938
        %5216 = vmatmul.mubr.bf16.gmra.mrb[0].mxu0 %v3937
        %v5217 = vpop.f32.mrb[0].mxu0
        %v5218 = vadd.f32 %v4069, %v5217
        %v5219 = vpop.f32.mrb[0].mxu0
        %v5220 = vpop.f32.mrb[0].mxu0
        %v5221 = vadd.f32 %v4069, %v5220
        %v5222 = vpop.f32.mrb[0].mxu0
        %5223 = vmatprep.mubr.bf16.mxu0 %v3941
        %5224 = vmatmul.mubr.bf16.gmra.mrb[0].mxu0 %v3940
        %v5225 = vpop.f32.mrb[0].mxu0
        %v5226 = vadd.f32 %v4069, %v5225
        %v5227 = vpop.f32.mrb[0].mxu0
        %v5228 = vpop.f32.mrb[0].mxu0
        %v5229 = vadd.f32 %v4069, %v5228
        %v5230 = vpop.f32.mrb[0].mxu0
        %5231 = vmatprep.mubr.bf16.mxu0 %v3944
        %5232 = vmatmul.mubr.bf16.gmra.mrb[0].mxu0 %v3943
        %v5233 = vpop.f32.mrb[0].mxu0
        %v5234 = vadd.f32 %v4069, %v5233
        %v5235 = vpop.f32.mrb[0].mxu0
        %v5236 = vpop.f32.mrb[0].mxu0
        %v5237 = vadd.f32 %v4069, %v5236
        %v5238 = vpop.f32.mrb[0].mxu0
        %5239 = vmatprep.mubr.bf16.mxu0 %v3947
        %5240 = vmatmul.mubr.bf16.gmra.mrb[0].mxu0 %v3946
        %v5241 = vpop.f32.mrb[0].mxu0
        %v5242 = vadd.f32 %v4069, %v5241
        %v5243 = vpop.f32.mrb[0].mxu0
        %v5244 = vpop.f32.mrb[0].mxu0
        %v5245 = vadd.f32 %v4069, %v5244
        %v5246 = vpop.f32.mrb[0].mxu0
        %5247 = vmatprep.mubr.bf16.mxu0 %v3950
        %5248 = vmatmul.mubr.bf16.gmra.mrb[0].mxu0 %v3949
        %v5249 = vpop.f32.mrb[0].mxu0
        %v5250 = vadd.f32 %v4069, %v5249
        %v5251 = vpop.f32.mrb[0].mxu0
        %v5252 = vpop.f32.mrb[0].mxu0
        %v5253 = vadd.f32 %v4069, %v5252
        %v5254 = vpop.f32.mrb[0].mxu0
        %5255 = vmatprep.mubr.bf16.mxu0 %v3953
        %5256 = vmatmul.mubr.bf16.gmra.mrb[0].mxu0 %v3952
        %v5257 = vpop.f32.mrb[0].mxu0
        %v5258 = vadd.f32 %v4069, %v5257
        %v5259 = vpop.f32.mrb[0].mxu0
        %v5260 = vpop.f32.mrb[0].mxu0
        %v5261 = vadd.f32 %v4069, %v5260
        %v5262 = vpop.f32.mrb[0].mxu0
        %5263 = vmatprep.mubr.bf16.mxu0 %v3956
        %5264 = vmatmul.mubr.bf16.gmra.mrb[0].mxu0 %v3955
        %v5265 = vpop.f32.mrb[0].mxu0
        %v5266 = vadd.f32 %v4069, %v5265
        %v5267 = vpop.f32.mrb[0].mxu0
        %v5268 = vpop.f32.mrb[0].mxu0
        %v5269 = vadd.f32 %v4069, %v5268
        %v5270 = vpop.f32.mrb[0].mxu0
        %5271 = vdwg.mxu0
        %5272 = vmatprep.subr.bf16.mxu0 0
        %5273 = vmatpush1.bf16.msra.mxu0 %v4363
        %5274 = vmatprep.subr.bf16.mxu0 0
        %5275 = vmatpush1.bf16.msra.mxu0 %v4366
        %5276 = vmatprep.subr.bf16.mxu0 0
        %5277 = vmatpush1.bf16.msra.mxu0 %v4369
        %5278 = vmatprep.subr.bf16.mxu0 0
        %5279 = vmatpush1.bf16.msra.mxu0 %v4372
        %5280 = vmatprep.subr.bf16.mxu0 0
        %5281 = vmatpush1.bf16.msra.mxu0 %v4375
        %5282 = vmatprep.subr.bf16.mxu0 0
        %5283 = vmatpush1.bf16.msra.mxu0 %v4378
        %5284 = vmatprep.subr.bf16.mxu0 0
        %5285 = vmatpush1.bf16.msra.mxu0 %v4381
        %5286 = vmatprep.subr.bf16.mxu0 0
        %5287 = vmatpush1.bf16.msra.mxu0 %v4384
        %5288 = vmatprep.subr.bf16.mxu0 0
        %5289 = vmatpush1.bf16.msra.mxu0 0
        %5290 = vmatprep.subr.bf16.mxu0 0
        %5291 = vmatpush1.bf16.msra.mxu0 0
        %5292 = vmatprep.subr.bf16.mxu0 0
        %5293 = vmatpush1.bf16.msra.mxu0 0
        %5294 = vmatprep.subr.bf16.mxu0 0
        %5295 = vmatpush1.bf16.msra.mxu0 0
        %5296 = vmatprep.subr.bf16.mxu0 0
        %5297 = vmatpush1.bf16.msra.mxu0 0
        %5298 = vmatprep.subr.bf16.mxu0 0
        %5299 = vmatpush1.bf16.msra.mxu0 0
        %5300 = vmatprep.subr.bf16.mxu0 0
        %5301 = vmatpush1.bf16.msra.mxu0 0
        %5302 = vmatprep.subr.bf16.mxu0 0
        %5303 = vmatpush1.bf16.msra.mxu0 0
        %5304 = vmatprep.mubr.bf16.mxu0 0
        %5305 = vmatmul.mubr.bf16.gmra.mrb[0].mxu0 %v3936
        %v5306 = vpop.f32.mrb[0].mxu0
        %v5307 = vadd.f32 %v5210, %v5306
        %v5308 = vpop.f32.mrb[0].mxu0
        %v5309 = vpop.f32.mrb[0].mxu0
        %v5310 = vadd.f32 %v5213, %v5309
        %v5311 = vpop.f32.mrb[0].mxu0
        %5312 = vmatprep.mubr.bf16.mxu0 0
        %5313 = vmatmul.mubr.bf16.gmra.mrb[0].mxu0 %v3939
        %v5314 = vpop.f32.mrb[0].mxu0
        %v5315 = vadd.f32 %v5218, %v5314
        %v5316 = vpop.f32.mrb[0].mxu0
        %v5317 = vpop.f32.mrb[0].mxu0
        %v5318 = vadd.f32 %v5221, %v5317
        %v5319 = vpop.f32.mrb[0].mxu0
        %5320 = vmatprep.mubr.bf16.mxu0 0
        %5321 = vmatmul.mubr.bf16.gmra.mrb[0].mxu0 %v3942
        %v5322 = vpop.f32.mrb[0].mxu0
        %v5323 = vadd.f32 %v5226, %v5322
        %v5324 = vpop.f32.mrb[0].mxu0
        %v5325 = vpop.f32.mrb[0].mxu0
        %v5326 = vadd.f32 %v5229, %v5325
        %v5327 = vpop.f32.mrb[0].mxu0
        %5328 = vmatprep.mubr.bf16.mxu0 0
        %5329 = vmatmul.mubr.bf16.gmra.mrb[0].mxu0 %v3945
        %v5330 = vpop.f32.mrb[0].mxu0
        %v5331 = vadd.f32 %v5234, %v5330
        %v5332 = vpop.f32.mrb[0].mxu0
        %v5333 = vpop.f32.mrb[0].mxu0
        %v5334 = vadd.f32 %v5237, %v5333
        %v5335 = vpop.f32.mrb[0].mxu0
        %5336 = vmatprep.mubr.bf16.mxu0 0
        %5337 = vmatmul.mubr.bf16.gmra.mrb[0].mxu0 %v3948
        %v5338 = vpop.f32.mrb[0].mxu0
        %v5339 = vadd.f32 %v5242, %v5338
        %v5340 = vpop.f32.mrb[0].mxu0
        %v5341 = vpop.f32.mrb[0].mxu0
        %v5342 = vadd.f32 %v5245, %v5341
        %v5343 = vpop.f32.mrb[0].mxu0
        %5344 = vmatprep.mubr.bf16.mxu0 0
        %5345 = vmatmul.mubr.bf16.gmra.mrb[0].mxu0 %v3951
        %v5346 = vpop.f32.mrb[0].mxu0
        %v5347 = vadd.f32 %v5250, %v5346
        %v5348 = vpop.f32.mrb[0].mxu0
        %v5349 = vpop.f32.mrb[0].mxu0
        %v5350 = vadd.f32 %v5253, %v5349
        %v5351 = vpop.f32.mrb[0].mxu0
        %5352 = vmatprep.mubr.bf16.mxu0 0
        %5353 = vmatmul.mubr.bf16.gmra.mrb[0].mxu0 %v3954
        %v5354 = vpop.f32.mrb[0].mxu0
        %v5355 = vadd.f32 %v5258, %v5354
        %v5356 = vpop.f32.mrb[0].mxu0
        %v5357 = vpop.f32.mrb[0].mxu0
        %v5358 = vadd.f32 %v5261, %v5357
        %v5359 = vpop.f32.mrb[0].mxu0
        %5360 = vmatprep.mubr.bf16.mxu0 0
        %5361 = vmatmul.mubr.bf16.gmra.mrb[0].mxu0 %v3957
        %v5362 = vpop.f32.mrb[0].mxu0
        %v5363 = vadd.f32 %v5266, %v5362
        %v5364 = vpop.f32.mrb[0].mxu0
        %v5365 = vpop.f32.mrb[0].mxu0
        %v5366 = vadd.f32 %v5269, %v5365
        %v5367 = vpop.f32.mrb[0].mxu0
        %5368 = vdwg.mxu0
        %v5369 = vtanh.pop %v5097
        %v5370 = vtanh.pop %v5099
        %v5371 = vtanh.pop %v5307
        %v5372 = vtanh.pop %v5101
        %v5373 = vtanh.pop %v5103
        %v5374 = vtanh.pop %v5310
        %v5375 = vtanh.pop %v5107
        %v5376 = vtanh.pop %v5109
        %v5377 = vtanh.pop %v5315
        %v5378 = vtanh.pop %v5111
        %v5379 = vtanh.pop %v5113
        %v5380 = vtanh.pop %v5318
        %v5381 = vtanh.pop %v5117
        %v5382 = vtanh.pop %v5119
        %v5383 = vtanh.pop %v5323
        %v5384 = vtanh.pop %v5121
        %v5385 = vtanh.pop %v5123
        %v5386 = vtanh.pop %v5326
        %v5387 = vtanh.pop %v5127
        %v5388 = vtanh.pop %v5129
        %v5389 = vtanh.pop %v5331
        %v5390 = vtanh.pop %v5131
        %v5391 = vtanh.pop %v5133
        %v5392 = vtanh.pop %v5334
        %v5393 = vtanh.pop %v5137
        %v5394 = vtanh.pop %v5139
        %v5395 = vtanh.pop %v5339
        %v5396 = vtanh.pop %v5141
        %v5397 = vtanh.pop %v5143
        %v5398 = vtanh.pop %v5342
        %v5399 = vtanh.pop %v5147
        %v5400 = vtanh.pop %v5149
        %v5401 = vtanh.pop %v5347
        %v5402 = vtanh.pop %v5151
        %v5403 = vtanh.pop %v5153
        %v5404 = vtanh.pop %v5350
        %v5405 = vtanh.pop %v5157
        %v5406 = vtanh.pop %v5159
        %v5407 = vtanh.pop %v5355
        %v5408 = vtanh.pop %v5161
        %v5409 = vtanh.pop %v5163
        %v5410 = vtanh.pop %v5358
        %v5411 = vtanh.pop %v5167
        %v5412 = vtanh.pop %v5169
        %v5413 = vtanh.pop %v5363
        %v5414 = vtanh.pop %v5171
        %v5415 = vtanh.pop %v5173
        %v5416 = vtanh.pop %v5366
        %v5417 = vpack.c.bf16 %v5372, %v5369
        %v5418 = vpack.c.bf16 %v5373, %v5370
        %v5419 = vpack.c.bf16 %v5374, %v5371
        %v5420 = vpack.c.bf16 %v5378, %v5375
        %v5421 = vpack.c.bf16 %v5379, %v5376
        %v5422 = vpack.c.bf16 %v5380, %v5377
        %v5423 = vpack.c.bf16 %v5384, %v5381
        %v5424 = vpack.c.bf16 %v5385, %v5382
        %v5425 = vpack.c.bf16 %v5386, %v5383
        %v5426 = vpack.c.bf16 %v5390, %v5387
        %v5427 = vpack.c.bf16 %v5391, %v5388
        %v5428 = vpack.c.bf16 %v5392, %v5389
        %v5429 = vpack.c.bf16 %v5396, %v5393
        %v5430 = vpack.c.bf16 %v5397, %v5394
        %v5431 = vpack.c.bf16 %v5398, %v5395
        %v5432 = vpack.c.bf16 %v5402, %v5399
        %v5433 = vpack.c.bf16 %v5403, %v5400
        %v5434 = vpack.c.bf16 %v5404, %v5401
        %v5435 = vpack.c.bf16 %v5408, %v5405
        %v5436 = vpack.c.bf16 %v5409, %v5406
        %v5437 = vpack.c.bf16 %v5410, %v5407
        %v5438 = vpack.c.bf16 %v5414, %v5411
        %v5439 = vpack.c.bf16 %v5415, %v5412
        %v5440 = vpack.c.bf16 %v5416, %v5413
        %s5441 = scalar_lea.vmem [#allocation2], 2304
        %v5442 = vld [vmem:[%s5441] sm:$0xff]
        %v5443 = vld [vmem:[%s5441 + $0x8] sm:$0xf]
        %v5444 = vld [vmem:[%s5441 + $0xc] sm:$0xff]
        %v5445 = vld [vmem:[%s5441 + $0x14] sm:$0xf]
        %v5446 = vld [vmem:[%s5441 + $0x18] sm:$0xff]
        %v5447 = vld [vmem:[%s5441 + $0x20] sm:$0xf]
        %v5448 = vld [vmem:[%s5441 + $0x24] sm:$0xff]
        %v5449 = vld [vmem:[%s5441 + $0x2c] sm:$0xf]
        %v5450 = vld [vmem:[%s5441 + $0x30] sm:$0xff]
        %v5451 = vld [vmem:[%s5441 + $0x38] sm:$0xf]
        %v5452 = vld [vmem:[%s5441 + $0x3c] sm:$0xff]
        %v5453 = vld [vmem:[%s5441 + $0x44] sm:$0xf]
        %v5454 = vld [vmem:[%s5441 + $0x48] sm:$0xff]
        %v5455 = vld [vmem:[%s5441 + $0x50] sm:$0xf]
        %v5456 = vld [vmem:[%s5441 + $0x54] sm:$0xff]
        %v5457 = vld [vmem:[%s5441 + $0x5c] sm:$0xf]
        %v5458 = vld [vmem:[%s5441 + $0x60] sm:$0xff]
        %v5459 = vld [vmem:[%s5441 + $0x68] sm:$0xf]
        %v5460 = vld [vmem:[%s5441 + $0x6c] sm:$0xff]
        %v5461 = vld [vmem:[%s5441 + $0x74] sm:$0xf]
        %v5462 = vld [vmem:[%s5441 + $0x78] sm:$0xff]
        %v5463 = vld [vmem:[%s5441 + $0x80] sm:$0xf]
        %v5464 = vld [vmem:[%s5441 + $0x84] sm:$0xff]
        %v5465 = vld [vmem:[%s5441 + $0x8c] sm:$0xf]
        %v5466 = vld [vmem:[%s5441 + $0x90] sm:$0xff]
        %v5467 = vld [vmem:[%s5441 + $0x98] sm:$0xf]
        %v5468 = vld [vmem:[%s5441 + $0x9c] sm:$0xff]
        %v5469 = vld [vmem:[%s5441 + $0xa4] sm:$0xf]
        %v5470 = vld [vmem:[%s5441 + $0xa8] sm:$0xff]
        %v5471 = vld [vmem:[%s5441 + $0xb0] sm:$0xf]
        %v5472 = vld [vmem:[%s5441 + $0xb4] sm:$0xff]
        %v5473 = vld [vmem:[%s5441 + $0xbc] sm:$0xf]
        %v5474 = vld [vmem:[%s5441 + $0xc0] sm:$0xff]
        %v5475 = vld [vmem:[%s5441 + $0xc8] sm:$0xf]
        %v5476 = vld [vmem:[%s5441 + $0xcc] sm:$0xff]
        %v5477 = vld [vmem:[%s5441 + $0xd4] sm:$0xf]
        %v5478 = vld [vmem:[%s5441 + $0xd8] sm:$0xff]
        %v5479 = vld [vmem:[%s5441 + $0xe0] sm:$0xf]
        %v5480 = vld [vmem:[%s5441 + $0xe4] sm:$0xff]
        %v5481 = vld [vmem:[%s5441 + $0xec] sm:$0xf]
        %v5482 = vld [vmem:[%s5441 + $0xf0] sm:$0xff]
        %v5483 = vld [vmem:[%s5441 + $0xf8] sm:$0xf]
        %v5484 = vld [vmem:[%s5441 + $0xfc] sm:$0xff]
        %v5485 = vld [vmem:[%s5441 + $0x104] sm:$0xf]
        %v5486 = vld [vmem:[%s5441 + $0x108] sm:$0xff]
        %v5487 = vld [vmem:[%s5441 + $0x110] sm:$0xf]
        %v5488 = vld [vmem:[%s5441 + $0x114] sm:$0xff]
        %v5489 = vld [vmem:[%s5441 + $0x11c] sm:$0xf]
        %v5490 = vld [vmem:[%s5441 + $0x120] sm:$0xff]
        %v5491 = vld [vmem:[%s5441 + $0x128] sm:$0xf]
        %v5492 = vld [vmem:[%s5441 + $0x12c] sm:$0xff]
        %v5493 = vld [vmem:[%s5441 + $0x134] sm:$0xf]
        %v5494 = vld [vmem:[%s5441 + $0x138] sm:$0xff]
        %v5495 = vld [vmem:[%s5441 + $0x140] sm:$0xf]
        %v5496 = vld [vmem:[%s5441 + $0x144] sm:$0xff]
        %v5497 = vld [vmem:[%s5441 + $0x14c] sm:$0xf]
        %v5498 = vld [vmem:[%s5441 + $0x150] sm:$0xff]
        %v5499 = vld [vmem:[%s5441 + $0x158] sm:$0xf]
        %v5500 = vld [vmem:[%s5441 + $0x15c] sm:$0xff]
        %v5501 = vld [vmem:[%s5441 + $0x164] sm:$0xf]
        %v5502 = vld [vmem:[%s5441 + $0x168] sm:$0xff]
        %v5503 = vld [vmem:[%s5441 + $0x170] sm:$0xf]
        %v5504 = vld [vmem:[%s5441 + $0x174] sm:$0xff]
        %v5505 = vld [vmem:[%s5441 + $0x17c] sm:$0xf]
        %v5506 = vld [vmem:[%s5441 + $0x180] sm:$0xff]
        %v5507 = vld [vmem:[%s5441 + $0x188] sm:$0xf]
        %v5508 = vld [vmem:[%s5441 + $0x18c] sm:$0xff]
        %v5509 = vld [vmem:[%s5441 + $0x194] sm:$0xf]
        %v5510 = vld [vmem:[%s5441 + $0x198] sm:$0xff]
        %v5511 = vld [vmem:[%s5441 + $0x1a0] sm:$0xf]
        %v5512 = vld [vmem:[%s5441 + $0x1a4] sm:$0xff]
        %v5513 = vld [vmem:[%s5441 + $0x1ac] sm:$0xf]
        %v5514 = vld [vmem:[%s5441 + $0x1b0] sm:$0xff]
        %v5515 = vld [vmem:[%s5441 + $0x1b8] sm:$0xf]
        %v5516 = vld [vmem:[%s5441 + $0x1bc] sm:$0xff]
        %v5517 = vld [vmem:[%s5441 + $0x1c4] sm:$0xf]
        %v5518 = vld [vmem:[%s5441 + $0x1c8] sm:$0xff]
        %v5519 = vld [vmem:[%s5441 + $0x1d0] sm:$0xf]
        %v5520 = vld [vmem:[%s5441 + $0x1d4] sm:$0xff]
        %v5521 = vld [vmem:[%s5441 + $0x1dc] sm:$0xf]
        %v5522 = vld [vmem:[%s5441 + $0x1e0] sm:$0xff]
        %v5523 = vld [vmem:[%s5441 + $0x1e8] sm:$0xf]
        %v5524 = vld [vmem:[%s5441 + $0x1ec] sm:$0xff]
        %v5525 = vld [vmem:[%s5441 + $0x1f4] sm:$0xf]
        %v5526 = vld [vmem:[%s5441 + $0x1f8] sm:$0xff]
        %v5527 = vld [vmem:[%s5441 + $0x200] sm:$0xf]
        %v5528 = vld [vmem:[%s5441 + $0x204] sm:$0xff]
        %v5529 = vld [vmem:[%s5441 + $0x20c] sm:$0xf]
        %v5530 = vld [vmem:[%s5441 + $0x210] sm:$0xff]
        %v5531 = vld [vmem:[%s5441 + $0x218] sm:$0xf]
        %v5532 = vld [vmem:[%s5441 + $0x21c] sm:$0xff]
        %v5533 = vld [vmem:[%s5441 + $0x224] sm:$0xf]
        %v5534 = vld [vmem:[%s5441 + $0x228] sm:$0xff]
        %v5535 = vld [vmem:[%s5441 + $0x230] sm:$0xf]
        %v5536 = vld [vmem:[%s5441 + $0x234] sm:$0xff]
        %v5537 = vld [vmem:[%s5441 + $0x23c] sm:$0xf]
        %s5538 = scalar_lea.vmem [#allocation4], 4
        %v5539 = vld [vmem:[%s5538] ss:$8 sm:$0x7]
        %v5541 = vlaneseq
        %v5542 = vshrl.u32 %v5541, 7
        %v5543 = vsub.s32 0, %v5542
        %v5544 = vrot.slane %v5539, %v5543
        %v5545 = vlaneseq
        %v5546 = vshrl.u32 %v5545, 7
        %v5547 = vsub.s32 1, %v5546
        %v5548 = vrot.slane %v5539, %v5547
        %v5549 = vlaneseq
        %v5550 = vshrl.u32 %v5549, 7
        %v5551 = vsub.s32 2, %v5550
        %v5552 = vrot.slane %v5539, %v5551
        %v5652 = vunpack.c.l.b16 %v5442
        %v5653 = vunpack.c.h.b16 %v5442
        %v5654 = vunpack.c.l.b16 %v5443
        %v5655 = vunpack.c.l.b16 %v5444
        %v5656 = vunpack.c.h.b16 %v5444
        %v5657 = vunpack.c.l.b16 %v5445
        %v5658 = vunpack.c.l.b16 %v5446
        %v5659 = vunpack.c.h.b16 %v5446
        %v5660 = vunpack.c.l.b16 %v5447
        %v5661 = vunpack.c.l.b16 %v5448
        %v5662 = vunpack.c.h.b16 %v5448
        %v5663 = vunpack.c.l.b16 %v5449
        %v5664 = vunpack.c.l.b16 %v5450
        %v5665 = vunpack.c.h.b16 %v5450
        %v5666 = vunpack.c.l.b16 %v5451
        %v5667 = vunpack.c.l.b16 %v5452
        %v5668 = vunpack.c.h.b16 %v5452
        %v5669 = vunpack.c.l.b16 %v5453
        %v5670 = vunpack.c.l.b16 %v5454
        %v5671 = vunpack.c.h.b16 %v5454
        %v5672 = vunpack.c.l.b16 %v5455
        %v5673 = vunpack.c.l.b16 %v5456
        %v5674 = vunpack.c.h.b16 %v5456
        %v5675 = vunpack.c.l.b16 %v5457
        %v5676 = vunpack.c.l.b16 %v5458
        %v5677 = vunpack.c.h.b16 %v5458
        %v5678 = vunpack.c.l.b16 %v5459
        %v5679 = vunpack.c.l.b16 %v5460
        %v5680 = vunpack.c.h.b16 %v5460
        %v5681 = vunpack.c.l.b16 %v5461
        %v5682 = vunpack.c.l.b16 %v5462
        %v5683 = vunpack.c.h.b16 %v5462
        %v5684 = vunpack.c.l.b16 %v5463
        %v5685 = vunpack.c.l.b16 %v5464
        %v5686 = vunpack.c.h.b16 %v5464
        %v5687 = vunpack.c.l.b16 %v5465
        %v5688 = vunpack.c.l.b16 %v5466
        %v5689 = vunpack.c.h.b16 %v5466
        %v5690 = vunpack.c.l.b16 %v5467
        %v5691 = vunpack.c.l.b16 %v5468
        %v5692 = vunpack.c.h.b16 %v5468
        %v5693 = vunpack.c.l.b16 %v5469
        %v5694 = vunpack.c.l.b16 %v5470
        %v5695 = vunpack.c.h.b16 %v5470
        %v5696 = vunpack.c.l.b16 %v5471
        %v5697 = vunpack.c.l.b16 %v5472
        %v5698 = vunpack.c.h.b16 %v5472
        %v5699 = vunpack.c.l.b16 %v5473
        %v5700 = vunpack.c.l.b16 %v5474
        %v5701 = vunpack.c.h.b16 %v5474
        %v5702 = vunpack.c.l.b16 %v5475
        %v5703 = vunpack.c.l.b16 %v5476
        %v5704 = vunpack.c.h.b16 %v5476
        %v5705 = vunpack.c.l.b16 %v5477
        %v5706 = vunpack.c.l.b16 %v5478
        %v5707 = vunpack.c.h.b16 %v5478
        %v5708 = vunpack.c.l.b16 %v5479
        %v5709 = vunpack.c.l.b16 %v5480
        %v5710 = vunpack.c.h.b16 %v5480
        %v5711 = vunpack.c.l.b16 %v5481
        %v5712 = vunpack.c.l.b16 %v5482
        %v5713 = vunpack.c.h.b16 %v5482
        %v5714 = vunpack.c.l.b16 %v5483
        %v5715 = vunpack.c.l.b16 %v5484
        %v5716 = vunpack.c.h.b16 %v5484
        %v5717 = vunpack.c.l.b16 %v5485
        %v5718 = vunpack.c.l.b16 %v5486
        %v5719 = vunpack.c.h.b16 %v5486
        %v5720 = vunpack.c.l.b16 %v5487
        %v5721 = vunpack.c.l.b16 %v5488
        %v5722 = vunpack.c.h.b16 %v5488
        %v5723 = vunpack.c.l.b16 %v5489
        %v5724 = vunpack.c.l.b16 %v5490
        %v5725 = vunpack.c.h.b16 %v5490
        %v5726 = vunpack.c.l.b16 %v5491
        %v5727 = vunpack.c.l.b16 %v5492
        %v5728 = vunpack.c.h.b16 %v5492
        %v5729 = vunpack.c.l.b16 %v5493
        %v5730 = vunpack.c.l.b16 %v5494
        %v5731 = vunpack.c.h.b16 %v5494
        %v5732 = vunpack.c.l.b16 %v5495
        %v5733 = vunpack.c.l.b16 %v5496
        %v5734 = vunpack.c.h.b16 %v5496
        %v5735 = vunpack.c.l.b16 %v5497
        %v5736 = vunpack.c.l.b16 %v5498
        %v5737 = vunpack.c.h.b16 %v5498
        %v5738 = vunpack.c.l.b16 %v5499
        %v5739 = vunpack.c.l.b16 %v5500
        %v5740 = vunpack.c.h.b16 %v5500
        %v5741 = vunpack.c.l.b16 %v5501
        %v5742 = vunpack.c.l.b16 %v5502
        %v5743 = vunpack.c.h.b16 %v5502
        %v5744 = vunpack.c.l.b16 %v5503
        %v5745 = vunpack.c.l.b16 %v5504
        %v5746 = vunpack.c.h.b16 %v5504
        %v5747 = vunpack.c.l.b16 %v5505
        %v5748 = vunpack.c.l.b16 %v5506
        %v5749 = vunpack.c.h.b16 %v5506
        %v5750 = vunpack.c.l.b16 %v5507
        %v5751 = vunpack.c.l.b16 %v5508
        %v5752 = vunpack.c.h.b16 %v5508
        %v5753 = vunpack.c.l.b16 %v5509
        %v5754 = vunpack.c.l.b16 %v5510
        %v5755 = vunpack.c.h.b16 %v5510
        %v5756 = vunpack.c.l.b16 %v5511
        %v5757 = vunpack.c.l.b16 %v5512
        %v5758 = vunpack.c.h.b16 %v5512
        %v5759 = vunpack.c.l.b16 %v5513
        %v5760 = vunpack.c.l.b16 %v5514
        %v5761 = vunpack.c.h.b16 %v5514
        %v5762 = vunpack.c.l.b16 %v5515
        %v5763 = vunpack.c.l.b16 %v5516
        %v5764 = vunpack.c.h.b16 %v5516
        %v5765 = vunpack.c.l.b16 %v5517
        %v5766 = vunpack.c.l.b16 %v5518
        %v5767 = vunpack.c.h.b16 %v5518
        %v5768 = vunpack.c.l.b16 %v5519
        %v5769 = vunpack.c.l.b16 %v5520
        %v5770 = vunpack.c.h.b16 %v5520
        %v5771 = vunpack.c.l.b16 %v5521
        %v5772 = vunpack.c.l.b16 %v5522
        %v5773 = vunpack.c.h.b16 %v5522
        %v5774 = vunpack.c.l.b16 %v5523
        %v5775 = vunpack.c.l.b16 %v5524
        %v5776 = vunpack.c.h.b16 %v5524
        %v5777 = vunpack.c.l.b16 %v5525
        %v5778 = vunpack.c.l.b16 %v5526
        %v5779 = vunpack.c.h.b16 %v5526
        %v5780 = vunpack.c.l.b16 %v5527
        %v5781 = vunpack.c.l.b16 %v5528
        %v5782 = vunpack.c.h.b16 %v5528
        %v5783 = vunpack.c.l.b16 %v5529
        %v5784 = vunpack.c.l.b16 %v5530
        %v5785 = vunpack.c.h.b16 %v5530
        %v5786 = vunpack.c.l.b16 %v5531
        %v5787 = vunpack.c.l.b16 %v5532
        %v5788 = vunpack.c.h.b16 %v5532
        %v5789 = vunpack.c.l.b16 %v5533
        %v5790 = vunpack.c.l.b16 %v5534
        %v5791 = vunpack.c.h.b16 %v5534
        %v5792 = vunpack.c.l.b16 %v5535
        %v5793 = vunpack.c.l.b16 %v5536
        %v5794 = vunpack.c.h.b16 %v5536
        %v5795 = vunpack.c.l.b16 %v5537
        %v5796 = vpack.c.b16 %v5655, %v5652
        %v5797 = vpack.c.b16 %v5656, %v5653
        %v5798 = vpack.c.b16 %v5657, %v5654
        %v5799 = vpack.c.b16 %v5661, %v5658
        %v5800 = vpack.c.b16 %v5662, %v5659
        %v5801 = vpack.c.b16 %v5663, %v5660
        %v5802 = vpack.c.b16 %v5667, %v5664
        %v5803 = vpack.c.b16 %v5668, %v5665
        %v5804 = vpack.c.b16 %v5669, %v5666
        %v5805 = vpack.c.b16 %v5673, %v5670
        %v5806 = vpack.c.b16 %v5674, %v5671
        %v5807 = vpack.c.b16 %v5675, %v5672
        %v5808 = vpack.c.b16 %v5679, %v5676
        %v5809 = vpack.c.b16 %v5680, %v5677
        %v5810 = vpack.c.b16 %v5681, %v5678
        %v5811 = vpack.c.b16 %v5685, %v5682
        %v5812 = vpack.c.b16 %v5686, %v5683
        %v5813 = vpack.c.b16 %v5687, %v5684
        %v5814 = vpack.c.b16 %v5691, %v5688
        %v5815 = vpack.c.b16 %v5692, %v5689
        %v5816 = vpack.c.b16 %v5693, %v5690
        %v5817 = vpack.c.b16 %v5697, %v5694
        %v5818 = vpack.c.b16 %v5698, %v5695
        %v5819 = vpack.c.b16 %v5699, %v5696
        %v5820 = vpack.c.b16 %v5703, %v5700
        %v5821 = vpack.c.b16 %v5704, %v5701
        %v5822 = vpack.c.b16 %v5705, %v5702
        %v5823 = vpack.c.b16 %v5709, %v5706
        %v5824 = vpack.c.b16 %v5710, %v5707
        %v5825 = vpack.c.b16 %v5711, %v5708
        %v5826 = vpack.c.b16 %v5715, %v5712
        %v5827 = vpack.c.b16 %v5716, %v5713
        %v5828 = vpack.c.b16 %v5717, %v5714
        %v5829 = vpack.c.b16 %v5721, %v5718
        %v5830 = vpack.c.b16 %v5722, %v5719
        %v5831 = vpack.c.b16 %v5723, %v5720
        %v5832 = vpack.c.b16 %v5727, %v5724
        %v5833 = vpack.c.b16 %v5728, %v5725
        %v5834 = vpack.c.b16 %v5729, %v5726
        %v5835 = vpack.c.b16 %v5733, %v5730
        %v5836 = vpack.c.b16 %v5734, %v5731
        %v5837 = vpack.c.b16 %v5735, %v5732
        %v5838 = vpack.c.b16 %v5739, %v5736
        %v5839 = vpack.c.b16 %v5740, %v5737
        %v5840 = vpack.c.b16 %v5741, %v5738
        %v5841 = vpack.c.b16 %v5745, %v5742
        %v5842 = vpack.c.b16 %v5746, %v5743
        %v5843 = vpack.c.b16 %v5747, %v5744
        %v5844 = vpack.c.b16 %v5751, %v5748
        %v5845 = vpack.c.b16 %v5752, %v5749
        %v5846 = vpack.c.b16 %v5753, %v5750
        %v5847 = vpack.c.b16 %v5757, %v5754
        %v5848 = vpack.c.b16 %v5758, %v5755
        %v5849 = vpack.c.b16 %v5759, %v5756
        %v5850 = vpack.c.b16 %v5763, %v5760
        %v5851 = vpack.c.b16 %v5764, %v5761
        %v5852 = vpack.c.b16 %v5765, %v5762
        %v5853 = vpack.c.b16 %v5769, %v5766
        %v5854 = vpack.c.b16 %v5770, %v5767
        %v5855 = vpack.c.b16 %v5771, %v5768
        %v5856 = vpack.c.b16 %v5775, %v5772
        %v5857 = vpack.c.b16 %v5776, %v5773
        %v5858 = vpack.c.b16 %v5777, %v5774
        %v5859 = vpack.c.b16 %v5781, %v5778
        %v5860 = vpack.c.b16 %v5782, %v5779
        %v5861 = vpack.c.b16 %v5783, %v5780
        %v5862 = vpack.c.b16 %v5787, %v5784
        %v5863 = vpack.c.b16 %v5788, %v5785
        %v5864 = vpack.c.b16 %v5789, %v5786
        %v5865 = vpack.c.b16 %v5793, %v5790
        %v5866 = vpack.c.b16 %v5794, %v5791
        %v5867 = vpack.c.b16 %v5795, %v5792
        %5940 = vmatprep.subr.bf16.mxu0 %v5797
        %5941 = vmatpush1.bf16.msra.mxu0 %v5796
        %5942 = vmatprep.subr.bf16.mxu0 %v5800
        %5943 = vmatpush1.bf16.msra.mxu0 %v5799
        %5944 = vmatprep.subr.bf16.mxu0 %v5803
        %5945 = vmatpush1.bf16.msra.mxu0 %v5802
        %5946 = vmatprep.subr.bf16.mxu0 %v5806
        %5947 = vmatpush1.bf16.msra.mxu0 %v5805
        %5948 = vmatprep.subr.bf16.mxu0 %v5809
        %5949 = vmatpush1.bf16.msra.mxu0 %v5808
        %5950 = vmatprep.subr.bf16.mxu0 %v5812
        %5951 = vmatpush1.bf16.msra.mxu0 %v5811
        %5952 = vmatprep.subr.bf16.mxu0 %v5815
        %5953 = vmatpush1.bf16.msra.mxu0 %v5814
        %5954 = vmatprep.subr.bf16.mxu0 %v5818
        %5955 = vmatpush1.bf16.msra.mxu0 %v5817
        %5956 = vmatprep.subr.bf16.mxu0 %v5821
        %5957 = vmatpush1.bf16.msra.mxu0 %v5820
        %5958 = vmatprep.subr.bf16.mxu0 %v5824
        %5959 = vmatpush1.bf16.msra.mxu0 %v5823
        %5960 = vmatprep.subr.bf16.mxu0 %v5827
        %5961 = vmatpush1.bf16.msra.mxu0 %v5826
        %5962 = vmatprep.subr.bf16.mxu0 %v5830
        %5963 = vmatpush1.bf16.msra.mxu0 %v5829
        %5964 = vmatprep.subr.bf16.mxu0 %v5833
        %5965 = vmatpush1.bf16.msra.mxu0 %v5832
        %5966 = vmatprep.subr.bf16.mxu0 %v5836
        %5967 = vmatpush1.bf16.msra.mxu0 %v5835
        %5968 = vmatprep.subr.bf16.mxu0 %v5839
        %5969 = vmatpush1.bf16.msra.mxu0 %v5838
        %5970 = vmatprep.subr.bf16.mxu0 %v5842
        %5971 = vmatpush1.bf16.msra.mxu0 %v5841
        %5972 = vmatprep.mubr.bf16.mxu0 %v4926
        %5973 = vmatmul.mubr.bf16.gmra.mrb[0].mxu0 %v4925
        %v5974 = vpop.f32.mrb[0].mxu0
        %v5975 = vadd.f32 %v5544, %v5974
        %v5976 = vpop.f32.mrb[0].mxu0
        %v5977 = vadd.f32 %v5548, %v5976
        %v5978 = vpop.f32.mrb[0].mxu0
        %v5979 = vadd.f32 %v5544, %v5978
        %v5980 = vpop.f32.mrb[0].mxu0
        %v5981 = vadd.f32 %v5548, %v5980
        %5982 = vmatprep.mubr.bf16.mxu0 %v4929
        %5983 = vmatmul.mubr.bf16.gmra.mrb[0].mxu0 %v4928
        %v5984 = vpop.f32.mrb[0].mxu0
        %v5985 = vadd.f32 %v5544, %v5984
        %v5986 = vpop.f32.mrb[0].mxu0
        %v5987 = vadd.f32 %v5548, %v5986
        %v5988 = vpop.f32.mrb[0].mxu0
        %v5989 = vadd.f32 %v5544, %v5988
        %v5990 = vpop.f32.mrb[0].mxu0
        %v5991 = vadd.f32 %v5548, %v5990
        %5992 = vmatprep.mubr.bf16.mxu0 %v4932
        %5993 = vmatmul.mubr.bf16.gmra.mrb[0].mxu0 %v4931
        %v5994 = vpop.f32.mrb[0].mxu0
        %v5995 = vadd.f32 %v5544, %v5994
        %v5996 = vpop.f32.mrb[0].mxu0
        %v5997 = vadd.f32 %v5548, %v5996
        %v5998 = vpop.f32.mrb[0].mxu0
        %v5999 = vadd.f32 %v5544, %v5998
        %v6000 = vpop.f32.mrb[0].mxu0
        %v6001 = vadd.f32 %v5548, %v6000
        %6002 = vmatprep.mubr.bf16.mxu0 %v4935
        %6003 = vmatmul.mubr.bf16.gmra.mrb[0].mxu0 %v4934
        %v6004 = vpop.f32.mrb[0].mxu0
        %v6005 = vadd.f32 %v5544, %v6004
        %v6006 = vpop.f32.mrb[0].mxu0
        %v6007 = vadd.f32 %v5548, %v6006
        %v6008 = vpop.f32.mrb[0].mxu0
        %v6009 = vadd.f32 %v5544, %v6008
        %v6010 = vpop.f32.mrb[0].mxu0
        %v6011 = vadd.f32 %v5548, %v6010
        %6012 = vmatprep.mubr.bf16.mxu0 %v4938
        %6013 = vmatmul.mubr.bf16.gmra.mrb[0].mxu0 %v4937
        %v6014 = vpop.f32.mrb[0].mxu0
        %v6015 = vadd.f32 %v5544, %v6014
        %v6016 = vpop.f32.mrb[0].mxu0
        %v6017 = vadd.f32 %v5548, %v6016
        %v6018 = vpop.f32.mrb[0].mxu0
        %v6019 = vadd.f32 %v5544, %v6018
        %v6020 = vpop.f32.mrb[0].mxu0
        %v6021 = vadd.f32 %v5548, %v6020
        %6022 = vmatprep.mubr.bf16.mxu0 %v4941
        %6023 = vmatmul.mubr.bf16.gmra.mrb[0].mxu0 %v4940
        %v6024 = vpop.f32.mrb[0].mxu0
        %v6025 = vadd.f32 %v5544, %v6024
        %v6026 = vpop.f32.mrb[0].mxu0
        %v6027 = vadd.f32 %v5548, %v6026
        %v6028 = vpop.f32.mrb[0].mxu0
        %v6029 = vadd.f32 %v5544, %v6028
        %v6030 = vpop.f32.mrb[0].mxu0
        %v6031 = vadd.f32 %v5548, %v6030
        %6032 = vmatprep.mubr.bf16.mxu0 %v4944
        %6033 = vmatmul.mubr.bf16.gmra.mrb[0].mxu0 %v4943
        %v6034 = vpop.f32.mrb[0].mxu0
        %v6035 = vadd.f32 %v5544, %v6034
        %v6036 = vpop.f32.mrb[0].mxu0
        %v6037 = vadd.f32 %v5548, %v6036
        %v6038 = vpop.f32.mrb[0].mxu0
        %v6039 = vadd.f32 %v5544, %v6038
        %v6040 = vpop.f32.mrb[0].mxu0
        %v6041 = vadd.f32 %v5548, %v6040
        %6042 = vmatprep.mubr.bf16.mxu0 %v4947
        %6043 = vmatmul.mubr.bf16.gmra.mrb[0].mxu0 %v4946
        %v6044 = vpop.f32.mrb[0].mxu0
        %v6045 = vadd.f32 %v5544, %v6044
        %v6046 = vpop.f32.mrb[0].mxu0
        %v6047 = vadd.f32 %v5548, %v6046
        %v6048 = vpop.f32.mrb[0].mxu0
        %v6049 = vadd.f32 %v5544, %v6048
        %v6050 = vpop.f32.mrb[0].mxu0
        %v6051 = vadd.f32 %v5548, %v6050
        %6052 = vdwg.mxu0
        %6053 = vmatprep.subr.bf16.mxu0 %v5845
        %6054 = vmatpush1.bf16.msra.mxu0 %v5844
        %6055 = vmatprep.subr.bf16.mxu0 %v5848
        %6056 = vmatpush1.bf16.msra.mxu0 %v5847
        %6057 = vmatprep.subr.bf16.mxu0 %v5851
        %6058 = vmatpush1.bf16.msra.mxu0 %v5850
        %6059 = vmatprep.subr.bf16.mxu0 %v5854
        %6060 = vmatpush1.bf16.msra.mxu0 %v5853
        %6061 = vmatprep.subr.bf16.mxu0 %v5857
        %6062 = vmatpush1.bf16.msra.mxu0 %v5856
        %6063 = vmatprep.subr.bf16.mxu0 %v5860
        %6064 = vmatpush1.bf16.msra.mxu0 %v5859
        %6065 = vmatprep.subr.bf16.mxu0 %v5863
        %6066 = vmatpush1.bf16.msra.mxu0 %v5862
        %6067 = vmatprep.subr.bf16.mxu0 %v5866
        %6068 = vmatpush1.bf16.msra.mxu0 %v5865
        %6069 = vmatprep.subr.bf16.mxu0 0
        %6070 = vmatpush1.bf16.msra.mxu0 0
        %6071 = vmatprep.subr.bf16.mxu0 0
        %6072 = vmatpush1.bf16.msra.mxu0 0
        %6073 = vmatprep.subr.bf16.mxu0 0
        %6074 = vmatpush1.bf16.msra.mxu0 0
        %6075 = vmatprep.subr.bf16.mxu0 0
        %6076 = vmatpush1.bf16.msra.mxu0 0
        %6077 = vmatprep.subr.bf16.mxu0 0
        %6078 = vmatpush1.bf16.msra.mxu0 0
        %6079 = vmatprep.subr.bf16.mxu0 0
        %6080 = vmatpush1.bf16.msra.mxu0 0
        %6081 = vmatprep.subr.bf16.mxu0 0
        %6082 = vmatpush1.bf16.msra.mxu0 0
        %6083 = vmatprep.subr.bf16.mxu0 0
        %6084 = vmatpush1.bf16.msra.mxu0 0
        %6085 = vmatprep.mubr.bf16.mxu0 0
        %6086 = vmatmul.mubr.bf16.gmra.mrb[0].mxu0 %v4927
        %v6087 = vpop.f32.mrb[0].mxu0
        %v6088 = vadd.f32 %v5975, %v6087
        %v6089 = vpop.f32.mrb[0].mxu0
        %v6090 = vadd.f32 %v5977, %v6089
        %v6091 = vpop.f32.mrb[0].mxu0
        %v6092 = vadd.f32 %v5979, %v6091
        %v6093 = vpop.f32.mrb[0].mxu0
        %v6094 = vadd.f32 %v5981, %v6093
        %6095 = vmatprep.mubr.bf16.mxu0 0
        %6096 = vmatmul.mubr.bf16.gmra.mrb[0].mxu0 %v4930
        %v6097 = vpop.f32.mrb[0].mxu0
        %v6098 = vadd.f32 %v5985, %v6097
        %v6099 = vpop.f32.mrb[0].mxu0
        %v6100 = vadd.f32 %v5987, %v6099
        %v6101 = vpop.f32.mrb[0].mxu0
        %v6102 = vadd.f32 %v5989, %v6101
        %v6103 = vpop.f32.mrb[0].mxu0
        %v6104 = vadd.f32 %v5991, %v6103
        %6105 = vmatprep.mubr.bf16.mxu0 0
        %6106 = vmatmul.mubr.bf16.gmra.mrb[0].mxu0 %v4933
        %v6107 = vpop.f32.mrb[0].mxu0
        %v6108 = vadd.f32 %v5995, %v6107
        %v6109 = vpop.f32.mrb[0].mxu0
        %v6110 = vadd.f32 %v5997, %v6109
        %v6111 = vpop.f32.mrb[0].mxu0
        %v6112 = vadd.f32 %v5999, %v6111
        %v6113 = vpop.f32.mrb[0].mxu0
        %v6114 = vadd.f32 %v6001, %v6113
        %6115 = vmatprep.mubr.bf16.mxu0 0
        %6116 = vmatmul.mubr.bf16.gmra.mrb[0].mxu0 %v4936
        %v6117 = vpop.f32.mrb[0].mxu0
        %v6118 = vadd.f32 %v6005, %v6117
        %v6119 = vpop.f32.mrb[0].mxu0
        %v6120 = vadd.f32 %v6007, %v6119
        %v6121 = vpop.f32.mrb[0].mxu0
        %v6122 = vadd.f32 %v6009, %v6121
        %v6123 = vpop.f32.mrb[0].mxu0
        %v6124 = vadd.f32 %v6011, %v6123
        %6125 = vmatprep.mubr.bf16.mxu0 0
        %6126 = vmatmul.mubr.bf16.gmra.mrb[0].mxu0 %v4939
        %v6127 = vpop.f32.mrb[0].mxu0
        %v6128 = vadd.f32 %v6015, %v6127
        %v6129 = vpop.f32.mrb[0].mxu0
        %v6130 = vadd.f32 %v6017, %v6129
        %v6131 = vpop.f32.mrb[0].mxu0
        %v6132 = vadd.f32 %v6019, %v6131
        %v6133 = vpop.f32.mrb[0].mxu0
        %v6134 = vadd.f32 %v6021, %v6133
        %6135 = vmatprep.mubr.bf16.mxu0 0
        %6136 = vmatmul.mubr.bf16.gmra.mrb[0].mxu0 %v4942
        %v6137 = vpop.f32.mrb[0].mxu0
        %v6138 = vadd.f32 %v6025, %v6137
        %v6139 = vpop.f32.mrb[0].mxu0
        %v6140 = vadd.f32 %v6027, %v6139
        %v6141 = vpop.f32.mrb[0].mxu0
        %v6142 = vadd.f32 %v6029, %v6141
        %v6143 = vpop.f32.mrb[0].mxu0
        %v6144 = vadd.f32 %v6031, %v6143
        %6145 = vmatprep.mubr.bf16.mxu0 0
        %6146 = vmatmul.mubr.bf16.gmra.mrb[0].mxu0 %v4945
        %v6147 = vpop.f32.mrb[0].mxu0
        %v6148 = vadd.f32 %v6035, %v6147
        %v6149 = vpop.f32.mrb[0].mxu0
        %v6150 = vadd.f32 %v6037, %v6149
        %v6151 = vpop.f32.mrb[0].mxu0
        %v6152 = vadd.f32 %v6039, %v6151
        %v6153 = vpop.f32.mrb[0].mxu0
        %v6154 = vadd.f32 %v6041, %v6153
        %6155 = vmatprep.mubr.bf16.mxu0 0
        %6156 = vmatmul.mubr.bf16.gmra.mrb[0].mxu0 %v4948
        %v6157 = vpop.f32.mrb[0].mxu0
        %v6158 = vadd.f32 %v6045, %v6157
        %v6159 = vpop.f32.mrb[0].mxu0
        %v6160 = vadd.f32 %v6047, %v6159
        %v6161 = vpop.f32.mrb[0].mxu0
        %v6162 = vadd.f32 %v6049, %v6161
        %v6163 = vpop.f32.mrb[0].mxu0
        %v6164 = vadd.f32 %v6051, %v6163
        %6165 = vdwg.mxu0
        %6166 = vmatprep.subr.bf16.mxu0 0
        %6167 = vmatpush1.bf16.msra.mxu0 %v5798
        %6168 = vmatprep.subr.bf16.mxu0 0
        %6169 = vmatpush1.bf16.msra.mxu0 %v5801
        %6170 = vmatprep.subr.bf16.mxu0 0
        %6171 = vmatpush1.bf16.msra.mxu0 %v5804
        %6172 = vmatprep.subr.bf16.mxu0 0
        %6173 = vmatpush1.bf16.msra.mxu0 %v5807
        %6174 = vmatprep.subr.bf16.mxu0 0
        %6175 = vmatpush1.bf16.msra.mxu0 %v5810
        %6176 = vmatprep.subr.bf16.mxu0 0
        %6177 = vmatpush1.bf16.msra.mxu0 %v5813
        %6178 = vmatprep.subr.bf16.mxu0 0
        %6179 = vmatpush1.bf16.msra.mxu0 %v5816
        %6180 = vmatprep.subr.bf16.mxu0 0
        %6181 = vmatpush1.bf16.msra.mxu0 %v5819
        %6182 = vmatprep.subr.bf16.mxu0 0
        %6183 = vmatpush1.bf16.msra.mxu0 %v5822
        %6184 = vmatprep.subr.bf16.mxu0 0
        %6185 = vmatpush1.bf16.msra.mxu0 %v5825
        %6186 = vmatprep.subr.bf16.mxu0 0
        %6187 = vmatpush1.bf16.msra.mxu0 %v5828
        %6188 = vmatprep.subr.bf16.mxu0 0
        %6189 = vmatpush1.bf16.msra.mxu0 %v5831
        %6190 = vmatprep.subr.bf16.mxu0 0
        %6191 = vmatpush1.bf16.msra.mxu0 %v5834
        %6192 = vmatprep.subr.bf16.mxu0 0
        %6193 = vmatpush1.bf16.msra.mxu0 %v5837
        %6194 = vmatprep.subr.bf16.mxu0 0
        %6195 = vmatpush1.bf16.msra.mxu0 %v5840
        %6196 = vmatprep.subr.bf16.mxu0 0
        %6197 = vmatpush1.bf16.msra.mxu0 %v5843
        %6198 = vmatprep.mubr.bf16.mxu0 %v4926
        %6199 = vmatmul.mubr.bf16.gmra.mrb[0].mxu0 %v4925
        %v6200 = vpop.f32.mrb[0].mxu0
        %v6201 = vadd.f32 %v5552, %v6200
        %v6202 = vpop.f32.mrb[0].mxu0
        %v6203 = vpop.f32.mrb[0].mxu0
        %v6204 = vadd.f32 %v5552, %v6203
        %v6205 = vpop.f32.mrb[0].mxu0
        %6206 = vmatprep.mubr.bf16.mxu0 %v4929
        %6207 = vmatmul.mubr.bf16.gmra.mrb[0].mxu0 %v4928
        %v6208 = vpop.f32.mrb[0].mxu0
        %v6209 = vadd.f32 %v5552, %v6208
        %v6210 = vpop.f32.mrb[0].mxu0
        %v6211 = vpop.f32.mrb[0].mxu0
        %v6212 = vadd.f32 %v5552, %v6211
        %v6213 = vpop.f32.mrb[0].mxu0
        %6214 = vmatprep.mubr.bf16.mxu0 %v4932
        %6215 = vmatmul.mubr.bf16.gmra.mrb[0].mxu0 %v4931
        %v6216 = vpop.f32.mrb[0].mxu0
        %v6217 = vadd.f32 %v5552, %v6216
        %v6218 = vpop.f32.mrb[0].mxu0
        %v6219 = vpop.f32.mrb[0].mxu0
        %v6220 = vadd.f32 %v5552, %v6219
        %v6221 = vpop.f32.mrb[0].mxu0
        %6222 = vmatprep.mubr.bf16.mxu0 %v4935
        %6223 = vmatmul.mubr.bf16.gmra.mrb[0].mxu0 %v4934
        %v6224 = vpop.f32.mrb[0].mxu0
        %v6225 = vadd.f32 %v5552, %v6224
        %v6226 = vpop.f32.mrb[0].mxu0
        %v6227 = vpop.f32.mrb[0].mxu0
        %v6228 = vadd.f32 %v5552, %v6227
        %v6229 = vpop.f32.mrb[0].mxu0
        %6230 = vmatprep.mubr.bf16.mxu0 %v4938
        %6231 = vmatmul.mubr.bf16.gmra.mrb[0].mxu0 %v4937
        %v6232 = vpop.f32.mrb[0].mxu0
        %v6233 = vadd.f32 %v5552, %v6232
        %v6234 = vpop.f32.mrb[0].mxu0
        %v6235 = vpop.f32.mrb[0].mxu0
        %v6236 = vadd.f32 %v5552, %v6235
        %v6237 = vpop.f32.mrb[0].mxu0
        %6238 = vmatprep.mubr.bf16.mxu0 %v4941
        %6239 = vmatmul.mubr.bf16.gmra.mrb[0].mxu0 %v4940
        %v6240 = vpop.f32.mrb[0].mxu0
        %v6241 = vadd.f32 %v5552, %v6240
        %v6242 = vpop.f32.mrb[0].mxu0
        %v6243 = vpop.f32.mrb[0].mxu0
        %v6244 = vadd.f32 %v5552, %v6243
        %v6245 = vpop.f32.mrb[0].mxu0
        %6246 = vmatprep.mubr.bf16.mxu0 %v4944
        %6247 = vmatmul.mubr.bf16.gmra.mrb[0].mxu0 %v4943
        %v6248 = vpop.f32.mrb[0].mxu0
        %v6249 = vadd.f32 %v5552, %v6248
        %v6250 = vpop.f32.mrb[0].mxu0
        %v6251 = vpop.f32.mrb[0].mxu0
        %v6252 = vadd.f32 %v5552, %v6251
        %v6253 = vpop.f32.mrb[0].mxu0
        %6254 = vmatprep.mubr.bf16.mxu0 %v4947
        %6255 = vmatmul.mubr.bf16.gmra.mrb[0].mxu0 %v4946
        %v6256 = vpop.f32.mrb[0].mxu0
        %v6257 = vadd.f32 %v5552, %v6256
        %v6258 = vpop.f32.mrb[0].mxu0
        %v6259 = vpop.f32.mrb[0].mxu0
        %v6260 = vadd.f32 %v5552, %v6259
        %v6261 = vpop.f32.mrb[0].mxu0
        %6262 = vdwg.mxu0
        %6263 = vmatprep.subr.bf16.mxu0 0
        %6264 = vmatpush1.bf16.msra.mxu0 %v5846
        %6265 = vmatprep.subr.bf16.mxu0 0
        %6266 = vmatpush1.bf16.msra.mxu0 %v5849
        %6267 = vmatprep.subr.bf16.mxu0 0
        %6268 = vmatpush1.bf16.msra.mxu0 %v5852
        %6269 = vmatprep.subr.bf16.mxu0 0
        %6270 = vmatpush1.bf16.msra.mxu0 %v5855
        %6271 = vmatprep.subr.bf16.mxu0 0
        %6272 = vmatpush1.bf16.msra.mxu0 %v5858
        %6273 = vmatprep.subr.bf16.mxu0 0
        %6274 = vmatpush1.bf16.msra.mxu0 %v5861
        %6275 = vmatprep.subr.bf16.mxu0 0
        %6276 = vmatpush1.bf16.msra.mxu0 %v5864
        %6277 = vmatprep.subr.bf16.mxu0 0
        %6278 = vmatpush1.bf16.msra.mxu0 %v5867
        %6279 = vmatprep.subr.bf16.mxu0 0
        %6280 = vmatpush1.bf16.msra.mxu0 0
        %6281 = vmatprep.subr.bf16.mxu0 0
        %6282 = vmatpush1.bf16.msra.mxu0 0
        %6283 = vmatprep.subr.bf16.mxu0 0
        %6284 = vmatpush1.bf16.msra.mxu0 0
        %6285 = vmatprep.subr.bf16.mxu0 0
        %6286 = vmatpush1.bf16.msra.mxu0 0
        %6287 = vmatprep.subr.bf16.mxu0 0
        %6288 = vmatpush1.bf16.msra.mxu0 0
        %6289 = vmatprep.subr.bf16.mxu0 0
        %6290 = vmatpush1.bf16.msra.mxu0 0
        %6291 = vmatprep.subr.bf16.mxu0 0
        %6292 = vmatpush1.bf16.msra.mxu0 0
        %6293 = vmatprep.subr.bf16.mxu0 0
        %6294 = vmatpush1.bf16.msra.mxu0 0
        %6295 = vmatprep.mubr.bf16.mxu0 0
        %6296 = vmatmul.mubr.bf16.gmra.mrb[0].mxu0 %v4927
        %v6297 = vpop.f32.mrb[0].mxu0
        %v6298 = vadd.f32 %v6201, %v6297
        %v6299 = vpop.f32.mrb[0].mxu0
        %v6300 = vpop.f32.mrb[0].mxu0
        %v6301 = vadd.f32 %v6204, %v6300
        %v6302 = vpop.f32.mrb[0].mxu0
        %6303 = vmatprep.mubr.bf16.mxu0 0
        %6304 = vmatmul.mubr.bf16.gmra.mrb[0].mxu0 %v4930
        %v6305 = vpop.f32.mrb[0].mxu0
        %v6306 = vadd.f32 %v6209, %v6305
        %v6307 = vpop.f32.mrb[0].mxu0
        %v6308 = vpop.f32.mrb[0].mxu0
        %v6309 = vadd.f32 %v6212, %v6308
        %v6310 = vpop.f32.mrb[0].mxu0
        %6311 = vmatprep.mubr.bf16.mxu0 0
        %6312 = vmatmul.mubr.bf16.gmra.mrb[0].mxu0 %v4933
        %v6313 = vpop.f32.mrb[0].mxu0
        %v6314 = vadd.f32 %v6217, %v6313
        %v6315 = vpop.f32.mrb[0].mxu0
        %v6316 = vpop.f32.mrb[0].mxu0
        %v6317 = vadd.f32 %v6220, %v6316
        %v6318 = vpop.f32.mrb[0].mxu0
        %6319 = vmatprep.mubr.bf16.mxu0 0
        %6320 = vmatmul.mubr.bf16.gmra.mrb[0].mxu0 %v4936
        %v6321 = vpop.f32.mrb[0].mxu0
        %v6322 = vadd.f32 %v6225, %v6321
        %v6323 = vpop.f32.mrb[0].mxu0
        %v6324 = vpop.f32.mrb[0].mxu0
        %v6325 = vadd.f32 %v6228, %v6324
        %v6326 = vpop.f32.mrb[0].mxu0
        %6327 = vmatprep.mubr.bf16.mxu0 0
        %6328 = vmatmul.mubr.bf16.gmra.mrb[0].mxu0 %v4939
        %v6329 = vpop.f32.mrb[0].mxu0
        %v6330 = vadd.f32 %v6233, %v6329
        %v6331 = vpop.f32.mrb[0].mxu0
        %v6332 = vpop.f32.mrb[0].mxu0
        %v6333 = vadd.f32 %v6236, %v6332
        %v6334 = vpop.f32.mrb[0].mxu0
        %6335 = vmatprep.mubr.bf16.mxu0 0
        %6336 = vmatmul.mubr.bf16.gmra.mrb[0].mxu0 %v4942
        %v6337 = vpop.f32.mrb[0].mxu0
        %v6338 = vadd.f32 %v6241, %v6337
        %v6339 = vpop.f32.mrb[0].mxu0
        %v6340 = vpop.f32.mrb[0].mxu0
        %v6341 = vadd.f32 %v6244, %v6340
        %v6342 = vpop.f32.mrb[0].mxu0
        %6343 = vmatprep.mubr.bf16.mxu0 0
        %6344 = vmatmul.mubr.bf16.gmra.mrb[0].mxu0 %v4945
        %v6345 = vpop.f32.mrb[0].mxu0
        %v6346 = vadd.f32 %v6249, %v6345
        %v6347 = vpop.f32.mrb[0].mxu0
        %v6348 = vpop.f32.mrb[0].mxu0
        %v6349 = vadd.f32 %v6252, %v6348
        %v6350 = vpop.f32.mrb[0].mxu0
        %6351 = vmatprep.mubr.bf16.mxu0 0
        %6352 = vmatmul.mubr.bf16.gmra.mrb[0].mxu0 %v4948
        %v6353 = vpop.f32.mrb[0].mxu0
        %v6354 = vadd.f32 %v6257, %v6353
        %v6355 = vpop.f32.mrb[0].mxu0
        %v6356 = vpop.f32.mrb[0].mxu0
        %v6357 = vadd.f32 %v6260, %v6356
        %v6358 = vpop.f32.mrb[0].mxu0
        %6359 = vdwg.mxu0
        %v6360 = vtanh.pop %v6088
        %v6361 = vtanh.pop %v6090
        %v6362 = vtanh.pop %v6298
        %v6363 = vtanh.pop %v6092
        %v6364 = vtanh.pop %v6094
        %v6365 = vtanh.pop %v6301
        %v6366 = vtanh.pop %v6098
        %v6367 = vtanh.pop %v6100
        %v6368 = vtanh.pop %v6306
        %v6369 = vtanh.pop %v6102
        %v6370 = vtanh.pop %v6104
        %v6371 = vtanh.pop %v6309
        %v6372 = vtanh.pop %v6108
        %v6373 = vtanh.pop %v6110
        %v6374 = vtanh.pop %v6314
        %v6375 = vtanh.pop %v6112
        %v6376 = vtanh.pop %v6114
        %v6377 = vtanh.pop %v6317
        %v6378 = vtanh.pop %v6118
        %v6379 = vtanh.pop %v6120
        %v6380 = vtanh.pop %v6322
        %v6381 = vtanh.pop %v6122
        %v6382 = vtanh.pop %v6124
        %v6383 = vtanh.pop %v6325
        %v6384 = vtanh.pop %v6128
        %v6385 = vtanh.pop %v6130
        %v6386 = vtanh.pop %v6330
        %v6387 = vtanh.pop %v6132
        %v6388 = vtanh.pop %v6134
        %v6389 = vtanh.pop %v6333
        %v6390 = vtanh.pop %v6138
        %v6391 = vtanh.pop %v6140
        %v6392 = vtanh.pop %v6338
        %v6393 = vtanh.pop %v6142
        %v6394 = vtanh.pop %v6144
        %v6395 = vtanh.pop %v6341
        %v6396 = vtanh.pop %v6148
        %v6397 = vtanh.pop %v6150
        %v6398 = vtanh.pop %v6346
        %v6399 = vtanh.pop %v6152
        %v6400 = vtanh.pop %v6154
        %v6401 = vtanh.pop %v6349
        %v6402 = vtanh.pop %v6158
        %v6403 = vtanh.pop %v6160
        %v6404 = vtanh.pop %v6354
        %v6405 = vtanh.pop %v6162
        %v6406 = vtanh.pop %v6164
        %v6407 = vtanh.pop %v6357
        %v6408 = vpack.c.bf16 %v6363, %v6360
        %v6409 = vpack.c.bf16 %v6364, %v6361
        %v6410 = vpack.c.bf16 %v6365, %v6362
        %v6411 = vpack.c.bf16 %v6369, %v6366
        %v6412 = vpack.c.bf16 %v6370, %v6367
        %v6413 = vpack.c.bf16 %v6371, %v6368
        %v6414 = vpack.c.bf16 %v6375, %v6372
        %v6415 = vpack.c.bf16 %v6376, %v6373
        %v6416 = vpack.c.bf16 %v6377, %v6374
        %v6417 = vpack.c.bf16 %v6381, %v6378
        %v6418 = vpack.c.bf16 %v6382, %v6379
        %v6419 = vpack.c.bf16 %v6383, %v6380
        %v6420 = vpack.c.bf16 %v6387, %v6384
        %v6421 = vpack.c.bf16 %v6388, %v6385
        %v6422 = vpack.c.bf16 %v6389, %v6386
        %v6423 = vpack.c.bf16 %v6393, %v6390
        %v6424 = vpack.c.bf16 %v6394, %v6391
        %v6425 = vpack.c.bf16 %v6395, %v6392
        %v6426 = vpack.c.bf16 %v6399, %v6396
        %v6427 = vpack.c.bf16 %v6400, %v6397
        %v6428 = vpack.c.bf16 %v6401, %v6398
        %v6429 = vpack.c.bf16 %v6405, %v6402
        %v6430 = vpack.c.bf16 %v6406, %v6403
        %v6431 = vpack.c.bf16 %v6407, %v6404
        %6432 = vmatprep.subr.bf16.mxu0 %v5797
        %6433 = vmatpush1.bf16.msra.mxu0 %v5796
        %6434 = vmatprep.subr.bf16.mxu0 %v5800
        %6435 = vmatpush1.bf16.msra.mxu0 %v5799
        %6436 = vmatprep.subr.bf16.mxu0 %v5803
        %6437 = vmatpush1.bf16.msra.mxu0 %v5802
        %6438 = vmatprep.subr.bf16.mxu0 %v5806
        %6439 = vmatpush1.bf16.msra.mxu0 %v5805
        %6440 = vmatprep.subr.bf16.mxu0 %v5809
        %6441 = vmatpush1.bf16.msra.mxu0 %v5808
        %6442 = vmatprep.subr.bf16.mxu0 %v5812
        %6443 = vmatpush1.bf16.msra.mxu0 %v5811
        %6444 = vmatprep.subr.bf16.mxu0 %v5815
        %6445 = vmatpush1.bf16.msra.mxu0 %v5814
        %6446 = vmatprep.subr.bf16.mxu0 %v5818
        %6447 = vmatpush1.bf16.msra.mxu0 %v5817
        %6448 = vmatprep.subr.bf16.mxu0 %v5821
        %6449 = vmatpush1.bf16.msra.mxu0 %v5820
        %6450 = vmatprep.subr.bf16.mxu0 %v5824
        %6451 = vmatpush1.bf16.msra.mxu0 %v5823
        %6452 = vmatprep.subr.bf16.mxu0 %v5827
        %6453 = vmatpush1.bf16.msra.mxu0 %v5826
        %6454 = vmatprep.subr.bf16.mxu0 %v5830
        %6455 = vmatpush1.bf16.msra.mxu0 %v5829
        %6456 = vmatprep.subr.bf16.mxu0 %v5833
        %6457 = vmatpush1.bf16.msra.mxu0 %v5832
        %6458 = vmatprep.subr.bf16.mxu0 %v5836
        %6459 = vmatpush1.bf16.msra.mxu0 %v5835
        %6460 = vmatprep.subr.bf16.mxu0 %v5839
        %6461 = vmatpush1.bf16.msra.mxu0 %v5838
        %6462 = vmatprep.subr.bf16.mxu0 %v5842
        %6463 = vmatpush1.bf16.msra.mxu0 %v5841
        %6464 = vmatprep.mubr.bf16.mxu0 %v5418
        %6465 = vmatmul.mubr.bf16.gmra.mrb[0].mxu0 %v5417
        %v6466 = vpop.f32.mrb[0].mxu0
        %v6467 = vadd.f32 %v5544, %v6466
        %v6468 = vpop.f32.mrb[0].mxu0
        %v6469 = vadd.f32 %v5548, %v6468
        %v6470 = vpop.f32.mrb[0].mxu0
        %v6471 = vadd.f32 %v5544, %v6470
        %v6472 = vpop.f32.mrb[0].mxu0
        %v6473 = vadd.f32 %v5548, %v6472
        %6474 = vmatprep.mubr.bf16.mxu0 %v5421
        %6475 = vmatmul.mubr.bf16.gmra.mrb[0].mxu0 %v5420
        %v6476 = vpop.f32.mrb[0].mxu0
        %v6477 = vadd.f32 %v5544, %v6476
        %v6478 = vpop.f32.mrb[0].mxu0
        %v6479 = vadd.f32 %v5548, %v6478
        %v6480 = vpop.f32.mrb[0].mxu0
        %v6481 = vadd.f32 %v5544, %v6480
        %v6482 = vpop.f32.mrb[0].mxu0
        %v6483 = vadd.f32 %v5548, %v6482
        %6484 = vmatprep.mubr.bf16.mxu0 %v5424
        %6485 = vmatmul.mubr.bf16.gmra.mrb[0].mxu0 %v5423
        %v6486 = vpop.f32.mrb[0].mxu0
        %v6487 = vadd.f32 %v5544, %v6486
        %v6488 = vpop.f32.mrb[0].mxu0
        %v6489 = vadd.f32 %v5548, %v6488
        %v6490 = vpop.f32.mrb[0].mxu0
        %v6491 = vadd.f32 %v5544, %v6490
        %v6492 = vpop.f32.mrb[0].mxu0
        %v6493 = vadd.f32 %v5548, %v6492
        %6494 = vmatprep.mubr.bf16.mxu0 %v5427
        %6495 = vmatmul.mubr.bf16.gmra.mrb[0].mxu0 %v5426
        %v6496 = vpop.f32.mrb[0].mxu0
        %v6497 = vadd.f32 %v5544, %v6496
        %v6498 = vpop.f32.mrb[0].mxu0
        %v6499 = vadd.f32 %v5548, %v6498
        %v6500 = vpop.f32.mrb[0].mxu0
        %v6501 = vadd.f32 %v5544, %v6500
        %v6502 = vpop.f32.mrb[0].mxu0
        %v6503 = vadd.f32 %v5548, %v6502
        %6504 = vmatprep.mubr.bf16.mxu0 %v5430
        %6505 = vmatmul.mubr.bf16.gmra.mrb[0].mxu0 %v5429
        %v6506 = vpop.f32.mrb[0].mxu0
        %v6507 = vadd.f32 %v5544, %v6506
        %v6508 = vpop.f32.mrb[0].mxu0
        %v6509 = vadd.f32 %v5548, %v6508
        %v6510 = vpop.f32.mrb[0].mxu0
        %v6511 = vadd.f32 %v5544, %v6510
        %v6512 = vpop.f32.mrb[0].mxu0
        %v6513 = vadd.f32 %v5548, %v6512
        %6514 = vmatprep.mubr.bf16.mxu0 %v5433
        %6515 = vmatmul.mubr.bf16.gmra.mrb[0].mxu0 %v5432
        %v6516 = vpop.f32.mrb[0].mxu0
        %v6517 = vadd.f32 %v5544, %v6516
        %v6518 = vpop.f32.mrb[0].mxu0
        %v6519 = vadd.f32 %v5548, %v6518
        %v6520 = vpop.f32.mrb[0].mxu0
        %v6521 = vadd.f32 %v5544, %v6520
        %v6522 = vpop.f32.mrb[0].mxu0
        %v6523 = vadd.f32 %v5548, %v6522
        %6524 = vmatprep.mubr.bf16.mxu0 %v5436
        %6525 = vmatmul.mubr.bf16.gmra.mrb[0].mxu0 %v5435
        %v6526 = vpop.f32.mrb[0].mxu0
        %v6527 = vadd.f32 %v5544, %v6526
        %v6528 = vpop.f32.mrb[0].mxu0
        %v6529 = vadd.f32 %v5548, %v6528
        %v6530 = vpop.f32.mrb[0].mxu0
        %v6531 = vadd.f32 %v5544, %v6530
        %v6532 = vpop.f32.mrb[0].mxu0
        %v6533 = vadd.f32 %v5548, %v6532
        %6534 = vmatprep.mubr.bf16.mxu0 %v5439
        %6535 = vmatmul.mubr.bf16.gmra.mrb[0].mxu0 %v5438
        %v6536 = vpop.f32.mrb[0].mxu0
        %v6537 = vadd.f32 %v5544, %v6536
        %v6538 = vpop.f32.mrb[0].mxu0
        %v6539 = vadd.f32 %v5548, %v6538
        %v6540 = vpop.f32.mrb[0].mxu0
        %v6541 = vadd.f32 %v5544, %v6540
        %v6542 = vpop.f32.mrb[0].mxu0
        %v6543 = vadd.f32 %v5548, %v6542
        %6544 = vdwg.mxu0
        %6545 = vmatprep.subr.bf16.mxu0 %v5845
        %6546 = vmatpush1.bf16.msra.mxu0 %v5844
        %6547 = vmatprep.subr.bf16.mxu0 %v5848
        %6548 = vmatpush1.bf16.msra.mxu0 %v5847
        %6549 = vmatprep.subr.bf16.mxu0 %v5851
        %6550 = vmatpush1.bf16.msra.mxu0 %v5850
        %6551 = vmatprep.subr.bf16.mxu0 %v5854
        %6552 = vmatpush1.bf16.msra.mxu0 %v5853
        %6553 = vmatprep.subr.bf16.mxu0 %v5857
        %6554 = vmatpush1.bf16.msra.mxu0 %v5856
        %6555 = vmatprep.subr.bf16.mxu0 %v5860
        %6556 = vmatpush1.bf16.msra.mxu0 %v5859
        %6557 = vmatprep.subr.bf16.mxu0 %v5863
        %6558 = vmatpush1.bf16.msra.mxu0 %v5862
        %6559 = vmatprep.subr.bf16.mxu0 %v5866
        %6560 = vmatpush1.bf16.msra.mxu0 %v5865
        %6561 = vmatprep.subr.bf16.mxu0 0
        %6562 = vmatpush1.bf16.msra.mxu0 0
        %6563 = vmatprep.subr.bf16.mxu0 0
        %6564 = vmatpush1.bf16.msra.mxu0 0
        %6565 = vmatprep.subr.bf16.mxu0 0
        %6566 = vmatpush1.bf16.msra.mxu0 0
        %6567 = vmatprep.subr.bf16.mxu0 0
        %6568 = vmatpush1.bf16.msra.mxu0 0
        %6569 = vmatprep.subr.bf16.mxu0 0
        %6570 = vmatpush1.bf16.msra.mxu0 0
        %6571 = vmatprep.subr.bf16.mxu0 0
        %6572 = vmatpush1.bf16.msra.mxu0 0
        %6573 = vmatprep.subr.bf16.mxu0 0
        %6574 = vmatpush1.bf16.msra.mxu0 0
        %6575 = vmatprep.subr.bf16.mxu0 0
        %6576 = vmatpush1.bf16.msra.mxu0 0
        %6577 = vmatprep.mubr.bf16.mxu0 0
        %6578 = vmatmul.mubr.bf16.gmra.mrb[0].mxu0 %v5419
        %v6579 = vpop.f32.mrb[0].mxu0
        %v6580 = vadd.f32 %v6467, %v6579
        %v6581 = vpop.f32.mrb[0].mxu0
        %v6582 = vadd.f32 %v6469, %v6581
        %v6583 = vpop.f32.mrb[0].mxu0
        %v6584 = vadd.f32 %v6471, %v6583
        %v6585 = vpop.f32.mrb[0].mxu0
        %v6586 = vadd.f32 %v6473, %v6585
        %6587 = vmatprep.mubr.bf16.mxu0 0
        %6588 = vmatmul.mubr.bf16.gmra.mrb[0].mxu0 %v5422
        %v6589 = vpop.f32.mrb[0].mxu0
        %v6590 = vadd.f32 %v6477, %v6589
        %v6591 = vpop.f32.mrb[0].mxu0
        %v6592 = vadd.f32 %v6479, %v6591
        %v6593 = vpop.f32.mrb[0].mxu0
        %v6594 = vadd.f32 %v6481, %v6593
        %v6595 = vpop.f32.mrb[0].mxu0
        %v6596 = vadd.f32 %v6483, %v6595
        %6597 = vmatprep.mubr.bf16.mxu0 0
        %6598 = vmatmul.mubr.bf16.gmra.mrb[0].mxu0 %v5425
        %v6599 = vpop.f32.mrb[0].mxu0
        %v6600 = vadd.f32 %v6487, %v6599
        %v6601 = vpop.f32.mrb[0].mxu0
        %v6602 = vadd.f32 %v6489, %v6601
        %v6603 = vpop.f32.mrb[0].mxu0
        %v6604 = vadd.f32 %v6491, %v6603
        %v6605 = vpop.f32.mrb[0].mxu0
        %v6606 = vadd.f32 %v6493, %v6605
        %6607 = vmatprep.mubr.bf16.mxu0 0
        %6608 = vmatmul.mubr.bf16.gmra.mrb[0].mxu0 %v5428
        %v6609 = vpop.f32.mrb[0].mxu0
        %v6610 = vadd.f32 %v6497, %v6609
        %v6611 = vpop.f32.mrb[0].mxu0
        %v6612 = vadd.f32 %v6499, %v6611
        %v6613 = vpop.f32.mrb[0].mxu0
        %v6614 = vadd.f32 %v6501, %v6613
        %v6615 = vpop.f32.mrb[0].mxu0
        %v6616 = vadd.f32 %v6503, %v6615
        %6617 = vmatprep.mubr.bf16.mxu0 0
        %6618 = vmatmul.mubr.bf16.gmra.mrb[0].mxu0 %v5431
        %v6619 = vpop.f32.mrb[0].mxu0
        %v6620 = vadd.f32 %v6507, %v6619
        %v6621 = vpop.f32.mrb[0].mxu0
        %v6622 = vadd.f32 %v6509, %v6621
        %v6623 = vpop.f32.mrb[0].mxu0
        %v6624 = vadd.f32 %v6511, %v6623
        %v6625 = vpop.f32.mrb[0].mxu0
        %v6626 = vadd.f32 %v6513, %v6625
        %6627 = vmatprep.mubr.bf16.mxu0 0
        %6628 = vmatmul.mubr.bf16.gmra.mrb[0].mxu0 %v5434
        %v6629 = vpop.f32.mrb[0].mxu0
        %v6630 = vadd.f32 %v6517, %v6629
        %v6631 = vpop.f32.mrb[0].mxu0
        %v6632 = vadd.f32 %v6519, %v6631
        %v6633 = vpop.f32.mrb[0].mxu0
        %v6634 = vadd.f32 %v6521, %v6633
        %v6635 = vpop.f32.mrb[0].mxu0
        %v6636 = vadd.f32 %v6523, %v6635
        %6637 = vmatprep.mubr.bf16.mxu0 0
        %6638 = vmatmul.mubr.bf16.gmra.mrb[0].mxu0 %v5437
        %v6639 = vpop.f32.mrb[0].mxu0
        %v6640 = vadd.f32 %v6527, %v6639
        %v6641 = vpop.f32.mrb[0].mxu0
        %v6642 = vadd.f32 %v6529, %v6641
        %v6643 = vpop.f32.mrb[0].mxu0
        %v6644 = vadd.f32 %v6531, %v6643
        %v6645 = vpop.f32.mrb[0].mxu0
        %v6646 = vadd.f32 %v6533, %v6645
        %6647 = vmatprep.mubr.bf16.mxu0 0
        %6648 = vmatmul.mubr.bf16.gmra.mrb[0].mxu0 %v5440
        %v6649 = vpop.f32.mrb[0].mxu0
        %v6650 = vadd.f32 %v6537, %v6649
        %v6651 = vpop.f32.mrb[0].mxu0
        %v6652 = vadd.f32 %v6539, %v6651
        %v6653 = vpop.f32.mrb[0].mxu0
        %v6654 = vadd.f32 %v6541, %v6653
        %v6655 = vpop.f32.mrb[0].mxu0
        %v6656 = vadd.f32 %v6543, %v6655
        %6657 = vdwg.mxu0
        %6658 = vmatprep.subr.bf16.mxu0 0
        %6659 = vmatpush1.bf16.msra.mxu0 %v5798
        %6660 = vmatprep.subr.bf16.mxu0 0
        %6661 = vmatpush1.bf16.msra.mxu0 %v5801
        %6662 = vmatprep.subr.bf16.mxu0 0
        %6663 = vmatpush1.bf16.msra.mxu0 %v5804
        %6664 = vmatprep.subr.bf16.mxu0 0
        %6665 = vmatpush1.bf16.msra.mxu0 %v5807
        %6666 = vmatprep.subr.bf16.mxu0 0
        %6667 = vmatpush1.bf16.msra.mxu0 %v5810
        %6668 = vmatprep.subr.bf16.mxu0 0
        %6669 = vmatpush1.bf16.msra.mxu0 %v5813
        %6670 = vmatprep.subr.bf16.mxu0 0
        %6671 = vmatpush1.bf16.msra.mxu0 %v5816
        %6672 = vmatprep.subr.bf16.mxu0 0
        %6673 = vmatpush1.bf16.msra.mxu0 %v5819
        %6674 = vmatprep.subr.bf16.mxu0 0
        %6675 = vmatpush1.bf16.msra.mxu0 %v5822
        %6676 = vmatprep.subr.bf16.mxu0 0
        %6677 = vmatpush1.bf16.msra.mxu0 %v5825
        %6678 = vmatprep.subr.bf16.mxu0 0
        %6679 = vmatpush1.bf16.msra.mxu0 %v5828
        %6680 = vmatprep.subr.bf16.mxu0 0
        %6681 = vmatpush1.bf16.msra.mxu0 %v5831
        %6682 = vmatprep.subr.bf16.mxu0 0
        %6683 = vmatpush1.bf16.msra.mxu0 %v5834
        %6684 = vmatprep.subr.bf16.mxu0 0
        %6685 = vmatpush1.bf16.msra.mxu0 %v5837
        %6686 = vmatprep.subr.bf16.mxu0 0
        %6687 = vmatpush1.bf16.msra.mxu0 %v5840
        %6688 = vmatprep.subr.bf16.mxu0 0
        %6689 = vmatpush1.bf16.msra.mxu0 %v5843
        %6690 = vmatprep.mubr.bf16.mxu0 %v5418
        %6691 = vmatmul.mubr.bf16.gmra.mrb[0].mxu0 %v5417
        %v6692 = vpop.f32.mrb[0].mxu0
        %v6693 = vadd.f32 %v5552, %v6692
        %v6694 = vpop.f32.mrb[0].mxu0
        %v6695 = vpop.f32.mrb[0].mxu0
        %v6696 = vadd.f32 %v5552, %v6695
        %v6697 = vpop.f32.mrb[0].mxu0
        %6698 = vmatprep.mubr.bf16.mxu0 %v5421
        %6699 = vmatmul.mubr.bf16.gmra.mrb[0].mxu0 %v5420
        %v6700 = vpop.f32.mrb[0].mxu0
        %v6701 = vadd.f32 %v5552, %v6700
        %v6702 = vpop.f32.mrb[0].mxu0
        %v6703 = vpop.f32.mrb[0].mxu0
        %v6704 = vadd.f32 %v5552, %v6703
        %v6705 = vpop.f32.mrb[0].mxu0
        %6706 = vmatprep.mubr.bf16.mxu0 %v5424
        %6707 = vmatmul.mubr.bf16.gmra.mrb[0].mxu0 %v5423
        %v6708 = vpop.f32.mrb[0].mxu0
        %v6709 = vadd.f32 %v5552, %v6708
        %v6710 = vpop.f32.mrb[0].mxu0
        %v6711 = vpop.f32.mrb[0].mxu0
        %v6712 = vadd.f32 %v5552, %v6711
        %v6713 = vpop.f32.mrb[0].mxu0
        %6714 = vmatprep.mubr.bf16.mxu0 %v5427
        %6715 = vmatmul.mubr.bf16.gmra.mrb[0].mxu0 %v5426
        %v6716 = vpop.f32.mrb[0].mxu0
        %v6717 = vadd.f32 %v5552, %v6716
        %v6718 = vpop.f32.mrb[0].mxu0
        %v6719 = vpop.f32.mrb[0].mxu0
        %v6720 = vadd.f32 %v5552, %v6719
        %v6721 = vpop.f32.mrb[0].mxu0
        %6722 = vmatprep.mubr.bf16.mxu0 %v5430
        %6723 = vmatmul.mubr.bf16.gmra.mrb[0].mxu0 %v5429
        %v6724 = vpop.f32.mrb[0].mxu0
        %v6725 = vadd.f32 %v5552, %v6724
        %v6726 = vpop.f32.mrb[0].mxu0
        %v6727 = vpop.f32.mrb[0].mxu0
        %v6728 = vadd.f32 %v5552, %v6727
        %v6729 = vpop.f32.mrb[0].mxu0
        %6730 = vmatprep.mubr.bf16.mxu0 %v5433
        %6731 = vmatmul.mubr.bf16.gmra.mrb[0].mxu0 %v5432
        %v6732 = vpop.f32.mrb[0].mxu0
        %v6733 = vadd.f32 %v5552, %v6732
        %v6734 = vpop.f32.mrb[0].mxu0
        %v6735 = vpop.f32.mrb[0].mxu0
        %v6736 = vadd.f32 %v5552, %v6735
        %v6737 = vpop.f32.mrb[0].mxu0
        %6738 = vmatprep.mubr.bf16.mxu0 %v5436
        %6739 = vmatmul.mubr.bf16.gmra.mrb[0].mxu0 %v5435
        %v6740 = vpop.f32.mrb[0].mxu0
        %v6741 = vadd.f32 %v5552, %v6740
        %v6742 = vpop.f32.mrb[0].mxu0
        %v6743 = vpop.f32.mrb[0].mxu0
        %v6744 = vadd.f32 %v5552, %v6743
        %v6745 = vpop.f32.mrb[0].mxu0
        %6746 = vmatprep.mubr.bf16.mxu0 %v5439
        %6747 = vmatmul.mubr.bf16.gmra.mrb[0].mxu0 %v5438
        %v6748 = vpop.f32.mrb[0].mxu0
        %v6749 = vadd.f32 %v5552, %v6748
        %v6750 = vpop.f32.mrb[0].mxu0
        %v6751 = vpop.f32.mrb[0].mxu0
        %v6752 = vadd.f32 %v5552, %v6751
        %v6753 = vpop.f32.mrb[0].mxu0
        %6754 = vdwg.mxu0
        %6755 = vmatprep.subr.bf16.mxu0 0
        %6756 = vmatpush1.bf16.msra.mxu0 %v5846
        %6757 = vmatprep.subr.bf16.mxu0 0
        %6758 = vmatpush1.bf16.msra.mxu0 %v5849
        %6759 = vmatprep.subr.bf16.mxu0 0
        %6760 = vmatpush1.bf16.msra.mxu0 %v5852
        %6761 = vmatprep.subr.bf16.mxu0 0
        %6762 = vmatpush1.bf16.msra.mxu0 %v5855
        %6763 = vmatprep.subr.bf16.mxu0 0
        %6764 = vmatpush1.bf16.msra.mxu0 %v5858
        %6765 = vmatprep.subr.bf16.mxu0 0
        %6766 = vmatpush1.bf16.msra.mxu0 %v5861
        %6767 = vmatprep.subr.bf16.mxu0 0
        %6768 = vmatpush1.bf16.msra.mxu0 %v5864
        %6769 = vmatprep.subr.bf16.mxu0 0
        %6770 = vmatpush1.bf16.msra.mxu0 %v5867
        %6771 = vmatprep.subr.bf16.mxu0 0
        %6772 = vmatpush1.bf16.msra.mxu0 0
        %6773 = vmatprep.subr.bf16.mxu0 0
        %6774 = vmatpush1.bf16.msra.mxu0 0
        %6775 = vmatprep.subr.bf16.mxu0 0
        %6776 = vmatpush1.bf16.msra.mxu0 0
        %6777 = vmatprep.subr.bf16.mxu0 0
        %6778 = vmatpush1.bf16.msra.mxu0 0
        %6779 = vmatprep.subr.bf16.mxu0 0
        %6780 = vmatpush1.bf16.msra.mxu0 0
        %6781 = vmatprep.subr.bf16.mxu0 0
        %6782 = vmatpush1.bf16.msra.mxu0 0
        %6783 = vmatprep.subr.bf16.mxu0 0
        %6784 = vmatpush1.bf16.msra.mxu0 0
        %6785 = vmatprep.subr.bf16.mxu0 0
        %6786 = vmatpush1.bf16.msra.mxu0 0
        %6787 = vmatprep.mubr.bf16.mxu0 0
        %6788 = vmatmul.mubr.bf16.gmra.mrb[0].mxu0 %v5419
        %v6789 = vpop.f32.mrb[0].mxu0
        %v6790 = vadd.f32 %v6693, %v6789
        %v6791 = vpop.f32.mrb[0].mxu0
        %v6792 = vpop.f32.mrb[0].mxu0
        %v6793 = vadd.f32 %v6696, %v6792
        %v6794 = vpop.f32.mrb[0].mxu0
        %6795 = vmatprep.mubr.bf16.mxu0 0
        %6796 = vmatmul.mubr.bf16.gmra.mrb[0].mxu0 %v5422
        %v6797 = vpop.f32.mrb[0].mxu0
        %v6798 = vadd.f32 %v6701, %v6797
        %v6799 = vpop.f32.mrb[0].mxu0
        %v6800 = vpop.f32.mrb[0].mxu0
        %v6801 = vadd.f32 %v6704, %v6800
        %v6802 = vpop.f32.mrb[0].mxu0
        %6803 = vmatprep.mubr.bf16.mxu0 0
        %6804 = vmatmul.mubr.bf16.gmra.mrb[0].mxu0 %v5425
        %v6805 = vpop.f32.mrb[0].mxu0
        %v6806 = vadd.f32 %v6709, %v6805
        %v6807 = vpop.f32.mrb[0].mxu0
        %v6808 = vpop.f32.mrb[0].mxu0
        %v6809 = vadd.f32 %v6712, %v6808
        %v6810 = vpop.f32.mrb[0].mxu0
        %6811 = vmatprep.mubr.bf16.mxu0 0
        %6812 = vmatmul.mubr.bf16.gmra.mrb[0].mxu0 %v5428
        %v6813 = vpop.f32.mrb[0].mxu0
        %v6814 = vadd.f32 %v6717, %v6813
        %v6815 = vpop.f32.mrb[0].mxu0
        %v6816 = vpop.f32.mrb[0].mxu0
        %v6817 = vadd.f32 %v6720, %v6816
        %v6818 = vpop.f32.mrb[0].mxu0
        %6819 = vmatprep.mubr.bf16.mxu0 0
        %6820 = vmatmul.mubr.bf16.gmra.mrb[0].mxu0 %v5431
        %v6821 = vpop.f32.mrb[0].mxu0
        %v6822 = vadd.f32 %v6725, %v6821
        %v6823 = vpop.f32.mrb[0].mxu0
        %v6824 = vpop.f32.mrb[0].mxu0
        %v6825 = vadd.f32 %v6728, %v6824
        %v6826 = vpop.f32.mrb[0].mxu0
        %6827 = vmatprep.mubr.bf16.mxu0 0
        %6828 = vmatmul.mubr.bf16.gmra.mrb[0].mxu0 %v5434
        %v6829 = vpop.f32.mrb[0].mxu0
        %v6830 = vadd.f32 %v6733, %v6829
        %v6831 = vpop.f32.mrb[0].mxu0
        %v6832 = vpop.f32.mrb[0].mxu0
        %v6833 = vadd.f32 %v6736, %v6832
        %v6834 = vpop.f32.mrb[0].mxu0
        %6835 = vmatprep.mubr.bf16.mxu0 0
        %6836 = vmatmul.mubr.bf16.gmra.mrb[0].mxu0 %v5437
        %v6837 = vpop.f32.mrb[0].mxu0
        %v6838 = vadd.f32 %v6741, %v6837
        %v6839 = vpop.f32.mrb[0].mxu0
        %v6840 = vpop.f32.mrb[0].mxu0
        %v6841 = vadd.f32 %v6744, %v6840
        %v6842 = vpop.f32.mrb[0].mxu0
        %6843 = vmatprep.mubr.bf16.mxu0 0
        %6844 = vmatmul.mubr.bf16.gmra.mrb[0].mxu0 %v5440
        %v6845 = vpop.f32.mrb[0].mxu0
        %v6846 = vadd.f32 %v6749, %v6845
        %v6847 = vpop.f32.mrb[0].mxu0
        %v6848 = vpop.f32.mrb[0].mxu0
        %v6849 = vadd.f32 %v6752, %v6848
        %v6850 = vpop.f32.mrb[0].mxu0
        %6851 = vdwg.mxu0
        %v6852 = vtanh.pop %v6580
        %v6853 = vtanh.pop %v6582
        %v6854 = vtanh.pop %v6790
        %v6855 = vtanh.pop %v6584
        %v6856 = vtanh.pop %v6586
        %v6857 = vtanh.pop %v6793
        %v6858 = vtanh.pop %v6590
        %v6859 = vtanh.pop %v6592
        %v6860 = vtanh.pop %v6798
        %v6861 = vtanh.pop %v6594
        %v6862 = vtanh.pop %v6596
        %v6863 = vtanh.pop %v6801
        %v6864 = vtanh.pop %v6600
        %v6865 = vtanh.pop %v6602
        %v6866 = vtanh.pop %v6806
        %v6867 = vtanh.pop %v6604
        %v6868 = vtanh.pop %v6606
        %v6869 = vtanh.pop %v6809
        %v6870 = vtanh.pop %v6610
        %v6871 = vtanh.pop %v6612
        %v6872 = vtanh.pop %v6814
        %v6873 = vtanh.pop %v6614
        %v6874 = vtanh.pop %v6616
        %v6875 = vtanh.pop %v6817
        %v6876 = vtanh.pop %v6620
        %v6877 = vtanh.pop %v6622
        %v6878 = vtanh.pop %v6822
        %v6879 = vtanh.pop %v6624
        %v6880 = vtanh.pop %v6626
        %v6881 = vtanh.pop %v6825
        %v6882 = vtanh.pop %v6630
        %v6883 = vtanh.pop %v6632
        %v6884 = vtanh.pop %v6830
        %v6885 = vtanh.pop %v6634
        %v6886 = vtanh.pop %v6636
        %v6887 = vtanh.pop %v6833
        %v6888 = vtanh.pop %v6640
        %v6889 = vtanh.pop %v6642
        %v6890 = vtanh.pop %v6838
        %v6891 = vtanh.pop %v6644
        %v6892 = vtanh.pop %v6646
        %v6893 = vtanh.pop %v6841
        %v6894 = vtanh.pop %v6650
        %v6895 = vtanh.pop %v6652
        %v6896 = vtanh.pop %v6846
        %v6897 = vtanh.pop %v6654
        %v6898 = vtanh.pop %v6656
        %v6899 = vtanh.pop %v6849
        %v6900 = vpack.c.bf16 %v6855, %v6852
        %v6901 = vpack.c.bf16 %v6856, %v6853
        %v6902 = vpack.c.bf16 %v6857, %v6854
        %v6903 = vpack.c.bf16 %v6861, %v6858
        %v6904 = vpack.c.bf16 %v6862, %v6859
        %v6905 = vpack.c.bf16 %v6863, %v6860
        %v6906 = vpack.c.bf16 %v6867, %v6864
        %v6907 = vpack.c.bf16 %v6868, %v6865
        %v6908 = vpack.c.bf16 %v6869, %v6866
        %v6909 = vpack.c.bf16 %v6873, %v6870
        %v6910 = vpack.c.bf16 %v6874, %v6871
        %v6911 = vpack.c.bf16 %v6875, %v6872
        %v6912 = vpack.c.bf16 %v6879, %v6876
        %v6913 = vpack.c.bf16 %v6880, %v6877
        %v6914 = vpack.c.bf16 %v6881, %v6878
        %v6915 = vpack.c.bf16 %v6885, %v6882
        %v6916 = vpack.c.bf16 %v6886, %v6883
        %v6917 = vpack.c.bf16 %v6887, %v6884
        %v6918 = vpack.c.bf16 %v6891, %v6888
        %v6919 = vpack.c.bf16 %v6892, %v6889
        %v6920 = vpack.c.bf16 %v6893, %v6890
        %v6921 = vpack.c.bf16 %v6897, %v6894
        %v6922 = vpack.c.bf16 %v6898, %v6895
        %v6923 = vpack.c.bf16 %v6899, %v6896
        %s6924 = scalar_lea.vmem [#allocation2], 2880
        %v6925 = vld [vmem:[%s6924] sm:$0xf]
        %v6926 = vld [vmem:[%s6924 + $0xc] sm:$0xf]
        %v6927 = vld [vmem:[%s6924 + $0x18] sm:$0xf]
        %v6928 = vld [vmem:[%s6924 + $0x24] sm:$0xf]
        %v6929 = vld [vmem:[%s6924 + $0x30] sm:$0xf]
        %v6930 = vld [vmem:[%s6924 + $0x3c] sm:$0xf]
        %v6931 = vld [vmem:[%s6924 + $0x48] sm:$0xf]
        %v6932 = vld [vmem:[%s6924 + $0x54] sm:$0xf]
        %v6933 = vld [vmem:[%s6924 + $0x60] sm:$0xf]
        %v6934 = vld [vmem:[%s6924 + $0x6c] sm:$0xf]
        %v6935 = vld [vmem:[%s6924 + $0x78] sm:$0xf]
        %v6936 = vld [vmem:[%s6924 + $0x84] sm:$0xf]
        %v6937 = vld [vmem:[%s6924 + $0x90] sm:$0xf]
        %v6938 = vld [vmem:[%s6924 + $0x9c] sm:$0xf]
        %v6939 = vld [vmem:[%s6924 + $0xa8] sm:$0xf]
        %v6940 = vld [vmem:[%s6924 + $0xb4] sm:$0xf]
        %v6941 = vld [vmem:[%s6924 + $0xc0] sm:$0xf]
        %v6942 = vld [vmem:[%s6924 + $0xcc] sm:$0xf]
        %v6943 = vld [vmem:[%s6924 + $0xd8] sm:$0xf]
        %v6944 = vld [vmem:[%s6924 + $0xe4] sm:$0xf]
        %v6945 = vld [vmem:[%s6924 + $0xf0] sm:$0xf]
        %v6946 = vld [vmem:[%s6924 + $0xfc] sm:$0xf]
        %v6947 = vld [vmem:[%s6924 + $0x108] sm:$0xf]
        %v6948 = vld [vmem:[%s6924 + $0x114] sm:$0xf]
        %v6949 = vld [vmem:[%s6924 + $0x120] sm:$0xf]
        %v6950 = vld [vmem:[%s6924 + $0x12c] sm:$0xf]
        %v6951 = vld [vmem:[%s6924 + $0x138] sm:$0xf]
        %v6952 = vld [vmem:[%s6924 + $0x144] sm:$0xf]
        %v6953 = vld [vmem:[%s6924 + $0x150] sm:$0xf]
        %v6954 = vld [vmem:[%s6924 + $0x15c] sm:$0xf]
        %v6955 = vld [vmem:[%s6924 + $0x168] sm:$0xf]
        %v6956 = vld [vmem:[%s6924 + $0x174] sm:$0xf]
        %v6957 = vld [vmem:[%s6924 + $0x180] sm:$0xf]
        %v6958 = vld [vmem:[%s6924 + $0x18c] sm:$0xf]
        %v6959 = vld [vmem:[%s6924 + $0x198] sm:$0xf]
        %v6960 = vld [vmem:[%s6924 + $0x1a4] sm:$0xf]
        %v6961 = vld [vmem:[%s6924 + $0x1b0] sm:$0xf]
        %v6962 = vld [vmem:[%s6924 + $0x1bc] sm:$0xf]
        %v6963 = vld [vmem:[%s6924 + $0x1c8] sm:$0xf]
        %v6964 = vld [vmem:[%s6924 + $0x1d4] sm:$0xf]
        %v6965 = vld [vmem:[%s6924 + $0x1e0] sm:$0xf]
        %v6966 = vld [vmem:[%s6924 + $0x1ec] sm:$0xf]
        %v6967 = vld [vmem:[%s6924 + $0x1f8] sm:$0xf]
        %v6968 = vld [vmem:[%s6924 + $0x204] sm:$0xf]
        %v6969 = vld [vmem:[%s6924 + $0x210] sm:$0xf]
        %v6970 = vld [vmem:[%s6924 + $0x21c] sm:$0xf]
        %v6971 = vld [vmem:[%s6924 + $0x228] sm:$0xf]
        %v6972 = vld [vmem:[%s6924 + $0x234] sm:$0xf]
        %v7021 = vunpack.c.l.b16 %v6925
        %v7022 = vunpack.c.l.b16 %v6926
        %v7023 = vunpack.c.l.b16 %v6927
        %v7024 = vunpack.c.l.b16 %v6928
        %v7025 = vunpack.c.l.b16 %v6929
        %v7026 = vunpack.c.l.b16 %v6930
        %v7027 = vunpack.c.l.b16 %v6931
        %v7028 = vunpack.c.l.b16 %v6932
        %v7029 = vunpack.c.l.b16 %v6933
        %v7030 = vunpack.c.l.b16 %v6934
        %v7031 = vunpack.c.l.b16 %v6935
        %v7032 = vunpack.c.l.b16 %v6936
        %v7033 = vunpack.c.l.b16 %v6937
        %v7034 = vunpack.c.l.b16 %v6938
        %v7035 = vunpack.c.l.b16 %v6939
        %v7036 = vunpack.c.l.b16 %v6940
        %v7037 = vunpack.c.l.b16 %v6941
        %v7038 = vunpack.c.l.b16 %v6942
        %v7039 = vunpack.c.l.b16 %v6943
        %v7040 = vunpack.c.l.b16 %v6944
        %v7041 = vunpack.c.l.b16 %v6945
        %v7042 = vunpack.c.l.b16 %v6946
        %v7043 = vunpack.c.l.b16 %v6947
        %v7044 = vunpack.c.l.b16 %v6948
        %v7045 = vunpack.c.l.b16 %v6949
        %v7046 = vunpack.c.l.b16 %v6950
        %v7047 = vunpack.c.l.b16 %v6951
        %v7048 = vunpack.c.l.b16 %v6952
        %v7049 = vunpack.c.l.b16 %v6953
        %v7050 = vunpack.c.l.b16 %v6954
        %v7051 = vunpack.c.l.b16 %v6955
        %v7052 = vunpack.c.l.b16 %v6956
        %v7053 = vunpack.c.l.b16 %v6957
        %v7054 = vunpack.c.l.b16 %v6958
        %v7055 = vunpack.c.l.b16 %v6959
        %v7056 = vunpack.c.l.b16 %v6960
        %v7057 = vunpack.c.l.b16 %v6961
        %v7058 = vunpack.c.l.b16 %v6962
        %v7059 = vunpack.c.l.b16 %v6963
        %v7060 = vunpack.c.l.b16 %v6964
        %v7061 = vunpack.c.l.b16 %v6965
        %v7062 = vunpack.c.l.b16 %v6966
        %v7063 = vunpack.c.l.b16 %v6967
        %v7064 = vunpack.c.l.b16 %v6968
        %v7065 = vunpack.c.l.b16 %v6969
        %v7066 = vunpack.c.l.b16 %v6970
        %v7067 = vunpack.c.l.b16 %v6971
        %v7068 = vunpack.c.l.b16 %v6972
        %v7069 = vpack.c.b16 %v7022, %v7021
        %v7070 = vpack.c.b16 %v7024, %v7023
        %v7071 = vpack.c.b16 %v7026, %v7025
        %v7072 = vpack.c.b16 %v7028, %v7027
        %v7073 = vpack.c.b16 %v7030, %v7029
        %v7074 = vpack.c.b16 %v7032, %v7031
        %v7075 = vpack.c.b16 %v7034, %v7033
        %v7076 = vpack.c.b16 %v7036, %v7035
        %v7077 = vpack.c.b16 %v7038, %v7037
        %v7078 = vpack.c.b16 %v7040, %v7039
        %v7079 = vpack.c.b16 %v7042, %v7041
        %v7080 = vpack.c.b16 %v7044, %v7043
        %v7081 = vpack.c.b16 %v7046, %v7045
        %v7082 = vpack.c.b16 %v7048, %v7047
        %v7083 = vpack.c.b16 %v7050, %v7049
        %v7084 = vpack.c.b16 %v7052, %v7051
        %v7085 = vpack.c.b16 %v7054, %v7053
        %v7086 = vpack.c.b16 %v7056, %v7055
        %v7087 = vpack.c.b16 %v7058, %v7057
        %v7088 = vpack.c.b16 %v7060, %v7059
        %v7089 = vpack.c.b16 %v7062, %v7061
        %v7090 = vpack.c.b16 %v7064, %v7063
        %v7091 = vpack.c.b16 %v7066, %v7065
        %v7092 = vpack.c.b16 %v7068, %v7067
        %7117 = vmatprep.subr.bf16.mxu0 0
        %7118 = vmatpush1.bf16.msra.mxu0 %v7069
        %7119 = vmatprep.subr.bf16.mxu0 0
        %7120 = vmatpush1.bf16.msra.mxu0 %v7070
        %7121 = vmatprep.subr.bf16.mxu0 0
        %7122 = vmatpush1.bf16.msra.mxu0 %v7071
        %7123 = vmatprep.subr.bf16.mxu0 0
        %7124 = vmatpush1.bf16.msra.mxu0 %v7072
        %7125 = vmatprep.subr.bf16.mxu0 0
        %7126 = vmatpush1.bf16.msra.mxu0 %v7073
        %7127 = vmatprep.subr.bf16.mxu0 0
        %7128 = vmatpush1.bf16.msra.mxu0 %v7074
        %7129 = vmatprep.subr.bf16.mxu0 0
        %7130 = vmatpush1.bf16.msra.mxu0 %v7075
        %7131 = vmatprep.subr.bf16.mxu0 0
        %7132 = vmatpush1.bf16.msra.mxu0 %v7076
        %7133 = vmatprep.subr.bf16.mxu0 0
        %7134 = vmatpush1.bf16.msra.mxu0 %v7077
        %7135 = vmatprep.subr.bf16.mxu0 0
        %7136 = vmatpush1.bf16.msra.mxu0 %v7078
        %7137 = vmatprep.subr.bf16.mxu0 0
        %7138 = vmatpush1.bf16.msra.mxu0 %v7079
        %7139 = vmatprep.subr.bf16.mxu0 0
        %7140 = vmatpush1.bf16.msra.mxu0 %v7080
        %7141 = vmatprep.subr.bf16.mxu0 0
        %7142 = vmatpush1.bf16.msra.mxu0 %v7081
        %7143 = vmatprep.subr.bf16.mxu0 0
        %7144 = vmatpush1.bf16.msra.mxu0 %v7082
        %7145 = vmatprep.subr.bf16.mxu0 0
        %7146 = vmatpush1.bf16.msra.mxu0 %v7083
        %7147 = vmatprep.subr.bf16.mxu0 0
        %7148 = vmatpush1.bf16.msra.mxu0 %v7084
        %7149 = vmatprep.mubr.bf16.mxu0 %v6409
        %7150 = vmatmul.mubr.bf16.gmra.mrb[0].mxu0 %v6408
        %v7151 = vpop.f32.mrb[0].mxu0
        %v7152 = vadd.f32 0.0, %v7151
        %v7153 = vpop.f32.mrb[0].mxu0
        %v7154 = vpop.f32.mrb[0].mxu0
        %v7155 = vadd.f32 0.0, %v7154
        %v7156 = vpop.f32.mrb[0].mxu0
        %7157 = vmatprep.mubr.bf16.mxu0 %v6412
        %7158 = vmatmul.mubr.bf16.gmra.mrb[0].mxu0 %v6411
        %v7159 = vpop.f32.mrb[0].mxu0
        %v7160 = vadd.f32 0.0, %v7159
        %v7161 = vpop.f32.mrb[0].mxu0
        %v7162 = vpop.f32.mrb[0].mxu0
        %v7163 = vadd.f32 0.0, %v7162
        %v7164 = vpop.f32.mrb[0].mxu0
        %7165 = vmatprep.mubr.bf16.mxu0 %v6415
        %7166 = vmatmul.mubr.bf16.gmra.mrb[0].mxu0 %v6414
        %v7167 = vpop.f32.mrb[0].mxu0
        %v7168 = vadd.f32 0.0, %v7167
        %v7169 = vpop.f32.mrb[0].mxu0
        %v7170 = vpop.f32.mrb[0].mxu0
        %v7171 = vadd.f32 0.0, %v7170
        %v7172 = vpop.f32.mrb[0].mxu0
        %7173 = vmatprep.mubr.bf16.mxu0 %v6418
        %7174 = vmatmul.mubr.bf16.gmra.mrb[0].mxu0 %v6417
        %v7175 = vpop.f32.mrb[0].mxu0
        %v7176 = vadd.f32 0.0, %v7175
        %v7177 = vpop.f32.mrb[0].mxu0
        %v7178 = vpop.f32.mrb[0].mxu0
        %v7179 = vadd.f32 0.0, %v7178
        %v7180 = vpop.f32.mrb[0].mxu0
        %7181 = vmatprep.mubr.bf16.mxu0 %v6421
        %7182 = vmatmul.mubr.bf16.gmra.mrb[0].mxu0 %v6420
        %v7183 = vpop.f32.mrb[0].mxu0
        %v7184 = vadd.f32 0.0, %v7183
        %v7185 = vpop.f32.mrb[0].mxu0
        %v7186 = vpop.f32.mrb[0].mxu0
        %v7187 = vadd.f32 0.0, %v7186
        %v7188 = vpop.f32.mrb[0].mxu0
        %7189 = vmatprep.mubr.bf16.mxu0 %v6424
        %7190 = vmatmul.mubr.bf16.gmra.mrb[0].mxu0 %v6423
        %v7191 = vpop.f32.mrb[0].mxu0
        %v7192 = vadd.f32 0.0, %v7191
        %v7193 = vpop.f32.mrb[0].mxu0
        %v7194 = vpop.f32.mrb[0].mxu0
        %v7195 = vadd.f32 0.0, %v7194
        %v7196 = vpop.f32.mrb[0].mxu0
        %7197 = vmatprep.mubr.bf16.mxu0 %v6427
        %7198 = vmatmul.mubr.bf16.gmra.mrb[0].mxu0 %v6426
        %v7199 = vpop.f32.mrb[0].mxu0
        %v7200 = vadd.f32 0.0, %v7199
        %v7201 = vpop.f32.mrb[0].mxu0
        %v7202 = vpop.f32.mrb[0].mxu0
        %v7203 = vadd.f32 0.0, %v7202
        %v7204 = vpop.f32.mrb[0].mxu0
        %7205 = vmatprep.mubr.bf16.mxu0 %v6430
        %7206 = vmatmul.mubr.bf16.gmra.mrb[0].mxu0 %v6429
        %v7207 = vpop.f32.mrb[0].mxu0
        %v7208 = vadd.f32 0.0, %v7207
        %v7209 = vpop.f32.mrb[0].mxu0
        %v7210 = vpop.f32.mrb[0].mxu0
        %v7211 = vadd.f32 0.0, %v7210
        %v7212 = vpop.f32.mrb[0].mxu0
        %7213 = vdwg.mxu0
        %7214 = vmatprep.subr.bf16.mxu0 0
        %7215 = vmatpush1.bf16.msra.mxu0 %v7085
        %7216 = vmatprep.subr.bf16.mxu0 0
        %7217 = vmatpush1.bf16.msra.mxu0 %v7086
        %7218 = vmatprep.subr.bf16.mxu0 0
        %7219 = vmatpush1.bf16.msra.mxu0 %v7087
        %7220 = vmatprep.subr.bf16.mxu0 0
        %7221 = vmatpush1.bf16.msra.mxu0 %v7088
        %7222 = vmatprep.subr.bf16.mxu0 0
        %7223 = vmatpush1.bf16.msra.mxu0 %v7089
        %7224 = vmatprep.subr.bf16.mxu0 0
        %7225 = vmatpush1.bf16.msra.mxu0 %v7090
        %7226 = vmatprep.subr.bf16.mxu0 0
        %7227 = vmatpush1.bf16.msra.mxu0 %v7091
        %7228 = vmatprep.subr.bf16.mxu0 0
        %7229 = vmatpush1.bf16.msra.mxu0 %v7092
        %7230 = vmatprep.subr.bf16.mxu0 0
        %7231 = vmatpush1.bf16.msra.mxu0 0
        %7232 = vmatprep.subr.bf16.mxu0 0
        %7233 = vmatpush1.bf16.msra.mxu0 0
        %7234 = vmatprep.subr.bf16.mxu0 0
        %7235 = vmatpush1.bf16.msra.mxu0 0
        %7236 = vmatprep.subr.bf16.mxu0 0
        %7237 = vmatpush1.bf16.msra.mxu0 0
        %7238 = vmatprep.subr.bf16.mxu0 0
        %7239 = vmatpush1.bf16.msra.mxu0 0
        %7240 = vmatprep.subr.bf16.mxu0 0
        %7241 = vmatpush1.bf16.msra.mxu0 0
        %7242 = vmatprep.subr.bf16.mxu0 0
        %7243 = vmatpush1.bf16.msra.mxu0 0
        %7244 = vmatprep.subr.bf16.mxu0 0
        %7245 = vmatpush1.bf16.msra.mxu0 0
        %7246 = vmatprep.mubr.bf16.mxu0 0
        %7247 = vmatmul.mubr.bf16.gmra.mrb[0].mxu0 %v6410
        %v7248 = vpop.f32.mrb[0].mxu0
        %v7249 = vadd.f32 %v7152, %v7248
        %v7250 = vpop.f32.mrb[0].mxu0
        %v7251 = vpop.f32.mrb[0].mxu0
        %v7252 = vadd.f32 %v7155, %v7251
        %v7253 = vpop.f32.mrb[0].mxu0
        %7254 = vmatprep.mubr.bf16.mxu0 0
        %7255 = vmatmul.mubr.bf16.gmra.mrb[0].mxu0 %v6413
        %v7256 = vpop.f32.mrb[0].mxu0
        %v7257 = vadd.f32 %v7160, %v7256
        %v7258 = vpop.f32.mrb[0].mxu0
        %v7259 = vpop.f32.mrb[0].mxu0
        %v7260 = vadd.f32 %v7163, %v7259
        %v7261 = vpop.f32.mrb[0].mxu0
        %7262 = vmatprep.mubr.bf16.mxu0 0
        %7263 = vmatmul.mubr.bf16.gmra.mrb[0].mxu0 %v6416
        %v7264 = vpop.f32.mrb[0].mxu0
        %v7265 = vadd.f32 %v7168, %v7264
        %v7266 = vpop.f32.mrb[0].mxu0
        %v7267 = vpop.f32.mrb[0].mxu0
        %v7268 = vadd.f32 %v7171, %v7267
        %v7269 = vpop.f32.mrb[0].mxu0
        %7270 = vmatprep.mubr.bf16.mxu0 0
        %7271 = vmatmul.mubr.bf16.gmra.mrb[0].mxu0 %v6419
        %v7272 = vpop.f32.mrb[0].mxu0
        %v7273 = vadd.f32 %v7176, %v7272
        %v7274 = vpop.f32.mrb[0].mxu0
        %v7275 = vpop.f32.mrb[0].mxu0
        %v7276 = vadd.f32 %v7179, %v7275
        %v7277 = vpop.f32.mrb[0].mxu0
        %7278 = vmatprep.mubr.bf16.mxu0 0
        %7279 = vmatmul.mubr.bf16.gmra.mrb[0].mxu0 %v6422
        %v7280 = vpop.f32.mrb[0].mxu0
        %v7281 = vadd.f32 %v7184, %v7280
        %v7282 = vpop.f32.mrb[0].mxu0
        %v7283 = vpop.f32.mrb[0].mxu0
        %v7284 = vadd.f32 %v7187, %v7283
        %v7285 = vpop.f32.mrb[0].mxu0
        %7286 = vmatprep.mubr.bf16.mxu0 0
        %7287 = vmatmul.mubr.bf16.gmra.mrb[0].mxu0 %v6425
        %v7288 = vpop.f32.mrb[0].mxu0
        %v7289 = vadd.f32 %v7192, %v7288
        %v7290 = vpop.f32.mrb[0].mxu0
        %v7291 = vpop.f32.mrb[0].mxu0
        %v7292 = vadd.f32 %v7195, %v7291
        %v7293 = vpop.f32.mrb[0].mxu0
        %7294 = vmatprep.mubr.bf16.mxu0 0
        %7295 = vmatmul.mubr.bf16.gmra.mrb[0].mxu0 %v6428
        %v7296 = vpop.f32.mrb[0].mxu0
        %v7297 = vadd.f32 %v7200, %v7296
        %v7298 = vpop.f32.mrb[0].mxu0
        %v7299 = vpop.f32.mrb[0].mxu0
        %v7300 = vadd.f32 %v7203, %v7299
        %v7301 = vpop.f32.mrb[0].mxu0
        %7302 = vmatprep.mubr.bf16.mxu0 0
        %7303 = vmatmul.mubr.bf16.gmra.mrb[0].mxu0 %v6431
        %v7304 = vpop.f32.mrb[0].mxu0
        %v7305 = vadd.f32 %v7208, %v7304
        %v7306 = vpop.f32.mrb[0].mxu0
        %v7307 = vpop.f32.mrb[0].mxu0
        %v7308 = vadd.f32 %v7211, %v7307
        %v7309 = vpop.f32.mrb[0].mxu0
        %7310 = vdwg.mxu0
        %v7311 = vadd.f32 %v203, %v7249
        %v7312 = vadd.f32 %v204, %v7252
        %v7313 = vadd.f32 %v205, %v7257
        %v7314 = vadd.f32 %v206, %v7260
        %v7315 = vadd.f32 %v207, %v7265
        %v7316 = vadd.f32 %v208, %v7268
        %v7317 = vadd.f32 %v209, %v7273
        %v7318 = vadd.f32 %v210, %v7276
        %v7319 = vadd.f32 %v211, %v7281
        %v7320 = vadd.f32 %v212, %v7284
        %v7321 = vadd.f32 %v213, %v7289
        %v7322 = vadd.f32 %v214, %v7292
        %v7323 = vadd.f32 %v215, %v7297
        %v7324 = vadd.f32 %v216, %v7300
        %v7325 = vadd.f32 %v217, %v7305
        %v7326 = vadd.f32 %v218, %v7308
        %v7327 = vld [vmem:[#allocation4 + $0x5] ss:$0 sm:$0xff]
        %v7328 = vadd.f32 %v7311, %v7327
        %v7329 = vadd.f32 %v7312, %v7327
        %v7330 = vadd.f32 %v7313, %v7327
        %v7331 = vadd.f32 %v7314, %v7327
        %v7332 = vadd.f32 %v7315, %v7327
        %v7333 = vadd.f32 %v7316, %v7327
        %v7334 = vadd.f32 %v7317, %v7327
        %v7335 = vadd.f32 %v7318, %v7327
        %v7336 = vadd.f32 %v7319, %v7327
        %v7337 = vadd.f32 %v7320, %v7327
        %v7338 = vadd.f32 %v7321, %v7327
        %v7339 = vadd.f32 %v7322, %v7327
        %v7340 = vadd.f32 %v7323, %v7327
        %v7341 = vadd.f32 %v7324, %v7327
        %v7342 = vadd.f32 %v7325, %v7327
        %v7343 = vadd.f32 %v7326, %v7327
        %7344 = vst [vmem:[%s200] sm:$0xff] %v7328
        %7345 = vst [vmem:[%s200 + $0x8] sm:$0xff] %v7329
        %7346 = vst [vmem:[%s200 + $0x10] sm:$0xff] %v7330
        %7347 = vst [vmem:[%s200 + $0x18] sm:$0xff] %v7331
        %7348 = vst [vmem:[%s200 + $0x20] sm:$0xff] %v7332
        %7349 = vst [vmem:[%s200 + $0x28] sm:$0xff] %v7333
        %7350 = vst [vmem:[%s200 + $0x30] sm:$0xff] %v7334
        %7351 = vst [vmem:[%s200 + $0x38] sm:$0xff] %v7335
        %7352 = vst [vmem:[%s200 + $0x40] sm:$0xff] %v7336
        %7353 = vst [vmem:[%s200 + $0x48] sm:$0xff] %v7337
        %7354 = vst [vmem:[%s200 + $0x50] sm:$0xff] %v7338
        %7355 = vst [vmem:[%s200 + $0x58] sm:$0xff] %v7339
        %7356 = vst [vmem:[%s200 + $0x60] sm:$0xff] %v7340
        %7357 = vst [vmem:[%s200 + $0x68] sm:$0xff] %v7341
        %7358 = vst [vmem:[%s200 + $0x70] sm:$0xff] %v7342
        %7359 = vst [vmem:[%s200 + $0x78] sm:$0xff] %v7343
        %v7360 = vld [vmem:[%s6924] sm:$0xf]
        %v7361 = vld [vmem:[%s6924 + $0xc] sm:$0xf]
        %v7362 = vld [vmem:[%s6924 + $0x18] sm:$0xf]
        %v7363 = vld [vmem:[%s6924 + $0x24] sm:$0xf]
        %v7364 = vld [vmem:[%s6924 + $0x30] sm:$0xf]
        %v7365 = vld [vmem:[%s6924 + $0x3c] sm:$0xf]
        %v7366 = vld [vmem:[%s6924 + $0x48] sm:$0xf]
        %v7367 = vld [vmem:[%s6924 + $0x54] sm:$0xf]
        %v7368 = vld [vmem:[%s6924 + $0x60] sm:$0xf]
        %v7369 = vld [vmem:[%s6924 + $0x6c] sm:$0xf]
        %v7370 = vld [vmem:[%s6924 + $0x78] sm:$0xf]
        %v7371 = vld [vmem:[%s6924 + $0x84] sm:$0xf]
        %v7372 = vld [vmem:[%s6924 + $0x90] sm:$0xf]
        %v7373 = vld [vmem:[%s6924 + $0x9c] sm:$0xf]
        %v7374 = vld [vmem:[%s6924 + $0xa8] sm:$0xf]
        %v7375 = vld [vmem:[%s6924 + $0xb4] sm:$0xf]
        %v7376 = vld [vmem:[%s6924 + $0xc0] sm:$0xf]
        %v7377 = vld [vmem:[%s6924 + $0xcc] sm:$0xf]
        %v7378 = vld [vmem:[%s6924 + $0xd8] sm:$0xf]
        %v7379 = vld [vmem:[%s6924 + $0xe4] sm:$0xf]
        %v7380 = vld [vmem:[%s6924 + $0xf0] sm:$0xf]
        %v7381 = vld [vmem:[%s6924 + $0xfc] sm:$0xf]
        %v7382 = vld [vmem:[%s6924 + $0x108] sm:$0xf]
        %v7383 = vld [vmem:[%s6924 + $0x114] sm:$0xf]
        %v7384 = vld [vmem:[%s6924 + $0x120] sm:$0xf]
        %v7385 = vld [vmem:[%s6924 + $0x12c] sm:$0xf]
        %v7386 = vld [vmem:[%s6924 + $0x138] sm:$0xf]
        %v7387 = vld [vmem:[%s6924 + $0x144] sm:$0xf]
        %v7388 = vld [vmem:[%s6924 + $0x150] sm:$0xf]
        %v7389 = vld [vmem:[%s6924 + $0x15c] sm:$0xf]
        %v7390 = vld [vmem:[%s6924 + $0x168] sm:$0xf]
        %v7391 = vld [vmem:[%s6924 + $0x174] sm:$0xf]
        %v7392 = vld [vmem:[%s6924 + $0x180] sm:$0xf]
        %v7393 = vld [vmem:[%s6924 + $0x18c] sm:$0xf]
        %v7394 = vld [vmem:[%s6924 + $0x198] sm:$0xf]
        %v7395 = vld [vmem:[%s6924 + $0x1a4] sm:$0xf]
        %v7396 = vld [vmem:[%s6924 + $0x1b0] sm:$0xf]
        %v7397 = vld [vmem:[%s6924 + $0x1bc] sm:$0xf]
        %v7398 = vld [vmem:[%s6924 + $0x1c8] sm:$0xf]
        %v7399 = vld [vmem:[%s6924 + $0x1d4] sm:$0xf]
        %v7400 = vld [vmem:[%s6924 + $0x1e0] sm:$0xf]
        %v7401 = vld [vmem:[%s6924 + $0x1ec] sm:$0xf]
        %v7402 = vld [vmem:[%s6924 + $0x1f8] sm:$0xf]
        %v7403 = vld [vmem:[%s6924 + $0x204] sm:$0xf]
        %v7404 = vld [vmem:[%s6924 + $0x210] sm:$0xf]
        %v7405 = vld [vmem:[%s6924 + $0x21c] sm:$0xf]
        %v7406 = vld [vmem:[%s6924 + $0x228] sm:$0xf]
        %v7407 = vld [vmem:[%s6924 + $0x234] sm:$0xf]
        %v7456 = vunpack.c.l.b16 %v7360
        %v7457 = vunpack.c.l.b16 %v7361
        %v7458 = vunpack.c.l.b16 %v7362
        %v7459 = vunpack.c.l.b16 %v7363
        %v7460 = vunpack.c.l.b16 %v7364
        %v7461 = vunpack.c.l.b16 %v7365
        %v7462 = vunpack.c.l.b16 %v7366
        %v7463 = vunpack.c.l.b16 %v7367
        %v7464 = vunpack.c.l.b16 %v7368
        %v7465 = vunpack.c.l.b16 %v7369
        %v7466 = vunpack.c.l.b16 %v7370
        %v7467 = vunpack.c.l.b16 %v7371
        %v7468 = vunpack.c.l.b16 %v7372
        %v7469 = vunpack.c.l.b16 %v7373
        %v7470 = vunpack.c.l.b16 %v7374
        %v7471 = vunpack.c.l.b16 %v7375
        %v7472 = vunpack.c.l.b16 %v7376
        %v7473 = vunpack.c.l.b16 %v7377
        %v7474 = vunpack.c.l.b16 %v7378
        %v7475 = vunpack.c.l.b16 %v7379
        %v7476 = vunpack.c.l.b16 %v7380
        %v7477 = vunpack.c.l.b16 %v7381
        %v7478 = vunpack.c.l.b16 %v7382
        %v7479 = vunpack.c.l.b16 %v7383
        %v7480 = vunpack.c.l.b16 %v7384
        %v7481 = vunpack.c.l.b16 %v7385
        %v7482 = vunpack.c.l.b16 %v7386
        %v7483 = vunpack.c.l.b16 %v7387
        %v7484 = vunpack.c.l.b16 %v7388
        %v7485 = vunpack.c.l.b16 %v7389
        %v7486 = vunpack.c.l.b16 %v7390
        %v7487 = vunpack.c.l.b16 %v7391
        %v7488 = vunpack.c.l.b16 %v7392
        %v7489 = vunpack.c.l.b16 %v7393
        %v7490 = vunpack.c.l.b16 %v7394
        %v7491 = vunpack.c.l.b16 %v7395
        %v7492 = vunpack.c.l.b16 %v7396
        %v7493 = vunpack.c.l.b16 %v7397
        %v7494 = vunpack.c.l.b16 %v7398
        %v7495 = vunpack.c.l.b16 %v7399
        %v7496 = vunpack.c.l.b16 %v7400
        %v7497 = vunpack.c.l.b16 %v7401
        %v7498 = vunpack.c.l.b16 %v7402
        %v7499 = vunpack.c.l.b16 %v7403
        %v7500 = vunpack.c.l.b16 %v7404
        %v7501 = vunpack.c.l.b16 %v7405
        %v7502 = vunpack.c.l.b16 %v7406
        %v7503 = vunpack.c.l.b16 %v7407
        %v7504 = vpack.c.b16 %v7457, %v7456
        %v7505 = vpack.c.b16 %v7459, %v7458
        %v7506 = vpack.c.b16 %v7461, %v7460
        %v7507 = vpack.c.b16 %v7463, %v7462
        %v7508 = vpack.c.b16 %v7465, %v7464
        %v7509 = vpack.c.b16 %v7467, %v7466
        %v7510 = vpack.c.b16 %v7469, %v7468
        %v7511 = vpack.c.b16 %v7471, %v7470
        %v7512 = vpack.c.b16 %v7473, %v7472
        %v7513 = vpack.c.b16 %v7475, %v7474
        %v7514 = vpack.c.b16 %v7477, %v7476
        %v7515 = vpack.c.b16 %v7479, %v7478
        %v7516 = vpack.c.b16 %v7481, %v7480
        %v7517 = vpack.c.b16 %v7483, %v7482
        %v7518 = vpack.c.b16 %v7485, %v7484
        %v7519 = vpack.c.b16 %v7487, %v7486
        %v7520 = vpack.c.b16 %v7489, %v7488
        %v7521 = vpack.c.b16 %v7491, %v7490
        %v7522 = vpack.c.b16 %v7493, %v7492
        %v7523 = vpack.c.b16 %v7495, %v7494
        %v7524 = vpack.c.b16 %v7497, %v7496
        %v7525 = vpack.c.b16 %v7499, %v7498
        %v7526 = vpack.c.b16 %v7501, %v7500
        %v7527 = vpack.c.b16 %v7503, %v7502
        %7552 = vmatprep.subr.bf16.mxu0 0
        %7553 = vmatpush1.bf16.msra.mxu0 %v7504
        %7554 = vmatprep.subr.bf16.mxu0 0
        %7555 = vmatpush1.bf16.msra.mxu0 %v7505
        %7556 = vmatprep.subr.bf16.mxu0 0
        %7557 = vmatpush1.bf16.msra.mxu0 %v7506
        %7558 = vmatprep.subr.bf16.mxu0 0
        %7559 = vmatpush1.bf16.msra.mxu0 %v7507
        %7560 = vmatprep.subr.bf16.mxu0 0
        %7561 = vmatpush1.bf16.msra.mxu0 %v7508
        %7562 = vmatprep.subr.bf16.mxu0 0
        %7563 = vmatpush1.bf16.msra.mxu0 %v7509
        %7564 = vmatprep.subr.bf16.mxu0 0
        %7565 = vmatpush1.bf16.msra.mxu0 %v7510
        %7566 = vmatprep.subr.bf16.mxu0 0
        %7567 = vmatpush1.bf16.msra.mxu0 %v7511
        %7568 = vmatprep.subr.bf16.mxu0 0
        %7569 = vmatpush1.bf16.msra.mxu0 %v7512
        %7570 = vmatprep.subr.bf16.mxu0 0
        %7571 = vmatpush1.bf16.msra.mxu0 %v7513
        %7572 = vmatprep.subr.bf16.mxu0 0
        %7573 = vmatpush1.bf16.msra.mxu0 %v7514
        %7574 = vmatprep.subr.bf16.mxu0 0
        %7575 = vmatpush1.bf16.msra.mxu0 %v7515
        %7576 = vmatprep.subr.bf16.mxu0 0
        %7577 = vmatpush1.bf16.msra.mxu0 %v7516
        %7578 = vmatprep.subr.bf16.mxu0 0
        %7579 = vmatpush1.bf16.msra.mxu0 %v7517
        %7580 = vmatprep.subr.bf16.mxu0 0
        %7581 = vmatpush1.bf16.msra.mxu0 %v7518
        %7582 = vmatprep.subr.bf16.mxu0 0
        %7583 = vmatpush1.bf16.msra.mxu0 %v7519
        %7584 = vmatprep.mubr.bf16.mxu0 %v6901
        %7585 = vmatmul.mubr.bf16.gmra.mrb[0].mxu0 %v6900
        %v7586 = vpop.f32.mrb[0].mxu0
        %v7587 = vadd.f32 0.0, %v7586
        %v7588 = vpop.f32.mrb[0].mxu0
        %v7589 = vpop.f32.mrb[0].mxu0
        %v7590 = vadd.f32 0.0, %v7589
        %v7591 = vpop.f32.mrb[0].mxu0
        %7592 = vmatprep.mubr.bf16.mxu0 %v6904
        %7593 = vmatmul.mubr.bf16.gmra.mrb[0].mxu0 %v6903
        %v7594 = vpop.f32.mrb[0].mxu0
        %v7595 = vadd.f32 0.0, %v7594
        %v7596 = vpop.f32.mrb[0].mxu0
        %v7597 = vpop.f32.mrb[0].mxu0
        %v7598 = vadd.f32 0.0, %v7597
        %v7599 = vpop.f32.mrb[0].mxu0
        %7600 = vmatprep.mubr.bf16.mxu0 %v6907
        %7601 = vmatmul.mubr.bf16.gmra.mrb[0].mxu0 %v6906
        %v7602 = vpop.f32.mrb[0].mxu0
        %v7603 = vadd.f32 0.0, %v7602
        %v7604 = vpop.f32.mrb[0].mxu0
        %v7605 = vpop.f32.mrb[0].mxu0
        %v7606 = vadd.f32 0.0, %v7605
        %v7607 = vpop.f32.mrb[0].mxu0
        %7608 = vmatprep.mubr.bf16.mxu0 %v6910
        %7609 = vmatmul.mubr.bf16.gmra.mrb[0].mxu0 %v6909
        %v7610 = vpop.f32.mrb[0].mxu0
        %v7611 = vadd.f32 0.0, %v7610
        %v7612 = vpop.f32.mrb[0].mxu0
        %v7613 = vpop.f32.mrb[0].mxu0
        %v7614 = vadd.f32 0.0, %v7613
        %v7615 = vpop.f32.mrb[0].mxu0
        %7616 = vmatprep.mubr.bf16.mxu0 %v6913
        %7617 = vmatmul.mubr.bf16.gmra.mrb[0].mxu0 %v6912
        %v7618 = vpop.f32.mrb[0].mxu0
        %v7619 = vadd.f32 0.0, %v7618
        %v7620 = vpop.f32.mrb[0].mxu0
        %v7621 = vpop.f32.mrb[0].mxu0
        %v7622 = vadd.f32 0.0, %v7621
        %v7623 = vpop.f32.mrb[0].mxu0
        %7624 = vmatprep.mubr.bf16.mxu0 %v6916
        %7625 = vmatmul.mubr.bf16.gmra.mrb[0].mxu0 %v6915
        %v7626 = vpop.f32.mrb[0].mxu0
        %v7627 = vadd.f32 0.0, %v7626
        %v7628 = vpop.f32.mrb[0].mxu0
        %v7629 = vpop.f32.mrb[0].mxu0
        %v7630 = vadd.f32 0.0, %v7629
        %v7631 = vpop.f32.mrb[0].mxu0
        %7632 = vmatprep.mubr.bf16.mxu0 %v6919
        %7633 = vmatmul.mubr.bf16.gmra.mrb[0].mxu0 %v6918
        %v7634 = vpop.f32.mrb[0].mxu0
        %v7635 = vadd.f32 0.0, %v7634
        %v7636 = vpop.f32.mrb[0].mxu0
        %v7637 = vpop.f32.mrb[0].mxu0
        %v7638 = vadd.f32 0.0, %v7637
        %v7639 = vpop.f32.mrb[0].mxu0
        %7640 = vmatprep.mubr.bf16.mxu0 %v6922
        %7641 = vmatmul.mubr.bf16.gmra.mrb[0].mxu0 %v6921
        %v7642 = vpop.f32.mrb[0].mxu0
        %v7643 = vadd.f32 0.0, %v7642
        %v7644 = vpop.f32.mrb[0].mxu0
        %v7645 = vpop.f32.mrb[0].mxu0
        %v7646 = vadd.f32 0.0, %v7645
        %v7647 = vpop.f32.mrb[0].mxu0
        %7648 = vdwg.mxu0
        %7649 = vmatprep.subr.bf16.mxu0 0
        %7650 = vmatpush1.bf16.msra.mxu0 %v7520
        %7651 = vmatprep.subr.bf16.mxu0 0
        %7652 = vmatpush1.bf16.msra.mxu0 %v7521
        %7653 = vmatprep.subr.bf16.mxu0 0
        %7654 = vmatpush1.bf16.msra.mxu0 %v7522
        %7655 = vmatprep.subr.bf16.mxu0 0
        %7656 = vmatpush1.bf16.msra.mxu0 %v7523
        %7657 = vmatprep.subr.bf16.mxu0 0
        %7658 = vmatpush1.bf16.msra.mxu0 %v7524
        %7659 = vmatprep.subr.bf16.mxu0 0
        %7660 = vmatpush1.bf16.msra.mxu0 %v7525
        %7661 = vmatprep.subr.bf16.mxu0 0
        %7662 = vmatpush1.bf16.msra.mxu0 %v7526
        %7663 = vmatprep.subr.bf16.mxu0 0
        %7664 = vmatpush1.bf16.msra.mxu0 %v7527
        %7665 = vmatprep.subr.bf16.mxu0 0
        %7666 = vmatpush1.bf16.msra.mxu0 0
        %7667 = vmatprep.subr.bf16.mxu0 0
        %7668 = vmatpush1.bf16.msra.mxu0 0
        %7669 = vmatprep.subr.bf16.mxu0 0
        %7670 = vmatpush1.bf16.msra.mxu0 0
        %7671 = vmatprep.subr.bf16.mxu0 0
        %7672 = vmatpush1.bf16.msra.mxu0 0
        %7673 = vmatprep.subr.bf16.mxu0 0
        %7674 = vmatpush1.bf16.msra.mxu0 0
        %7675 = vmatprep.subr.bf16.mxu0 0
        %7676 = vmatpush1.bf16.msra.mxu0 0
        %7677 = vmatprep.subr.bf16.mxu0 0
        %7678 = vmatpush1.bf16.msra.mxu0 0
        %7679 = vmatprep.subr.bf16.mxu0 0
        %7680 = vmatpush1.bf16.msra.mxu0 0
        %7681 = vmatprep.mubr.bf16.mxu0 0
        %7682 = vmatmul.mubr.bf16.gmra.mrb[0].mxu0 %v6902
        %v7683 = vpop.f32.mrb[0].mxu0
        %v7684 = vadd.f32 %v7587, %v7683
        %v7685 = vpop.f32.mrb[0].mxu0
        %v7686 = vpop.f32.mrb[0].mxu0
        %v7687 = vadd.f32 %v7590, %v7686
        %v7688 = vpop.f32.mrb[0].mxu0
        %7689 = vmatprep.mubr.bf16.mxu0 0
        %7690 = vmatmul.mubr.bf16.gmra.mrb[0].mxu0 %v6905
        %v7691 = vpop.f32.mrb[0].mxu0
        %v7692 = vadd.f32 %v7595, %v7691
        %v7693 = vpop.f32.mrb[0].mxu0
        %v7694 = vpop.f32.mrb[0].mxu0
        %v7695 = vadd.f32 %v7598, %v7694
        %v7696 = vpop.f32.mrb[0].mxu0
        %7697 = vmatprep.mubr.bf16.mxu0 0
        %7698 = vmatmul.mubr.bf16.gmra.mrb[0].mxu0 %v6908
        %v7699 = vpop.f32.mrb[0].mxu0
        %v7700 = vadd.f32 %v7603, %v7699
        %v7701 = vpop.f32.mrb[0].mxu0
        %v7702 = vpop.f32.mrb[0].mxu0
        %v7703 = vadd.f32 %v7606, %v7702
        %v7704 = vpop.f32.mrb[0].mxu0
        %7705 = vmatprep.mubr.bf16.mxu0 0
        %7706 = vmatmul.mubr.bf16.gmra.mrb[0].mxu0 %v6911
        %v7707 = vpop.f32.mrb[0].mxu0
        %v7708 = vadd.f32 %v7611, %v7707
        %v7709 = vpop.f32.mrb[0].mxu0
        %v7710 = vpop.f32.mrb[0].mxu0
        %v7711 = vadd.f32 %v7614, %v7710
        %v7712 = vpop.f32.mrb[0].mxu0
        %7713 = vmatprep.mubr.bf16.mxu0 0
        %7714 = vmatmul.mubr.bf16.gmra.mrb[0].mxu0 %v6914
        %v7715 = vpop.f32.mrb[0].mxu0
        %v7716 = vadd.f32 %v7619, %v7715
        %v7717 = vpop.f32.mrb[0].mxu0
        %v7718 = vpop.f32.mrb[0].mxu0
        %v7719 = vadd.f32 %v7622, %v7718
        %v7720 = vpop.f32.mrb[0].mxu0
        %7721 = vmatprep.mubr.bf16.mxu0 0
        %7722 = vmatmul.mubr.bf16.gmra.mrb[0].mxu0 %v6917
        %v7723 = vpop.f32.mrb[0].mxu0
        %v7724 = vadd.f32 %v7627, %v7723
        %v7725 = vpop.f32.mrb[0].mxu0
        %v7726 = vpop.f32.mrb[0].mxu0
        %v7727 = vadd.f32 %v7630, %v7726
        %v7728 = vpop.f32.mrb[0].mxu0
        %7729 = vmatprep.mubr.bf16.mxu0 0
        %7730 = vmatmul.mubr.bf16.gmra.mrb[0].mxu0 %v6920
        %v7731 = vpop.f32.mrb[0].mxu0
        %v7732 = vadd.f32 %v7635, %v7731
        %v7733 = vpop.f32.mrb[0].mxu0
        %v7734 = vpop.f32.mrb[0].mxu0
        %v7735 = vadd.f32 %v7638, %v7734
        %v7736 = vpop.f32.mrb[0].mxu0
        %7737 = vmatprep.mubr.bf16.mxu0 0
        %7738 = vmatmul.mubr.bf16.gmra.mrb[0].mxu0 %v6923
        %v7739 = vpop.f32.mrb[0].mxu0
        %v7740 = vadd.f32 %v7643, %v7739
        %v7741 = vpop.f32.mrb[0].mxu0
        %v7742 = vpop.f32.mrb[0].mxu0
        %v7743 = vadd.f32 %v7646, %v7742
        %v7744 = vpop.f32.mrb[0].mxu0
        %7745 = vdwg.mxu0
        %v7746 = vadd.f32 %v219, %v7684
        %v7747 = vadd.f32 %v220, %v7687
        %v7748 = vadd.f32 %v221, %v7692
        %v7749 = vadd.f32 %v222, %v7695
        %v7750 = vadd.f32 %v223, %v7700
        %v7751 = vadd.f32 %v224, %v7703
        %v7752 = vadd.f32 %v225, %v7708
        %v7753 = vadd.f32 %v226, %v7711
        %v7754 = vadd.f32 %v227, %v7716
        %v7755 = vadd.f32 %v228, %v7719
        %v7756 = vadd.f32 %v229, %v7724
        %v7757 = vadd.f32 %v230, %v7727
        %v7758 = vadd.f32 %v231, %v7732
        %v7759 = vadd.f32 %v232, %v7735
        %v7760 = vadd.f32 %v233, %v7740
        %v7761 = vadd.f32 %v234, %v7743
        %v7762 = vld [vmem:[#allocation4 + $0x5] ss:$0 sm:$0xff]
        %v7763 = vadd.f32 %v7746, %v7762
        %v7764 = vadd.f32 %v7747, %v7762
        %v7765 = vadd.f32 %v7748, %v7762
        %v7766 = vadd.f32 %v7749, %v7762
        %v7767 = vadd.f32 %v7750, %v7762
        %v7768 = vadd.f32 %v7751, %v7762
        %v7769 = vadd.f32 %v7752, %v7762
        %v7770 = vadd.f32 %v7753, %v7762
        %v7771 = vadd.f32 %v7754, %v7762
        %v7772 = vadd.f32 %v7755, %v7762
        %v7773 = vadd.f32 %v7756, %v7762
        %v7774 = vadd.f32 %v7757, %v7762
        %v7775 = vadd.f32 %v7758, %v7762
        %v7776 = vadd.f32 %v7759, %v7762
        %v7777 = vadd.f32 %v7760, %v7762
        %v7778 = vadd.f32 %v7761, %v7762
        %7779 = vst [vmem:[%s200 + $0x80] sm:$0xff] %v7763
        %7780 = vst [vmem:[%s200 + $0x88] sm:$0xff] %v7764
        %7781 = vst [vmem:[%s200 + $0x90] sm:$0xff] %v7765
        %7782 = vst [vmem:[%s200 + $0x98] sm:$0xff] %v7766
        %7783 = vst [vmem:[%s200 + $0xa0] sm:$0xff] %v7767
        %7784 = vst [vmem:[%s200 + $0xa8] sm:$0xff] %v7768
        %7785 = vst [vmem:[%s200 + $0xb0] sm:$0xff] %v7769
        %7786 = vst [vmem:[%s200 + $0xb8] sm:$0xff] %v7770
        %7787 = vst [vmem:[%s200 + $0xc0] sm:$0xff] %v7771
        %7788 = vst [vmem:[%s200 + $0xc8] sm:$0xff] %v7772
        %7789 = vst [vmem:[%s200 + $0xd0] sm:$0xff] %v7773
        %7790 = vst [vmem:[%s200 + $0xd8] sm:$0xff] %v7774
        %7791 = vst [vmem:[%s200 + $0xe0] sm:$0xff] %v7775
        %7792 = vst [vmem:[%s200 + $0xe8] sm:$0xff] %v7776
        %7793 = vst [vmem:[%s200 + $0xf0] sm:$0xff] %v7777
        %7794 = vst [vmem:[%s200 + $0xf8] sm:$0xff] %v7778
        %s7795 = smul.u32 32, %s16
        %p7796 = scmp.lt.s32.totalorder %s7795, 63
        %s7797 = scalar_select %p7796, %s7795, 63
        %s7798 = smul.addr %s7797, 8
        %s7799 = scalar_lea.vmem %s3, %s7798
        // Predicated region
        $region41: #{another_dn_forward.1} parent=31 // pred_check
          %p7800 = pneg %p102
        $region42: #{another_dn_forward.1} parent=31 // pred_check_branch
          %7802 = sbr.rel (%p7800) target = $region44
        $region43: #{another_dn_forward.1} parent=31 // pred_region
          %s7803 = smul.u32 32, %s16
        $region44: #{another_dn_forward.1} parent=31 // pred_fallthru
          _
      $region32: #{another_dn_forward.1} parent=5 // pred_fallthru
        _
      %p7804 = scmp.le.s32.totalorder 2, %s11
      // Predicated region
      $region45: #{another_dn_forward.1} parent=5 // pred_check
        %p7805 = pneg %p7804
      $region46: #{another_dn_forward.1} parent=5 // pred_check_branch
        %7807 = sbr.rel (%p7805) target = $region48
      $region47: #{another_dn_forward.1} parent=5 // pred_region
        %s7808 = ssub.s32 %s11, 2
        // Predicated region
        $region49: #{another_dn_forward.1} parent=47 // pred_check
          %p7809 = pneg %p108
        $region50: #{another_dn_forward.1} parent=47 // pred_check_branch
          %7811 = sbr.rel (%p7809) target = $region52
        $region51: #{another_dn_forward.1} parent=47 // pred_region
          %s7812 = smul.u32 32, %s17
          %p7813 = scmp.lt.s32.totalorder %s7812, 63
          %s7814 = scalar_select %p7813, %s7812, 63
          %s7815 = smul.addr %s7814, 8
          %s7816 = scalar_lea.vmem %s3, %s7815
        $region52: #{another_dn_forward.1} parent=47 // pred_fallthru
          _
      $region48: #{another_dn_forward.1} parent=5 // pred_fallthru
        _
    $region6: #{another_dn_forward.1} parent=1 // loop_footer
      %s15 = sadd.s32 1, %s11
    $region7: #{another_dn_forward.1} parent=1 // loop_footer_branch
      %10 = sbr.rel target = $region3
    $region8: #{another_dn_forward.1} parent=1 // loop_exit
      _
    %7817 = vsyncpa [#allocation3], 1
    %s7818 = scalar_lea.sflag [#allocation3], 1
    %7819 = vsyncpa %s7818, 1
    %7820 = vsyncpa [#allocation5], 1

</llo_original>
